<compile_context>
chip_gen: v7x
topology: tpu7x:2x2x1
jax: 0.10.0
libtpu: 0.0.40
codegen_flags: <defaults>
</compile_context>

<pallas_src>
import functools

import jax
import jax.numpy as jnp
from jax import lax
from jax.experimental import pallas as pl
from jax.experimental.pallas import tpu as pltpu


LANE = 128
VMEM_LIMIT_BYTES = 32 * 1024 * 1024     # explicit scoped-VMEM cap (fits every gen)

N_FEATURES = 4
N_CLASSES = 5
SA_CFG = {
    "sa1": dict(n_samples=32, radius=0.4, n_group=8, mlp=(16, 16, 32)),
    "sa2": dict(n_samples=16, radius=0.8, n_group=8, mlp=(32, 32, 64)),
    "sa3": dict(n_samples=8, radius=1.2, n_group=8, mlp=(64, 64, 128)),
    "sa4": dict(n_samples=4, radius=1.6, n_group=8, mlp=(128, 128, 256)),
}
FP_CFG = {"fp4": (128, 128), "fp3": (128, 64), "fp2": (64, 32), "fp1": (32, 32)}


def round_up(x, m=LANE):
    return -(-x // m) * m


def _single_tensorcore_chip():
    """True for 1-TC chips (v5e/v6e): fold batch into M (single grid step).
    Multi-TC chips (v7x, megacore v4) keep a per-batch 'parallel' grid axis."""
    try:
        kind = jax.devices()[0].device_kind.lower()
    except Exception:
        return False
    return any(t in kind for t in
               ("v5e", "v5 lite", "v5lite", "v6e", "v6 lite", "v6lite"))


_SINGLE_TC = _single_tensorcore_chip()


def _use_batch_grid(batch):
    return (not _SINGLE_TC) and batch >= 2


def _cparams(parallel):
    return pltpu.CompilerParams(
        dimension_semantics=(("parallel",) if parallel else ("arbitrary",)),
        vmem_limit_bytes=VMEM_LIMIT_BYTES)


# ----------------------------------------------------------------------------
# Fused SA kernel: 1x1-conv MLP stack (bf16 dots) + group max-pool epilogue
# ----------------------------------------------------------------------------
def _sa_mlp_kernel(*refs, n_layers, pool_groups):
    x_ref, o_ref = refs[0], refs[-1]
    x = x_ref[...]                                           # [M, Kpad] f32
    for li in range(n_layers):
        w = refs[1 + 2 * li][...]                            # [Kpad, Npad] bf16
        b = refs[2 + 2 * li][...]                            # [1, Npad]    f32
        x = jnp.dot(x.astype(jnp.bfloat16), w,
                    preferred_element_type=jnp.float32) + b
        x = jnp.maximum(x, 0.0)
    # [S*G, C] -> [S, G, C] is layout-preserving (G=8 sublanes, f32); the group
    # max runs on the XLU and is effectively free next to the MXU work.
    s = x.shape[0] // pool_groups
    x = jnp.max(x.reshape(s, pool_groups, x.shape[1]), axis=1)
    o_ref[...] = x.astype(o_ref.dtype)


def sa_fused_mlp(x, layers, *, pool_groups):
    """x: [B, S*G, Kpad] f32 (real channels zero-padded once to a 128 multiple).
    layers: [(w_bf16 [Kpad, Npad], b_f32 [1, Npad]), ...].  Returns padded f32."""
    B, M, K = x.shape
    cout = layers[-1][0].shape[1]
    mout = M // pool_groups
    kernel = functools.partial(_sa_mlp_kernel, n_layers=len(layers),
                               pool_groups=pool_groups)
    w_args, w_specs = [], []
    for (w, b) in layers:
        w_args += [w, b]
        w_specs += [pl.BlockSpec(w.shape, lambda *_: (0, 0)),
                    pl.BlockSpec(b.shape, lambda *_: (0, 0))]

    if _use_batch_grid(B):
        return pl.pallas_call(
            kernel,
            out_shape=jax.ShapeDtypeStruct((B, mout, cout), jnp.float32),
            grid=(B,),
            in_specs=[pl.BlockSpec((None, M, K), lambda b: (b, 0, 0))] + w_specs,
            out_specs=pl.BlockSpec((None, mout, cout), lambda b: (b, 0, 0)),
            compiler_params=_cparams(parallel=True),
        )(x, *w_args)

    out = pl.pallas_call(
        kernel,
        out_shape=jax.ShapeDtypeStruct((B * mout, cout), jnp.float32),
        grid=(1,),
        in_specs=[pl.BlockSpec((B * M, K), lambda i: (0, 0))] + w_specs,
        out_specs=pl.BlockSpec((B * mout, cout), lambda i: (0, 0)),
        compiler_params=_cparams(parallel=False),
    )(x.reshape(B * M, K), *w_args)
    return out.reshape(B, mout, cout)


# ----------------------------------------------------------------------------
# Fused FP kernel: inverse-distance interp + [skip|interp] first layer as two
# accumulated dots + remaining MLP layers (+ optional fused class head)
# ----------------------------------------------------------------------------
def _fp_kernel(*refs, n_layers, relus, k):
    neighs = refs[:k]                       # k x [M, Csp]       f32
    wgt_ref = refs[k]                       # [M, k]             f32
    skip_ref = refs[k + 1]                  # [M, Csk_pad8]      f32
    wsp = refs[k + 2][...]                  # [Csp, N1pad]       bf16
    wsk = refs[k + 3][...]                  # [Csk_pad8, N1pad]  bf16
    b0 = refs[k + 4][...]                   # [1, N1pad]         f32
    rest = refs[k + 5:-1]
    o_ref = refs[-1]

    wgt = wgt_ref[...]
    interp = neighs[0][...] * wgt[:, 0:1]               # VPU, f32
    for i in range(1, k):
        interp = interp + neighs[i][...] * wgt[:, i:i + 1]
    x = (jnp.dot(interp.astype(jnp.bfloat16), wsp,
                 preferred_element_type=jnp.float32)
         + jnp.dot(skip_ref[...].astype(jnp.bfloat16), wsk,
                   preferred_element_type=jnp.float32)
         + b0)
    if relus[0]:
        x = jnp.maximum(x, 0.0)
    for li in range(1, n_layers):
        w = rest[2 * (li - 1)][...]
        b = rest[2 * (li - 1) + 1][...]
        x = jnp.dot(x.astype(jnp.bfloat16), w, preferred_element_type=jnp.float32) + b
        if relus[li]:
            x = jnp.maximum(x, 0.0)
    o_ref[...] = x.astype(o_ref.dtype)


def fp_fused(neighs, weight, skip, fp_params, relus):
    B, M, _ = neighs[0].shape
    k = len(neighs)
    rest = fp_params["rest"]
    n_layers = 1 + len(rest)
    cout = rest[-1][0].shape[1] if rest else fp_params["wsp"].shape[1]
    kernel = functools.partial(_fp_kernel, n_layers=n_layers,
                               relus=tuple(relus), k=k)
    w_args = [fp_params["wsp"], fp_params["wsk"], fp_params["b0"]]
    for (w, b) in rest:
        w_args += [w, b]
    w_specs = [pl.BlockSpec(a.shape, lambda *_: (0, 0)) for a in w_args]
    pts = list(neighs) + [weight, skip]

    if _use_batch_grid(B):
        in_specs = [pl.BlockSpec((None, M, t.shape[-1]), lambda b: (b, 0, 0))
                    for t in pts] + w_specs
        return pl.pallas_call(
            kernel,
            out_shape=jax.ShapeDtypeStruct((B, M, cout), jnp.float32),
            grid=(B,),
            in_specs=in_specs,
            out_specs=pl.BlockSpec((None, M, cout), lambda b: (b, 0, 0)),
            compiler_params=_cparams(parallel=True),
        )(*pts, *w_args)

    pts_f = [t.reshape(B * M, t.shape[-1]) for t in pts]
    in_specs = [pl.BlockSpec(t.shape, lambda i: (0, 0)) for t in pts_f] + w_specs
    out = pl.pallas_call(
        kernel,
        out_shape=jax.ShapeDtypeStruct((B * M, cout), jnp.float32),
        grid=(1,),
        in_specs=in_specs,
        out_specs=pl.BlockSpec((B * M, cout), lambda i: (0, 0)),
        compiler_params=_cparams(parallel=False),
    )(*pts_f, *w_args)
    return out.reshape(B, M, cout)


# ----------------------------------------------------------------------------
# Plain-JAX glue: sampling / grouping / kNN index math
# ----------------------------------------------------------------------------
def square_distance(a, b):
    # a: [B, N, 3], b: [B, M, 3] -> [B, N, M]
    return jnp.sum((a[:, :, None, :] - b[:, None, :, :]) ** 2, axis=-1)


def index_points(points, idx):
    # points: [B, N, C], idx: [B, ...] -> [B, ..., C]
    B = points.shape[0]
    flat = jnp.take_along_axis(points, idx.reshape(B, -1)[..., None], axis=1)
    return flat.reshape(*idx.shape, points.shape[-1])


def farthest_point_sample(xyz, n_samples):
    B, N, _ = xyz.shape
    idxs0 = jnp.zeros((B, n_samples), jnp.int32)
    dist0 = jnp.full((B, N), 1e10, jnp.float32)
    far0 = jnp.zeros((B,), jnp.int32)

    def body(i, state):
        idxs, dist, far = state
        idxs = idxs.at[:, i].set(far)
        centroid = jnp.take_along_axis(xyz, far[:, None, None], axis=1)
        d = jnp.sum((xyz - centroid) ** 2, axis=-1)
        dist = jnp.minimum(dist, d)
        far = jnp.argmax(dist, axis=-1).astype(jnp.int32)
        return idxs, dist, far

    idxs, _, _ = lax.fori_loop(0, n_samples, body, (idxs0, dist0, far0))
    return idxs


def ball_query(radius, n_group, xyz, new_xyz):
    B, N, _ = xyz.shape
    S = new_xyz.shape[1]
    d2 = square_distance(new_xyz, xyz)                        # [B, S, N]
    gidx = jnp.broadcast_to(jnp.arange(N, dtype=jnp.int32), (B, S, N))
    gidx = jnp.where(d2 > radius ** 2, N, gidx)
    gidx = jnp.sort(gidx, axis=-1)[:, :, :n_group]
    first = gidx[:, :, :1]
    gidx = jnp.where(gidx == N, first, gidx)
    # Empty-ball guard: unreachable in practice because every centroid is a
    # member of xyz (distance 0 <= radius); kept only as an OOB safety clamp.
    gidx = jnp.minimum(gidx, N - 1)
    return gidx


# ----------------------------------------------------------------------------
# PointNet++ blocks (index glue in JAX, dense compute in one Pallas call each)
# ----------------------------------------------------------------------------
def set_abstraction(xyz, feats, layers, *, n_samples, radius, n_group):
    """xyz: [B,N,3], feats: [B,N,C_real] -> ([B,S,3], pooled [B,S,Cout_pad])."""
    B = xyz.shape[0]
    fps_idx = farthest_point_sample(xyz, n_samples)                  # [B, S]
    new_xyz = index_points(xyz, fps_idx)                             # [B, S, 3]
    gidx = ball_query(radius, n_group, xyz, new_xyz)                 # [B, S, G]
    grouped_xyz = index_points(xyz, gidx) - new_xyz[:, :, None, :]   # [B, S, G, 3]
    grouped_feats = index_points(feats, gidx)                        # [B, S, G, C]
    # Real-channel concat, padded ONCE to the next multiple of 128 (lane-dense,
    # no 256-wide K when the real K fits in 128).
    x = jnp.concatenate([grouped_xyz, grouped_feats], axis=-1)
    cin = x.shape[-1]
    cin_pad = round_up(cin)
    if cin_pad > cin:
        x = jnp.pad(x, ((0, 0), (0, 0), (0, 0), (0, cin_pad - cin)))
    x = x.reshape(B, n_samples * n_group, cin_pad)
    return new_xyz, sa_fused_mlp(x, layers, pool_groups=n_group)


def feature_propagation(sparse_xyz, sparse_feats, dense_xyz, skip_feats,
                        fp_params, relus, k=3):
    """sparse_feats / skip_feats carry only real channels.  The k=3 inverse-
    distance interpolation and the first FP layer are fused into the kernel."""
    d2 = square_distance(dense_xyz, sparse_xyz)                # [B, N, M]
    neg_d, idx = lax.top_k(-d2, k)                             # k nearest
    recip = 1.0 / ((-neg_d) + 1e-8)
    weight = recip / jnp.sum(recip, axis=-1, keepdims=True)    # [B, N, k]
    neigh = index_points(sparse_feats, idx)                    # [B, N, k, Csp]
    neighs = [neigh[:, :, i, :] for i in range(k)]
    csk = skip_feats.shape[-1]
    csk_pad = round_up(csk, 8)                                 # sublane-align skip
    if csk_pad > csk:
        skip_feats = jnp.pad(skip_feats, ((0, 0), (0, 0), (0, csk_pad - csk)))
    return fp_fused(neighs, weight, skip_feats, fp_params, relus)


# ----------------------------------------------------------------------------
# Parameter init: padded bf16 weight slabs / f32 biases built once
# ----------------------------------------------------------------------------
def init_linear_padded(key, cin, cout, kpad, npad):
    kw, kb = jax.random.split(key)
    w = jax.random.normal(kw, (cin, cout), jnp.float32) / jnp.sqrt(float(cin))
    b = 0.01 * jax.random.normal(kb, (cout,), jnp.float32)
    wp = (jnp.zeros((kpad, npad), jnp.float32)
          .at[:cin, :cout].set(w).astype(jnp.bfloat16))
    bp = jnp.zeros((1, npad), jnp.float32).at[0, :cout].set(b)
    return wp, bp


def init_params(key):
    params = {}
    real = {"input": N_FEATURES}

    prev = "input"
    for name in ("sa1", "sa2", "sa3", "sa4"):
        mlp = SA_CFG[name]["mlp"]
        cin = 3 + real[prev]                      # real concat width [xyz | feats]
        layers = []
        for cout in mlp:
            key, sub = jax.random.split(key)
            layers.append(init_linear_padded(sub, cin, cout,
                                             round_up(cin), round_up(cout)))
            cin = cout
        params[name] = layers
        real[name] = mlp[-1]
        prev = name

    for name, sp_src, sk_src in (("fp4", "sa4", "sa3"), ("fp3", "fp4", "sa2"),
                                 ("fp2", "fp3", "sa1"), ("fp1", "fp2", "input")):
        csp, csk = real[sp_src], real[sk_src]
        csk_pad = round_up(csk, 8)
        mlp = FP_CFG[name]
        n1, n1_pad = mlp[0], round_up(mlp[0])
        key, sub = jax.random.split(key)
        kw, kb = jax.random.split(sub)
        # Reference concat order is [skip (points1), interpolated]; here the
        # first layer is two accumulated dots, so order only matters when
        # porting pretrained PyTorch weights (keep this row split then).
        w = jax.random.normal(kw, (csk + csp, n1), jnp.float32) / jnp.sqrt(float(csk + csp))
        b = 0.01 * jax.random.normal(kb, (n1,), jnp.float32)
        wsk = (jnp.zeros((csk_pad, n1_pad), jnp.float32)
               .at[:csk, :n1].set(w[:csk]).astype(jnp.bfloat16))
        wsp = (jnp.zeros((csp, n1_pad), jnp.float32)
               .at[:, :n1].set(w[csk:]).astype(jnp.bfloat16))
        b0 = jnp.zeros((1, n1_pad), jnp.float32).at[0, :n1].set(b)
        rest = []
        cin = n1
        for cout in mlp[1:]:
            key, sub = jax.random.split(key)
            rest.append(init_linear_padded(sub, cin, cout,
                                           round_up(cin), round_up(cout)))
            cin = cout
        if name == "fp1":
            # Final 1x1 Conv1d classification head fused into the fp1 kernel.
            key, sub = jax.random.split(key)
            rest.append(init_linear_padded(sub, cin, N_CLASSES,
                                           round_up(cin), round_up(N_CLASSES)))
        params[name] = {"wsp": wsp, "wsk": wsk, "b0": b0, "rest": rest}
        real[name] = mlp[-1]
    return params


# ----------------------------------------------------------------------------
# Full model forward
# ----------------------------------------------------------------------------
def pointnet2_seg_forward(inputs, params):
    """inputs: [B, 3 + n_features, n_points] -> [B, n_classes, n_points]"""
    input_xyz = jnp.transpose(inputs[:, :3, :], (0, 2, 1))        # [B, N, 3]
    input_feats = jnp.transpose(inputs[:, 3:, :], (0, 2, 1))      # [B, N, 4] real

    def sa(name, xyz, feats):
        c = SA_CFG[name]
        new_xyz, pooled = set_abstraction(
            xyz, feats, params[name],
            n_samples=c["n_samples"], radius=c["radius"], n_group=c["n_group"])
        return new_xyz, pooled[..., :c["mlp"][-1]]                # real channels

    s1_xyz, s1_f = sa("sa1", input_xyz, input_feats)
    s2_xyz, s2_f = sa("sa2", s1_xyz, s1_f)
    s3_xyz, s3_f = sa("sa3", s2_xyz, s2_f)
    s4_xyz, s4_f = sa("sa4", s3_xyz, s3_f)

    f3 = feature_propagation(s4_xyz, s4_f, s3_xyz, s3_f, params["fp4"],
                             (True, True))[..., :FP_CFG["fp4"][-1]]
    f2 = feature_propagation(s3_xyz, f3, s2_xyz, s2_f, params["fp3"],
                             (True, True))[..., :FP_CFG["fp3"][-1]]
    f1 = feature_propagation(s2_xyz, f2, s1_xyz, s1_f, params["fp2"],
                             (True, True))[..., :FP_CFG["fp2"][-1]]
    # fp1 MLP (ReLU, ReLU) + fused no-ReLU classification head.
    f0 = feature_propagation(s1_xyz, f1, input_xyz, input_feats, params["fp1"],
                             (True, True, False))
    logits = f0[..., :N_CLASSES]                                  # drop lane padding
    return jnp.transpose(logits, (0, 2, 1))                       # [B, n_classes, N]


if __name__ == "__main__":
    key = jax.random.PRNGKey(0)
    k_pts, k_feat, k_param = jax.random.split(key, 3)

    B, N_POINTS = 2, 64
    xyz = jax.random.uniform(k_pts, (B, 3, N_POINTS), jnp.float32)
    feats = jax.random.normal(k_feat, (B, N_FEATURES, N_POINTS), jnp.float32)
    inputs = jnp.concatenate([xyz, feats], axis=1)                # [2, 7, 64]

    params = init_params(k_param)

    fwd = jax.jit(pointnet2_seg_forward)
    outputs = jax.block_until_ready(fwd(inputs, params))
    assert outputs.shape == (B, N_CLASSES, N_POINTS), outputs.shape
    assert bool(jnp.all(jnp.isfinite(outputs)))
    print("KERNEL_OK")
</pallas_src>

<mosaic_0001>
module attributes {stable_mosaic.version = 11 : i64} {
  func.func @_sa_mlp_kernel(%arg0: i32, %arg1: memref<1x256x128xf32, #tpu.memory_space<vmem>>, %arg2: memref<128x128xbf16, #tpu.memory_space<vmem>>, %arg3: memref<1x128xf32, #tpu.memory_space<vmem>>, %arg4: memref<128x128xbf16, #tpu.memory_space<vmem>>, %arg5: memref<1x128xf32, #tpu.memory_space<vmem>>, %arg6: memref<128x128xbf16, #tpu.memory_space<vmem>>, %arg7: memref<1x128xf32, #tpu.memory_space<vmem>>, %arg8: memref<1x32x128xf32, #tpu.memory_space<vmem>>) attributes {dimension_semantics = [#tpu.dimension_semantics<parallel>], iteration_bounds = array<i64: 2>, scalar_prefetch = 0 : i64, scratch_operands = 0 : i64, tpu.core_type = #tpu.core_type<tc>, window_params = [{transform_indices = @transform_0, window_bounds = array<i64: 1, 256, 128>}, {pipeline_mode = #tpu.pipeline_mode<synchronous>, transform_indices = @transform_1, window_bounds = array<i64: 128, 128>}, {pipeline_mode = #tpu.pipeline_mode<synchronous>, transform_indices = @transform_2, window_bounds = array<i64: 1, 128>}, {pipeline_mode = #tpu.pipeline_mode<synchronous>, transform_indices = @transform_3, window_bounds = array<i64: 128, 128>}, {pipeline_mode = #tpu.pipeline_mode<synchronous>, transform_indices = @transform_4, window_bounds = array<i64: 1, 128>}, {pipeline_mode = #tpu.pipeline_mode<synchronous>, transform_indices = @transform_5, window_bounds = array<i64: 128, 128>}, {pipeline_mode = #tpu.pipeline_mode<synchronous>, transform_indices = @transform_6, window_bounds = array<i64: 1, 128>}, {transform_indices = @transform_7, window_bounds = array<i64: 1, 32, 128>}]} {
    %c0 = arith.constant 0 : index
    %c0_0 = arith.constant 0 : index
    %c0_1 = arith.constant 0 : index
    %0 = vector.load %arg1[%c0, %c0_0, %c0_1] : memref<1x256x128xf32, #tpu.memory_space<vmem>>, vector<1x256x128xf32>
    %1 = vector.shape_cast %0 : vector<1x256x128xf32> to vector<256x128xf32>
    %c0_2 = arith.constant 0 : index
    %c0_3 = arith.constant 0 : index
    %2 = vector.load %arg2[%c0_2, %c0_3] : memref<128x128xbf16, #tpu.memory_space<vmem>>, vector<128x128xbf16>
    %c0_4 = arith.constant 0 : index
    %c0_5 = arith.constant 0 : index
    %3 = vector.load %arg3[%c0_4, %c0_5] : memref<1x128xf32, #tpu.memory_space<vmem>>, vector<1x128xf32>
    %4 = arith.truncf %1 : vector<256x128xf32> to vector<256x128xbf16>
    %cst = arith.constant dense<0.000000e+00> : vector<256x128xf32>
    %5 = tpu.matmul %4, %2, %cst {dimension_numbers = #tpu.dot_dimension_numbers<[1], [0], [0], [1], [0, 0, 1, 1], [], []>} : vector<256x128xbf16>, vector<128x128xbf16>, vector<256x128xf32> -> vector<256x128xf32>
    %6 = vector.broadcast %3 : vector<1x128xf32> to vector<256x128xf32>
    %7 = arith.addf %5, %6 : vector<256x128xf32>
    %cst_6 = arith.constant 0.000000e+00 : f32
    %8 = vector.broadcast %cst_6 : f32 to vector<256x128xf32>
    %9 = arith.maximumf %7, %8 : vector<256x128xf32>
    %c0_7 = arith.constant 0 : index
    %c0_8 = arith.constant 0 : index
    %10 = vector.load %arg4[%c0_7, %c0_8] : memref<128x128xbf16, #tpu.memory_space<vmem>>, vector<128x128xbf16>
    %c0_9 = arith.constant 0 : index
    %c0_10 = arith.constant 0 : index
    %11 = vector.load %arg5[%c0_9, %c0_10] : memref<1x128xf32, #tpu.memory_space<vmem>>, vector<1x128xf32>
    %12 = arith.truncf %9 : vector<256x128xf32> to vector<256x128xbf16>
    %cst_11 = arith.constant dense<0.000000e+00> : vector<256x128xf32>
    %13 = tpu.matmul %12, %10, %cst_11 {dimension_numbers = #tpu.dot_dimension_numbers<[1], [0], [0], [1], [0, 0, 1, 1], [], []>} : vector<256x128xbf16>, vector<128x128xbf16>, vector<256x128xf32> -> vector<256x128xf32>
    %14 = vector.broadcast %11 : vector<1x128xf32> to vector<256x128xf32>
    %15 = arith.addf %13, %14 : vector<256x128xf32>
    %cst_12 = arith.constant 0.000000e+00 : f32
    %16 = vector.broadcast %cst_12 : f32 to vector<256x128xf32>
    %17 = arith.maximumf %15, %16 : vector<256x128xf32>
    %c0_13 = arith.constant 0 : index
    %c0_14 = arith.constant 0 : index
    %18 = vector.load %arg6[%c0_13, %c0_14] : memref<128x128xbf16, #tpu.memory_space<vmem>>, vector<128x128xbf16>
    %c0_15 = arith.constant 0 : index
    %c0_16 = arith.constant 0 : index
    %19 = vector.load %arg7[%c0_15, %c0_16] : memref<1x128xf32, #tpu.memory_space<vmem>>, vector<1x128xf32>
    %20 = arith.truncf %17 : vector<256x128xf32> to vector<256x128xbf16>
    %cst_17 = arith.constant dense<0.000000e+00> : vector<256x128xf32>
    %21 = tpu.matmul %20, %18, %cst_17 {dimension_numbers = #tpu.dot_dimension_numbers<[1], [0], [0], [1], [0, 0, 1, 1], [], []>} : vector<256x128xbf16>, vector<128x128xbf16>, vector<256x128xf32> -> vector<256x128xf32>
    %22 = vector.broadcast %19 : vector<1x128xf32> to vector<256x128xf32>
    %23 = arith.addf %21, %22 : vector<256x128xf32>
    %cst_18 = arith.constant 0.000000e+00 : f32
    %24 = vector.broadcast %cst_18 : f32 to vector<256x128xf32>
    %25 = arith.maximumf %23, %24 : vector<256x128xf32>
    %26 = vector.shape_cast %25 : vector<256x128xf32> to vector<32x8x128xf32>
    %cst_19 = arith.constant dense<0xFF800000> : vector<32x128xf32>
    %27 = vector.multi_reduction <maximumf>, %26, %cst_19 [1] : vector<32x8x128xf32> to vector<32x128xf32>
    %c0_20 = arith.constant 0 : index
    %c0_21 = arith.constant 0 : index
    %c0_22 = arith.constant 0 : index
    %28 = vector.load %arg8[%c0_20, %c0_21, %c0_22] : memref<1x32x128xf32, #tpu.memory_space<vmem>>, vector<1x32x128xf32>
    %29 = vector.shape_cast %28 : vector<1x32x128xf32> to vector<32x128xf32>
    %30 = vector.shape_cast %27 : vector<32x128xf32> to vector<1x32x128xf32>
    tpu.vector_store %arg8[%c0_20, %c0_21, %c0_22], %30 {strides = array<i32>} : memref<1x32x128xf32, #tpu.memory_space<vmem>>, vector<1x32x128xf32>,
    return
  }
  func.func @transform_0(%arg0: i32) -> (i32, i32, i32) {
    %c0_i32 = arith.constant 0 : i32
    %c0_i32_0 = arith.constant 0 : i32
    %c0_i32_1 = arith.constant 0 : i32
    return %arg0, %c0_i32, %c0_i32_0 : i32, i32, i32
  }
  func.func @transform_1(%arg0: i32) -> (i32, i32) {
    %c0_i32 = arith.constant 0 : i32
    %c0_i32_0 = arith.constant 0 : i32
    %c0_i32_1 = arith.constant 0 : i32
    return %c0_i32, %c0_i32_0 : i32, i32
  }
  func.func @transform_2(%arg0: i32) -> (i32, i32) {
    %c0_i32 = arith.constant 0 : i32
    %c0_i32_0 = arith.constant 0 : i32
    %c0_i32_1 = arith.constant 0 : i32
    return %c0_i32, %c0_i32_0 : i32, i32
  }
  func.func @transform_3(%arg0: i32) -> (i32, i32) {
    %c0_i32 = arith.constant 0 : i32
    %c0_i32_0 = arith.constant 0 : i32
    %c0_i32_1 = arith.constant 0 : i32
    return %c0_i32, %c0_i32_0 : i32, i32
  }
  func.func @transform_4(%arg0: i32) -> (i32, i32) {
    %c0_i32 = arith.constant 0 : i32
    %c0_i32_0 = arith.constant 0 : i32
    %c0_i32_1 = arith.constant 0 : i32
    return %c0_i32, %c0_i32_0 : i32, i32
  }
  func.func @transform_5(%arg0: i32) -> (i32, i32) {
    %c0_i32 = arith.constant 0 : i32
    %c0_i32_0 = arith.constant 0 : i32
    %c0_i32_1 = arith.constant 0 : i32
    return %c0_i32, %c0_i32_0 : i32, i32
  }
  func.func @transform_6(%arg0: i32) -> (i32, i32) {
    %c0_i32 = arith.constant 0 : i32
    %c0_i32_0 = arith.constant 0 : i32
    %c0_i32_1 = arith.constant 0 : i32
    return %c0_i32, %c0_i32_0 : i32, i32
  }
  func.func @transform_7(%arg0: i32) -> (i32, i32, i32) {
    %c0_i32 = arith.constant 0 : i32
    %c0_i32_0 = arith.constant 0 : i32
    %c0_i32_1 = arith.constant 0 : i32
    return %arg0, %c0_i32, %c0_i32_0 : i32, i32, i32
  }
}

module attributes {stable_mosaic.version = 11 : i64} {
  func.func @_sa_mlp_kernel(%arg0: i32, %arg1: memref<1x128x128xf32, #tpu.memory_space<vmem>>, %arg2: memref<128x128xbf16, #tpu.memory_space<vmem>>, %arg3: memref<1x128xf32, #tpu.memory_space<vmem>>, %arg4: memref<128x128xbf16, #tpu.memory_space<vmem>>, %arg5: memref<1x128xf32, #tpu.memory_space<vmem>>, %arg6: memref<128x128xbf16, #tpu.memory_space<vmem>>, %arg7: memref<1x128xf32, #tpu.memory_space<vmem>>, %arg8: memref<1x16x128xf32, #tpu.memory_space<vmem>>) attributes {dimension_semantics = [#tpu.dimension_semantics<parallel>], iteration_bounds = array<i64: 2>, scalar_prefetch = 0 : i64, scratch_operands = 0 : i64, tpu.core_type = #tpu.core_type<tc>, window_params = [{transform_indices = @transform_0, window_bounds = array<i64: 1, 128, 128>}, {pipeline_mode = #tpu.pipeline_mode<synchronous>, transform_indices = @transform_1, window_bounds = array<i64: 128, 128>}, {pipeline_mode = #tpu.pipeline_mode<synchronous>, transform_indices = @transform_2, window_bounds = array<i64: 1, 128>}, {pipeline_mode = #tpu.pipeline_mode<synchronous>, transform_indices = @transform_3, window_bounds = array<i64: 128, 128>}, {pipeline_mode = #tpu.pipeline_mode<synchronous>, transform_indices = @transform_4, window_bounds = array<i64: 1, 128>}, {pipeline_mode = #tpu.pipeline_mode<synchronous>, transform_indices = @transform_5, window_bounds = array<i64: 128, 128>}, {pipeline_mode = #tpu.pipeline_mode<synchronous>, transform_indices = @transform_6, window_bounds = array<i64: 1, 128>}, {transform_indices = @transform_7, window_bounds = array<i64: 1, 16, 128>}]} {
    %c0 = arith.constant 0 : index
    %c0_0 = arith.constant 0 : index
    %c0_1 = arith.constant 0 : index
    %0 = vector.load %arg1[%c0, %c0_0, %c0_1] : memref<1x128x128xf32, #tpu.memory_space<vmem>>, vector<1x128x128xf32>
    %1 = vector.shape_cast %0 : vector<1x128x128xf32> to vector<128x128xf32>
    %c0_2 = arith.constant 0 : index
    %c0_3 = arith.constant 0 : index
    %2 = vector.load %arg2[%c0_2, %c0_3] : memref<128x128xbf16, #tpu.memory_space<vmem>>, vector<128x128xbf16>
    %c0_4 = arith.constant 0 : index
    %c0_5 = arith.constant 0 : index
    %3 = vector.load %arg3[%c0_4, %c0_5] : memref<1x128xf32, #tpu.memory_space<vmem>>, vector<1x128xf32>
    %4 = arith.truncf %1 : vector<128x128xf32> to vector<128x128xbf16>
    %cst = arith.constant dense<0.000000e+00> : vector<128x128xf32>
    %5 = tpu.matmul %4, %2, %cst {dimension_numbers = #tpu.dot_dimension_numbers<[1], [0], [0], [1], [0, 0, 1, 1], [], []>} : vector<128x128xbf16>, vector<128x128xbf16>, vector<128x128xf32> -> vector<128x128xf32>
    %6 = vector.broadcast %3 : vector<1x128xf32> to vector<128x128xf32>
    %7 = arith.addf %5, %6 : vector<128x128xf32>
    %cst_6 = arith.constant 0.000000e+00 : f32
    %8 = vector.broadcast %cst_6 : f32 to vector<128x128xf32>
    %9 = arith.maximumf %7, %8 : vector<128x128xf32>
    %c0_7 = arith.constant 0 : index
    %c0_8 = arith.constant 0 : index
    %10 = vector.load %arg4[%c0_7, %c0_8] : memref<128x128xbf16, #tpu.memory_space<vmem>>, vector<128x128xbf16>
    %c0_9 = arith.constant 0 : index
    %c0_10 = arith.constant 0 : index
    %11 = vector.load %arg5[%c0_9, %c0_10] : memref<1x128xf32, #tpu.memory_space<vmem>>, vector<1x128xf32>
    %12 = arith.truncf %9 : vector<128x128xf32> to vector<128x128xbf16>
    %cst_11 = arith.constant dense<0.000000e+00> : vector<128x128xf32>
    %13 = tpu.matmul %12, %10, %cst_11 {dimension_numbers = #tpu.dot_dimension_numbers<[1], [0], [0], [1], [0, 0, 1, 1], [], []>} : vector<128x128xbf16>, vector<128x128xbf16>, vector<128x128xf32> -> vector<128x128xf32>
    %14 = vector.broadcast %11 : vector<1x128xf32> to vector<128x128xf32>
    %15 = arith.addf %13, %14 : vector<128x128xf32>
    %cst_12 = arith.constant 0.000000e+00 : f32
    %16 = vector.broadcast %cst_12 : f32 to vector<128x128xf32>
    %17 = arith.maximumf %15, %16 : vector<128x128xf32>
    %c0_13 = arith.constant 0 : index
    %c0_14 = arith.constant 0 : index
    %18 = vector.load %arg6[%c0_13, %c0_14] : memref<128x128xbf16, #tpu.memory_space<vmem>>, vector<128x128xbf16>
    %c0_15 = arith.constant 0 : index
    %c0_16 = arith.constant 0 : index
    %19 = vector.load %arg7[%c0_15, %c0_16] : memref<1x128xf32, #tpu.memory_space<vmem>>, vector<1x128xf32>
    %20 = arith.truncf %17 : vector<128x128xf32> to vector<128x128xbf16>
    %cst_17 = arith.constant dense<0.000000e+00> : vector<128x128xf32>
    %21 = tpu.matmul %20, %18, %cst_17 {dimension_numbers = #tpu.dot_dimension_numbers<[1], [0], [0], [1], [0, 0, 1, 1], [], []>} : vector<128x128xbf16>, vector<128x128xbf16>, vector<128x128xf32> -> vector<128x128xf32>
    %22 = vector.broadcast %19 : vector<1x128xf32> to vector<128x128xf32>
    %23 = arith.addf %21, %22 : vector<128x128xf32>
    %cst_18 = arith.constant 0.000000e+00 : f32
    %24 = vector.broadcast %cst_18 : f32 to vector<128x128xf32>
    %25 = arith.maximumf %23, %24 : vector<128x128xf32>
    %26 = vector.shape_cast %25 : vector<128x128xf32> to vector<16x8x128xf32>
    %cst_19 = arith.constant dense<0xFF800000> : vector<16x128xf32>
    %27 = vector.multi_reduction <maximumf>, %26, %cst_19 [1] : vector<16x8x128xf32> to vector<16x128xf32>
    %c0_20 = arith.constant 0 : index
    %c0_21 = arith.constant 0 : index
    %c0_22 = arith.constant 0 : index
    %28 = vector.load %arg8[%c0_20, %c0_21, %c0_22] : memref<1x16x128xf32, #tpu.memory_space<vmem>>, vector<1x16x128xf32>
    %29 = vector.shape_cast %28 : vector<1x16x128xf32> to vector<16x128xf32>
    %30 = vector.shape_cast %27 : vector<16x128xf32> to vector<1x16x128xf32>
    tpu.vector_store %arg8[%c0_20, %c0_21, %c0_22], %30 {strides = array<i32>} : memref<1x16x128xf32, #tpu.memory_space<vmem>>, vector<1x16x128xf32>,
    return
  }
  func.func @transform_0(%arg0: i32) -> (i32, i32, i32) {
    %c0_i32 = arith.constant 0 : i32
    %c0_i32_0 = arith.constant 0 : i32
    %c0_i32_1 = arith.constant 0 : i32
    return %arg0, %c0_i32, %c0_i32_0 : i32, i32, i32
  }
  func.func @transform_1(%arg0: i32) -> (i32, i32) {
    %c0_i32 = arith.constant 0 : i32
    %c0_i32_0 = arith.constant 0 : i32
    %c0_i32_1 = arith.constant 0 : i32
    return %c0_i32, %c0_i32_0 : i32, i32
  }
  func.func @transform_2(%arg0: i32) -> (i32, i32) {
    %c0_i32 = arith.constant 0 : i32
    %c0_i32_0 = arith.constant 0 : i32
    %c0_i32_1 = arith.constant 0 : i32
    return %c0_i32, %c0_i32_0 : i32, i32
  }
  func.func @transform_3(%arg0: i32) -> (i32, i32) {
    %c0_i32 = arith.constant 0 : i32
    %c0_i32_0 = arith.constant 0 : i32
    %c0_i32_1 = arith.constant 0 : i32
    return %c0_i32, %c0_i32_0 : i32, i32
  }
  func.func @transform_4(%arg0: i32) -> (i32, i32) {
    %c0_i32 = arith.constant 0 : i32
    %c0_i32_0 = arith.constant 0 : i32
    %c0_i32_1 = arith.constant 0 : i32
    return %c0_i32, %c0_i32_0 : i32, i32
  }
  func.func @transform_5(%arg0: i32) -> (i32, i32) {
    %c0_i32 = arith.constant 0 : i32
    %c0_i32_0 = arith.constant 0 : i32
    %c0_i32_1 = arith.constant 0 : i32
    return %c0_i32, %c0_i32_0 : i32, i32
  }
  func.func @transform_6(%arg0: i32) -> (i32, i32) {
    %c0_i32 = arith.constant 0 : i32
    %c0_i32_0 = arith.constant 0 : i32
    %c0_i32_1 = arith.constant 0 : i32
    return %c0_i32, %c0_i32_0 : i32, i32
  }
  func.func @transform_7(%arg0: i32) -> (i32, i32, i32) {
    %c0_i32 = arith.constant 0 : i32
    %c0_i32_0 = arith.constant 0 : i32
    %c0_i32_1 = arith.constant 0 : i32
    return %arg0, %c0_i32, %c0_i32_0 : i32, i32, i32
  }
}

module attributes {stable_mosaic.version = 11 : i64} {
  func.func @_sa_mlp_kernel(%arg0: i32, %arg1: memref<1x64x128xf32, #tpu.memory_space<vmem>>, %arg2: memref<128x128xbf16, #tpu.memory_space<vmem>>, %arg3: memref<1x128xf32, #tpu.memory_space<vmem>>, %arg4: memref<128x128xbf16, #tpu.memory_space<vmem>>, %arg5: memref<1x128xf32, #tpu.memory_space<vmem>>, %arg6: memref<128x128xbf16, #tpu.memory_space<vmem>>, %arg7: memref<1x128xf32, #tpu.memory_space<vmem>>, %arg8: memref<1x8x128xf32, #tpu.memory_space<vmem>>) attributes {dimension_semantics = [#tpu.dimension_semantics<parallel>], iteration_bounds = array<i64: 2>, scalar_prefetch = 0 : i64, scratch_operands = 0 : i64, tpu.core_type = #tpu.core_type<tc>, window_params = [{transform_indices = @transform_0, window_bounds = array<i64: 1, 64, 128>}, {pipeline_mode = #tpu.pipeline_mode<synchronous>, transform_indices = @transform_1, window_bounds = array<i64: 128, 128>}, {pipeline_mode = #tpu.pipeline_mode<synchronous>, transform_indices = @transform_2, window_bounds = array<i64: 1, 128>}, {pipeline_mode = #tpu.pipeline_mode<synchronous>, transform_indices = @transform_3, window_bounds = array<i64: 128, 128>}, {pipeline_mode = #tpu.pipeline_mode<synchronous>, transform_indices = @transform_4, window_bounds = array<i64: 1, 128>}, {pipeline_mode = #tpu.pipeline_mode<synchronous>, transform_indices = @transform_5, window_bounds = array<i64: 128, 128>}, {pipeline_mode = #tpu.pipeline_mode<synchronous>, transform_indices = @transform_6, window_bounds = array<i64: 1, 128>}, {transform_indices = @transform_7, window_bounds = array<i64: 1, 8, 128>}]} {
    %c0 = arith.constant 0 : index
    %c0_0 = arith.constant 0 : index
    %c0_1 = arith.constant 0 : index
    %0 = vector.load %arg1[%c0, %c0_0, %c0_1] : memref<1x64x128xf32, #tpu.memory_space<vmem>>, vector<1x64x128xf32>
    %1 = vector.shape_cast %0 : vector<1x64x128xf32> to vector<64x128xf32>
    %c0_2 = arith.constant 0 : index
    %c0_3 = arith.constant 0 : index
    %2 = vector.load %arg2[%c0_2, %c0_3] : memref<128x128xbf16, #tpu.memory_space<vmem>>, vector<128x128xbf16>
    %c0_4 = arith.constant 0 : index
    %c0_5 = arith.constant 0 : index
    %3 = vector.load %arg3[%c0_4, %c0_5] : memref<1x128xf32, #tpu.memory_space<vmem>>, vector<1x128xf32>
    %4 = arith.truncf %1 : vector<64x128xf32> to vector<64x128xbf16>
    %cst = arith.constant dense<0.000000e+00> : vector<64x128xf32>
    %5 = tpu.matmul %4, %2, %cst {dimension_numbers = #tpu.dot_dimension_numbers<[1], [0], [0], [1], [0, 0, 1, 1], [], []>} : vector<64x128xbf16>, vector<128x128xbf16>, vector<64x128xf32> -> vector<64x128xf32>
    %6 = vector.broadcast %3 : vector<1x128xf32> to vector<64x128xf32>
    %7 = arith.addf %5, %6 : vector<64x128xf32>
    %cst_6 = arith.constant 0.000000e+00 : f32
    %8 = vector.broadcast %cst_6 : f32 to vector<64x128xf32>
    %9 = arith.maximumf %7, %8 : vector<64x128xf32>
    %c0_7 = arith.constant 0 : index
    %c0_8 = arith.constant 0 : index
    %10 = vector.load %arg4[%c0_7, %c0_8] : memref<128x128xbf16, #tpu.memory_space<vmem>>, vector<128x128xbf16>
    %c0_9 = arith.constant 0 : index
    %c0_10 = arith.constant 0 : index
    %11 = vector.load %arg5[%c0_9, %c0_10] : memref<1x128xf32, #tpu.memory_space<vmem>>, vector<1x128xf32>
    %12 = arith.truncf %9 : vector<64x128xf32> to vector<64x128xbf16>
    %cst_11 = arith.constant dense<0.000000e+00> : vector<64x128xf32>
    %13 = tpu.matmul %12, %10, %cst_11 {dimension_numbers = #tpu.dot_dimension_numbers<[1], [0], [0], [1], [0, 0, 1, 1], [], []>} : vector<64x128xbf16>, vector<128x128xbf16>, vector<64x128xf32> -> vector<64x128xf32>
    %14 = vector.broadcast %11 : vector<1x128xf32> to vector<64x128xf32>
    %15 = arith.addf %13, %14 : vector<64x128xf32>
    %cst_12 = arith.constant 0.000000e+00 : f32
    %16 = vector.broadcast %cst_12 : f32 to vector<64x128xf32>
    %17 = arith.maximumf %15, %16 : vector<64x128xf32>
    %c0_13 = arith.constant 0 : index
    %c0_14 = arith.constant 0 : index
    %18 = vector.load %arg6[%c0_13, %c0_14] : memref<128x128xbf16, #tpu.memory_space<vmem>>, vector<128x128xbf16>
    %c0_15 = arith.constant 0 : index
    %c0_16 = arith.constant 0 : index
    %19 = vector.load %arg7[%c0_15, %c0_16] : memref<1x128xf32, #tpu.memory_space<vmem>>, vector<1x128xf32>
    %20 = arith.truncf %17 : vector<64x128xf32> to vector<64x128xbf16>
    %cst_17 = arith.constant dense<0.000000e+00> : vector<64x128xf32>
    %21 = tpu.matmul %20, %18, %cst_17 {dimension_numbers = #tpu.dot_dimension_numbers<[1], [0], [0], [1], [0, 0, 1, 1], [], []>} : vector<64x128xbf16>, vector<128x128xbf16>, vector<64x128xf32> -> vector<64x128xf32>
    %22 = vector.broadcast %19 : vector<1x128xf32> to vector<64x128xf32>
    %23 = arith.addf %21, %22 : vector<64x128xf32>
    %cst_18 = arith.constant 0.000000e+00 : f32
    %24 = vector.broadcast %cst_18 : f32 to vector<64x128xf32>
    %25 = arith.maximumf %23, %24 : vector<64x128xf32>
    %26 = vector.shape_cast %25 : vector<64x128xf32> to vector<8x8x128xf32>
    %cst_19 = arith.constant dense<0xFF800000> : vector<8x128xf32>
    %27 = vector.multi_reduction <maximumf>, %26, %cst_19 [1] : vector<8x8x128xf32> to vector<8x128xf32>
    %c0_20 = arith.constant 0 : index
    %c0_21 = arith.constant 0 : index
    %c0_22 = arith.constant 0 : index
    %28 = vector.load %arg8[%c0_20, %c0_21, %c0_22] : memref<1x8x128xf32, #tpu.memory_space<vmem>>, vector<1x8x128xf32>
    %29 = vector.shape_cast %28 : vector<1x8x128xf32> to vector<8x128xf32>
    %30 = vector.shape_cast %27 : vector<8x128xf32> to vector<1x8x128xf32>
    tpu.vector_store %arg8[%c0_20, %c0_21, %c0_22], %30 {strides = array<i32>} : memref<1x8x128xf32, #tpu.memory_space<vmem>>, vector<1x8x128xf32>,
    return
  }
  func.func @transform_0(%arg0: i32) -> (i32, i32, i32) {
    %c0_i32 = arith.constant 0 : i32
    %c0_i32_0 = arith.constant 0 : i32
    %c0_i32_1 = arith.constant 0 : i32
    return %arg0, %c0_i32, %c0_i32_0 : i32, i32, i32
  }
  func.func @transform_1(%arg0: i32) -> (i32, i32) {
    %c0_i32 = arith.constant 0 : i32
    %c0_i32_0 = arith.constant 0 : i32
    %c0_i32_1 = arith.constant 0 : i32
    return %c0_i32, %c0_i32_0 : i32, i32
  }
  func.func @transform_2(%arg0: i32) -> (i32, i32) {
    %c0_i32 = arith.constant 0 : i32
    %c0_i32_0 = arith.constant 0 : i32
    %c0_i32_1 = arith.constant 0 : i32
    return %c0_i32, %c0_i32_0 : i32, i32
  }
  func.func @transform_3(%arg0: i32) -> (i32, i32) {
    %c0_i32 = arith.constant 0 : i32
    %c0_i32_0 = arith.constant 0 : i32
    %c0_i32_1 = arith.constant 0 : i32
    return %c0_i32, %c0_i32_0 : i32, i32
  }
  func.func @transform_4(%arg0: i32) -> (i32, i32) {
    %c0_i32 = arith.constant 0 : i32
    %c0_i32_0 = arith.constant 0 : i32
    %c0_i32_1 = arith.constant 0 : i32
    return %c0_i32, %c0_i32_0 : i32, i32
  }
  func.func @transform_5(%arg0: i32) -> (i32, i32) {
    %c0_i32 = arith.constant 0 : i32
    %c0_i32_0 = arith.constant 0 : i32
    %c0_i32_1 = arith.constant 0 : i32
    return %c0_i32, %c0_i32_0 : i32, i32
  }
  func.func @transform_6(%arg0: i32) -> (i32, i32) {
    %c0_i32 = arith.constant 0 : i32
    %c0_i32_0 = arith.constant 0 : i32
    %c0_i32_1 = arith.constant 0 : i32
    return %c0_i32, %c0_i32_0 : i32, i32
  }
  func.func @transform_7(%arg0: i32) -> (i32, i32, i32) {
    %c0_i32 = arith.constant 0 : i32
    %c0_i32_0 = arith.constant 0 : i32
    %c0_i32_1 = arith.constant 0 : i32
    return %arg0, %c0_i32, %c0_i32_0 : i32, i32, i32
  }
}

module attributes {stable_mosaic.version = 11 : i64} {
  func.func @_sa_mlp_kernel(%arg0: i32, %arg1: memref<1x32x256xf32, #tpu.memory_space<vmem>>, %arg2: memref<256x128xbf16, #tpu.memory_space<vmem>>, %arg3: memref<1x128xf32, #tpu.memory_space<vmem>>, %arg4: memref<128x128xbf16, #tpu.memory_space<vmem>>, %arg5: memref<1x128xf32, #tpu.memory_space<vmem>>, %arg6: memref<128x256xbf16, #tpu.memory_space<vmem>>, %arg7: memref<1x256xf32, #tpu.memory_space<vmem>>, %arg8: memref<1x4x256xf32, #tpu.memory_space<vmem>>) attributes {dimension_semantics = [#tpu.dimension_semantics<parallel>], iteration_bounds = array<i64: 2>, scalar_prefetch = 0 : i64, scratch_operands = 0 : i64, tpu.core_type = #tpu.core_type<tc>, window_params = [{transform_indices = @transform_0, window_bounds = array<i64: 1, 32, 256>}, {pipeline_mode = #tpu.pipeline_mode<synchronous>, transform_indices = @transform_1, window_bounds = array<i64: 256, 128>}, {pipeline_mode = #tpu.pipeline_mode<synchronous>, transform_indices = @transform_2, window_bounds = array<i64: 1, 128>}, {pipeline_mode = #tpu.pipeline_mode<synchronous>, transform_indices = @transform_3, window_bounds = array<i64: 128, 128>}, {pipeline_mode = #tpu.pipeline_mode<synchronous>, transform_indices = @transform_4, window_bounds = array<i64: 1, 128>}, {pipeline_mode = #tpu.pipeline_mode<synchronous>, transform_indices = @transform_5, window_bounds = array<i64: 128, 256>}, {pipeline_mode = #tpu.pipeline_mode<synchronous>, transform_indices = @transform_6, window_bounds = array<i64: 1, 256>}, {transform_indices = @transform_7, window_bounds = array<i64: 1, 4, 256>}]} {
    %c0 = arith.constant 0 : index
    %c0_0 = arith.constant 0 : index
    %c0_1 = arith.constant 0 : index
    %0 = vector.load %arg1[%c0, %c0_0, %c0_1] : memref<1x32x256xf32, #tpu.memory_space<vmem>>, vector<1x32x256xf32>
    %1 = vector.shape_cast %0 : vector<1x32x256xf32> to vector<32x256xf32>
    %c0_2 = arith.constant 0 : index
    %c0_3 = arith.constant 0 : index
    %2 = vector.load %arg2[%c0_2, %c0_3] : memref<256x128xbf16, #tpu.memory_space<vmem>>, vector<256x128xbf16>
    %c0_4 = arith.constant 0 : index
    %c0_5 = arith.constant 0 : index
    %3 = vector.load %arg3[%c0_4, %c0_5] : memref<1x128xf32, #tpu.memory_space<vmem>>, vector<1x128xf32>
    %4 = arith.truncf %1 : vector<32x256xf32> to vector<32x256xbf16>
    %cst = arith.constant dense<0.000000e+00> : vector<32x128xf32>
    %5 = tpu.matmul %4, %2, %cst {dimension_numbers = #tpu.dot_dimension_numbers<[1], [0], [0], [1], [0, 0, 1, 1], [], []>} : vector<32x256xbf16>, vector<256x128xbf16>, vector<32x128xf32> -> vector<32x128xf32>
    %6 = vector.broadcast %3 : vector<1x128xf32> to vector<32x128xf32>
    %7 = arith.addf %5, %6 : vector<32x128xf32>
    %cst_6 = arith.constant 0.000000e+00 : f32
    %8 = vector.broadcast %cst_6 : f32 to vector<32x128xf32>
    %9 = arith.maximumf %7, %8 : vector<32x128xf32>
    %c0_7 = arith.constant 0 : index
    %c0_8 = arith.constant 0 : index
    %10 = vector.load %arg4[%c0_7, %c0_8] : memref<128x128xbf16, #tpu.memory_space<vmem>>, vector<128x128xbf16>
    %c0_9 = arith.constant 0 : index
    %c0_10 = arith.constant 0 : index
    %11 = vector.load %arg5[%c0_9, %c0_10] : memref<1x128xf32, #tpu.memory_space<vmem>>, vector<1x128xf32>
    %12 = arith.truncf %9 : vector<32x128xf32> to vector<32x128xbf16>
    %cst_11 = arith.constant dense<0.000000e+00> : vector<32x128xf32>
    %13 = tpu.matmul %12, %10, %cst_11 {dimension_numbers = #tpu.dot_dimension_numbers<[1], [0], [0], [1], [0, 0, 1, 1], [], []>} : vector<32x128xbf16>, vector<128x128xbf16>, vector<32x128xf32> -> vector<32x128xf32>
    %14 = vector.broadcast %11 : vector<1x128xf32> to vector<32x128xf32>
    %15 = arith.addf %13, %14 : vector<32x128xf32>
    %cst_12 = arith.constant 0.000000e+00 : f32
    %16 = vector.broadcast %cst_12 : f32 to vector<32x128xf32>
    %17 = arith.maximumf %15, %16 : vector<32x128xf32>
    %c0_13 = arith.constant 0 : index
    %c0_14 = arith.constant 0 : index
    %18 = vector.load %arg6[%c0_13, %c0_14] : memref<128x256xbf16, #tpu.memory_space<vmem>>, vector<128x256xbf16>
    %c0_15 = arith.constant 0 : index
    %c0_16 = arith.constant 0 : index
    %19 = vector.load %arg7[%c0_15, %c0_16] : memref<1x256xf32, #tpu.memory_space<vmem>>, vector<1x256xf32>
    %20 = arith.truncf %17 : vector<32x128xf32> to vector<32x128xbf16>
    %cst_17 = arith.constant dense<0.000000e+00> : vector<32x256xf32>
    %21 = tpu.matmul %20, %18, %cst_17 {dimension_numbers = #tpu.dot_dimension_numbers<[1], [0], [0], [1], [0, 0, 1, 1], [], []>} : vector<32x128xbf16>, vector<128x256xbf16>, vector<32x256xf32> -> vector<32x256xf32>
    %22 = vector.broadcast %19 : vector<1x256xf32> to vector<32x256xf32>
    %23 = arith.addf %21, %22 : vector<32x256xf32>
    %cst_18 = arith.constant 0.000000e+00 : f32
    %24 = vector.broadcast %cst_18 : f32 to vector<32x256xf32>
    %25 = arith.maximumf %23, %24 : vector<32x256xf32>
    %26 = vector.shape_cast %25 : vector<32x256xf32> to vector<4x8x256xf32>
    %cst_19 = arith.constant dense<0xFF800000> : vector<4x256xf32>
    %27 = vector.multi_reduction <maximumf>, %26, %cst_19 [1] : vector<4x8x256xf32> to vector<4x256xf32>
    %c0_20 = arith.constant 0 : index
    %c0_21 = arith.constant 0 : index
    %c0_22 = arith.constant 0 : index
    %28 = vector.load %arg8[%c0_20, %c0_21, %c0_22] : memref<1x4x256xf32, #tpu.memory_space<vmem>>, vector<1x4x256xf32>
    %29 = vector.shape_cast %28 : vector<1x4x256xf32> to vector<4x256xf32>
    %30 = vector.shape_cast %27 : vector<4x256xf32> to vector<1x4x256xf32>
    tpu.vector_store %arg8[%c0_20, %c0_21, %c0_22], %30 {strides = array<i32>} : memref<1x4x256xf32, #tpu.memory_space<vmem>>, vector<1x4x256xf32>,
    return
  }
  func.func @transform_0(%arg0: i32) -> (i32, i32, i32) {
    %c0_i32 = arith.constant 0 : i32
    %c0_i32_0 = arith.constant 0 : i32
    %c0_i32_1 = arith.constant 0 : i32
    return %arg0, %c0_i32, %c0_i32_0 : i32, i32, i32
  }
  func.func @transform_1(%arg0: i32) -> (i32, i32) {
    %c0_i32 = arith.constant 0 : i32
    %c0_i32_0 = arith.constant 0 : i32
    %c0_i32_1 = arith.constant 0 : i32
    return %c0_i32, %c0_i32_0 : i32, i32
  }
  func.func @transform_2(%arg0: i32) -> (i32, i32) {
    %c0_i32 = arith.constant 0 : i32
    %c0_i32_0 = arith.constant 0 : i32
    %c0_i32_1 = arith.constant 0 : i32
    return %c0_i32, %c0_i32_0 : i32, i32
  }
  func.func @transform_3(%arg0: i32) -> (i32, i32) {
    %c0_i32 = arith.constant 0 : i32
    %c0_i32_0 = arith.constant 0 : i32
    %c0_i32_1 = arith.constant 0 : i32
    return %c0_i32, %c0_i32_0 : i32, i32
  }
  func.func @transform_4(%arg0: i32) -> (i32, i32) {
    %c0_i32 = arith.constant 0 : i32
    %c0_i32_0 = arith.constant 0 : i32
    %c0_i32_1 = arith.constant 0 : i32
    return %c0_i32, %c0_i32_0 : i32, i32
  }
  func.func @transform_5(%arg0: i32) -> (i32, i32) {
    %c0_i32 = arith.constant 0 : i32
    %c0_i32_0 = arith.constant 0 : i32
    %c0_i32_1 = arith.constant 0 : i32
    return %c0_i32, %c0_i32_0 : i32, i32
  }
  func.func @transform_6(%arg0: i32) -> (i32, i32) {
    %c0_i32 = arith.constant 0 : i32
    %c0_i32_0 = arith.constant 0 : i32
    %c0_i32_1 = arith.constant 0 : i32
    return %c0_i32, %c0_i32_0 : i32, i32
  }
  func.func @transform_7(%arg0: i32) -> (i32, i32, i32) {
    %c0_i32 = arith.constant 0 : i32
    %c0_i32_0 = arith.constant 0 : i32
    %c0_i32_1 = arith.constant 0 : i32
    return %arg0, %c0_i32, %c0_i32_0 : i32, i32, i32
  }
}

module attributes {stable_mosaic.version = 11 : i64} {
  func.func @_fp_kernel(%arg0: i32, %arg1: memref<1x8x256xf32, #tpu.memory_space<vmem>>, %arg2: memref<1x8x256xf32, #tpu.memory_space<vmem>>, %arg3: memref<1x8x256xf32, #tpu.memory_space<vmem>>, %arg4: memref<1x8x3xf32, #tpu.memory_space<vmem>>, %arg5: memref<1x8x128xf32, #tpu.memory_space<vmem>>, %arg6: memref<256x128xbf16, #tpu.memory_space<vmem>>, %arg7: memref<128x128xbf16, #tpu.memory_space<vmem>>, %arg8: memref<1x128xf32, #tpu.memory_space<vmem>>, %arg9: memref<128x128xbf16, #tpu.memory_space<vmem>>, %arg10: memref<1x128xf32, #tpu.memory_space<vmem>>, %arg11: memref<1x8x128xf32, #tpu.memory_space<vmem>>) attributes {dimension_semantics = [#tpu.dimension_semantics<parallel>], iteration_bounds = array<i64: 2>, scalar_prefetch = 0 : i64, scratch_operands = 0 : i64, tpu.core_type = #tpu.core_type<tc>, window_params = [{transform_indices = @transform_0, window_bounds = array<i64: 1, 8, 256>}, {transform_indices = @transform_1, window_bounds = array<i64: 1, 8, 256>}, {transform_indices = @transform_2, window_bounds = array<i64: 1, 8, 256>}, {transform_indices = @transform_3, window_bounds = array<i64: 1, 8, 3>}, {transform_indices = @transform_4, window_bounds = array<i64: 1, 8, 128>}, {pipeline_mode = #tpu.pipeline_mode<synchronous>, transform_indices = @transform_5, window_bounds = array<i64: 256, 128>}, {pipeline_mode = #tpu.pipeline_mode<synchronous>, transform_indices = @transform_6, window_bounds = array<i64: 128, 128>}, {pipeline_mode = #tpu.pipeline_mode<synchronous>, transform_indices = @transform_7, window_bounds = array<i64: 1, 128>}, {pipeline_mode = #tpu.pipeline_mode<synchronous>, transform_indices = @transform_8, window_bounds = array<i64: 128, 128>}, {pipeline_mode = #tpu.pipeline_mode<synchronous>, transform_indices = @transform_9, window_bounds = array<i64: 1, 128>}, {transform_indices = @transform_10, window_bounds = array<i64: 1, 8, 128>}]} {
    %c0 = arith.constant 0 : index
    %c0_0 = arith.constant 0 : index
    %0 = vector.load %arg6[%c0, %c0_0] : memref<256x128xbf16, #tpu.memory_space<vmem>>, vector<256x128xbf16>
    %c0_1 = arith.constant 0 : index
    %c0_2 = arith.constant 0 : index
    %1 = vector.load %arg7[%c0_1, %c0_2] : memref<128x128xbf16, #tpu.memory_space<vmem>>, vector<128x128xbf16>
    %c0_3 = arith.constant 0 : index
    %c0_4 = arith.constant 0 : index
    %2 = vector.load %arg8[%c0_3, %c0_4] : memref<1x128xf32, #tpu.memory_space<vmem>>, vector<1x128xf32>
    %c0_5 = arith.constant 0 : index
    %c0_6 = arith.constant 0 : index
    %c0_7 = arith.constant 0 : index
    %3 = vector.load %arg4[%c0_5, %c0_6, %c0_7] : memref<1x8x3xf32, #tpu.memory_space<vmem>>, vector<1x8x3xf32>
    %4 = vector.shape_cast %3 : vector<1x8x3xf32> to vector<8x3xf32>
    %c0_8 = arith.constant 0 : index
    %c0_9 = arith.constant 0 : index
    %c0_10 = arith.constant 0 : index
    %5 = vector.load %arg1[%c0_8, %c0_9, %c0_10] : memref<1x8x256xf32, #tpu.memory_space<vmem>>, vector<1x8x256xf32>
    %6 = vector.shape_cast %5 : vector<1x8x256xf32> to vector<8x256xf32>
    %7 = vector.extract_strided_slice %4 {offsets = [0, 0], sizes = [8, 1], strides = [1, 1]} : vector<8x3xf32> to vector<8x1xf32>
    %8 = vector.broadcast %7 : vector<8x1xf32> to vector<8x256xf32>
    %9 = arith.mulf %6, %8 : vector<8x256xf32>
    %c0_11 = arith.constant 0 : index
    %c0_12 = arith.constant 0 : index
    %c0_13 = arith.constant 0 : index
    %10 = vector.load %arg2[%c0_11, %c0_12, %c0_13] : memref<1x8x256xf32, #tpu.memory_space<vmem>>, vector<1x8x256xf32>
    %11 = vector.shape_cast %10 : vector<1x8x256xf32> to vector<8x256xf32>
    %12 = vector.extract_strided_slice %4 {offsets = [0, 1], sizes = [8, 1], strides = [1, 1]} : vector<8x3xf32> to vector<8x1xf32>
    %13 = vector.broadcast %12 : vector<8x1xf32> to vector<8x256xf32>
    %14 = arith.mulf %11, %13 : vector<8x256xf32>
    %15 = arith.addf %9, %14 : vector<8x256xf32>
    %c0_14 = arith.constant 0 : index
    %c0_15 = arith.constant 0 : index
    %c0_16 = arith.constant 0 : index
    %16 = vector.load %arg3[%c0_14, %c0_15, %c0_16] : memref<1x8x256xf32, #tpu.memory_space<vmem>>, vector<1x8x256xf32>
    %17 = vector.shape_cast %16 : vector<1x8x256xf32> to vector<8x256xf32>
    %18 = vector.extract_strided_slice %4 {offsets = [0, 2], sizes = [8, 1], strides = [1, 1]} : vector<8x3xf32> to vector<8x1xf32>
    %19 = vector.broadcast %18 : vector<8x1xf32> to vector<8x256xf32>
    %20 = arith.mulf %17, %19 : vector<8x256xf32>
    %21 = arith.addf %15, %20 : vector<8x256xf32>
    %22 = arith.truncf %21 : vector<8x256xf32> to vector<8x256xbf16>
    %cst = arith.constant dense<0.000000e+00> : vector<8x128xf32>
    %23 = tpu.matmul %22, %0, %cst {dimension_numbers = #tpu.dot_dimension_numbers<[1], [0], [0], [1], [0, 0, 1, 1], [], []>} : vector<8x256xbf16>, vector<256x128xbf16>, vector<8x128xf32> -> vector<8x128xf32>
    %c0_17 = arith.constant 0 : index
    %c0_18 = arith.constant 0 : index
    %c0_19 = arith.constant 0 : index
    %24 = vector.load %arg5[%c0_17, %c0_18, %c0_19] : memref<1x8x128xf32, #tpu.memory_space<vmem>>, vector<1x8x128xf32>
    %25 = vector.shape_cast %24 : vector<1x8x128xf32> to vector<8x128xf32>
    %26 = arith.truncf %25 : vector<8x128xf32> to vector<8x128xbf16>
    %cst_20 = arith.constant dense<0.000000e+00> : vector<8x128xf32>
    %27 = tpu.matmul %26, %1, %cst_20 {dimension_numbers = #tpu.dot_dimension_numbers<[1], [0], [0], [1], [0, 0, 1, 1], [], []>} : vector<8x128xbf16>, vector<128x128xbf16>, vector<8x128xf32> -> vector<8x128xf32>
    %28 = arith.addf %23, %27 : vector<8x128xf32>
    %29 = vector.broadcast %2 : vector<1x128xf32> to vector<8x128xf32>
    %30 = arith.addf %28, %29 : vector<8x128xf32>
    %cst_21 = arith.constant 0.000000e+00 : f32
    %31 = vector.broadcast %cst_21 : f32 to vector<8x128xf32>
    %32 = arith.maximumf %30, %31 : vector<8x128xf32>
    %c0_22 = arith.constant 0 : index
    %c0_23 = arith.constant 0 : index
    %33 = vector.load %arg9[%c0_22, %c0_23] : memref<128x128xbf16, #tpu.memory_space<vmem>>, vector<128x128xbf16>
    %c0_24 = arith.constant 0 : index
    %c0_25 = arith.constant 0 : index
    %34 = vector.load %arg10[%c0_24, %c0_25] : memref<1x128xf32, #tpu.memory_space<vmem>>, vector<1x128xf32>
    %35 = arith.truncf %32 : vector<8x128xf32> to vector<8x128xbf16>
    %cst_26 = arith.constant dense<0.000000e+00> : vector<8x128xf32>
    %36 = tpu.matmul %35, %33, %cst_26 {dimension_numbers = #tpu.dot_dimension_numbers<[1], [0], [0], [1], [0, 0, 1, 1], [], []>} : vector<8x128xbf16>, vector<128x128xbf16>, vector<8x128xf32> -> vector<8x128xf32>
    %37 = vector.broadcast %34 : vector<1x128xf32> to vector<8x128xf32>
    %38 = arith.addf %36, %37 : vector<8x128xf32>
    %cst_27 = arith.constant 0.000000e+00 : f32
    %39 = vector.broadcast %cst_27 : f32 to vector<8x128xf32>
    %40 = arith.maximumf %38, %39 : vector<8x128xf32>
    %c0_28 = arith.constant 0 : index
    %c0_29 = arith.constant 0 : index
    %c0_30 = arith.constant 0 : index
    %41 = vector.load %arg11[%c0_28, %c0_29, %c0_30] : memref<1x8x128xf32, #tpu.memory_space<vmem>>, vector<1x8x128xf32>
    %42 = vector.shape_cast %41 : vector<1x8x128xf32> to vector<8x128xf32>
    %43 = vector.shape_cast %40 : vector<8x128xf32> to vector<1x8x128xf32>
    tpu.vector_store %arg11[%c0_28, %c0_29, %c0_30], %43 {strides = array<i32>} : memref<1x8x128xf32, #tpu.memory_space<vmem>>, vector<1x8x128xf32>,
    return
  }
  func.func @transform_0(%arg0: i32) -> (i32, i32, i32) {
    %c0_i32 = arith.constant 0 : i32
    %c0_i32_0 = arith.constant 0 : i32
    %c0_i32_1 = arith.constant 0 : i32
    return %arg0, %c0_i32, %c0_i32_0 : i32, i32, i32
  }
  func.func @transform_1(%arg0: i32) -> (i32, i32, i32) {
    %c0_i32 = arith.constant 0 : i32
    %c0_i32_0 = arith.constant 0 : i32
    %c0_i32_1 = arith.constant 0 : i32
    return %arg0, %c0_i32, %c0_i32_0 : i32, i32, i32
  }
  func.func @transform_2(%arg0: i32) -> (i32, i32, i32) {
    %c0_i32 = arith.constant 0 : i32
    %c0_i32_0 = arith.constant 0 : i32
    %c0_i32_1 = arith.constant 0 : i32
    return %arg0, %c0_i32, %c0_i32_0 : i32, i32, i32
  }
  func.func @transform_3(%arg0: i32) -> (i32, i32, i32) {
    %c0_i32 = arith.constant 0 : i32
    %c0_i32_0 = arith.constant 0 : i32
    %c0_i32_1 = arith.constant 0 : i32
    return %arg0, %c0_i32, %c0_i32_0 : i32, i32, i32
  }
  func.func @transform_4(%arg0: i32) -> (i32, i32, i32) {
    %c0_i32 = arith.constant 0 : i32
    %c0_i32_0 = arith.constant 0 : i32
    %c0_i32_1 = arith.constant 0 : i32
    return %arg0, %c0_i32, %c0_i32_0 : i32, i32, i32
  }
  func.func @transform_5(%arg0: i32) -> (i32, i32) {
    %c0_i32 = arith.constant 0 : i32
    %c0_i32_0 = arith.constant 0 : i32
    %c0_i32_1 = arith.constant 0 : i32
    return %c0_i32, %c0_i32_0 : i32, i32
  }
  func.func @transform_6(%arg0: i32) -> (i32, i32) {
    %c0_i32 = arith.constant 0 : i32
    %c0_i32_0 = arith.constant 0 : i32
    %c0_i32_1 = arith.constant 0 : i32
    return %c0_i32, %c0_i32_0 : i32, i32
  }
  func.func @transform_7(%arg0: i32) -> (i32, i32) {
    %c0_i32 = arith.constant 0 : i32
    %c0_i32_0 = arith.constant 0 : i32
    %c0_i32_1 = arith.constant 0 : i32
    return %c0_i32, %c0_i32_0 : i32, i32
  }
  func.func @transform_8(%arg0: i32) -> (i32, i32) {
    %c0_i32 = arith.constant 0 : i32
    %c0_i32_0 = arith.constant 0 : i32
    %c0_i32_1 = arith.constant 0 : i32
    return %c0_i32, %c0_i32_0 : i32, i32
  }
  func.func @transform_9(%arg0: i32) -> (i32, i32) {
    %c0_i32 = arith.constant 0 : i32
    %c0_i32_0 = arith.constant 0 : i32
    %c0_i32_1 = arith.constant 0 : i32
    return %c0_i32, %c0_i32_0 : i32, i32
  }
  func.func @transform_10(%arg0: i32) -> (i32, i32, i32) {
    %c0_i32 = arith.constant 0 : i32
    %c0_i32_0 = arith.constant 0 : i32
    %c0_i32_1 = arith.constant 0 : i32
    return %arg0, %c0_i32, %c0_i32_0 : i32, i32, i32
  }
}

module attributes {stable_mosaic.version = 11 : i64} {
  func.func @_fp_kernel(%arg0: i32, %arg1: memref<1x16x128xf32, #tpu.memory_space<vmem>>, %arg2: memref<1x16x128xf32, #tpu.memory_space<vmem>>, %arg3: memref<1x16x128xf32, #tpu.memory_space<vmem>>, %arg4: memref<1x16x3xf32, #tpu.memory_space<vmem>>, %arg5: memref<1x16x64xf32, #tpu.memory_space<vmem>>, %arg6: memref<128x128xbf16, #tpu.memory_space<vmem>>, %arg7: memref<64x128xbf16, #tpu.memory_space<vmem>>, %arg8: memref<1x128xf32, #tpu.memory_space<vmem>>, %arg9: memref<128x128xbf16, #tpu.memory_space<vmem>>, %arg10: memref<1x128xf32, #tpu.memory_space<vmem>>, %arg11: memref<1x16x128xf32, #tpu.memory_space<vmem>>) attributes {dimension_semantics = [#tpu.dimension_semantics<parallel>], iteration_bounds = array<i64: 2>, scalar_prefetch = 0 : i64, scratch_operands = 0 : i64, tpu.core_type = #tpu.core_type<tc>, window_params = [{transform_indices = @transform_0, window_bounds = array<i64: 1, 16, 128>}, {transform_indices = @transform_1, window_bounds = array<i64: 1, 16, 128>}, {transform_indices = @transform_2, window_bounds = array<i64: 1, 16, 128>}, {transform_indices = @transform_3, window_bounds = array<i64: 1, 16, 3>}, {transform_indices = @transform_4, window_bounds = array<i64: 1, 16, 64>}, {pipeline_mode = #tpu.pipeline_mode<synchronous>, transform_indices = @transform_5, window_bounds = array<i64: 128, 128>}, {pipeline_mode = #tpu.pipeline_mode<synchronous>, transform_indices = @transform_6, window_bounds = array<i64: 64, 128>}, {pipeline_mode = #tpu.pipeline_mode<synchronous>, transform_indices = @transform_7, window_bounds = array<i64: 1, 128>}, {pipeline_mode = #tpu.pipeline_mode<synchronous>, transform_indices = @transform_8, window_bounds = array<i64: 128, 128>}, {pipeline_mode = #tpu.pipeline_mode<synchronous>, transform_indices = @transform_9, window_bounds = array<i64: 1, 128>}, {transform_indices = @transform_10, window_bounds = array<i64: 1, 16, 128>}]} {
    %c0 = arith.constant 0 : index
    %c0_0 = arith.constant 0 : index
    %0 = vector.load %arg6[%c0, %c0_0] : memref<128x128xbf16, #tpu.memory_space<vmem>>, vector<128x128xbf16>
    %c0_1 = arith.constant 0 : index
    %c0_2 = arith.constant 0 : index
    %1 = vector.load %arg7[%c0_1, %c0_2] : memref<64x128xbf16, #tpu.memory_space<vmem>>, vector<64x128xbf16>
    %c0_3 = arith.constant 0 : index
    %c0_4 = arith.constant 0 : index
    %2 = vector.load %arg8[%c0_3, %c0_4] : memref<1x128xf32, #tpu.memory_space<vmem>>, vector<1x128xf32>
    %c0_5 = arith.constant 0 : index
    %c0_6 = arith.constant 0 : index
    %c0_7 = arith.constant 0 : index
    %3 = vector.load %arg4[%c0_5, %c0_6, %c0_7] : memref<1x16x3xf32, #tpu.memory_space<vmem>>, vector<1x16x3xf32>
    %4 = vector.shape_cast %3 : vector<1x16x3xf32> to vector<16x3xf32>
    %c0_8 = arith.constant 0 : index
    %c0_9 = arith.constant 0 : index
    %c0_10 = arith.constant 0 : index
    %5 = vector.load %arg1[%c0_8, %c0_9, %c0_10] : memref<1x16x128xf32, #tpu.memory_space<vmem>>, vector<1x16x128xf32>
    %6 = vector.shape_cast %5 : vector<1x16x128xf32> to vector<16x128xf32>
    %7 = vector.extract_strided_slice %4 {offsets = [0, 0], sizes = [16, 1], strides = [1, 1]} : vector<16x3xf32> to vector<16x1xf32>
    %8 = vector.broadcast %7 : vector<16x1xf32> to vector<16x128xf32>
    %9 = arith.mulf %6, %8 : vector<16x128xf32>
    %c0_11 = arith.constant 0 : index
    %c0_12 = arith.constant 0 : index
    %c0_13 = arith.constant 0 : index
    %10 = vector.load %arg2[%c0_11, %c0_12, %c0_13] : memref<1x16x128xf32, #tpu.memory_space<vmem>>, vector<1x16x128xf32>
    %11 = vector.shape_cast %10 : vector<1x16x128xf32> to vector<16x128xf32>
    %12 = vector.extract_strided_slice %4 {offsets = [0, 1], sizes = [16, 1], strides = [1, 1]} : vector<16x3xf32> to vector<16x1xf32>
    %13 = vector.broadcast %12 : vector<16x1xf32> to vector<16x128xf32>
    %14 = arith.mulf %11, %13 : vector<16x128xf32>
    %15 = arith.addf %9, %14 : vector<16x128xf32>
    %c0_14 = arith.constant 0 : index
    %c0_15 = arith.constant 0 : index
    %c0_16 = arith.constant 0 : index
    %16 = vector.load %arg3[%c0_14, %c0_15, %c0_16] : memref<1x16x128xf32, #tpu.memory_space<vmem>>, vector<1x16x128xf32>
    %17 = vector.shape_cast %16 : vector<1x16x128xf32> to vector<16x128xf32>
    %18 = vector.extract_strided_slice %4 {offsets = [0, 2], sizes = [16, 1], strides = [1, 1]} : vector<16x3xf32> to vector<16x1xf32>
    %19 = vector.broadcast %18 : vector<16x1xf32> to vector<16x128xf32>
    %20 = arith.mulf %17, %19 : vector<16x128xf32>
    %21 = arith.addf %15, %20 : vector<16x128xf32>
    %22 = arith.truncf %21 : vector<16x128xf32> to vector<16x128xbf16>
    %cst = arith.constant dense<0.000000e+00> : vector<16x128xf32>
    %23 = tpu.matmul %22, %0, %cst {dimension_numbers = #tpu.dot_dimension_numbers<[1], [0], [0], [1], [0, 0, 1, 1], [], []>} : vector<16x128xbf16>, vector<128x128xbf16>, vector<16x128xf32> -> vector<16x128xf32>
    %c0_17 = arith.constant 0 : index
    %c0_18 = arith.constant 0 : index
    %c0_19 = arith.constant 0 : index
    %24 = vector.load %arg5[%c0_17, %c0_18, %c0_19] : memref<1x16x64xf32, #tpu.memory_space<vmem>>, vector<1x16x64xf32>
    %25 = vector.shape_cast %24 : vector<1x16x64xf32> to vector<16x64xf32>
    %26 = arith.truncf %25 : vector<16x64xf32> to vector<16x64xbf16>
    %cst_20 = arith.constant dense<0.000000e+00> : vector<16x128xf32>
    %27 = tpu.matmul %26, %1, %cst_20 {dimension_numbers = #tpu.dot_dimension_numbers<[1], [0], [0], [1], [0, 0, 1, 1], [], []>} : vector<16x64xbf16>, vector<64x128xbf16>, vector<16x128xf32> -> vector<16x128xf32>
    %28 = arith.addf %23, %27 : vector<16x128xf32>
    %29 = vector.broadcast %2 : vector<1x128xf32> to vector<16x128xf32>
    %30 = arith.addf %28, %29 : vector<16x128xf32>
    %cst_21 = arith.constant 0.000000e+00 : f32
    %31 = vector.broadcast %cst_21 : f32 to vector<16x128xf32>
    %32 = arith.maximumf %30, %31 : vector<16x128xf32>
    %c0_22 = arith.constant 0 : index
    %c0_23 = arith.constant 0 : index
    %33 = vector.load %arg9[%c0_22, %c0_23] : memref<128x128xbf16, #tpu.memory_space<vmem>>, vector<128x128xbf16>
    %c0_24 = arith.constant 0 : index
    %c0_25 = arith.constant 0 : index
    %34 = vector.load %arg10[%c0_24, %c0_25] : memref<1x128xf32, #tpu.memory_space<vmem>>, vector<1x128xf32>
    %35 = arith.truncf %32 : vector<16x128xf32> to vector<16x128xbf16>
    %cst_26 = arith.constant dense<0.000000e+00> : vector<16x128xf32>
    %36 = tpu.matmul %35, %33, %cst_26 {dimension_numbers = #tpu.dot_dimension_numbers<[1], [0], [0], [1], [0, 0, 1, 1], [], []>} : vector<16x128xbf16>, vector<128x128xbf16>, vector<16x128xf32> -> vector<16x128xf32>
    %37 = vector.broadcast %34 : vector<1x128xf32> to vector<16x128xf32>
    %38 = arith.addf %36, %37 : vector<16x128xf32>
    %cst_27 = arith.constant 0.000000e+00 : f32
    %39 = vector.broadcast %cst_27 : f32 to vector<16x128xf32>
    %40 = arith.maximumf %38, %39 : vector<16x128xf32>
    %c0_28 = arith.constant 0 : index
    %c0_29 = arith.constant 0 : index
    %c0_30 = arith.constant 0 : index
    %41 = vector.load %arg11[%c0_28, %c0_29, %c0_30] : memref<1x16x128xf32, #tpu.memory_space<vmem>>, vector<1x16x128xf32>
    %42 = vector.shape_cast %41 : vector<1x16x128xf32> to vector<16x128xf32>
    %43 = vector.shape_cast %40 : vector<16x128xf32> to vector<1x16x128xf32>
    tpu.vector_store %arg11[%c0_28, %c0_29, %c0_30], %43 {strides = array<i32>} : memref<1x16x128xf32, #tpu.memory_space<vmem>>, vector<1x16x128xf32>,
    return
  }
  func.func @transform_0(%arg0: i32) -> (i32, i32, i32) {
    %c0_i32 = arith.constant 0 : i32
    %c0_i32_0 = arith.constant 0 : i32
    %c0_i32_1 = arith.constant 0 : i32
    return %arg0, %c0_i32, %c0_i32_0 : i32, i32, i32
  }
  func.func @transform_1(%arg0: i32) -> (i32, i32, i32) {
    %c0_i32 = arith.constant 0 : i32
    %c0_i32_0 = arith.constant 0 : i32
    %c0_i32_1 = arith.constant 0 : i32
    return %arg0, %c0_i32, %c0_i32_0 : i32, i32, i32
  }
  func.func @transform_2(%arg0: i32) -> (i32, i32, i32) {
    %c0_i32 = arith.constant 0 : i32
    %c0_i32_0 = arith.constant 0 : i32
    %c0_i32_1 = arith.constant 0 : i32
    return %arg0, %c0_i32, %c0_i32_0 : i32, i32, i32
  }
  func.func @transform_3(%arg0: i32) -> (i32, i32, i32) {
    %c0_i32 = arith.constant 0 : i32
    %c0_i32_0 = arith.constant 0 : i32
    %c0_i32_1 = arith.constant 0 : i32
    return %arg0, %c0_i32, %c0_i32_0 : i32, i32, i32
  }
  func.func @transform_4(%arg0: i32) -> (i32, i32, i32) {
    %c0_i32 = arith.constant 0 : i32
    %c0_i32_0 = arith.constant 0 : i32
    %c0_i32_1 = arith.constant 0 : i32
    return %arg0, %c0_i32, %c0_i32_0 : i32, i32, i32
  }
  func.func @transform_5(%arg0: i32) -> (i32, i32) {
    %c0_i32 = arith.constant 0 : i32
    %c0_i32_0 = arith.constant 0 : i32
    %c0_i32_1 = arith.constant 0 : i32
    return %c0_i32, %c0_i32_0 : i32, i32
  }
  func.func @transform_6(%arg0: i32) -> (i32, i32) {
    %c0_i32 = arith.constant 0 : i32
    %c0_i32_0 = arith.constant 0 : i32
    %c0_i32_1 = arith.constant 0 : i32
    return %c0_i32, %c0_i32_0 : i32, i32
  }
  func.func @transform_7(%arg0: i32) -> (i32, i32) {
    %c0_i32 = arith.constant 0 : i32
    %c0_i32_0 = arith.constant 0 : i32
    %c0_i32_1 = arith.constant 0 : i32
    return %c0_i32, %c0_i32_0 : i32, i32
  }
  func.func @transform_8(%arg0: i32) -> (i32, i32) {
    %c0_i32 = arith.constant 0 : i32
    %c0_i32_0 = arith.constant 0 : i32
    %c0_i32_1 = arith.constant 0 : i32
    return %c0_i32, %c0_i32_0 : i32, i32
  }
  func.func @transform_9(%arg0: i32) -> (i32, i32) {
    %c0_i32 = arith.constant 0 : i32
    %c0_i32_0 = arith.constant 0 : i32
    %c0_i32_1 = arith.constant 0 : i32
    return %c0_i32, %c0_i32_0 : i32, i32
  }
  func.func @transform_10(%arg0: i32) -> (i32, i32, i32) {
    %c0_i32 = arith.constant 0 : i32
    %c0_i32_0 = arith.constant 0 : i32
    %c0_i32_1 = arith.constant 0 : i32
    return %arg0, %c0_i32, %c0_i32_0 : i32, i32, i32
  }
}

module attributes {stable_mosaic.version = 11 : i64} {
  func.func @_fp_kernel(%arg0: i32, %arg1: memref<1x32x64xf32, #tpu.memory_space<vmem>>, %arg2: memref<1x32x64xf32, #tpu.memory_space<vmem>>, %arg3: memref<1x32x64xf32, #tpu.memory_space<vmem>>, %arg4: memref<1x32x3xf32, #tpu.memory_space<vmem>>, %arg5: memref<1x32x32xf32, #tpu.memory_space<vmem>>, %arg6: memref<64x128xbf16, #tpu.memory_space<vmem>>, %arg7: memref<32x128xbf16, #tpu.memory_space<vmem>>, %arg8: memref<1x128xf32, #tpu.memory_space<vmem>>, %arg9: memref<128x128xbf16, #tpu.memory_space<vmem>>, %arg10: memref<1x128xf32, #tpu.memory_space<vmem>>, %arg11: memref<1x32x128xf32, #tpu.memory_space<vmem>>) attributes {dimension_semantics = [#tpu.dimension_semantics<parallel>], iteration_bounds = array<i64: 2>, scalar_prefetch = 0 : i64, scratch_operands = 0 : i64, tpu.core_type = #tpu.core_type<tc>, window_params = [{transform_indices = @transform_0, window_bounds = array<i64: 1, 32, 64>}, {transform_indices = @transform_1, window_bounds = array<i64: 1, 32, 64>}, {transform_indices = @transform_2, window_bounds = array<i64: 1, 32, 64>}, {transform_indices = @transform_3, window_bounds = array<i64: 1, 32, 3>}, {transform_indices = @transform_4, window_bounds = array<i64: 1, 32, 32>}, {pipeline_mode = #tpu.pipeline_mode<synchronous>, transform_indices = @transform_5, window_bounds = array<i64: 64, 128>}, {pipeline_mode = #tpu.pipeline_mode<synchronous>, transform_indices = @transform_6, window_bounds = array<i64: 32, 128>}, {pipeline_mode = #tpu.pipeline_mode<synchronous>, transform_indices = @transform_7, window_bounds = array<i64: 1, 128>}, {pipeline_mode = #tpu.pipeline_mode<synchronous>, transform_indices = @transform_8, window_bounds = array<i64: 128, 128>}, {pipeline_mode = #tpu.pipeline_mode<synchronous>, transform_indices = @transform_9, window_bounds = array<i64: 1, 128>}, {transform_indices = @transform_10, window_bounds = array<i64: 1, 32, 128>}]} {
    %c0 = arith.constant 0 : index
    %c0_0 = arith.constant 0 : index
    %0 = vector.load %arg6[%c0, %c0_0] : memref<64x128xbf16, #tpu.memory_space<vmem>>, vector<64x128xbf16>
    %c0_1 = arith.constant 0 : index
    %c0_2 = arith.constant 0 : index
    %1 = vector.load %arg7[%c0_1, %c0_2] : memref<32x128xbf16, #tpu.memory_space<vmem>>, vector<32x128xbf16>
    %c0_3 = arith.constant 0 : index
    %c0_4 = arith.constant 0 : index
    %2 = vector.load %arg8[%c0_3, %c0_4] : memref<1x128xf32, #tpu.memory_space<vmem>>, vector<1x128xf32>
    %c0_5 = arith.constant 0 : index
    %c0_6 = arith.constant 0 : index
    %c0_7 = arith.constant 0 : index
    %3 = vector.load %arg4[%c0_5, %c0_6, %c0_7] : memref<1x32x3xf32, #tpu.memory_space<vmem>>, vector<1x32x3xf32>
    %4 = vector.shape_cast %3 : vector<1x32x3xf32> to vector<32x3xf32>
    %c0_8 = arith.constant 0 : index
    %c0_9 = arith.constant 0 : index
    %c0_10 = arith.constant 0 : index
    %5 = vector.load %arg1[%c0_8, %c0_9, %c0_10] : memref<1x32x64xf32, #tpu.memory_space<vmem>>, vector<1x32x64xf32>
    %6 = vector.shape_cast %5 : vector<1x32x64xf32> to vector<32x64xf32>
    %7 = vector.extract_strided_slice %4 {offsets = [0, 0], sizes = [32, 1], strides = [1, 1]} : vector<32x3xf32> to vector<32x1xf32>
    %8 = vector.broadcast %7 : vector<32x1xf32> to vector<32x64xf32>
    %9 = arith.mulf %6, %8 : vector<32x64xf32>
    %c0_11 = arith.constant 0 : index
    %c0_12 = arith.constant 0 : index
    %c0_13 = arith.constant 0 : index
    %10 = vector.load %arg2[%c0_11, %c0_12, %c0_13] : memref<1x32x64xf32, #tpu.memory_space<vmem>>, vector<1x32x64xf32>
    %11 = vector.shape_cast %10 : vector<1x32x64xf32> to vector<32x64xf32>
    %12 = vector.extract_strided_slice %4 {offsets = [0, 1], sizes = [32, 1], strides = [1, 1]} : vector<32x3xf32> to vector<32x1xf32>
    %13 = vector.broadcast %12 : vector<32x1xf32> to vector<32x64xf32>
    %14 = arith.mulf %11, %13 : vector<32x64xf32>
    %15 = arith.addf %9, %14 : vector<32x64xf32>
    %c0_14 = arith.constant 0 : index
    %c0_15 = arith.constant 0 : index
    %c0_16 = arith.constant 0 : index
    %16 = vector.load %arg3[%c0_14, %c0_15, %c0_16] : memref<1x32x64xf32, #tpu.memory_space<vmem>>, vector<1x32x64xf32>
    %17 = vector.shape_cast %16 : vector<1x32x64xf32> to vector<32x64xf32>
    %18 = vector.extract_strided_slice %4 {offsets = [0, 2], sizes = [32, 1], strides = [1, 1]} : vector<32x3xf32> to vector<32x1xf32>
    %19 = vector.broadcast %18 : vector<32x1xf32> to vector<32x64xf32>
    %20 = arith.mulf %17, %19 : vector<32x64xf32>
    %21 = arith.addf %15, %20 : vector<32x64xf32>
    %22 = arith.truncf %21 : vector<32x64xf32> to vector<32x64xbf16>
    %cst = arith.constant dense<0.000000e+00> : vector<32x128xf32>
    %23 = tpu.matmul %22, %0, %cst {dimension_numbers = #tpu.dot_dimension_numbers<[1], [0], [0], [1], [0, 0, 1, 1], [], []>} : vector<32x64xbf16>, vector<64x128xbf16>, vector<32x128xf32> -> vector<32x128xf32>
    %c0_17 = arith.constant 0 : index
    %c0_18 = arith.constant 0 : index
    %c0_19 = arith.constant 0 : index
    %24 = vector.load %arg5[%c0_17, %c0_18, %c0_19] : memref<1x32x32xf32, #tpu.memory_space<vmem>>, vector<1x32x32xf32>
    %25 = vector.shape_cast %24 : vector<1x32x32xf32> to vector<32x32xf32>
    %26 = arith.truncf %25 : vector<32x32xf32> to vector<32x32xbf16>
    %cst_20 = arith.constant dense<0.000000e+00> : vector<32x128xf32>
    %27 = tpu.matmul %26, %1, %cst_20 {dimension_numbers = #tpu.dot_dimension_numbers<[1], [0], [0], [1], [0, 0, 1, 1], [], []>} : vector<32x32xbf16>, vector<32x128xbf16>, vector<32x128xf32> -> vector<32x128xf32>
    %28 = arith.addf %23, %27 : vector<32x128xf32>
    %29 = vector.broadcast %2 : vector<1x128xf32> to vector<32x128xf32>
    %30 = arith.addf %28, %29 : vector<32x128xf32>
    %cst_21 = arith.constant 0.000000e+00 : f32
    %31 = vector.broadcast %cst_21 : f32 to vector<32x128xf32>
    %32 = arith.maximumf %30, %31 : vector<32x128xf32>
    %c0_22 = arith.constant 0 : index
    %c0_23 = arith.constant 0 : index
    %33 = vector.load %arg9[%c0_22, %c0_23] : memref<128x128xbf16, #tpu.memory_space<vmem>>, vector<128x128xbf16>
    %c0_24 = arith.constant 0 : index
    %c0_25 = arith.constant 0 : index
    %34 = vector.load %arg10[%c0_24, %c0_25] : memref<1x128xf32, #tpu.memory_space<vmem>>, vector<1x128xf32>
    %35 = arith.truncf %32 : vector<32x128xf32> to vector<32x128xbf16>
    %cst_26 = arith.constant dense<0.000000e+00> : vector<32x128xf32>
    %36 = tpu.matmul %35, %33, %cst_26 {dimension_numbers = #tpu.dot_dimension_numbers<[1], [0], [0], [1], [0, 0, 1, 1], [], []>} : vector<32x128xbf16>, vector<128x128xbf16>, vector<32x128xf32> -> vector<32x128xf32>
    %37 = vector.broadcast %34 : vector<1x128xf32> to vector<32x128xf32>
    %38 = arith.addf %36, %37 : vector<32x128xf32>
    %cst_27 = arith.constant 0.000000e+00 : f32
    %39 = vector.broadcast %cst_27 : f32 to vector<32x128xf32>
    %40 = arith.maximumf %38, %39 : vector<32x128xf32>
    %c0_28 = arith.constant 0 : index
    %c0_29 = arith.constant 0 : index
    %c0_30 = arith.constant 0 : index
    %41 = vector.load %arg11[%c0_28, %c0_29, %c0_30] : memref<1x32x128xf32, #tpu.memory_space<vmem>>, vector<1x32x128xf32>
    %42 = vector.shape_cast %41 : vector<1x32x128xf32> to vector<32x128xf32>
    %43 = vector.shape_cast %40 : vector<32x128xf32> to vector<1x32x128xf32>
    tpu.vector_store %arg11[%c0_28, %c0_29, %c0_30], %43 {strides = array<i32>} : memref<1x32x128xf32, #tpu.memory_space<vmem>>, vector<1x32x128xf32>,
    return
  }
  func.func @transform_0(%arg0: i32) -> (i32, i32, i32) {
    %c0_i32 = arith.constant 0 : i32
    %c0_i32_0 = arith.constant 0 : i32
    %c0_i32_1 = arith.constant 0 : i32
    return %arg0, %c0_i32, %c0_i32_0 : i32, i32, i32
  }
  func.func @transform_1(%arg0: i32) -> (i32, i32, i32) {
    %c0_i32 = arith.constant 0 : i32
    %c0_i32_0 = arith.constant 0 : i32
    %c0_i32_1 = arith.constant 0 : i32
    return %arg0, %c0_i32, %c0_i32_0 : i32, i32, i32
  }
  func.func @transform_2(%arg0: i32) -> (i32, i32, i32) {
    %c0_i32 = arith.constant 0 : i32
    %c0_i32_0 = arith.constant 0 : i32
    %c0_i32_1 = arith.constant 0 : i32
    return %arg0, %c0_i32, %c0_i32_0 : i32, i32, i32
  }
  func.func @transform_3(%arg0: i32) -> (i32, i32, i32) {
    %c0_i32 = arith.constant 0 : i32
    %c0_i32_0 = arith.constant 0 : i32
    %c0_i32_1 = arith.constant 0 : i32
    return %arg0, %c0_i32, %c0_i32_0 : i32, i32, i32
  }
  func.func @transform_4(%arg0: i32) -> (i32, i32, i32) {
    %c0_i32 = arith.constant 0 : i32
    %c0_i32_0 = arith.constant 0 : i32
    %c0_i32_1 = arith.constant 0 : i32
    return %arg0, %c0_i32, %c0_i32_0 : i32, i32, i32
  }
  func.func @transform_5(%arg0: i32) -> (i32, i32) {
    %c0_i32 = arith.constant 0 : i32
    %c0_i32_0 = arith.constant 0 : i32
    %c0_i32_1 = arith.constant 0 : i32
    return %c0_i32, %c0_i32_0 : i32, i32
  }
  func.func @transform_6(%arg0: i32) -> (i32, i32) {
    %c0_i32 = arith.constant 0 : i32
    %c0_i32_0 = arith.constant 0 : i32
    %c0_i32_1 = arith.constant 0 : i32
    return %c0_i32, %c0_i32_0 : i32, i32
  }
  func.func @transform_7(%arg0: i32) -> (i32, i32) {
    %c0_i32 = arith.constant 0 : i32
    %c0_i32_0 = arith.constant 0 : i32
    %c0_i32_1 = arith.constant 0 : i32
    return %c0_i32, %c0_i32_0 : i32, i32
  }
  func.func @transform_8(%arg0: i32) -> (i32, i32) {
    %c0_i32 = arith.constant 0 : i32
    %c0_i32_0 = arith.constant 0 : i32
    %c0_i32_1 = arith.constant 0 : i32
    return %c0_i32, %c0_i32_0 : i32, i32
  }
  func.func @transform_9(%arg0: i32) -> (i32, i32) {
    %c0_i32 = arith.constant 0 : i32
    %c0_i32_0 = arith.constant 0 : i32
    %c0_i32_1 = arith.constant 0 : i32
    return %c0_i32, %c0_i32_0 : i32, i32
  }
  func.func @transform_10(%arg0: i32) -> (i32, i32, i32) {
    %c0_i32 = arith.constant 0 : i32
    %c0_i32_0 = arith.constant 0 : i32
    %c0_i32_1 = arith.constant 0 : i32
    return %arg0, %c0_i32, %c0_i32_0 : i32, i32, i32
  }
}

module attributes {stable_mosaic.version = 11 : i64} {
  func.func @_fp_kernel(%arg0: i32, %arg1: memref<1x64x32xf32, #tpu.memory_space<vmem>>, %arg2: memref<1x64x32xf32, #tpu.memory_space<vmem>>, %arg3: memref<1x64x32xf32, #tpu.memory_space<vmem>>, %arg4: memref<1x64x3xf32, #tpu.memory_space<vmem>>, %arg5: memref<1x64x8xf32, #tpu.memory_space<vmem>>, %arg6: memref<32x128xbf16, #tpu.memory_space<vmem>>, %arg7: memref<8x128xbf16, #tpu.memory_space<vmem>>, %arg8: memref<1x128xf32, #tpu.memory_space<vmem>>, %arg9: memref<128x128xbf16, #tpu.memory_space<vmem>>, %arg10: memref<1x128xf32, #tpu.memory_space<vmem>>, %arg11: memref<128x128xbf16, #tpu.memory_space<vmem>>, %arg12: memref<1x128xf32, #tpu.memory_space<vmem>>, %arg13: memref<1x64x128xf32, #tpu.memory_space<vmem>>) attributes {dimension_semantics = [#tpu.dimension_semantics<parallel>], iteration_bounds = array<i64: 2>, scalar_prefetch = 0 : i64, scratch_operands = 0 : i64, tpu.core_type = #tpu.core_type<tc>, window_params = [{transform_indices = @transform_0, window_bounds = array<i64: 1, 64, 32>}, {transform_indices = @transform_1, window_bounds = array<i64: 1, 64, 32>}, {transform_indices = @transform_2, window_bounds = array<i64: 1, 64, 32>}, {transform_indices = @transform_3, window_bounds = array<i64: 1, 64, 3>}, {transform_indices = @transform_4, window_bounds = array<i64: 1, 64, 8>}, {pipeline_mode = #tpu.pipeline_mode<synchronous>, transform_indices = @transform_5, window_bounds = array<i64: 32, 128>}, {pipeline_mode = #tpu.pipeline_mode<synchronous>, transform_indices = @transform_6, window_bounds = array<i64: 8, 128>}, {pipeline_mode = #tpu.pipeline_mode<synchronous>, transform_indices = @transform_7, window_bounds = array<i64: 1, 128>}, {pipeline_mode = #tpu.pipeline_mode<synchronous>, transform_indices = @transform_8, window_bounds = array<i64: 128, 128>}, {pipeline_mode = #tpu.pipeline_mode<synchronous>, transform_indices = @transform_9, window_bounds = array<i64: 1, 128>}, {pipeline_mode = #tpu.pipeline_mode<synchronous>, transform_indices = @transform_10, window_bounds = array<i64: 128, 128>}, {pipeline_mode = #tpu.pipeline_mode<synchronous>, transform_indices = @transform_11, window_bounds = array<i64: 1, 128>}, {transform_indices = @transform_12, window_bounds = array<i64: 1, 64, 128>}]} {
    %c0 = arith.constant 0 : index
    %c0_0 = arith.constant 0 : index
    %0 = vector.load %arg6[%c0, %c0_0] : memref<32x128xbf16, #tpu.memory_space<vmem>>, vector<32x128xbf16>
    %c0_1 = arith.constant 0 : index
    %c0_2 = arith.constant 0 : index
    %1 = vector.load %arg7[%c0_1, %c0_2] : memref<8x128xbf16, #tpu.memory_space<vmem>>, vector<8x128xbf16>
    %c0_3 = arith.constant 0 : index
    %c0_4 = arith.constant 0 : index
    %2 = vector.load %arg8[%c0_3, %c0_4] : memref<1x128xf32, #tpu.memory_space<vmem>>, vector<1x128xf32>
    %c0_5 = arith.constant 0 : index
    %c0_6 = arith.constant 0 : index
    %c0_7 = arith.constant 0 : index
    %3 = vector.load %arg4[%c0_5, %c0_6, %c0_7] : memref<1x64x3xf32, #tpu.memory_space<vmem>>, vector<1x64x3xf32>
    %4 = vector.shape_cast %3 : vector<1x64x3xf32> to vector<64x3xf32>
    %c0_8 = arith.constant 0 : index
    %c0_9 = arith.constant 0 : index
    %c0_10 = arith.constant 0 : index
    %5 = vector.load %arg1[%c0_8, %c0_9, %c0_10] : memref<1x64x32xf32, #tpu.memory_space<vmem>>, vector<1x64x32xf32>
    %6 = vector.shape_cast %5 : vector<1x64x32xf32> to vector<64x32xf32>
    %7 = vector.extract_strided_slice %4 {offsets = [0, 0], sizes = [64, 1], strides = [1, 1]} : vector<64x3xf32> to vector<64x1xf32>
    %8 = vector.broadcast %7 : vector<64x1xf32> to vector<64x32xf32>
    %9 = arith.mulf %6, %8 : vector<64x32xf32>
    %c0_11 = arith.constant 0 : index
    %c0_12 = arith.constant 0 : index
    %c0_13 = arith.constant 0 : index
    %10 = vector.load %arg2[%c0_11, %c0_12, %c0_13] : memref<1x64x32xf32, #tpu.memory_space<vmem>>, vector<1x64x32xf32>
    %11 = vector.shape_cast %10 : vector<1x64x32xf32> to vector<64x32xf32>
    %12 = vector.extract_strided_slice %4 {offsets = [0, 1], sizes = [64, 1], strides = [1, 1]} : vector<64x3xf32> to vector<64x1xf32>
    %13 = vector.broadcast %12 : vector<64x1xf32> to vector<64x32xf32>
    %14 = arith.mulf %11, %13 : vector<64x32xf32>
    %15 = arith.addf %9, %14 : vector<64x32xf32>
    %c0_14 = arith.constant 0 : index
    %c0_15 = arith.constant 0 : index
    %c0_16 = arith.constant 0 : index
    %16 = vector.load %arg3[%c0_14, %c0_15, %c0_16] : memref<1x64x32xf32, #tpu.memory_space<vmem>>, vector<1x64x32xf32>
    %17 = vector.shape_cast %16 : vector<1x64x32xf32> to vector<64x32xf32>
    %18 = vector.extract_strided_slice %4 {offsets = [0, 2], sizes = [64, 1], strides = [1, 1]} : vector<64x3xf32> to vector<64x1xf32>
    %19 = vector.broadcast %18 : vector<64x1xf32> to vector<64x32xf32>
    %20 = arith.mulf %17, %19 : vector<64x32xf32>
    %21 = arith.addf %15, %20 : vector<64x32xf32>
    %22 = arith.truncf %21 : vector<64x32xf32> to vector<64x32xbf16>
    %cst = arith.constant dense<0.000000e+00> : vector<64x128xf32>
    %23 = tpu.matmul %22, %0, %cst {dimension_numbers = #tpu.dot_dimension_numbers<[1], [0], [0], [1], [0, 0, 1, 1], [], []>} : vector<64x32xbf16>, vector<32x128xbf16>, vector<64x128xf32> -> vector<64x128xf32>
    %c0_17 = arith.constant 0 : index
    %c0_18 = arith.constant 0 : index
    %c0_19 = arith.constant 0 : index
    %24 = vector.load %arg5[%c0_17, %c0_18, %c0_19] : memref<1x64x8xf32, #tpu.memory_space<vmem>>, vector<1x64x8xf32>
    %25 = vector.shape_cast %24 : vector<1x64x8xf32> to vector<64x8xf32>
    %26 = arith.truncf %25 : vector<64x8xf32> to vector<64x8xbf16>
    %cst_20 = arith.constant dense<0.000000e+00> : vector<64x128xf32>
    %27 = tpu.matmul %26, %1, %cst_20 {dimension_numbers = #tpu.dot_dimension_numbers<[1], [0], [0], [1], [0, 0, 1, 1], [], []>} : vector<64x8xbf16>, vector<8x128xbf16>, vector<64x128xf32> -> vector<64x128xf32>
    %28 = arith.addf %23, %27 : vector<64x128xf32>
    %29 = vector.broadcast %2 : vector<1x128xf32> to vector<64x128xf32>
    %30 = arith.addf %28, %29 : vector<64x128xf32>
    %cst_21 = arith.constant 0.000000e+00 : f32
    %31 = vector.broadcast %cst_21 : f32 to vector<64x128xf32>
    %32 = arith.maximumf %30, %31 : vector<64x128xf32>
    %c0_22 = arith.constant 0 : index
    %c0_23 = arith.constant 0 : index
    %33 = vector.load %arg9[%c0_22, %c0_23] : memref<128x128xbf16, #tpu.memory_space<vmem>>, vector<128x128xbf16>
    %c0_24 = arith.constant 0 : index
    %c0_25 = arith.constant 0 : index
    %34 = vector.load %arg10[%c0_24, %c0_25] : memref<1x128xf32, #tpu.memory_space<vmem>>, vector<1x128xf32>
    %35 = arith.truncf %32 : vector<64x128xf32> to vector<64x128xbf16>
    %cst_26 = arith.constant dense<0.000000e+00> : vector<64x128xf32>
    %36 = tpu.matmul %35, %33, %cst_26 {dimension_numbers = #tpu.dot_dimension_numbers<[1], [0], [0], [1], [0, 0, 1, 1], [], []>} : vector<64x128xbf16>, vector<128x128xbf16>, vector<64x128xf32> -> vector<64x128xf32>
    %37 = vector.broadcast %34 : vector<1x128xf32> to vector<64x128xf32>
    %38 = arith.addf %36, %37 : vector<64x128xf32>
    %cst_27 = arith.constant 0.000000e+00 : f32
    %39 = vector.broadcast %cst_27 : f32 to vector<64x128xf32>
    %40 = arith.maximumf %38, %39 : vector<64x128xf32>
    %c0_28 = arith.constant 0 : index
    %c0_29 = arith.constant 0 : index
    %41 = vector.load %arg11[%c0_28, %c0_29] : memref<128x128xbf16, #tpu.memory_space<vmem>>, vector<128x128xbf16>
    %c0_30 = arith.constant 0 : index
    %c0_31 = arith.constant 0 : index
    %42 = vector.load %arg12[%c0_30, %c0_31] : memref<1x128xf32, #tpu.memory_space<vmem>>, vector<1x128xf32>
    %43 = arith.truncf %40 : vector<64x128xf32> to vector<64x128xbf16>
    %cst_32 = arith.constant dense<0.000000e+00> : vector<64x128xf32>
    %44 = tpu.matmul %43, %41, %cst_32 {dimension_numbers = #tpu.dot_dimension_numbers<[1], [0], [0], [1], [0, 0, 1, 1], [], []>} : vector<64x128xbf16>, vector<128x128xbf16>, vector<64x128xf32> -> vector<64x128xf32>
    %45 = vector.broadcast %42 : vector<1x128xf32> to vector<64x128xf32>
    %46 = arith.addf %44, %45 : vector<64x128xf32>
    %c0_33 = arith.constant 0 : index
    %c0_34 = arith.constant 0 : index
    %c0_35 = arith.constant 0 : index
    %47 = vector.load %arg13[%c0_33, %c0_34, %c0_35] : memref<1x64x128xf32, #tpu.memory_space<vmem>>, vector<1x64x128xf32>
    %48 = vector.shape_cast %47 : vector<1x64x128xf32> to vector<64x128xf32>
    %49 = vector.shape_cast %46 : vector<64x128xf32> to vector<1x64x128xf32>
    tpu.vector_store %arg13[%c0_33, %c0_34, %c0_35], %49 {strides = array<i32>} : memref<1x64x128xf32, #tpu.memory_space<vmem>>, vector<1x64x128xf32>,
    return
  }
  func.func @transform_0(%arg0: i32) -> (i32, i32, i32) {
    %c0_i32 = arith.constant 0 : i32
    %c0_i32_0 = arith.constant 0 : i32
    %c0_i32_1 = arith.constant 0 : i32
    return %arg0, %c0_i32, %c0_i32_0 : i32, i32, i32
  }
  func.func @transform_1(%arg0: i32) -> (i32, i32, i32) {
    %c0_i32 = arith.constant 0 : i32
    %c0_i32_0 = arith.constant 0 : i32
    %c0_i32_1 = arith.constant 0 : i32
    return %arg0, %c0_i32, %c0_i32_0 : i32, i32, i32
  }
  func.func @transform_2(%arg0: i32) -> (i32, i32, i32) {
    %c0_i32 = arith.constant 0 : i32
    %c0_i32_0 = arith.constant 0 : i32
    %c0_i32_1 = arith.constant 0 : i32
    return %arg0, %c0_i32, %c0_i32_0 : i32, i32, i32
  }
  func.func @transform_3(%arg0: i32) -> (i32, i32, i32) {
    %c0_i32 = arith.constant 0 : i32
    %c0_i32_0 = arith.constant 0 : i32
    %c0_i32_1 = arith.constant 0 : i32
    return %arg0, %c0_i32, %c0_i32_0 : i32, i32, i32
  }
  func.func @transform_4(%arg0: i32) -> (i32, i32, i32) {
    %c0_i32 = arith.constant 0 : i32
    %c0_i32_0 = arith.constant 0 : i32
    %c0_i32_1 = arith.constant 0 : i32
    return %arg0, %c0_i32, %c0_i32_0 : i32, i32, i32
  }
  func.func @transform_5(%arg0: i32) -> (i32, i32) {
    %c0_i32 = arith.constant 0 : i32
    %c0_i32_0 = arith.constant 0 : i32
    %c0_i32_1 = arith.constant 0 : i32
    return %c0_i32, %c0_i32_0 : i32, i32
  }
  func.func @transform_6(%arg0: i32) -> (i32, i32) {
    %c0_i32 = arith.constant 0 : i32
    %c0_i32_0 = arith.constant 0 : i32
    %c0_i32_1 = arith.constant 0 : i32
    return %c0_i32, %c0_i32_0 : i32, i32
  }
  func.func @transform_7(%arg0: i32) -> (i32, i32) {
    %c0_i32 = arith.constant 0 : i32
    %c0_i32_0 = arith.constant 0 : i32
    %c0_i32_1 = arith.constant 0 : i32
    return %c0_i32, %c0_i32_0 : i32, i32
  }
  func.func @transform_8(%arg0: i32) -> (i32, i32) {
    %c0_i32 = arith.constant 0 : i32
    %c0_i32_0 = arith.constant 0 : i32
    %c0_i32_1 = arith.constant 0 : i32
    return %c0_i32, %c0_i32_0 : i32, i32
  }
  func.func @transform_9(%arg0: i32) -> (i32, i32) {
    %c0_i32 = arith.constant 0 : i32
    %c0_i32_0 = arith.constant 0 : i32
    %c0_i32_1 = arith.constant 0 : i32
    return %c0_i32, %c0_i32_0 : i32, i32
  }
  func.func @transform_10(%arg0: i32) -> (i32, i32) {
    %c0_i32 = arith.constant 0 : i32
    %c0_i32_0 = arith.constant 0 : i32
    %c0_i32_1 = arith.constant 0 : i32
    return %c0_i32, %c0_i32_0 : i32, i32
  }
  func.func @transform_11(%arg0: i32) -> (i32, i32) {
    %c0_i32 = arith.constant 0 : i32
    %c0_i32_0 = arith.constant 0 : i32
    %c0_i32_1 = arith.constant 0 : i32
    return %c0_i32, %c0_i32_0 : i32, i32
  }
  func.func @transform_12(%arg0: i32) -> (i32, i32, i32) {
    %c0_i32 = arith.constant 0 : i32
    %c0_i32_0 = arith.constant 0 : i32
    %c0_i32_1 = arith.constant 0 : i32
    return %arg0, %c0_i32, %c0_i32_0 : i32, i32, i32
  }
}

</mosaic_0001>

<llo_original>
// kernel: custom-call.40
$region0: #{custom-call.40}
  %s0 = inlined_call_operand.vmem [shape: f32[2,64], index: 0, kind: output, shape index: {}]

// kernel: custom-call.41
$region0: #{custom-call.41}
  %s0 = inlined_call_operand.vmem [shape: f32[2,32], index: 0, kind: output, shape index: {}]

// kernel: custom-call.42
$region0: #{custom-call.42}
  %s0 = inlined_call_operand.vmem [shape: f32[2,16], index: 0, kind: output, shape index: {}]

// kernel: pointnet2_seg_forward.8
$region0: #{pointnet2_seg_forward.8}
  #allocation0 [shape = 'u32[]', space=smem, size = 0x4, offset = 0x4, fixed_abs, tag = 'smem constant byte address 0x4 - core index']
  #allocation1 [shape = 'u32[144,128]{1,0:T(1,128)}', space=vmem, size = 0x12000, scoped, tag = 'internal scratch']
  %s0 = inlined_call_operand.vmem [shape: f32[2,256,128], index: 0, kind: input, shape index: {}]
  %s1 = inlined_call_operand.vmem [shape: bf16[128,128], index: 1, kind: input, shape index: {}]
  %s2 = inlined_call_operand.vmem [shape: f32[1,128], index: 2, kind: input, shape index: {}]
  %s3 = inlined_call_operand.vmem [shape: bf16[128,128], index: 3, kind: input, shape index: {}]
  %s4 = inlined_call_operand.vmem [shape: f32[1,128], index: 4, kind: input, shape index: {}]
  %s5 = inlined_call_operand.vmem [shape: bf16[128,128], index: 5, kind: input, shape index: {}]
  %s6 = inlined_call_operand.vmem [shape: f32[1,128], index: 6, kind: input, shape index: {}]
  %s7 = inlined_call_operand.vmem [shape: f32[2,32,128], index: 7, kind: output, shape index: {}]
  %s8 = sld [smem:[#allocation0]]
  $region61: #{pointnet2_seg_forward.8} parent=0
    _
  %s10 = ssub.s32 1, %s8
  %s11 = scalar_select 0, %s10, %s8
  loop: start=0, step=1, limit=4
  $region2: #{pointnet2_seg_forward.8} parent=0 // loop_pre_header
    _
  $region3: #{pointnet2_seg_forward.8} parent=0 // loop_header
    %s13 = sphi 0, %s17
    %p14 = scmp.ge.s32.totalorder %s13, 4
    %s23 = sphi 0, %s25
    %s26 = sphi 0, %s23
    %s27 = sphi 0, %s26
    %s43 = sphi 0, %s27
    %s47 = sphi 0, %s47
    %s49 = sphi 0, %s47
    %s50 = sphi 0, %s49
    %s64 = sphi 0, %s50
    %s68 = sphi 0, %s68
    %s70 = sphi 0, %s68
    %s71 = sphi 0, %s70
    %s85 = sphi 0, %s71
    %s89 = sphi 0, %s89
    %s91 = sphi 0, %s89
    %s92 = sphi 0, %s91
    %s106 = sphi 0, %s92
    %s110 = sphi 0, %s110
    %s112 = sphi 0, %s110
    %s113 = sphi 0, %s112
    %s127 = sphi 0, %s113
    %s131 = sphi 0, %s131
    %s133 = sphi 0, %s131
    %s134 = sphi 0, %s133
    %s148 = sphi 0, %s134
    %s152 = sphi 0, %s152
    %s154 = sphi 0, %s152
    %s155 = sphi 0, %s154
    %s169 = sphi 0, %s155
    %s175 = sphi 0, %s177
    %s178 = sphi 0, %s175
    %s179 = sphi 0, %s178
    %s195 = sphi 0, %s179
  $region4: #{pointnet2_seg_forward.8} parent=0 // loop_header_branch
    %16 = sbr.rel (%p14) target = $region8
  $region5: #{pointnet2_seg_forward.8} parent=0 // loop_body
    %s18 = ssub.s32 %s13, 1
    %s19 = ssub.s32 %s13, 2
    %s20 = sadd.s32 %s13, 1
    %s21 = ssub.s32 %s13, %s20
    %p22 = scmp.eq.s32.totalorder %s21, 0
    %s24 = sadd.s32 %s23, 1
    %s25 = scalar_select %p22, %s23, %s24
    %p28 = pneg %p22
    %p29 = scmp.eq.s32.totalorder %s13, 1
    %p30 = por %p28, %p29
    %p31 = scmp.ne.s32.totalorder %s23, %s26
    %p32 = scmp.eq.s32.totalorder %s13, 0
    %p33 = por %p31, %p32
    %p34 = scmp.ne.s32.totalorder %s23, %s26
    %p35 = scmp.eq.s32.totalorder %s18, 1
    %p36 = por %p34, %p35
    %p37 = scmp.ne.s32.totalorder %s26, %s27
    %p38 = scmp.eq.s32.totalorder %s18, 0
    %p39 = por %p37, %p38
    %p40 = scmp.ne.s32.totalorder %s26, %s27
    %p41 = scmp.eq.s32.totalorder %s19, 1
    %p42 = por %p40, %p41
    %p44 = scmp.ne.s32.totalorder %s27, %s43
    %p45 = scmp.eq.s32.totalorder %s19, 0
    %p46 = por %p44, %p45
    %s48 = sadd.s32 %s47, 1
    %p51 = scmp.eq.s32.totalorder %s13, 1
    %p52 = scmp.ne.s32.totalorder %s47, %s49
    %p53 = scmp.eq.s32.totalorder %s13, 0
    %p54 = por %p52, %p53
    %p55 = scmp.ne.s32.totalorder %s47, %s49
    %p56 = scmp.eq.s32.totalorder %s18, 1
    %p57 = por %p55, %p56
    %p58 = scmp.ne.s32.totalorder %s49, %s50
    %p59 = scmp.eq.s32.totalorder %s18, 0
    %p60 = por %p58, %p59
    %p61 = scmp.ne.s32.totalorder %s49, %s50
    %p62 = scmp.eq.s32.totalorder %s19, 1
    %p63 = por %p61, %p62
    %p65 = scmp.ne.s32.totalorder %s50, %s64
    %p66 = scmp.eq.s32.totalorder %s19, 0
    %p67 = por %p65, %p66
    %s69 = sadd.s32 %s68, 1
    %p72 = scmp.eq.s32.totalorder %s13, 1
    %p73 = scmp.ne.s32.totalorder %s68, %s70
    %p74 = scmp.eq.s32.totalorder %s13, 0
    %p75 = por %p73, %p74
    %p76 = scmp.ne.s32.totalorder %s68, %s70
    %p77 = scmp.eq.s32.totalorder %s18, 1
    %p78 = por %p76, %p77
    %p79 = scmp.ne.s32.totalorder %s70, %s71
    %p80 = scmp.eq.s32.totalorder %s18, 0
    %p81 = por %p79, %p80
    %p82 = scmp.ne.s32.totalorder %s70, %s71
    %p83 = scmp.eq.s32.totalorder %s19, 1
    %p84 = por %p82, %p83
    %p86 = scmp.ne.s32.totalorder %s71, %s85
    %p87 = scmp.eq.s32.totalorder %s19, 0
    %p88 = por %p86, %p87
    %s90 = sadd.s32 %s89, 1
    %p93 = scmp.eq.s32.totalorder %s13, 1
    %p94 = scmp.ne.s32.totalorder %s89, %s91
    %p95 = scmp.eq.s32.totalorder %s13, 0
    %p96 = por %p94, %p95
    %p97 = scmp.ne.s32.totalorder %s89, %s91
    %p98 = scmp.eq.s32.totalorder %s18, 1
    %p99 = por %p97, %p98
    %p100 = scmp.ne.s32.totalorder %s91, %s92
    %p101 = scmp.eq.s32.totalorder %s18, 0
    %p102 = por %p100, %p101
    %p103 = scmp.ne.s32.totalorder %s91, %s92
    %p104 = scmp.eq.s32.totalorder %s19, 1
    %p105 = por %p103, %p104
    %p107 = scmp.ne.s32.totalorder %s92, %s106
    %p108 = scmp.eq.s32.totalorder %s19, 0
    %p109 = por %p107, %p108
    %s111 = sadd.s32 %s110, 1
    %p114 = scmp.eq.s32.totalorder %s13, 1
    %p115 = scmp.ne.s32.totalorder %s110, %s112
    %p116 = scmp.eq.s32.totalorder %s13, 0
    %p117 = por %p115, %p116
    %p118 = scmp.ne.s32.totalorder %s110, %s112
    %p119 = scmp.eq.s32.totalorder %s18, 1
    %p120 = por %p118, %p119
    %p121 = scmp.ne.s32.totalorder %s112, %s113
    %p122 = scmp.eq.s32.totalorder %s18, 0
    %p123 = por %p121, %p122
    %p124 = scmp.ne.s32.totalorder %s112, %s113
    %p125 = scmp.eq.s32.totalorder %s19, 1
    %p126 = por %p124, %p125
    %p128 = scmp.ne.s32.totalorder %s113, %s127
    %p129 = scmp.eq.s32.totalorder %s19, 0
    %p130 = por %p128, %p129
    %s132 = sadd.s32 %s131, 1
    %p135 = scmp.eq.s32.totalorder %s13, 1
    %p136 = scmp.ne.s32.totalorder %s131, %s133
    %p137 = scmp.eq.s32.totalorder %s13, 0
    %p138 = por %p136, %p137
    %p139 = scmp.ne.s32.totalorder %s131, %s133
    %p140 = scmp.eq.s32.totalorder %s18, 1
    %p141 = por %p139, %p140
    %p142 = scmp.ne.s32.totalorder %s133, %s134
    %p143 = scmp.eq.s32.totalorder %s18, 0
    %p144 = por %p142, %p143
    %p145 = scmp.ne.s32.totalorder %s133, %s134
    %p146 = scmp.eq.s32.totalorder %s19, 1
    %p147 = por %p145, %p146
    %p149 = scmp.ne.s32.totalorder %s134, %s148
    %p150 = scmp.eq.s32.totalorder %s19, 0
    %p151 = por %p149, %p150
    %s153 = sadd.s32 %s152, 1
    %p156 = scmp.eq.s32.totalorder %s13, 1
    %p157 = scmp.ne.s32.totalorder %s152, %s154
    %p158 = scmp.eq.s32.totalorder %s13, 0
    %p159 = por %p157, %p158
    %p160 = scmp.ne.s32.totalorder %s152, %s154
    %p161 = scmp.eq.s32.totalorder %s18, 1
    %p162 = por %p160, %p161
    %p163 = scmp.ne.s32.totalorder %s154, %s155
    %p164 = scmp.eq.s32.totalorder %s18, 0
    %p165 = por %p163, %p164
    %p166 = scmp.ne.s32.totalorder %s154, %s155
    %p167 = scmp.eq.s32.totalorder %s19, 1
    %p168 = por %p166, %p167
    %p170 = scmp.ne.s32.totalorder %s155, %s169
    %p171 = scmp.eq.s32.totalorder %s19, 0
    %p172 = por %p170, %p171
    %s173 = ssub.s32 %s13, %s20
    %p174 = scmp.eq.s32.totalorder %s173, 0
    %s176 = sadd.s32 %s175, 1
    %s177 = scalar_select %p174, %s175, %s176
    %p180 = pneg %p174
    %p181 = scmp.eq.s32.totalorder %s13, 1
    %p182 = por %p180, %p181
    %p183 = scmp.ne.s32.totalorder %s175, %s178
    %p184 = scmp.eq.s32.totalorder %s13, 0
    %p185 = por %p183, %p184
    %p186 = scmp.ne.s32.totalorder %s175, %s178
    %p187 = scmp.eq.s32.totalorder %s18, 1
    %p188 = por %p186, %p187
    %p189 = scmp.ne.s32.totalorder %s178, %s179
    %p190 = scmp.eq.s32.totalorder %s18, 0
    %p191 = por %p189, %p190
    %p192 = scmp.ne.s32.totalorder %s178, %s179
    %p193 = scmp.eq.s32.totalorder %s19, 1
    %p194 = por %p192, %p193
    %p196 = scmp.ne.s32.totalorder %s179, %s195
    %p197 = scmp.eq.s32.totalorder %s19, 0
    %p198 = por %p196, %p197
    %p199 = scmp.le.s32.totalorder 1, %s13
    %p200 = scmp.lt.s32.totalorder %s13, 3
    %p201 = pnand %p199, %p200
    %p202 = pneg %p201
    // Predicated region
    $region9: #{pointnet2_seg_forward.8} parent=5 // pred_check
      _
    $region10: #{pointnet2_seg_forward.8} parent=5 // pred_check_branch
      %204 = sbr.rel (%p201) target = $region12
    $region11: #{pointnet2_seg_forward.8} parent=5 // pred_region
      %s205 = ssub.s32 %s13, 1
      // Predicated region
      $region13: #{pointnet2_seg_forward.8} parent=11 // pred_check
        %p206 = pneg %p60
      $region14: #{pointnet2_seg_forward.8} parent=11 // pred_check_branch
        %208 = sbr.rel (%p206) target = $region16
      $region15: #{pointnet2_seg_forward.8} parent=11 // pred_region
        _
      $region16: #{pointnet2_seg_forward.8} parent=11 // pred_fallthru
        _
      // Predicated region
      $region17: #{pointnet2_seg_forward.8} parent=11 // pred_check
        %p209 = pneg %p81
      $region18: #{pointnet2_seg_forward.8} parent=11 // pred_check_branch
        %211 = sbr.rel (%p209) target = $region20
      $region19: #{pointnet2_seg_forward.8} parent=11 // pred_region
        _
      $region20: #{pointnet2_seg_forward.8} parent=11 // pred_fallthru
        _
      // Predicated region
      $region21: #{pointnet2_seg_forward.8} parent=11 // pred_check
        %p212 = pneg %p102
      $region22: #{pointnet2_seg_forward.8} parent=11 // pred_check_branch
        %214 = sbr.rel (%p212) target = $region24
      $region23: #{pointnet2_seg_forward.8} parent=11 // pred_region
        _
      $region24: #{pointnet2_seg_forward.8} parent=11 // pred_fallthru
        _
      // Predicated region
      $region25: #{pointnet2_seg_forward.8} parent=11 // pred_check
        %p215 = pneg %p123
      $region26: #{pointnet2_seg_forward.8} parent=11 // pred_check_branch
        %217 = sbr.rel (%p215) target = $region28
      $region27: #{pointnet2_seg_forward.8} parent=11 // pred_region
        _
      $region28: #{pointnet2_seg_forward.8} parent=11 // pred_fallthru
        _
      // Predicated region
      $region29: #{pointnet2_seg_forward.8} parent=11 // pred_check
        %p218 = pneg %p144
      $region30: #{pointnet2_seg_forward.8} parent=11 // pred_check_branch
        %220 = sbr.rel (%p218) target = $region32
      $region31: #{pointnet2_seg_forward.8} parent=11 // pred_region
        _
      $region32: #{pointnet2_seg_forward.8} parent=11 // pred_fallthru
        _
      // Predicated region
      $region33: #{pointnet2_seg_forward.8} parent=11 // pred_check
        %p221 = pneg %p165
      $region34: #{pointnet2_seg_forward.8} parent=11 // pred_check_branch
        %223 = sbr.rel (%p221) target = $region36
      $region35: #{pointnet2_seg_forward.8} parent=11 // pred_region
        _
      $region36: #{pointnet2_seg_forward.8} parent=11 // pred_fallthru
        _
    $region12: #{pointnet2_seg_forward.8} parent=5 // pred_fallthru
      _
    %p224 = scmp.lt.s32.totalorder %s13, 2
    // Predicated region
    $region37: #{pointnet2_seg_forward.8} parent=5 // pred_check
      %p225 = pneg %p224
    $region38: #{pointnet2_seg_forward.8} parent=5 // pred_check_branch
      %227 = sbr.rel (%p225) target = $region40
    $region39: #{pointnet2_seg_forward.8} parent=5 // pred_region
      // Predicated region
      $region41: #{pointnet2_seg_forward.8} parent=39 // pred_check
        %p228 = pneg %p33
      $region42: #{pointnet2_seg_forward.8} parent=39 // pred_check_branch
        %230 = sbr.rel (%p228) target = $region44
      $region43: #{pointnet2_seg_forward.8} parent=39 // pred_region
        %p231 = scmp.lt.s32.totalorder %s13, 1
        %s232 = scalar_select %p231, %s13, 1
        %s233 = smul.addr %s232, 32
        %s234 = smul.addr %s233, 8
        %s235 = scalar_lea.vmem %s0, %s234
      $region44: #{pointnet2_seg_forward.8} parent=39 // pred_fallthru
        _
    $region40: #{pointnet2_seg_forward.8} parent=5 // pred_fallthru
      _
    %p236 = scmp.le.s32.totalorder 1, %s13
    %p237 = scmp.lt.s32.totalorder %s13, 3
    %p238 = pnand %p236, %p237
    %p239 = pneg %p238
    // Predicated region
    $region45: #{pointnet2_seg_forward.8} parent=5 // pred_check
      _
    $region46: #{pointnet2_seg_forward.8} parent=5 // pred_check_branch
      %241 = sbr.rel (%p238) target = $region48
    $region47: #{pointnet2_seg_forward.8} parent=5 // pred_region
      %s242 = ssub.s32 %s13, 1
      %p243 = scmp.lt.s32.totalorder %s18, 1
      %s244 = scalar_select %p243, %s18, 1
      %s245 = smul.addr %s244, 32
      %s246 = smul.addr %s245, 8
      %s247 = scalar_lea.vmem %s0, %s246
      %p248 = pneg %p39
      %p249 = pneg %p36
      %p250 = pneg %p60
      %p251 = pneg %p57
      %p252 = pneg %p81
      %p253 = pneg %p78
      %p254 = pneg %p102
      %p255 = pneg %p99
      %p256 = pneg %p123
      %p257 = pneg %p120
      %p258 = pneg %p144
      %p259 = pneg %p141
      %p260 = pneg %p165
      %p261 = pneg %p162
      %p262 = pneg %p191
      %p263 = pneg %p188
      %p264 = scmp.lt.s32.totalorder %s18, 1
      %s265 = scalar_select %p264, %s18, 1
      %s266 = smul.addr %s265, 4
      %s267 = smul.addr %s266, 8
      %s268 = scalar_lea.vmem %s7, %s267
      %p269 = scmp.lt.s32.totalorder %s18, 1
      %s270 = scalar_select %p269, %s18, 1
      %s271 = smul.addr %s270, 32
      %s272 = smul.addr %s271, 8
      %s273 = scalar_lea.vmem %s0, %s272
      %p274 = scmp.lt.s32.totalorder %s18, 1
      %s275 = scalar_select %p274, %s18, 1
      %s276 = smul.addr %s275, 4
      %s277 = smul.addr %s276, 8
      %s278 = scalar_lea.vmem %s7, %s277
      %v280 = vld [vmem:[%s273] sm:$0xff]
      %v281 = vld [vmem:[%s273 + $0x8] sm:$0xff]
      %v282 = vld [vmem:[%s273 + $0x10] sm:$0xff]
      %v283 = vld [vmem:[%s273 + $0x18] sm:$0xff]
      %v284 = vld [vmem:[%s273 + $0x20] sm:$0xff]
      %v285 = vld [vmem:[%s273 + $0x28] sm:$0xff]
      %v286 = vld [vmem:[%s273 + $0x30] sm:$0xff]
      %v287 = vld [vmem:[%s273 + $0x38] sm:$0xff]
      %v288 = vld [vmem:[%s273 + $0x40] sm:$0xff]
      %v289 = vld [vmem:[%s273 + $0x48] sm:$0xff]
      %v290 = vld [vmem:[%s273 + $0x50] sm:$0xff]
      %v291 = vld [vmem:[%s273 + $0x58] sm:$0xff]
      %v292 = vld [vmem:[%s273 + $0x60] sm:$0xff]
      %v293 = vld [vmem:[%s273 + $0x68] sm:$0xff]
      %v294 = vld [vmem:[%s273 + $0x70] sm:$0xff]
      %v295 = vld [vmem:[%s273 + $0x78] sm:$0xff]
      %v296 = vld [vmem:[%s273 + $0x80] sm:$0xff]
      %v297 = vld [vmem:[%s273 + $0x88] sm:$0xff]
      %v298 = vld [vmem:[%s273 + $0x90] sm:$0xff]
      %v299 = vld [vmem:[%s273 + $0x98] sm:$0xff]
      %v300 = vld [vmem:[%s273 + $0xa0] sm:$0xff]
      %v301 = vld [vmem:[%s273 + $0xa8] sm:$0xff]
      %v302 = vld [vmem:[%s273 + $0xb0] sm:$0xff]
      %v303 = vld [vmem:[%s273 + $0xb8] sm:$0xff]
      %v304 = vld [vmem:[%s273 + $0xc0] sm:$0xff]
      %v305 = vld [vmem:[%s273 + $0xc8] sm:$0xff]
      %v306 = vld [vmem:[%s273 + $0xd0] sm:$0xff]
      %v307 = vld [vmem:[%s273 + $0xd8] sm:$0xff]
      %v308 = vld [vmem:[%s273 + $0xe0] sm:$0xff]
      %v309 = vld [vmem:[%s273 + $0xe8] sm:$0xff]
      %v310 = vld [vmem:[%s273 + $0xf0] sm:$0xff]
      %v311 = vld [vmem:[%s273 + $0xf8] sm:$0xff]
      %v312 = vld [vmem:[%s1] sm:$0xf]
      %v313 = vld [vmem:[%s1 + $0x4] sm:$0xf]
      %v314 = vld [vmem:[%s1 + $0x8] sm:$0xf]
      %v315 = vld [vmem:[%s1 + $0xc] sm:$0xf]
      %v316 = vld [vmem:[%s1 + $0x10] sm:$0xf]
      %v317 = vld [vmem:[%s1 + $0x14] sm:$0xf]
      %v318 = vld [vmem:[%s1 + $0x18] sm:$0xf]
      %v319 = vld [vmem:[%s1 + $0x1c] sm:$0xf]
      %v320 = vld [vmem:[%s1 + $0x20] sm:$0xf]
      %v321 = vld [vmem:[%s1 + $0x24] sm:$0xf]
      %v322 = vld [vmem:[%s1 + $0x28] sm:$0xf]
      %v323 = vld [vmem:[%s1 + $0x2c] sm:$0xf]
      %v324 = vld [vmem:[%s1 + $0x30] sm:$0xf]
      %v325 = vld [vmem:[%s1 + $0x34] sm:$0xf]
      %v326 = vld [vmem:[%s1 + $0x38] sm:$0xf]
      %v327 = vld [vmem:[%s1 + $0x3c] sm:$0xf]
      %v328 = vld [vmem:[%s2] sm:$0x1]
      %v329 = vpack.c.bf16 %v281, %v280
      %v330 = vpack.c.bf16 %v283, %v282
      %v331 = vpack.c.bf16 %v285, %v284
      %v332 = vpack.c.bf16 %v287, %v286
      %v333 = vpack.c.bf16 %v289, %v288
      %v334 = vpack.c.bf16 %v291, %v290
      %v335 = vpack.c.bf16 %v293, %v292
      %v336 = vpack.c.bf16 %v295, %v294
      %v337 = vpack.c.bf16 %v297, %v296
      %v338 = vpack.c.bf16 %v299, %v298
      %v339 = vpack.c.bf16 %v301, %v300
      %v340 = vpack.c.bf16 %v303, %v302
      %v341 = vpack.c.bf16 %v305, %v304
      %v342 = vpack.c.bf16 %v307, %v306
      %v343 = vpack.c.bf16 %v309, %v308
      %v344 = vpack.c.bf16 %v311, %v310
      %v346 = vlaneseq
      %v347 = vshrl.u32 %v346, 7
      %v348 = vsub.s32 0, %v347
      %v349 = vrot.slane %v328, %v348
      %v367 = vunpack.c.l.b16 %v312
      %v368 = vunpack.c.l.b16 %v313
      %v369 = vunpack.c.l.b16 %v314
      %v370 = vunpack.c.l.b16 %v315
      %v371 = vunpack.c.l.b16 %v316
      %v372 = vunpack.c.l.b16 %v317
      %v373 = vunpack.c.l.b16 %v318
      %v374 = vunpack.c.l.b16 %v319
      %v375 = vunpack.c.l.b16 %v320
      %v376 = vunpack.c.l.b16 %v321
      %v377 = vunpack.c.l.b16 %v322
      %v378 = vunpack.c.l.b16 %v323
      %v379 = vunpack.c.l.b16 %v324
      %v380 = vunpack.c.l.b16 %v325
      %v381 = vunpack.c.l.b16 %v326
      %v382 = vunpack.c.l.b16 %v327
      %v383 = vpack.c.b16 %v368, %v367
      %v384 = vpack.c.b16 %v370, %v369
      %v385 = vpack.c.b16 %v372, %v371
      %v386 = vpack.c.b16 %v374, %v373
      %v387 = vpack.c.b16 %v376, %v375
      %v388 = vpack.c.b16 %v378, %v377
      %v389 = vpack.c.b16 %v380, %v379
      %v390 = vpack.c.b16 %v382, %v381
      %399 = vmatprep.subr.bf16.mxu0 0
      %400 = vmatpush1.bf16.msra.mxu0 %v383
      %401 = vmatprep.subr.bf16.mxu0 0
      %402 = vmatpush1.bf16.msra.mxu0 %v384
      %403 = vmatprep.subr.bf16.mxu0 0
      %404 = vmatpush1.bf16.msra.mxu0 %v385
      %405 = vmatprep.subr.bf16.mxu0 0
      %406 = vmatpush1.bf16.msra.mxu0 %v386
      %407 = vmatprep.subr.bf16.mxu0 0
      %408 = vmatpush1.bf16.msra.mxu0 %v387
      %409 = vmatprep.subr.bf16.mxu0 0
      %410 = vmatpush1.bf16.msra.mxu0 %v388
      %411 = vmatprep.subr.bf16.mxu0 0
      %412 = vmatpush1.bf16.msra.mxu0 %v389
      %413 = vmatprep.subr.bf16.mxu0 0
      %414 = vmatpush1.bf16.msra.mxu0 %v390
      %415 = vmatprep.subr.bf16.mxu0 0
      %416 = vmatpush1.bf16.msra.mxu0 0
      %417 = vmatprep.subr.bf16.mxu0 0
      %418 = vmatpush1.bf16.msra.mxu0 0
      %419 = vmatprep.subr.bf16.mxu0 0
      %420 = vmatpush1.bf16.msra.mxu0 0
      %421 = vmatprep.subr.bf16.mxu0 0
      %422 = vmatpush1.bf16.msra.mxu0 0
      %423 = vmatprep.subr.bf16.mxu0 0
      %424 = vmatpush1.bf16.msra.mxu0 0
      %425 = vmatprep.subr.bf16.mxu0 0
      %426 = vmatpush1.bf16.msra.mxu0 0
      %427 = vmatprep.subr.bf16.mxu0 0
      %428 = vmatpush1.bf16.msra.mxu0 0
      %429 = vmatprep.subr.bf16.mxu0 0
      %430 = vmatpush1.bf16.msra.mxu0 0
      %431 = vmatprep.mubr.bf16.mxu0 0
      %432 = vmatmul.mubr.bf16.gmra.mrb[0].mxu0 %v329
      %v433 = vpop.f32.mrb[0].mxu0
      %v434 = vadd.f32 %v349, %v433
      %v435 = vpop.f32.mrb[0].mxu0
      %v436 = vpop.f32.mrb[0].mxu0
      %v437 = vadd.f32 %v349, %v436
      %v438 = vpop.f32.mrb[0].mxu0
      %439 = vmatprep.mubr.bf16.mxu0 0
      %440 = vmatmul.mubr.bf16.gmra.mrb[0].mxu0 %v330
      %v441 = vpop.f32.mrb[0].mxu0
      %v442 = vadd.f32 %v349, %v441
      %v443 = vpop.f32.mrb[0].mxu0
      %v444 = vpop.f32.mrb[0].mxu0
      %v445 = vadd.f32 %v349, %v444
      %v446 = vpop.f32.mrb[0].mxu0
      %447 = vmatprep.mubr.bf16.mxu0 0
      %448 = vmatmul.mubr.bf16.gmra.mrb[0].mxu0 %v331
      %v449 = vpop.f32.mrb[0].mxu0
      %v450 = vadd.f32 %v349, %v449
      %v451 = vpop.f32.mrb[0].mxu0
      %v452 = vpop.f32.mrb[0].mxu0
      %v453 = vadd.f32 %v349, %v452
      %v454 = vpop.f32.mrb[0].mxu0
      %455 = vmatprep.mubr.bf16.mxu0 0
      %456 = vmatmul.mubr.bf16.gmra.mrb[0].mxu0 %v332
      %v457 = vpop.f32.mrb[0].mxu0
      %v458 = vadd.f32 %v349, %v457
      %v459 = vpop.f32.mrb[0].mxu0
      %v460 = vpop.f32.mrb[0].mxu0
      %v461 = vadd.f32 %v349, %v460
      %v462 = vpop.f32.mrb[0].mxu0
      %463 = vmatprep.mubr.bf16.mxu0 0
      %464 = vmatmul.mubr.bf16.gmra.mrb[0].mxu0 %v333
      %v465 = vpop.f32.mrb[0].mxu0
      %v466 = vadd.f32 %v349, %v465
      %v467 = vpop.f32.mrb[0].mxu0
      %v468 = vpop.f32.mrb[0].mxu0
      %v469 = vadd.f32 %v349, %v468
      %v470 = vpop.f32.mrb[0].mxu0
      %471 = vmatprep.mubr.bf16.mxu0 0
      %472 = vmatmul.mubr.bf16.gmra.mrb[0].mxu0 %v334
      %v473 = vpop.f32.mrb[0].mxu0
      %v474 = vadd.f32 %v349, %v473
      %v475 = vpop.f32.mrb[0].mxu0
      %v476 = vpop.f32.mrb[0].mxu0
      %v477 = vadd.f32 %v349, %v476
      %v478 = vpop.f32.mrb[0].mxu0
      %479 = vmatprep.mubr.bf16.mxu0 0
      %480 = vmatmul.mubr.bf16.gmra.mrb[0].mxu0 %v335
      %v481 = vpop.f32.mrb[0].mxu0
      %v482 = vadd.f32 %v349, %v481
      %v483 = vpop.f32.mrb[0].mxu0
      %v484 = vpop.f32.mrb[0].mxu0
      %v485 = vadd.f32 %v349, %v484
      %v486 = vpop.f32.mrb[0].mxu0
      %487 = vmatprep.mubr.bf16.mxu0 0
      %488 = vmatmul.mubr.bf16.gmra.mrb[0].mxu0 %v336
      %v489 = vpop.f32.mrb[0].mxu0
      %v490 = vadd.f32 %v349, %v489
      %v491 = vpop.f32.mrb[0].mxu0
      %v492 = vpop.f32.mrb[0].mxu0
      %v493 = vadd.f32 %v349, %v492
      %v494 = vpop.f32.mrb[0].mxu0
      %495 = vmatprep.mubr.bf16.mxu0 0
      %496 = vmatmul.mubr.bf16.gmra.mrb[0].mxu0 %v337
      %v497 = vpop.f32.mrb[0].mxu0
      %v498 = vadd.f32 %v349, %v497
      %v499 = vpop.f32.mrb[0].mxu0
      %v500 = vpop.f32.mrb[0].mxu0
      %v501 = vadd.f32 %v349, %v500
      %v502 = vpop.f32.mrb[0].mxu0
      %503 = vmatprep.mubr.bf16.mxu0 0
      %504 = vmatmul.mubr.bf16.gmra.mrb[0].mxu0 %v338
      %v505 = vpop.f32.mrb[0].mxu0
      %v506 = vadd.f32 %v349, %v505
      %v507 = vpop.f32.mrb[0].mxu0
      %v508 = vpop.f32.mrb[0].mxu0
      %v509 = vadd.f32 %v349, %v508
      %v510 = vpop.f32.mrb[0].mxu0
      %511 = vmatprep.mubr.bf16.mxu0 0
      %512 = vmatmul.mubr.bf16.gmra.mrb[0].mxu0 %v339
      %v513 = vpop.f32.mrb[0].mxu0
      %v514 = vadd.f32 %v349, %v513
      %v515 = vpop.f32.mrb[0].mxu0
      %v516 = vpop.f32.mrb[0].mxu0
      %v517 = vadd.f32 %v349, %v516
      %v518 = vpop.f32.mrb[0].mxu0
      %519 = vmatprep.mubr.bf16.mxu0 0
      %520 = vmatmul.mubr.bf16.gmra.mrb[0].mxu0 %v340
      %v521 = vpop.f32.mrb[0].mxu0
      %v522 = vadd.f32 %v349, %v521
      %v523 = vpop.f32.mrb[0].mxu0
      %v524 = vpop.f32.mrb[0].mxu0
      %v525 = vadd.f32 %v349, %v524
      %v526 = vpop.f32.mrb[0].mxu0
      %527 = vmatprep.mubr.bf16.mxu0 0
      %528 = vmatmul.mubr.bf16.gmra.mrb[0].mxu0 %v341
      %v529 = vpop.f32.mrb[0].mxu0
      %v530 = vadd.f32 %v349, %v529
      %v531 = vpop.f32.mrb[0].mxu0
      %v532 = vpop.f32.mrb[0].mxu0
      %v533 = vadd.f32 %v349, %v532
      %v534 = vpop.f32.mrb[0].mxu0
      %535 = vmatprep.mubr.bf16.mxu0 0
      %536 = vmatmul.mubr.bf16.gmra.mrb[0].mxu0 %v342
      %v537 = vpop.f32.mrb[0].mxu0
      %v538 = vadd.f32 %v349, %v537
      %v539 = vpop.f32.mrb[0].mxu0
      %v540 = vpop.f32.mrb[0].mxu0
      %v541 = vadd.f32 %v349, %v540
      %v542 = vpop.f32.mrb[0].mxu0
      %543 = vmatprep.mubr.bf16.mxu0 0
      %544 = vmatmul.mubr.bf16.gmra.mrb[0].mxu0 %v343
      %v545 = vpop.f32.mrb[0].mxu0
      %v546 = vadd.f32 %v349, %v545
      %v547 = vpop.f32.mrb[0].mxu0
      %v548 = vpop.f32.mrb[0].mxu0
      %v549 = vadd.f32 %v349, %v548
      %v550 = vpop.f32.mrb[0].mxu0
      %551 = vmatprep.mubr.bf16.mxu0 0
      %552 = vmatmul.mubr.bf16.gmra.mrb[0].mxu0 %v344
      %v553 = vpop.f32.mrb[0].mxu0
      %v554 = vadd.f32 %v349, %v553
      %v555 = vpop.f32.mrb[0].mxu0
      %v556 = vpop.f32.mrb[0].mxu0
      %v557 = vadd.f32 %v349, %v556
      %v558 = vpop.f32.mrb[0].mxu0
      %559 = vdwg.mxu0
      %v560 = vmax.f32 %v434, 0.0
      %v561 = vmax.f32 %v437, 0.0
      %v562 = vmax.f32 %v442, 0.0
      %v563 = vmax.f32 %v445, 0.0
      %v564 = vmax.f32 %v450, 0.0
      %v565 = vmax.f32 %v453, 0.0
      %v566 = vmax.f32 %v458, 0.0
      %v567 = vmax.f32 %v461, 0.0
      %v568 = vmax.f32 %v466, 0.0
      %v569 = vmax.f32 %v469, 0.0
      %v570 = vmax.f32 %v474, 0.0
      %v571 = vmax.f32 %v477, 0.0
      %v572 = vmax.f32 %v482, 0.0
      %v573 = vmax.f32 %v485, 0.0
      %v574 = vmax.f32 %v490, 0.0
      %v575 = vmax.f32 %v493, 0.0
      %v576 = vmax.f32 %v498, 0.0
      %v577 = vmax.f32 %v501, 0.0
      %v578 = vmax.f32 %v506, 0.0
      %v579 = vmax.f32 %v509, 0.0
      %v580 = vmax.f32 %v514, 0.0
      %v581 = vmax.f32 %v517, 0.0
      %v582 = vmax.f32 %v522, 0.0
      %v583 = vmax.f32 %v525, 0.0
      %v584 = vmax.f32 %v530, 0.0
      %v585 = vmax.f32 %v533, 0.0
      %v586 = vmax.f32 %v538, 0.0
      %v587 = vmax.f32 %v541, 0.0
      %v588 = vmax.f32 %v546, 0.0
      %v589 = vmax.f32 %v549, 0.0
      %v590 = vmax.f32 %v554, 0.0
      %v591 = vmax.f32 %v557, 0.0
      %v592 = vld [vmem:[%s3] sm:$0xf]
      %v593 = vld [vmem:[%s3 + $0x4] sm:$0xf]
      %v594 = vld [vmem:[%s3 + $0x8] sm:$0xf]
      %v595 = vld [vmem:[%s3 + $0xc] sm:$0xf]
      %v596 = vld [vmem:[%s3 + $0x10] sm:$0xf]
      %v597 = vld [vmem:[%s3 + $0x14] sm:$0xf]
      %v598 = vld [vmem:[%s3 + $0x18] sm:$0xf]
      %v599 = vld [vmem:[%s3 + $0x1c] sm:$0xf]
      %v600 = vld [vmem:[%s3 + $0x20] sm:$0xf]
      %v601 = vld [vmem:[%s3 + $0x24] sm:$0xf]
      %v602 = vld [vmem:[%s3 + $0x28] sm:$0xf]
      %v603 = vld [vmem:[%s3 + $0x2c] sm:$0xf]
      %v604 = vld [vmem:[%s3 + $0x30] sm:$0xf]
      %v605 = vld [vmem:[%s3 + $0x34] sm:$0xf]
      %v606 = vld [vmem:[%s3 + $0x38] sm:$0xf]
      %v607 = vld [vmem:[%s3 + $0x3c] sm:$0xf]
      %v608 = vld [vmem:[%s4] sm:$0x1]
      %v609 = vpack.c.bf16 %v561, %v560
      %v610 = vpack.c.bf16 %v563, %v562
      %v611 = vpack.c.bf16 %v565, %v564
      %v612 = vpack.c.bf16 %v567, %v566
      %v613 = vpack.c.bf16 %v569, %v568
      %v614 = vpack.c.bf16 %v571, %v570
      %v615 = vpack.c.bf16 %v573, %v572
      %v616 = vpack.c.bf16 %v575, %v574
      %v617 = vpack.c.bf16 %v577, %v576
      %v618 = vpack.c.bf16 %v579, %v578
      %v619 = vpack.c.bf16 %v581, %v580
      %v620 = vpack.c.bf16 %v583, %v582
      %v621 = vpack.c.bf16 %v585, %v584
      %v622 = vpack.c.bf16 %v587, %v586
      %v623 = vpack.c.bf16 %v589, %v588
      %v624 = vpack.c.bf16 %v591, %v590
      %v626 = vlaneseq
      %v627 = vshrl.u32 %v626, 7
      %v628 = vsub.s32 0, %v627
      %v629 = vrot.slane %v608, %v628
      %v647 = vunpack.c.l.b16 %v592
      %v648 = vunpack.c.l.b16 %v593
      %v649 = vunpack.c.l.b16 %v594
      %v650 = vunpack.c.l.b16 %v595
      %v651 = vunpack.c.l.b16 %v596
      %v652 = vunpack.c.l.b16 %v597
      %v653 = vunpack.c.l.b16 %v598
      %v654 = vunpack.c.l.b16 %v599
      %v655 = vunpack.c.l.b16 %v600
      %v656 = vunpack.c.l.b16 %v601
      %v657 = vunpack.c.l.b16 %v602
      %v658 = vunpack.c.l.b16 %v603
      %v659 = vunpack.c.l.b16 %v604
      %v660 = vunpack.c.l.b16 %v605
      %v661 = vunpack.c.l.b16 %v606
      %v662 = vunpack.c.l.b16 %v607
      %v663 = vpack.c.b16 %v648, %v647
      %v664 = vpack.c.b16 %v650, %v649
      %v665 = vpack.c.b16 %v652, %v651
      %v666 = vpack.c.b16 %v654, %v653
      %v667 = vpack.c.b16 %v656, %v655
      %v668 = vpack.c.b16 %v658, %v657
      %v669 = vpack.c.b16 %v660, %v659
      %v670 = vpack.c.b16 %v662, %v661
      %679 = vmatprep.subr.bf16.mxu0 0
      %680 = vmatpush1.bf16.msra.mxu0 %v663
      %681 = vmatprep.subr.bf16.mxu0 0
      %682 = vmatpush1.bf16.msra.mxu0 %v664
      %683 = vmatprep.subr.bf16.mxu0 0
      %684 = vmatpush1.bf16.msra.mxu0 %v665
      %685 = vmatprep.subr.bf16.mxu0 0
      %686 = vmatpush1.bf16.msra.mxu0 %v666
      %687 = vmatprep.subr.bf16.mxu0 0
      %688 = vmatpush1.bf16.msra.mxu0 %v667
      %689 = vmatprep.subr.bf16.mxu0 0
      %690 = vmatpush1.bf16.msra.mxu0 %v668
      %691 = vmatprep.subr.bf16.mxu0 0
      %692 = vmatpush1.bf16.msra.mxu0 %v669
      %693 = vmatprep.subr.bf16.mxu0 0
      %694 = vmatpush1.bf16.msra.mxu0 %v670
      %695 = vmatprep.subr.bf16.mxu0 0
      %696 = vmatpush1.bf16.msra.mxu0 0
      %697 = vmatprep.subr.bf16.mxu0 0
      %698 = vmatpush1.bf16.msra.mxu0 0
      %699 = vmatprep.subr.bf16.mxu0 0
      %700 = vmatpush1.bf16.msra.mxu0 0
      %701 = vmatprep.subr.bf16.mxu0 0
      %702 = vmatpush1.bf16.msra.mxu0 0
      %703 = vmatprep.subr.bf16.mxu0 0
      %704 = vmatpush1.bf16.msra.mxu0 0
      %705 = vmatprep.subr.bf16.mxu0 0
      %706 = vmatpush1.bf16.msra.mxu0 0
      %707 = vmatprep.subr.bf16.mxu0 0
      %708 = vmatpush1.bf16.msra.mxu0 0
      %709 = vmatprep.subr.bf16.mxu0 0
      %710 = vmatpush1.bf16.msra.mxu0 0
      %711 = vmatprep.mubr.bf16.mxu0 0
      %712 = vmatmul.mubr.bf16.gmra.mrb[0].mxu0 %v609
      %v713 = vpop.f32.mrb[0].mxu0
      %v714 = vadd.f32 %v629, %v713
      %v715 = vpop.f32.mrb[0].mxu0
      %v716 = vpop.f32.mrb[0].mxu0
      %v717 = vadd.f32 %v629, %v716
      %v718 = vpop.f32.mrb[0].mxu0
      %719 = vmatprep.mubr.bf16.mxu0 0
      %720 = vmatmul.mubr.bf16.gmra.mrb[0].mxu0 %v610
      %v721 = vpop.f32.mrb[0].mxu0
      %v722 = vadd.f32 %v629, %v721
      %v723 = vpop.f32.mrb[0].mxu0
      %v724 = vpop.f32.mrb[0].mxu0
      %v725 = vadd.f32 %v629, %v724
      %v726 = vpop.f32.mrb[0].mxu0
      %727 = vmatprep.mubr.bf16.mxu0 0
      %728 = vmatmul.mubr.bf16.gmra.mrb[0].mxu0 %v611
      %v729 = vpop.f32.mrb[0].mxu0
      %v730 = vadd.f32 %v629, %v729
      %v731 = vpop.f32.mrb[0].mxu0
      %v732 = vpop.f32.mrb[0].mxu0
      %v733 = vadd.f32 %v629, %v732
      %v734 = vpop.f32.mrb[0].mxu0
      %735 = vmatprep.mubr.bf16.mxu0 0
      %736 = vmatmul.mubr.bf16.gmra.mrb[0].mxu0 %v612
      %v737 = vpop.f32.mrb[0].mxu0
      %v738 = vadd.f32 %v629, %v737
      %v739 = vpop.f32.mrb[0].mxu0
      %v740 = vpop.f32.mrb[0].mxu0
      %v741 = vadd.f32 %v629, %v740
      %v742 = vpop.f32.mrb[0].mxu0
      %743 = vmatprep.mubr.bf16.mxu0 0
      %744 = vmatmul.mubr.bf16.gmra.mrb[0].mxu0 %v613
      %v745 = vpop.f32.mrb[0].mxu0
      %v746 = vadd.f32 %v629, %v745
      %v747 = vpop.f32.mrb[0].mxu0
      %v748 = vpop.f32.mrb[0].mxu0
      %v749 = vadd.f32 %v629, %v748
      %v750 = vpop.f32.mrb[0].mxu0
      %751 = vmatprep.mubr.bf16.mxu0 0
      %752 = vmatmul.mubr.bf16.gmra.mrb[0].mxu0 %v614
      %v753 = vpop.f32.mrb[0].mxu0
      %v754 = vadd.f32 %v629, %v753
      %v755 = vpop.f32.mrb[0].mxu0
      %v756 = vpop.f32.mrb[0].mxu0
      %v757 = vadd.f32 %v629, %v756
      %v758 = vpop.f32.mrb[0].mxu0
      %759 = vmatprep.mubr.bf16.mxu0 0
      %760 = vmatmul.mubr.bf16.gmra.mrb[0].mxu0 %v615
      %v761 = vpop.f32.mrb[0].mxu0
      %v762 = vadd.f32 %v629, %v761
      %v763 = vpop.f32.mrb[0].mxu0
      %v764 = vpop.f32.mrb[0].mxu0
      %v765 = vadd.f32 %v629, %v764
      %v766 = vpop.f32.mrb[0].mxu0
      %767 = vmatprep.mubr.bf16.mxu0 0
      %768 = vmatmul.mubr.bf16.gmra.mrb[0].mxu0 %v616
      %v769 = vpop.f32.mrb[0].mxu0
      %v770 = vadd.f32 %v629, %v769
      %v771 = vpop.f32.mrb[0].mxu0
      %v772 = vpop.f32.mrb[0].mxu0
      %v773 = vadd.f32 %v629, %v772
      %v774 = vpop.f32.mrb[0].mxu0
      %775 = vmatprep.mubr.bf16.mxu0 0
      %776 = vmatmul.mubr.bf16.gmra.mrb[0].mxu0 %v617
      %v777 = vpop.f32.mrb[0].mxu0
      %v778 = vadd.f32 %v629, %v777
      %v779 = vpop.f32.mrb[0].mxu0
      %v780 = vpop.f32.mrb[0].mxu0
      %v781 = vadd.f32 %v629, %v780
      %v782 = vpop.f32.mrb[0].mxu0
      %783 = vmatprep.mubr.bf16.mxu0 0
      %784 = vmatmul.mubr.bf16.gmra.mrb[0].mxu0 %v618
      %v785 = vpop.f32.mrb[0].mxu0
      %v786 = vadd.f32 %v629, %v785
      %v787 = vpop.f32.mrb[0].mxu0
      %v788 = vpop.f32.mrb[0].mxu0
      %v789 = vadd.f32 %v629, %v788
      %v790 = vpop.f32.mrb[0].mxu0
      %791 = vmatprep.mubr.bf16.mxu0 0
      %792 = vmatmul.mubr.bf16.gmra.mrb[0].mxu0 %v619
      %v793 = vpop.f32.mrb[0].mxu0
      %v794 = vadd.f32 %v629, %v793
      %v795 = vpop.f32.mrb[0].mxu0
      %v796 = vpop.f32.mrb[0].mxu0
      %v797 = vadd.f32 %v629, %v796
      %v798 = vpop.f32.mrb[0].mxu0
      %799 = vmatprep.mubr.bf16.mxu0 0
      %800 = vmatmul.mubr.bf16.gmra.mrb[0].mxu0 %v620
      %v801 = vpop.f32.mrb[0].mxu0
      %v802 = vadd.f32 %v629, %v801
      %v803 = vpop.f32.mrb[0].mxu0
      %v804 = vpop.f32.mrb[0].mxu0
      %v805 = vadd.f32 %v629, %v804
      %v806 = vpop.f32.mrb[0].mxu0
      %807 = vmatprep.mubr.bf16.mxu0 0
      %808 = vmatmul.mubr.bf16.gmra.mrb[0].mxu0 %v621
      %v809 = vpop.f32.mrb[0].mxu0
      %v810 = vadd.f32 %v629, %v809
      %v811 = vpop.f32.mrb[0].mxu0
      %v812 = vpop.f32.mrb[0].mxu0
      %v813 = vadd.f32 %v629, %v812
      %v814 = vpop.f32.mrb[0].mxu0
      %815 = vmatprep.mubr.bf16.mxu0 0
      %816 = vmatmul.mubr.bf16.gmra.mrb[0].mxu0 %v622
      %v817 = vpop.f32.mrb[0].mxu0
      %v818 = vadd.f32 %v629, %v817
      %v819 = vpop.f32.mrb[0].mxu0
      %v820 = vpop.f32.mrb[0].mxu0
      %v821 = vadd.f32 %v629, %v820
      %v822 = vpop.f32.mrb[0].mxu0
      %823 = vmatprep.mubr.bf16.mxu0 0
      %824 = vmatmul.mubr.bf16.gmra.mrb[0].mxu0 %v623
      %v825 = vpop.f32.mrb[0].mxu0
      %v826 = vadd.f32 %v629, %v825
      %v827 = vpop.f32.mrb[0].mxu0
      %v828 = vpop.f32.mrb[0].mxu0
      %v829 = vadd.f32 %v629, %v828
      %v830 = vpop.f32.mrb[0].mxu0
      %831 = vmatprep.mubr.bf16.mxu0 0
      %832 = vmatmul.mubr.bf16.gmra.mrb[0].mxu0 %v624
      %v833 = vpop.f32.mrb[0].mxu0
      %v834 = vadd.f32 %v629, %v833
      %v835 = vpop.f32.mrb[0].mxu0
      %v836 = vpop.f32.mrb[0].mxu0
      %v837 = vadd.f32 %v629, %v836
      %v838 = vpop.f32.mrb[0].mxu0
      %839 = vdwg.mxu0
      %v840 = vmax.f32 %v714, 0.0
      %v841 = vmax.f32 %v717, 0.0
      %v842 = vmax.f32 %v722, 0.0
      %v843 = vmax.f32 %v725, 0.0
      %v844 = vmax.f32 %v730, 0.0
      %v845 = vmax.f32 %v733, 0.0
      %v846 = vmax.f32 %v738, 0.0
      %v847 = vmax.f32 %v741, 0.0
      %v848 = vmax.f32 %v746, 0.0
      %v849 = vmax.f32 %v749, 0.0
      %v850 = vmax.f32 %v754, 0.0
      %v851 = vmax.f32 %v757, 0.0
      %v852 = vmax.f32 %v762, 0.0
      %v853 = vmax.f32 %v765, 0.0
      %v854 = vmax.f32 %v770, 0.0
      %v855 = vmax.f32 %v773, 0.0
      %v856 = vmax.f32 %v778, 0.0
      %v857 = vmax.f32 %v781, 0.0
      %v858 = vmax.f32 %v786, 0.0
      %v859 = vmax.f32 %v789, 0.0
      %v860 = vmax.f32 %v794, 0.0
      %v861 = vmax.f32 %v797, 0.0
      %v862 = vmax.f32 %v802, 0.0
      %v863 = vmax.f32 %v805, 0.0
      %v864 = vmax.f32 %v810, 0.0
      %v865 = vmax.f32 %v813, 0.0
      %v866 = vmax.f32 %v818, 0.0
      %v867 = vmax.f32 %v821, 0.0
      %v868 = vmax.f32 %v826, 0.0
      %v869 = vmax.f32 %v829, 0.0
      %v870 = vmax.f32 %v834, 0.0
      %v871 = vmax.f32 %v837, 0.0
      %v872 = vld [vmem:[%s5] sm:$0xf]
      %v873 = vld [vmem:[%s5 + $0x4] sm:$0xf]
      %v874 = vld [vmem:[%s5 + $0x8] sm:$0xf]
      %v875 = vld [vmem:[%s5 + $0xc] sm:$0xf]
      %v876 = vld [vmem:[%s5 + $0x10] sm:$0xf]
      %v877 = vld [vmem:[%s5 + $0x14] sm:$0xf]
      %v878 = vld [vmem:[%s5 + $0x18] sm:$0xf]
      %v879 = vld [vmem:[%s5 + $0x1c] sm:$0xf]
      %v880 = vld [vmem:[%s5 + $0x20] sm:$0xf]
      %v881 = vld [vmem:[%s5 + $0x24] sm:$0xf]
      %v882 = vld [vmem:[%s5 + $0x28] sm:$0xf]
      %v883 = vld [vmem:[%s5 + $0x2c] sm:$0xf]
      %v884 = vld [vmem:[%s5 + $0x30] sm:$0xf]
      %v885 = vld [vmem:[%s5 + $0x34] sm:$0xf]
      %v886 = vld [vmem:[%s5 + $0x38] sm:$0xf]
      %v887 = vld [vmem:[%s5 + $0x3c] sm:$0xf]
      %v888 = vld [vmem:[%s6] sm:$0x1]
      %v889 = vpack.c.bf16 %v841, %v840
      %v890 = vpack.c.bf16 %v843, %v842
      %v891 = vpack.c.bf16 %v845, %v844
      %v892 = vpack.c.bf16 %v847, %v846
      %v893 = vpack.c.bf16 %v849, %v848
      %v894 = vpack.c.bf16 %v851, %v850
      %v895 = vpack.c.bf16 %v853, %v852
      %v896 = vpack.c.bf16 %v855, %v854
      %v897 = vpack.c.bf16 %v857, %v856
      %v898 = vpack.c.bf16 %v859, %v858
      %v899 = vpack.c.bf16 %v861, %v860
      %v900 = vpack.c.bf16 %v863, %v862
      %v901 = vpack.c.bf16 %v865, %v864
      %v902 = vpack.c.bf16 %v867, %v866
      %v903 = vpack.c.bf16 %v869, %v868
      %v904 = vpack.c.bf16 %v871, %v870
      %v906 = vlaneseq
      %v907 = vshrl.u32 %v906, 7
      %v908 = vsub.s32 0, %v907
      %v909 = vrot.slane %v888, %v908
      %v927 = vunpack.c.l.b16 %v872
      %v928 = vunpack.c.l.b16 %v873
      %v929 = vunpack.c.l.b16 %v874
      %v930 = vunpack.c.l.b16 %v875
      %v931 = vunpack.c.l.b16 %v876
      %v932 = vunpack.c.l.b16 %v877
      %v933 = vunpack.c.l.b16 %v878
      %v934 = vunpack.c.l.b16 %v879
      %v935 = vunpack.c.l.b16 %v880
      %v936 = vunpack.c.l.b16 %v881
      %v937 = vunpack.c.l.b16 %v882
      %v938 = vunpack.c.l.b16 %v883
      %v939 = vunpack.c.l.b16 %v884
      %v940 = vunpack.c.l.b16 %v885
      %v941 = vunpack.c.l.b16 %v886
      %v942 = vunpack.c.l.b16 %v887
      %v943 = vpack.c.b16 %v928, %v927
      %v944 = vpack.c.b16 %v930, %v929
      %v945 = vpack.c.b16 %v932, %v931
      %v946 = vpack.c.b16 %v934, %v933
      %v947 = vpack.c.b16 %v936, %v935
      %v948 = vpack.c.b16 %v938, %v937
      %v949 = vpack.c.b16 %v940, %v939
      %v950 = vpack.c.b16 %v942, %v941
      %959 = vmatprep.subr.bf16.mxu0 0
      %960 = vmatpush1.bf16.msra.mxu0 %v943
      %961 = vmatprep.subr.bf16.mxu0 0
      %962 = vmatpush1.bf16.msra.mxu0 %v944
      %963 = vmatprep.subr.bf16.mxu0 0
      %964 = vmatpush1.bf16.msra.mxu0 %v945
      %965 = vmatprep.subr.bf16.mxu0 0
      %966 = vmatpush1.bf16.msra.mxu0 %v946
      %967 = vmatprep.subr.bf16.mxu0 0
      %968 = vmatpush1.bf16.msra.mxu0 %v947
      %969 = vmatprep.subr.bf16.mxu0 0
      %970 = vmatpush1.bf16.msra.mxu0 %v948
      %971 = vmatprep.subr.bf16.mxu0 0
      %972 = vmatpush1.bf16.msra.mxu0 %v949
      %973 = vmatprep.subr.bf16.mxu0 0
      %974 = vmatpush1.bf16.msra.mxu0 %v950
      %975 = vmatprep.subr.bf16.mxu0 0
      %976 = vmatpush1.bf16.msra.mxu0 0
      %977 = vmatprep.subr.bf16.mxu0 0
      %978 = vmatpush1.bf16.msra.mxu0 0
      %979 = vmatprep.subr.bf16.mxu0 0
      %980 = vmatpush1.bf16.msra.mxu0 0
      %981 = vmatprep.subr.bf16.mxu0 0
      %982 = vmatpush1.bf16.msra.mxu0 0
      %983 = vmatprep.subr.bf16.mxu0 0
      %984 = vmatpush1.bf16.msra.mxu0 0
      %985 = vmatprep.subr.bf16.mxu0 0
      %986 = vmatpush1.bf16.msra.mxu0 0
      %987 = vmatprep.subr.bf16.mxu0 0
      %988 = vmatpush1.bf16.msra.mxu0 0
      %989 = vmatprep.subr.bf16.mxu0 0
      %990 = vmatpush1.bf16.msra.mxu0 0
      %991 = vmatprep.mubr.bf16.mxu0 0
      %992 = vmatmul.mubr.bf16.gmra.mrb[0].mxu0 %v889
      %v993 = vpop.f32.mrb[0].mxu0
      %v994 = vadd.f32 %v909, %v993
      %v995 = vpop.f32.mrb[0].mxu0
      %v996 = vpop.f32.mrb[0].mxu0
      %v997 = vadd.f32 %v909, %v996
      %v998 = vpop.f32.mrb[0].mxu0
      %999 = vmatprep.mubr.bf16.mxu0 0
      %1000 = vmatmul.mubr.bf16.gmra.mrb[0].mxu0 %v890
      %v1001 = vpop.f32.mrb[0].mxu0
      %v1002 = vadd.f32 %v909, %v1001
      %v1003 = vpop.f32.mrb[0].mxu0
      %v1004 = vpop.f32.mrb[0].mxu0
      %v1005 = vadd.f32 %v909, %v1004
      %v1006 = vpop.f32.mrb[0].mxu0
      %1007 = vmatprep.mubr.bf16.mxu0 0
      %1008 = vmatmul.mubr.bf16.gmra.mrb[0].mxu0 %v891
      %v1009 = vpop.f32.mrb[0].mxu0
      %v1010 = vadd.f32 %v909, %v1009
      %v1011 = vpop.f32.mrb[0].mxu0
      %v1012 = vpop.f32.mrb[0].mxu0
      %v1013 = vadd.f32 %v909, %v1012
      %v1014 = vpop.f32.mrb[0].mxu0
      %1015 = vmatprep.mubr.bf16.mxu0 0
      %1016 = vmatmul.mubr.bf16.gmra.mrb[0].mxu0 %v892
      %v1017 = vpop.f32.mrb[0].mxu0
      %v1018 = vadd.f32 %v909, %v1017
      %v1019 = vpop.f32.mrb[0].mxu0
      %v1020 = vpop.f32.mrb[0].mxu0
      %v1021 = vadd.f32 %v909, %v1020
      %v1022 = vpop.f32.mrb[0].mxu0
      %1023 = vmatprep.mubr.bf16.mxu0 0
      %1024 = vmatmul.mubr.bf16.gmra.mrb[0].mxu0 %v893
      %v1025 = vpop.f32.mrb[0].mxu0
      %v1026 = vadd.f32 %v909, %v1025
      %v1027 = vpop.f32.mrb[0].mxu0
      %v1028 = vpop.f32.mrb[0].mxu0
      %v1029 = vadd.f32 %v909, %v1028
      %v1030 = vpop.f32.mrb[0].mxu0
      %1031 = vmatprep.mubr.bf16.mxu0 0
      %1032 = vmatmul.mubr.bf16.gmra.mrb[0].mxu0 %v894
      %v1033 = vpop.f32.mrb[0].mxu0
      %v1034 = vadd.f32 %v909, %v1033
      %v1035 = vpop.f32.mrb[0].mxu0
      %v1036 = vpop.f32.mrb[0].mxu0
      %v1037 = vadd.f32 %v909, %v1036
      %v1038 = vpop.f32.mrb[0].mxu0
      %1039 = vmatprep.mubr.bf16.mxu0 0
      %1040 = vmatmul.mubr.bf16.gmra.mrb[0].mxu0 %v895
      %v1041 = vpop.f32.mrb[0].mxu0
      %v1042 = vadd.f32 %v909, %v1041
      %v1043 = vpop.f32.mrb[0].mxu0
      %v1044 = vpop.f32.mrb[0].mxu0
      %v1045 = vadd.f32 %v909, %v1044
      %v1046 = vpop.f32.mrb[0].mxu0
      %1047 = vmatprep.mubr.bf16.mxu0 0
      %1048 = vmatmul.mubr.bf16.gmra.mrb[0].mxu0 %v896
      %v1049 = vpop.f32.mrb[0].mxu0
      %v1050 = vadd.f32 %v909, %v1049
      %v1051 = vpop.f32.mrb[0].mxu0
      %v1052 = vpop.f32.mrb[0].mxu0
      %v1053 = vadd.f32 %v909, %v1052
      %v1054 = vpop.f32.mrb[0].mxu0
      %1055 = vmatprep.mubr.bf16.mxu0 0
      %1056 = vmatmul.mubr.bf16.gmra.mrb[0].mxu0 %v897
      %v1057 = vpop.f32.mrb[0].mxu0
      %v1058 = vadd.f32 %v909, %v1057
      %v1059 = vpop.f32.mrb[0].mxu0
      %v1060 = vpop.f32.mrb[0].mxu0
      %v1061 = vadd.f32 %v909, %v1060
      %v1062 = vpop.f32.mrb[0].mxu0
      %1063 = vmatprep.mubr.bf16.mxu0 0
      %1064 = vmatmul.mubr.bf16.gmra.mrb[0].mxu0 %v898
      %v1065 = vpop.f32.mrb[0].mxu0
      %v1066 = vadd.f32 %v909, %v1065
      %v1067 = vpop.f32.mrb[0].mxu0
      %v1068 = vpop.f32.mrb[0].mxu0
      %v1069 = vadd.f32 %v909, %v1068
      %v1070 = vpop.f32.mrb[0].mxu0
      %1071 = vmatprep.mubr.bf16.mxu0 0
      %1072 = vmatmul.mubr.bf16.gmra.mrb[0].mxu0 %v899
      %v1073 = vpop.f32.mrb[0].mxu0
      %v1074 = vadd.f32 %v909, %v1073
      %v1075 = vpop.f32.mrb[0].mxu0
      %v1076 = vpop.f32.mrb[0].mxu0
      %v1077 = vadd.f32 %v909, %v1076
      %v1078 = vpop.f32.mrb[0].mxu0
      %1079 = vmatprep.mubr.bf16.mxu0 0
      %1080 = vmatmul.mubr.bf16.gmra.mrb[0].mxu0 %v900
      %v1081 = vpop.f32.mrb[0].mxu0
      %v1082 = vadd.f32 %v909, %v1081
      %v1083 = vpop.f32.mrb[0].mxu0
      %v1084 = vpop.f32.mrb[0].mxu0
      %v1085 = vadd.f32 %v909, %v1084
      %v1086 = vpop.f32.mrb[0].mxu0
      %1087 = vmatprep.mubr.bf16.mxu0 0
      %1088 = vmatmul.mubr.bf16.gmra.mrb[0].mxu0 %v901
      %v1089 = vpop.f32.mrb[0].mxu0
      %v1090 = vadd.f32 %v909, %v1089
      %v1091 = vpop.f32.mrb[0].mxu0
      %v1092 = vpop.f32.mrb[0].mxu0
      %v1093 = vadd.f32 %v909, %v1092
      %v1094 = vpop.f32.mrb[0].mxu0
      %1095 = vmatprep.mubr.bf16.mxu0 0
      %1096 = vmatmul.mubr.bf16.gmra.mrb[0].mxu0 %v902
      %v1097 = vpop.f32.mrb[0].mxu0
      %v1098 = vadd.f32 %v909, %v1097
      %v1099 = vpop.f32.mrb[0].mxu0
      %v1100 = vpop.f32.mrb[0].mxu0
      %v1101 = vadd.f32 %v909, %v1100
      %v1102 = vpop.f32.mrb[0].mxu0
      %1103 = vmatprep.mubr.bf16.mxu0 0
      %1104 = vmatmul.mubr.bf16.gmra.mrb[0].mxu0 %v903
      %v1105 = vpop.f32.mrb[0].mxu0
      %v1106 = vadd.f32 %v909, %v1105
      %v1107 = vpop.f32.mrb[0].mxu0
      %v1108 = vpop.f32.mrb[0].mxu0
      %v1109 = vadd.f32 %v909, %v1108
      %v1110 = vpop.f32.mrb[0].mxu0
      %1111 = vmatprep.mubr.bf16.mxu0 0
      %1112 = vmatmul.mubr.bf16.gmra.mrb[0].mxu0 %v904
      %v1113 = vpop.f32.mrb[0].mxu0
      %v1114 = vadd.f32 %v909, %v1113
      %v1115 = vpop.f32.mrb[0].mxu0
      %v1116 = vpop.f32.mrb[0].mxu0
      %v1117 = vadd.f32 %v909, %v1116
      %v1118 = vpop.f32.mrb[0].mxu0
      %1119 = vdwg.mxu0
      %v1120 = vmax.f32 %v994, 0.0
      %v1121 = vmax.f32 %v997, 0.0
      %v1122 = vmax.f32 %v1002, 0.0
      %v1123 = vmax.f32 %v1005, 0.0
      %v1124 = vmax.f32 %v1010, 0.0
      %v1125 = vmax.f32 %v1013, 0.0
      %v1126 = vmax.f32 %v1018, 0.0
      %v1127 = vmax.f32 %v1021, 0.0
      %v1128 = vmax.f32 %v1026, 0.0
      %v1129 = vmax.f32 %v1029, 0.0
      %v1130 = vmax.f32 %v1034, 0.0
      %v1131 = vmax.f32 %v1037, 0.0
      %v1132 = vmax.f32 %v1042, 0.0
      %v1133 = vmax.f32 %v1045, 0.0
      %v1134 = vmax.f32 %v1050, 0.0
      %v1135 = vmax.f32 %v1053, 0.0
      %v1136 = vmax.f32 %v1058, 0.0
      %v1137 = vmax.f32 %v1061, 0.0
      %v1138 = vmax.f32 %v1066, 0.0
      %v1139 = vmax.f32 %v1069, 0.0
      %v1140 = vmax.f32 %v1074, 0.0
      %v1141 = vmax.f32 %v1077, 0.0
      %v1142 = vmax.f32 %v1082, 0.0
      %v1143 = vmax.f32 %v1085, 0.0
      %v1144 = vmax.f32 %v1090, 0.0
      %v1145 = vmax.f32 %v1093, 0.0
      %v1146 = vmax.f32 %v1098, 0.0
      %v1147 = vmax.f32 %v1101, 0.0
      %v1148 = vmax.f32 %v1106, 0.0
      %v1149 = vmax.f32 %v1109, 0.0
      %v1150 = vmax.f32 %v1114, 0.0
      %v1151 = vmax.f32 %v1117, 0.0
      %v1152 = vrot.slane %v1120, 4
      %v1153 = vmax.f32 %v1120, %v1152
      %v1154 = vrot.slane %v1153, 2
      %v1155 = vmax.f32 %v1153, %v1154
      %v1156 = vrot.slane %v1155, 1
      %v1157 = vmax.f32 %v1155, %v1156
      %v1158 = vrot.slane %v1121, 4
      %v1159 = vmax.f32 %v1121, %v1158
      %v1160 = vrot.slane %v1159, 2
      %v1161 = vmax.f32 %v1159, %v1160
      %v1162 = vrot.slane %v1161, 1
      %v1163 = vmax.f32 %v1161, %v1162
      %v1164 = vrot.slane %v1122, 4
      %v1165 = vmax.f32 %v1122, %v1164
      %v1166 = vrot.slane %v1165, 2
      %v1167 = vmax.f32 %v1165, %v1166
      %v1168 = vrot.slane %v1167, 1
      %v1169 = vmax.f32 %v1167, %v1168
      %v1170 = vrot.slane %v1123, 4
      %v1171 = vmax.f32 %v1123, %v1170
      %v1172 = vrot.slane %v1171, 2
      %v1173 = vmax.f32 %v1171, %v1172
      %v1174 = vrot.slane %v1173, 1
      %v1175 = vmax.f32 %v1173, %v1174
      %v1176 = vrot.slane %v1124, 4
      %v1177 = vmax.f32 %v1124, %v1176
      %v1178 = vrot.slane %v1177, 2
      %v1179 = vmax.f32 %v1177, %v1178
      %v1180 = vrot.slane %v1179, 1
      %v1181 = vmax.f32 %v1179, %v1180
      %v1182 = vrot.slane %v1125, 4
      %v1183 = vmax.f32 %v1125, %v1182
      %v1184 = vrot.slane %v1183, 2
      %v1185 = vmax.f32 %v1183, %v1184
      %v1186 = vrot.slane %v1185, 1
      %v1187 = vmax.f32 %v1185, %v1186
      %v1188 = vrot.slane %v1126, 4
      %v1189 = vmax.f32 %v1126, %v1188
      %v1190 = vrot.slane %v1189, 2
      %v1191 = vmax.f32 %v1189, %v1190
      %v1192 = vrot.slane %v1191, 1
      %v1193 = vmax.f32 %v1191, %v1192
      %v1194 = vrot.slane %v1127, 4
      %v1195 = vmax.f32 %v1127, %v1194
      %v1196 = vrot.slane %v1195, 2
      %v1197 = vmax.f32 %v1195, %v1196
      %v1198 = vrot.slane %v1197, 1
      %v1199 = vmax.f32 %v1197, %v1198
      %v1200 = vrot.slane %v1128, 4
      %v1201 = vmax.f32 %v1128, %v1200
      %v1202 = vrot.slane %v1201, 2
      %v1203 = vmax.f32 %v1201, %v1202
      %v1204 = vrot.slane %v1203, 1
      %v1205 = vmax.f32 %v1203, %v1204
      %v1206 = vrot.slane %v1129, 4
      %v1207 = vmax.f32 %v1129, %v1206
      %v1208 = vrot.slane %v1207, 2
      %v1209 = vmax.f32 %v1207, %v1208
      %v1210 = vrot.slane %v1209, 1
      %v1211 = vmax.f32 %v1209, %v1210
      %v1212 = vrot.slane %v1130, 4
      %v1213 = vmax.f32 %v1130, %v1212
      %v1214 = vrot.slane %v1213, 2
      %v1215 = vmax.f32 %v1213, %v1214
      %v1216 = vrot.slane %v1215, 1
      %v1217 = vmax.f32 %v1215, %v1216
      %v1218 = vrot.slane %v1131, 4
      %v1219 = vmax.f32 %v1131, %v1218
      %v1220 = vrot.slane %v1219, 2
      %v1221 = vmax.f32 %v1219, %v1220
      %v1222 = vrot.slane %v1221, 1
      %v1223 = vmax.f32 %v1221, %v1222
      %v1224 = vrot.slane %v1132, 4
      %v1225 = vmax.f32 %v1132, %v1224
      %v1226 = vrot.slane %v1225, 2
      %v1227 = vmax.f32 %v1225, %v1226
      %v1228 = vrot.slane %v1227, 1
      %v1229 = vmax.f32 %v1227, %v1228
      %v1230 = vrot.slane %v1133, 4
      %v1231 = vmax.f32 %v1133, %v1230
      %v1232 = vrot.slane %v1231, 2
      %v1233 = vmax.f32 %v1231, %v1232
      %v1234 = vrot.slane %v1233, 1
      %v1235 = vmax.f32 %v1233, %v1234
      %v1236 = vrot.slane %v1134, 4
      %v1237 = vmax.f32 %v1134, %v1236
      %v1238 = vrot.slane %v1237, 2
      %v1239 = vmax.f32 %v1237, %v1238
      %v1240 = vrot.slane %v1239, 1
      %v1241 = vmax.f32 %v1239, %v1240
      %v1242 = vrot.slane %v1135, 4
      %v1243 = vmax.f32 %v1135, %v1242
      %v1244 = vrot.slane %v1243, 2
      %v1245 = vmax.f32 %v1243, %v1244
      %v1246 = vrot.slane %v1245, 1
      %v1247 = vmax.f32 %v1245, %v1246
      %v1248 = vrot.slane %v1136, 4
      %v1249 = vmax.f32 %v1136, %v1248
      %v1250 = vrot.slane %v1249, 2
      %v1251 = vmax.f32 %v1249, %v1250
      %v1252 = vrot.slane %v1251, 1
      %v1253 = vmax.f32 %v1251, %v1252
      %v1254 = vrot.slane %v1137, 4
      %v1255 = vmax.f32 %v1137, %v1254
      %v1256 = vrot.slane %v1255, 2
      %v1257 = vmax.f32 %v1255, %v1256
      %v1258 = vrot.slane %v1257, 1
      %v1259 = vmax.f32 %v1257, %v1258
      %v1260 = vrot.slane %v1138, 4
      %v1261 = vmax.f32 %v1138, %v1260
      %v1262 = vrot.slane %v1261, 2
      %v1263 = vmax.f32 %v1261, %v1262
      %v1264 = vrot.slane %v1263, 1
      %v1265 = vmax.f32 %v1263, %v1264
      %v1266 = vrot.slane %v1139, 4
      %v1267 = vmax.f32 %v1139, %v1266
      %v1268 = vrot.slane %v1267, 2
      %v1269 = vmax.f32 %v1267, %v1268
      %v1270 = vrot.slane %v1269, 1
      %v1271 = vmax.f32 %v1269, %v1270
      %v1272 = vrot.slane %v1140, 4
      %v1273 = vmax.f32 %v1140, %v1272
      %v1274 = vrot.slane %v1273, 2
      %v1275 = vmax.f32 %v1273, %v1274
      %v1276 = vrot.slane %v1275, 1
      %v1277 = vmax.f32 %v1275, %v1276
      %v1278 = vrot.slane %v1141, 4
      %v1279 = vmax.f32 %v1141, %v1278
      %v1280 = vrot.slane %v1279, 2
      %v1281 = vmax.f32 %v1279, %v1280
      %v1282 = vrot.slane %v1281, 1
      %v1283 = vmax.f32 %v1281, %v1282
      %v1284 = vrot.slane %v1142, 4
      %v1285 = vmax.f32 %v1142, %v1284
      %v1286 = vrot.slane %v1285, 2
      %v1287 = vmax.f32 %v1285, %v1286
      %v1288 = vrot.slane %v1287, 1
      %v1289 = vmax.f32 %v1287, %v1288
      %v1290 = vrot.slane %v1143, 4
      %v1291 = vmax.f32 %v1143, %v1290
      %v1292 = vrot.slane %v1291, 2
      %v1293 = vmax.f32 %v1291, %v1292
      %v1294 = vrot.slane %v1293, 1
      %v1295 = vmax.f32 %v1293, %v1294
      %v1296 = vrot.slane %v1144, 4
      %v1297 = vmax.f32 %v1144, %v1296
      %v1298 = vrot.slane %v1297, 2
      %v1299 = vmax.f32 %v1297, %v1298
      %v1300 = vrot.slane %v1299, 1
      %v1301 = vmax.f32 %v1299, %v1300
      %v1302 = vrot.slane %v1145, 4
      %v1303 = vmax.f32 %v1145, %v1302
      %v1304 = vrot.slane %v1303, 2
      %v1305 = vmax.f32 %v1303, %v1304
      %v1306 = vrot.slane %v1305, 1
      %v1307 = vmax.f32 %v1305, %v1306
      %v1308 = vrot.slane %v1146, 4
      %v1309 = vmax.f32 %v1146, %v1308
      %v1310 = vrot.slane %v1309, 2
      %v1311 = vmax.f32 %v1309, %v1310
      %v1312 = vrot.slane %v1311, 1
      %v1313 = vmax.f32 %v1311, %v1312
      %v1314 = vrot.slane %v1147, 4
      %v1315 = vmax.f32 %v1147, %v1314
      %v1316 = vrot.slane %v1315, 2
      %v1317 = vmax.f32 %v1315, %v1316
      %v1318 = vrot.slane %v1317, 1
      %v1319 = vmax.f32 %v1317, %v1318
      %v1320 = vrot.slane %v1148, 4
      %v1321 = vmax.f32 %v1148, %v1320
      %v1322 = vrot.slane %v1321, 2
      %v1323 = vmax.f32 %v1321, %v1322
      %v1324 = vrot.slane %v1323, 1
      %v1325 = vmax.f32 %v1323, %v1324
      %v1326 = vrot.slane %v1149, 4
      %v1327 = vmax.f32 %v1149, %v1326
      %v1328 = vrot.slane %v1327, 2
      %v1329 = vmax.f32 %v1327, %v1328
      %v1330 = vrot.slane %v1329, 1
      %v1331 = vmax.f32 %v1329, %v1330
      %v1332 = vrot.slane %v1150, 4
      %v1333 = vmax.f32 %v1150, %v1332
      %v1334 = vrot.slane %v1333, 2
      %v1335 = vmax.f32 %v1333, %v1334
      %v1336 = vrot.slane %v1335, 1
      %v1337 = vmax.f32 %v1335, %v1336
      %v1338 = vrot.slane %v1151, 4
      %v1339 = vmax.f32 %v1151, %v1338
      %v1340 = vrot.slane %v1339, 2
      %v1341 = vmax.f32 %v1339, %v1340
      %v1342 = vrot.slane %v1341, 1
      %v1343 = vmax.f32 %v1341, %v1342
      %vm1376 = vcmask 1041409
      %v1377 = vsel %vm1376, %v1163, %v1157
      %vm1378 = vcmask 1042434
      %v1379 = vsel %vm1378, %v1169, %v1377
      %vm1380 = vcmask 1043459
      %v1381 = vsel %vm1380, %v1175, %v1379
      %vm1382 = vcmask 1044484
      %v1383 = vsel %vm1382, %v1181, %v1381
      %vm1384 = vcmask 1045509
      %v1385 = vsel %vm1384, %v1187, %v1383
      %vm1386 = vcmask 1046534
      %v1387 = vsel %vm1386, %v1193, %v1385
      %vm1388 = vcmask 1047559
      %v1389 = vsel %vm1388, %v1199, %v1387
      %v1390 = vsel %vm1376, %v1211, %v1205
      %v1391 = vsel %vm1378, %v1217, %v1390
      %v1392 = vsel %vm1380, %v1223, %v1391
      %v1393 = vsel %vm1382, %v1229, %v1392
      %v1394 = vsel %vm1384, %v1235, %v1393
      %v1395 = vsel %vm1386, %v1241, %v1394
      %v1396 = vsel %vm1388, %v1247, %v1395
      %v1397 = vsel %vm1376, %v1259, %v1253
      %v1398 = vsel %vm1378, %v1265, %v1397
      %v1399 = vsel %vm1380, %v1271, %v1398
      %v1400 = vsel %vm1382, %v1277, %v1399
      %v1401 = vsel %vm1384, %v1283, %v1400
      %v1402 = vsel %vm1386, %v1289, %v1401
      %v1403 = vsel %vm1388, %v1295, %v1402
      %v1404 = vsel %vm1376, %v1307, %v1301
      %v1405 = vsel %vm1378, %v1313, %v1404
      %v1406 = vsel %vm1380, %v1319, %v1405
      %v1407 = vsel %vm1382, %v1325, %v1406
      %v1408 = vsel %vm1384, %v1331, %v1407
      %v1409 = vsel %vm1386, %v1337, %v1408
      %v1410 = vsel %vm1388, %v1343, %v1409
      %1415 = vst [vmem:[%s278] sm:$0xff] %v1389
      %1416 = vst [vmem:[%s278 + $0x8] sm:$0xff] %v1396
      %1417 = vst [vmem:[%s278 + $0x10] sm:$0xff] %v1403
      %1418 = vst [vmem:[%s278 + $0x18] sm:$0xff] %v1410
      %p1419 = scmp.lt.s32.totalorder %s18, 1
      %s1420 = scalar_select %p1419, %s18, 1
      %s1421 = smul.addr %s1420, 4
      %s1422 = smul.addr %s1421, 8
      %s1423 = scalar_lea.vmem %s7, %s1422
      // Predicated region
      $region49: #{pointnet2_seg_forward.8} parent=47 // pred_check
        %p1424 = pneg %p188
      $region50: #{pointnet2_seg_forward.8} parent=47 // pred_check_branch
        %1426 = sbr.rel (%p1424) target = $region52
      $region51: #{pointnet2_seg_forward.8} parent=47 // pred_region
        _
      $region52: #{pointnet2_seg_forward.8} parent=47 // pred_fallthru
        _
    $region48: #{pointnet2_seg_forward.8} parent=5 // pred_fallthru
      _
    %p1427 = scmp.le.s32.totalorder 2, %s13
    // Predicated region
    $region53: #{pointnet2_seg_forward.8} parent=5 // pred_check
      %p1428 = pneg %p1427
    $region54: #{pointnet2_seg_forward.8} parent=5 // pred_check_branch
      %1430 = sbr.rel (%p1428) target = $region56
    $region55: #{pointnet2_seg_forward.8} parent=5 // pred_region
      %s1431 = ssub.s32 %s13, 2
      // Predicated region
      $region57: #{pointnet2_seg_forward.8} parent=55 // pred_check
        %p1432 = pneg %p194
      $region58: #{pointnet2_seg_forward.8} parent=55 // pred_check_branch
        %1434 = sbr.rel (%p1432) target = $region60
      $region59: #{pointnet2_seg_forward.8} parent=55 // pred_region
        %p1435 = scmp.lt.s32.totalorder %s19, 1
        %s1436 = scalar_select %p1435, %s19, 1
        %s1437 = smul.addr %s1436, 4
        %s1438 = smul.addr %s1437, 8
        %s1439 = scalar_lea.vmem %s7, %s1438
      $region60: #{pointnet2_seg_forward.8} parent=55 // pred_fallthru
        _
    $region56: #{pointnet2_seg_forward.8} parent=5 // pred_fallthru
      _
  $region6: #{pointnet2_seg_forward.8} parent=0 // loop_footer
    %s17 = sadd.s32 1, %s13
  $region7: #{pointnet2_seg_forward.8} parent=0 // loop_footer_branch
    %12 = sbr.rel target = $region3
  $region8: #{pointnet2_seg_forward.8} parent=0 // loop_exit
    _

// kernel: pointnet2_seg_forward.9
$region0: #{pointnet2_seg_forward.9}
  #allocation0 [shape = 'u32[]', space=smem, size = 0x4, offset = 0x4, fixed_abs, tag = 'smem constant byte address 0x4 - core index']
  #allocation1 [shape = 'u32[144,128]{1,0:T(1,128)}', space=vmem, size = 0x12000, scoped, tag = 'internal scratch']
  %s0 = inlined_call_operand.vmem [shape: f32[2,128,128], index: 0, kind: input, shape index: {}]
  %s1 = inlined_call_operand.vmem [shape: bf16[128,128], index: 1, kind: input, shape index: {}]
  %s2 = inlined_call_operand.vmem [shape: f32[1,128], index: 2, kind: input, shape index: {}]
  %s3 = inlined_call_operand.vmem [shape: bf16[128,128], index: 3, kind: input, shape index: {}]
  %s4 = inlined_call_operand.vmem [shape: f32[1,128], index: 4, kind: input, shape index: {}]
  %s5 = inlined_call_operand.vmem [shape: bf16[128,128], index: 5, kind: input, shape index: {}]
  %s6 = inlined_call_operand.vmem [shape: f32[1,128], index: 6, kind: input, shape index: {}]
  %s7 = inlined_call_operand.vmem [shape: f32[2,16,128], index: 7, kind: output, shape index: {}]
  %s8 = sld [smem:[#allocation0]]
  $region61: #{pointnet2_seg_forward.9} parent=0
    _
  %s10 = ssub.s32 1, %s8
  %s11 = scalar_select 0, %s10, %s8
  loop: start=0, step=1, limit=4
  $region2: #{pointnet2_seg_forward.9} parent=0 // loop_pre_header
    _
  $region3: #{pointnet2_seg_forward.9} parent=0 // loop_header
    %s13 = sphi 0, %s17
    %p14 = scmp.ge.s32.totalorder %s13, 4
    %s23 = sphi 0, %s25
    %s26 = sphi 0, %s23
    %s27 = sphi 0, %s26
    %s43 = sphi 0, %s27
    %s47 = sphi 0, %s47
    %s49 = sphi 0, %s47
    %s50 = sphi 0, %s49
    %s64 = sphi 0, %s50
    %s68 = sphi 0, %s68
    %s70 = sphi 0, %s68
    %s71 = sphi 0, %s70
    %s85 = sphi 0, %s71
    %s89 = sphi 0, %s89
    %s91 = sphi 0, %s89
    %s92 = sphi 0, %s91
    %s106 = sphi 0, %s92
    %s110 = sphi 0, %s110
    %s112 = sphi 0, %s110
    %s113 = sphi 0, %s112
    %s127 = sphi 0, %s113
    %s131 = sphi 0, %s131
    %s133 = sphi 0, %s131
    %s134 = sphi 0, %s133
    %s148 = sphi 0, %s134
    %s152 = sphi 0, %s152
    %s154 = sphi 0, %s152
    %s155 = sphi 0, %s154
    %s169 = sphi 0, %s155
    %s175 = sphi 0, %s177
    %s178 = sphi 0, %s175
    %s179 = sphi 0, %s178
    %s195 = sphi 0, %s179
  $region4: #{pointnet2_seg_forward.9} parent=0 // loop_header_branch
    %16 = sbr.rel (%p14) target = $region8
  $region5: #{pointnet2_seg_forward.9} parent=0 // loop_body
    %s18 = ssub.s32 %s13, 1
    %s19 = ssub.s32 %s13, 2
    %s20 = sadd.s32 %s13, 1
    %s21 = ssub.s32 %s13, %s20
    %p22 = scmp.eq.s32.totalorder %s21, 0
    %s24 = sadd.s32 %s23, 1
    %s25 = scalar_select %p22, %s23, %s24
    %p28 = pneg %p22
    %p29 = scmp.eq.s32.totalorder %s13, 1
    %p30 = por %p28, %p29
    %p31 = scmp.ne.s32.totalorder %s23, %s26
    %p32 = scmp.eq.s32.totalorder %s13, 0
    %p33 = por %p31, %p32
    %p34 = scmp.ne.s32.totalorder %s23, %s26
    %p35 = scmp.eq.s32.totalorder %s18, 1
    %p36 = por %p34, %p35
    %p37 = scmp.ne.s32.totalorder %s26, %s27
    %p38 = scmp.eq.s32.totalorder %s18, 0
    %p39 = por %p37, %p38
    %p40 = scmp.ne.s32.totalorder %s26, %s27
    %p41 = scmp.eq.s32.totalorder %s19, 1
    %p42 = por %p40, %p41
    %p44 = scmp.ne.s32.totalorder %s27, %s43
    %p45 = scmp.eq.s32.totalorder %s19, 0
    %p46 = por %p44, %p45
    %s48 = sadd.s32 %s47, 1
    %p51 = scmp.eq.s32.totalorder %s13, 1
    %p52 = scmp.ne.s32.totalorder %s47, %s49
    %p53 = scmp.eq.s32.totalorder %s13, 0
    %p54 = por %p52, %p53
    %p55 = scmp.ne.s32.totalorder %s47, %s49
    %p56 = scmp.eq.s32.totalorder %s18, 1
    %p57 = por %p55, %p56
    %p58 = scmp.ne.s32.totalorder %s49, %s50
    %p59 = scmp.eq.s32.totalorder %s18, 0
    %p60 = por %p58, %p59
    %p61 = scmp.ne.s32.totalorder %s49, %s50
    %p62 = scmp.eq.s32.totalorder %s19, 1
    %p63 = por %p61, %p62
    %p65 = scmp.ne.s32.totalorder %s50, %s64
    %p66 = scmp.eq.s32.totalorder %s19, 0
    %p67 = por %p65, %p66
    %s69 = sadd.s32 %s68, 1
    %p72 = scmp.eq.s32.totalorder %s13, 1
    %p73 = scmp.ne.s32.totalorder %s68, %s70
    %p74 = scmp.eq.s32.totalorder %s13, 0
    %p75 = por %p73, %p74
    %p76 = scmp.ne.s32.totalorder %s68, %s70
    %p77 = scmp.eq.s32.totalorder %s18, 1
    %p78 = por %p76, %p77
    %p79 = scmp.ne.s32.totalorder %s70, %s71
    %p80 = scmp.eq.s32.totalorder %s18, 0
    %p81 = por %p79, %p80
    %p82 = scmp.ne.s32.totalorder %s70, %s71
    %p83 = scmp.eq.s32.totalorder %s19, 1
    %p84 = por %p82, %p83
    %p86 = scmp.ne.s32.totalorder %s71, %s85
    %p87 = scmp.eq.s32.totalorder %s19, 0
    %p88 = por %p86, %p87
    %s90 = sadd.s32 %s89, 1
    %p93 = scmp.eq.s32.totalorder %s13, 1
    %p94 = scmp.ne.s32.totalorder %s89, %s91
    %p95 = scmp.eq.s32.totalorder %s13, 0
    %p96 = por %p94, %p95
    %p97 = scmp.ne.s32.totalorder %s89, %s91
    %p98 = scmp.eq.s32.totalorder %s18, 1
    %p99 = por %p97, %p98
    %p100 = scmp.ne.s32.totalorder %s91, %s92
    %p101 = scmp.eq.s32.totalorder %s18, 0
    %p102 = por %p100, %p101
    %p103 = scmp.ne.s32.totalorder %s91, %s92
    %p104 = scmp.eq.s32.totalorder %s19, 1
    %p105 = por %p103, %p104
    %p107 = scmp.ne.s32.totalorder %s92, %s106
    %p108 = scmp.eq.s32.totalorder %s19, 0
    %p109 = por %p107, %p108
    %s111 = sadd.s32 %s110, 1
    %p114 = scmp.eq.s32.totalorder %s13, 1
    %p115 = scmp.ne.s32.totalorder %s110, %s112
    %p116 = scmp.eq.s32.totalorder %s13, 0
    %p117 = por %p115, %p116
    %p118 = scmp.ne.s32.totalorder %s110, %s112
    %p119 = scmp.eq.s32.totalorder %s18, 1
    %p120 = por %p118, %p119
    %p121 = scmp.ne.s32.totalorder %s112, %s113
    %p122 = scmp.eq.s32.totalorder %s18, 0
    %p123 = por %p121, %p122
    %p124 = scmp.ne.s32.totalorder %s112, %s113
    %p125 = scmp.eq.s32.totalorder %s19, 1
    %p126 = por %p124, %p125
    %p128 = scmp.ne.s32.totalorder %s113, %s127
    %p129 = scmp.eq.s32.totalorder %s19, 0
    %p130 = por %p128, %p129
    %s132 = sadd.s32 %s131, 1
    %p135 = scmp.eq.s32.totalorder %s13, 1
    %p136 = scmp.ne.s32.totalorder %s131, %s133
    %p137 = scmp.eq.s32.totalorder %s13, 0
    %p138 = por %p136, %p137
    %p139 = scmp.ne.s32.totalorder %s131, %s133
    %p140 = scmp.eq.s32.totalorder %s18, 1
    %p141 = por %p139, %p140
    %p142 = scmp.ne.s32.totalorder %s133, %s134
    %p143 = scmp.eq.s32.totalorder %s18, 0
    %p144 = por %p142, %p143
    %p145 = scmp.ne.s32.totalorder %s133, %s134
    %p146 = scmp.eq.s32.totalorder %s19, 1
    %p147 = por %p145, %p146
    %p149 = scmp.ne.s32.totalorder %s134, %s148
    %p150 = scmp.eq.s32.totalorder %s19, 0
    %p151 = por %p149, %p150
    %s153 = sadd.s32 %s152, 1
    %p156 = scmp.eq.s32.totalorder %s13, 1
    %p157 = scmp.ne.s32.totalorder %s152, %s154
    %p158 = scmp.eq.s32.totalorder %s13, 0
    %p159 = por %p157, %p158
    %p160 = scmp.ne.s32.totalorder %s152, %s154
    %p161 = scmp.eq.s32.totalorder %s18, 1
    %p162 = por %p160, %p161
    %p163 = scmp.ne.s32.totalorder %s154, %s155
    %p164 = scmp.eq.s32.totalorder %s18, 0
    %p165 = por %p163, %p164
    %p166 = scmp.ne.s32.totalorder %s154, %s155
    %p167 = scmp.eq.s32.totalorder %s19, 1
    %p168 = por %p166, %p167
    %p170 = scmp.ne.s32.totalorder %s155, %s169
    %p171 = scmp.eq.s32.totalorder %s19, 0
    %p172 = por %p170, %p171
    %s173 = ssub.s32 %s13, %s20
    %p174 = scmp.eq.s32.totalorder %s173, 0
    %s176 = sadd.s32 %s175, 1
    %s177 = scalar_select %p174, %s175, %s176
    %p180 = pneg %p174
    %p181 = scmp.eq.s32.totalorder %s13, 1
    %p182 = por %p180, %p181
    %p183 = scmp.ne.s32.totalorder %s175, %s178
    %p184 = scmp.eq.s32.totalorder %s13, 0
    %p185 = por %p183, %p184
    %p186 = scmp.ne.s32.totalorder %s175, %s178
    %p187 = scmp.eq.s32.totalorder %s18, 1
    %p188 = por %p186, %p187
    %p189 = scmp.ne.s32.totalorder %s178, %s179
    %p190 = scmp.eq.s32.totalorder %s18, 0
    %p191 = por %p189, %p190
    %p192 = scmp.ne.s32.totalorder %s178, %s179
    %p193 = scmp.eq.s32.totalorder %s19, 1
    %p194 = por %p192, %p193
    %p196 = scmp.ne.s32.totalorder %s179, %s195
    %p197 = scmp.eq.s32.totalorder %s19, 0
    %p198 = por %p196, %p197
    %p199 = scmp.le.s32.totalorder 1, %s13
    %p200 = scmp.lt.s32.totalorder %s13, 3
    %p201 = pnand %p199, %p200
    %p202 = pneg %p201
    // Predicated region
    $region9: #{pointnet2_seg_forward.9} parent=5 // pred_check
      _
    $region10: #{pointnet2_seg_forward.9} parent=5 // pred_check_branch
      %204 = sbr.rel (%p201) target = $region12
    $region11: #{pointnet2_seg_forward.9} parent=5 // pred_region
      %s205 = ssub.s32 %s13, 1
      // Predicated region
      $region13: #{pointnet2_seg_forward.9} parent=11 // pred_check
        %p206 = pneg %p60
      $region14: #{pointnet2_seg_forward.9} parent=11 // pred_check_branch
        %208 = sbr.rel (%p206) target = $region16
      $region15: #{pointnet2_seg_forward.9} parent=11 // pred_region
        _
      $region16: #{pointnet2_seg_forward.9} parent=11 // pred_fallthru
        _
      // Predicated region
      $region17: #{pointnet2_seg_forward.9} parent=11 // pred_check
        %p209 = pneg %p81
      $region18: #{pointnet2_seg_forward.9} parent=11 // pred_check_branch
        %211 = sbr.rel (%p209) target = $region20
      $region19: #{pointnet2_seg_forward.9} parent=11 // pred_region
        _
      $region20: #{pointnet2_seg_forward.9} parent=11 // pred_fallthru
        _
      // Predicated region
      $region21: #{pointnet2_seg_forward.9} parent=11 // pred_check
        %p212 = pneg %p102
      $region22: #{pointnet2_seg_forward.9} parent=11 // pred_check_branch
        %214 = sbr.rel (%p212) target = $region24
      $region23: #{pointnet2_seg_forward.9} parent=11 // pred_region
        _
      $region24: #{pointnet2_seg_forward.9} parent=11 // pred_fallthru
        _
      // Predicated region
      $region25: #{pointnet2_seg_forward.9} parent=11 // pred_check
        %p215 = pneg %p123
      $region26: #{pointnet2_seg_forward.9} parent=11 // pred_check_branch
        %217 = sbr.rel (%p215) target = $region28
      $region27: #{pointnet2_seg_forward.9} parent=11 // pred_region
        _
      $region28: #{pointnet2_seg_forward.9} parent=11 // pred_fallthru
        _
      // Predicated region
      $region29: #{pointnet2_seg_forward.9} parent=11 // pred_check
        %p218 = pneg %p144
      $region30: #{pointnet2_seg_forward.9} parent=11 // pred_check_branch
        %220 = sbr.rel (%p218) target = $region32
      $region31: #{pointnet2_seg_forward.9} parent=11 // pred_region
        _
      $region32: #{pointnet2_seg_forward.9} parent=11 // pred_fallthru
        _
      // Predicated region
      $region33: #{pointnet2_seg_forward.9} parent=11 // pred_check
        %p221 = pneg %p165
      $region34: #{pointnet2_seg_forward.9} parent=11 // pred_check_branch
        %223 = sbr.rel (%p221) target = $region36
      $region35: #{pointnet2_seg_forward.9} parent=11 // pred_region
        _
      $region36: #{pointnet2_seg_forward.9} parent=11 // pred_fallthru
        _
    $region12: #{pointnet2_seg_forward.9} parent=5 // pred_fallthru
      _
    %p224 = scmp.lt.s32.totalorder %s13, 2
    // Predicated region
    $region37: #{pointnet2_seg_forward.9} parent=5 // pred_check
      %p225 = pneg %p224
    $region38: #{pointnet2_seg_forward.9} parent=5 // pred_check_branch
      %227 = sbr.rel (%p225) target = $region40
    $region39: #{pointnet2_seg_forward.9} parent=5 // pred_region
      // Predicated region
      $region41: #{pointnet2_seg_forward.9} parent=39 // pred_check
        %p228 = pneg %p33
      $region42: #{pointnet2_seg_forward.9} parent=39 // pred_check_branch
        %230 = sbr.rel (%p228) target = $region44
      $region43: #{pointnet2_seg_forward.9} parent=39 // pred_region
        %p231 = scmp.lt.s32.totalorder %s13, 1
        %s232 = scalar_select %p231, %s13, 1
        %s233 = smul.addr %s232, 16
        %s234 = smul.addr %s233, 8
        %s235 = scalar_lea.vmem %s0, %s234
      $region44: #{pointnet2_seg_forward.9} parent=39 // pred_fallthru
        _
    $region40: #{pointnet2_seg_forward.9} parent=5 // pred_fallthru
      _
    %p236 = scmp.le.s32.totalorder 1, %s13
    %p237 = scmp.lt.s32.totalorder %s13, 3
    %p238 = pnand %p236, %p237
    %p239 = pneg %p238
    // Predicated region
    $region45: #{pointnet2_seg_forward.9} parent=5 // pred_check
      _
    $region46: #{pointnet2_seg_forward.9} parent=5 // pred_check_branch
      %241 = sbr.rel (%p238) target = $region48
    $region47: #{pointnet2_seg_forward.9} parent=5 // pred_region
      %s242 = ssub.s32 %s13, 1
      %p243 = scmp.lt.s32.totalorder %s18, 1
      %s244 = scalar_select %p243, %s18, 1
      %s245 = smul.addr %s244, 16
      %s246 = smul.addr %s245, 8
      %s247 = scalar_lea.vmem %s0, %s246
      %p248 = pneg %p39
      %p249 = pneg %p36
      %p250 = pneg %p60
      %p251 = pneg %p57
      %p252 = pneg %p81
      %p253 = pneg %p78
      %p254 = pneg %p102
      %p255 = pneg %p99
      %p256 = pneg %p123
      %p257 = pneg %p120
      %p258 = pneg %p144
      %p259 = pneg %p141
      %p260 = pneg %p165
      %p261 = pneg %p162
      %p262 = pneg %p191
      %p263 = pneg %p188
      %p264 = scmp.lt.s32.totalorder %s18, 1
      %s265 = scalar_select %p264, %s18, 1
      %s266 = smul.addr %s265, 2
      %s267 = smul.addr %s266, 8
      %s268 = scalar_lea.vmem %s7, %s267
      %p269 = scmp.lt.s32.totalorder %s18, 1
      %s270 = scalar_select %p269, %s18, 1
      %s271 = smul.addr %s270, 16
      %s272 = smul.addr %s271, 8
      %s273 = scalar_lea.vmem %s0, %s272
      %p274 = scmp.lt.s32.totalorder %s18, 1
      %s275 = scalar_select %p274, %s18, 1
      %s276 = smul.addr %s275, 2
      %s277 = smul.addr %s276, 8
      %s278 = scalar_lea.vmem %s7, %s277
      %v280 = vld [vmem:[%s273] sm:$0xff]
      %v281 = vld [vmem:[%s273 + $0x8] sm:$0xff]
      %v282 = vld [vmem:[%s273 + $0x10] sm:$0xff]
      %v283 = vld [vmem:[%s273 + $0x18] sm:$0xff]
      %v284 = vld [vmem:[%s273 + $0x20] sm:$0xff]
      %v285 = vld [vmem:[%s273 + $0x28] sm:$0xff]
      %v286 = vld [vmem:[%s273 + $0x30] sm:$0xff]
      %v287 = vld [vmem:[%s273 + $0x38] sm:$0xff]
      %v288 = vld [vmem:[%s273 + $0x40] sm:$0xff]
      %v289 = vld [vmem:[%s273 + $0x48] sm:$0xff]
      %v290 = vld [vmem:[%s273 + $0x50] sm:$0xff]
      %v291 = vld [vmem:[%s273 + $0x58] sm:$0xff]
      %v292 = vld [vmem:[%s273 + $0x60] sm:$0xff]
      %v293 = vld [vmem:[%s273 + $0x68] sm:$0xff]
      %v294 = vld [vmem:[%s273 + $0x70] sm:$0xff]
      %v295 = vld [vmem:[%s273 + $0x78] sm:$0xff]
      %v296 = vld [vmem:[%s1] sm:$0xf]
      %v297 = vld [vmem:[%s1 + $0x4] sm:$0xf]
      %v298 = vld [vmem:[%s1 + $0x8] sm:$0xf]
      %v299 = vld [vmem:[%s1 + $0xc] sm:$0xf]
      %v300 = vld [vmem:[%s1 + $0x10] sm:$0xf]
      %v301 = vld [vmem:[%s1 + $0x14] sm:$0xf]
      %v302 = vld [vmem:[%s1 + $0x18] sm:$0xf]
      %v303 = vld [vmem:[%s1 + $0x1c] sm:$0xf]
      %v304 = vld [vmem:[%s1 + $0x20] sm:$0xf]
      %v305 = vld [vmem:[%s1 + $0x24] sm:$0xf]
      %v306 = vld [vmem:[%s1 + $0x28] sm:$0xf]
      %v307 = vld [vmem:[%s1 + $0x2c] sm:$0xf]
      %v308 = vld [vmem:[%s1 + $0x30] sm:$0xf]
      %v309 = vld [vmem:[%s1 + $0x34] sm:$0xf]
      %v310 = vld [vmem:[%s1 + $0x38] sm:$0xf]
      %v311 = vld [vmem:[%s1 + $0x3c] sm:$0xf]
      %v312 = vld [vmem:[%s2] sm:$0x1]
      %v313 = vpack.c.bf16 %v281, %v280
      %v314 = vpack.c.bf16 %v283, %v282
      %v315 = vpack.c.bf16 %v285, %v284
      %v316 = vpack.c.bf16 %v287, %v286
      %v317 = vpack.c.bf16 %v289, %v288
      %v318 = vpack.c.bf16 %v291, %v290
      %v319 = vpack.c.bf16 %v293, %v292
      %v320 = vpack.c.bf16 %v295, %v294
      %v322 = vlaneseq
      %v323 = vshrl.u32 %v322, 7
      %v324 = vsub.s32 0, %v323
      %v325 = vrot.slane %v312, %v324
      %v343 = vunpack.c.l.b16 %v296
      %v344 = vunpack.c.l.b16 %v297
      %v345 = vunpack.c.l.b16 %v298
      %v346 = vunpack.c.l.b16 %v299
      %v347 = vunpack.c.l.b16 %v300
      %v348 = vunpack.c.l.b16 %v301
      %v349 = vunpack.c.l.b16 %v302
      %v350 = vunpack.c.l.b16 %v303
      %v351 = vunpack.c.l.b16 %v304
      %v352 = vunpack.c.l.b16 %v305
      %v353 = vunpack.c.l.b16 %v306
      %v354 = vunpack.c.l.b16 %v307
      %v355 = vunpack.c.l.b16 %v308
      %v356 = vunpack.c.l.b16 %v309
      %v357 = vunpack.c.l.b16 %v310
      %v358 = vunpack.c.l.b16 %v311
      %v359 = vpack.c.b16 %v344, %v343
      %v360 = vpack.c.b16 %v346, %v345
      %v361 = vpack.c.b16 %v348, %v347
      %v362 = vpack.c.b16 %v350, %v349
      %v363 = vpack.c.b16 %v352, %v351
      %v364 = vpack.c.b16 %v354, %v353
      %v365 = vpack.c.b16 %v356, %v355
      %v366 = vpack.c.b16 %v358, %v357
      %375 = vmatprep.subr.bf16.mxu0 0
      %376 = vmatpush1.bf16.msra.mxu0 %v359
      %377 = vmatprep.subr.bf16.mxu0 0
      %378 = vmatpush1.bf16.msra.mxu0 %v360
      %379 = vmatprep.subr.bf16.mxu0 0
      %380 = vmatpush1.bf16.msra.mxu0 %v361
      %381 = vmatprep.subr.bf16.mxu0 0
      %382 = vmatpush1.bf16.msra.mxu0 %v362
      %383 = vmatprep.subr.bf16.mxu0 0
      %384 = vmatpush1.bf16.msra.mxu0 %v363
      %385 = vmatprep.subr.bf16.mxu0 0
      %386 = vmatpush1.bf16.msra.mxu0 %v364
      %387 = vmatprep.subr.bf16.mxu0 0
      %388 = vmatpush1.bf16.msra.mxu0 %v365
      %389 = vmatprep.subr.bf16.mxu0 0
      %390 = vmatpush1.bf16.msra.mxu0 %v366
      %391 = vmatprep.subr.bf16.mxu0 0
      %392 = vmatpush1.bf16.msra.mxu0 0
      %393 = vmatprep.subr.bf16.mxu0 0
      %394 = vmatpush1.bf16.msra.mxu0 0
      %395 = vmatprep.subr.bf16.mxu0 0
      %396 = vmatpush1.bf16.msra.mxu0 0
      %397 = vmatprep.subr.bf16.mxu0 0
      %398 = vmatpush1.bf16.msra.mxu0 0
      %399 = vmatprep.subr.bf16.mxu0 0
      %400 = vmatpush1.bf16.msra.mxu0 0
      %401 = vmatprep.subr.bf16.mxu0 0
      %402 = vmatpush1.bf16.msra.mxu0 0
      %403 = vmatprep.subr.bf16.mxu0 0
      %404 = vmatpush1.bf16.msra.mxu0 0
      %405 = vmatprep.subr.bf16.mxu0 0
      %406 = vmatpush1.bf16.msra.mxu0 0
      %407 = vmatprep.mubr.bf16.mxu0 0
      %408 = vmatmul.mubr.bf16.gmra.mrb[0].mxu0 %v313
      %v409 = vpop.f32.mrb[0].mxu0
      %v410 = vadd.f32 %v325, %v409
      %v411 = vpop.f32.mrb[0].mxu0
      %v412 = vpop.f32.mrb[0].mxu0
      %v413 = vadd.f32 %v325, %v412
      %v414 = vpop.f32.mrb[0].mxu0
      %415 = vmatprep.mubr.bf16.mxu0 0
      %416 = vmatmul.mubr.bf16.gmra.mrb[0].mxu0 %v314
      %v417 = vpop.f32.mrb[0].mxu0
      %v418 = vadd.f32 %v325, %v417
      %v419 = vpop.f32.mrb[0].mxu0
      %v420 = vpop.f32.mrb[0].mxu0
      %v421 = vadd.f32 %v325, %v420
      %v422 = vpop.f32.mrb[0].mxu0
      %423 = vmatprep.mubr.bf16.mxu0 0
      %424 = vmatmul.mubr.bf16.gmra.mrb[0].mxu0 %v315
      %v425 = vpop.f32.mrb[0].mxu0
      %v426 = vadd.f32 %v325, %v425
      %v427 = vpop.f32.mrb[0].mxu0
      %v428 = vpop.f32.mrb[0].mxu0
      %v429 = vadd.f32 %v325, %v428
      %v430 = vpop.f32.mrb[0].mxu0
      %431 = vmatprep.mubr.bf16.mxu0 0
      %432 = vmatmul.mubr.bf16.gmra.mrb[0].mxu0 %v316
      %v433 = vpop.f32.mrb[0].mxu0
      %v434 = vadd.f32 %v325, %v433
      %v435 = vpop.f32.mrb[0].mxu0
      %v436 = vpop.f32.mrb[0].mxu0
      %v437 = vadd.f32 %v325, %v436
      %v438 = vpop.f32.mrb[0].mxu0
      %439 = vmatprep.mubr.bf16.mxu0 0
      %440 = vmatmul.mubr.bf16.gmra.mrb[0].mxu0 %v317
      %v441 = vpop.f32.mrb[0].mxu0
      %v442 = vadd.f32 %v325, %v441
      %v443 = vpop.f32.mrb[0].mxu0
      %v444 = vpop.f32.mrb[0].mxu0
      %v445 = vadd.f32 %v325, %v444
      %v446 = vpop.f32.mrb[0].mxu0
      %447 = vmatprep.mubr.bf16.mxu0 0
      %448 = vmatmul.mubr.bf16.gmra.mrb[0].mxu0 %v318
      %v449 = vpop.f32.mrb[0].mxu0
      %v450 = vadd.f32 %v325, %v449
      %v451 = vpop.f32.mrb[0].mxu0
      %v452 = vpop.f32.mrb[0].mxu0
      %v453 = vadd.f32 %v325, %v452
      %v454 = vpop.f32.mrb[0].mxu0
      %455 = vmatprep.mubr.bf16.mxu0 0
      %456 = vmatmul.mubr.bf16.gmra.mrb[0].mxu0 %v319
      %v457 = vpop.f32.mrb[0].mxu0
      %v458 = vadd.f32 %v325, %v457
      %v459 = vpop.f32.mrb[0].mxu0
      %v460 = vpop.f32.mrb[0].mxu0
      %v461 = vadd.f32 %v325, %v460
      %v462 = vpop.f32.mrb[0].mxu0
      %463 = vmatprep.mubr.bf16.mxu0 0
      %464 = vmatmul.mubr.bf16.gmra.mrb[0].mxu0 %v320
      %v465 = vpop.f32.mrb[0].mxu0
      %v466 = vadd.f32 %v325, %v465
      %v467 = vpop.f32.mrb[0].mxu0
      %v468 = vpop.f32.mrb[0].mxu0
      %v469 = vadd.f32 %v325, %v468
      %v470 = vpop.f32.mrb[0].mxu0
      %471 = vdwg.mxu0
      %v472 = vmax.f32 %v410, 0.0
      %v473 = vmax.f32 %v413, 0.0
      %v474 = vmax.f32 %v418, 0.0
      %v475 = vmax.f32 %v421, 0.0
      %v476 = vmax.f32 %v426, 0.0
      %v477 = vmax.f32 %v429, 0.0
      %v478 = vmax.f32 %v434, 0.0
      %v479 = vmax.f32 %v437, 0.0
      %v480 = vmax.f32 %v442, 0.0
      %v481 = vmax.f32 %v445, 0.0
      %v482 = vmax.f32 %v450, 0.0
      %v483 = vmax.f32 %v453, 0.0
      %v484 = vmax.f32 %v458, 0.0
      %v485 = vmax.f32 %v461, 0.0
      %v486 = vmax.f32 %v466, 0.0
      %v487 = vmax.f32 %v469, 0.0
      %v488 = vld [vmem:[%s3] sm:$0xf]
      %v489 = vld [vmem:[%s3 + $0x4] sm:$0xf]
      %v490 = vld [vmem:[%s3 + $0x8] sm:$0xf]
      %v491 = vld [vmem:[%s3 + $0xc] sm:$0xf]
      %v492 = vld [vmem:[%s3 + $0x10] sm:$0xf]
      %v493 = vld [vmem:[%s3 + $0x14] sm:$0xf]
      %v494 = vld [vmem:[%s3 + $0x18] sm:$0xf]
      %v495 = vld [vmem:[%s3 + $0x1c] sm:$0xf]
      %v496 = vld [vmem:[%s3 + $0x20] sm:$0xf]
      %v497 = vld [vmem:[%s3 + $0x24] sm:$0xf]
      %v498 = vld [vmem:[%s3 + $0x28] sm:$0xf]
      %v499 = vld [vmem:[%s3 + $0x2c] sm:$0xf]
      %v500 = vld [vmem:[%s3 + $0x30] sm:$0xf]
      %v501 = vld [vmem:[%s3 + $0x34] sm:$0xf]
      %v502 = vld [vmem:[%s3 + $0x38] sm:$0xf]
      %v503 = vld [vmem:[%s3 + $0x3c] sm:$0xf]
      %v504 = vld [vmem:[%s4] sm:$0x1]
      %v505 = vpack.c.bf16 %v473, %v472
      %v506 = vpack.c.bf16 %v475, %v474
      %v507 = vpack.c.bf16 %v477, %v476
      %v508 = vpack.c.bf16 %v479, %v478
      %v509 = vpack.c.bf16 %v481, %v480
      %v510 = vpack.c.bf16 %v483, %v482
      %v511 = vpack.c.bf16 %v485, %v484
      %v512 = vpack.c.bf16 %v487, %v486
      %v514 = vlaneseq
      %v515 = vshrl.u32 %v514, 7
      %v516 = vsub.s32 0, %v515
      %v517 = vrot.slane %v504, %v516
      %v535 = vunpack.c.l.b16 %v488
      %v536 = vunpack.c.l.b16 %v489
      %v537 = vunpack.c.l.b16 %v490
      %v538 = vunpack.c.l.b16 %v491
      %v539 = vunpack.c.l.b16 %v492
      %v540 = vunpack.c.l.b16 %v493
      %v541 = vunpack.c.l.b16 %v494
      %v542 = vunpack.c.l.b16 %v495
      %v543 = vunpack.c.l.b16 %v496
      %v544 = vunpack.c.l.b16 %v497
      %v545 = vunpack.c.l.b16 %v498
      %v546 = vunpack.c.l.b16 %v499
      %v547 = vunpack.c.l.b16 %v500
      %v548 = vunpack.c.l.b16 %v501
      %v549 = vunpack.c.l.b16 %v502
      %v550 = vunpack.c.l.b16 %v503
      %v551 = vpack.c.b16 %v536, %v535
      %v552 = vpack.c.b16 %v538, %v537
      %v553 = vpack.c.b16 %v540, %v539
      %v554 = vpack.c.b16 %v542, %v541
      %v555 = vpack.c.b16 %v544, %v543
      %v556 = vpack.c.b16 %v546, %v545
      %v557 = vpack.c.b16 %v548, %v547
      %v558 = vpack.c.b16 %v550, %v549
      %567 = vmatprep.subr.bf16.mxu0 0
      %568 = vmatpush1.bf16.msra.mxu0 %v551
      %569 = vmatprep.subr.bf16.mxu0 0
      %570 = vmatpush1.bf16.msra.mxu0 %v552
      %571 = vmatprep.subr.bf16.mxu0 0
      %572 = vmatpush1.bf16.msra.mxu0 %v553
      %573 = vmatprep.subr.bf16.mxu0 0
      %574 = vmatpush1.bf16.msra.mxu0 %v554
      %575 = vmatprep.subr.bf16.mxu0 0
      %576 = vmatpush1.bf16.msra.mxu0 %v555
      %577 = vmatprep.subr.bf16.mxu0 0
      %578 = vmatpush1.bf16.msra.mxu0 %v556
      %579 = vmatprep.subr.bf16.mxu0 0
      %580 = vmatpush1.bf16.msra.mxu0 %v557
      %581 = vmatprep.subr.bf16.mxu0 0
      %582 = vmatpush1.bf16.msra.mxu0 %v558
      %583 = vmatprep.subr.bf16.mxu0 0
      %584 = vmatpush1.bf16.msra.mxu0 0
      %585 = vmatprep.subr.bf16.mxu0 0
      %586 = vmatpush1.bf16.msra.mxu0 0
      %587 = vmatprep.subr.bf16.mxu0 0
      %588 = vmatpush1.bf16.msra.mxu0 0
      %589 = vmatprep.subr.bf16.mxu0 0
      %590 = vmatpush1.bf16.msra.mxu0 0
      %591 = vmatprep.subr.bf16.mxu0 0
      %592 = vmatpush1.bf16.msra.mxu0 0
      %593 = vmatprep.subr.bf16.mxu0 0
      %594 = vmatpush1.bf16.msra.mxu0 0
      %595 = vmatprep.subr.bf16.mxu0 0
      %596 = vmatpush1.bf16.msra.mxu0 0
      %597 = vmatprep.subr.bf16.mxu0 0
      %598 = vmatpush1.bf16.msra.mxu0 0
      %599 = vmatprep.mubr.bf16.mxu0 0
      %600 = vmatmul.mubr.bf16.gmra.mrb[0].mxu0 %v505
      %v601 = vpop.f32.mrb[0].mxu0
      %v602 = vadd.f32 %v517, %v601
      %v603 = vpop.f32.mrb[0].mxu0
      %v604 = vpop.f32.mrb[0].mxu0
      %v605 = vadd.f32 %v517, %v604
      %v606 = vpop.f32.mrb[0].mxu0
      %607 = vmatprep.mubr.bf16.mxu0 0
      %608 = vmatmul.mubr.bf16.gmra.mrb[0].mxu0 %v506
      %v609 = vpop.f32.mrb[0].mxu0
      %v610 = vadd.f32 %v517, %v609
      %v611 = vpop.f32.mrb[0].mxu0
      %v612 = vpop.f32.mrb[0].mxu0
      %v613 = vadd.f32 %v517, %v612
      %v614 = vpop.f32.mrb[0].mxu0
      %615 = vmatprep.mubr.bf16.mxu0 0
      %616 = vmatmul.mubr.bf16.gmra.mrb[0].mxu0 %v507
      %v617 = vpop.f32.mrb[0].mxu0
      %v618 = vadd.f32 %v517, %v617
      %v619 = vpop.f32.mrb[0].mxu0
      %v620 = vpop.f32.mrb[0].mxu0
      %v621 = vadd.f32 %v517, %v620
      %v622 = vpop.f32.mrb[0].mxu0
      %623 = vmatprep.mubr.bf16.mxu0 0
      %624 = vmatmul.mubr.bf16.gmra.mrb[0].mxu0 %v508
      %v625 = vpop.f32.mrb[0].mxu0
      %v626 = vadd.f32 %v517, %v625
      %v627 = vpop.f32.mrb[0].mxu0
      %v628 = vpop.f32.mrb[0].mxu0
      %v629 = vadd.f32 %v517, %v628
      %v630 = vpop.f32.mrb[0].mxu0
      %631 = vmatprep.mubr.bf16.mxu0 0
      %632 = vmatmul.mubr.bf16.gmra.mrb[0].mxu0 %v509
      %v633 = vpop.f32.mrb[0].mxu0
      %v634 = vadd.f32 %v517, %v633
      %v635 = vpop.f32.mrb[0].mxu0
      %v636 = vpop.f32.mrb[0].mxu0
      %v637 = vadd.f32 %v517, %v636
      %v638 = vpop.f32.mrb[0].mxu0
      %639 = vmatprep.mubr.bf16.mxu0 0
      %640 = vmatmul.mubr.bf16.gmra.mrb[0].mxu0 %v510
      %v641 = vpop.f32.mrb[0].mxu0
      %v642 = vadd.f32 %v517, %v641
      %v643 = vpop.f32.mrb[0].mxu0
      %v644 = vpop.f32.mrb[0].mxu0
      %v645 = vadd.f32 %v517, %v644
      %v646 = vpop.f32.mrb[0].mxu0
      %647 = vmatprep.mubr.bf16.mxu0 0
      %648 = vmatmul.mubr.bf16.gmra.mrb[0].mxu0 %v511
      %v649 = vpop.f32.mrb[0].mxu0
      %v650 = vadd.f32 %v517, %v649
      %v651 = vpop.f32.mrb[0].mxu0
      %v652 = vpop.f32.mrb[0].mxu0
      %v653 = vadd.f32 %v517, %v652
      %v654 = vpop.f32.mrb[0].mxu0
      %655 = vmatprep.mubr.bf16.mxu0 0
      %656 = vmatmul.mubr.bf16.gmra.mrb[0].mxu0 %v512
      %v657 = vpop.f32.mrb[0].mxu0
      %v658 = vadd.f32 %v517, %v657
      %v659 = vpop.f32.mrb[0].mxu0
      %v660 = vpop.f32.mrb[0].mxu0
      %v661 = vadd.f32 %v517, %v660
      %v662 = vpop.f32.mrb[0].mxu0
      %663 = vdwg.mxu0
      %v664 = vmax.f32 %v602, 0.0
      %v665 = vmax.f32 %v605, 0.0
      %v666 = vmax.f32 %v610, 0.0
      %v667 = vmax.f32 %v613, 0.0
      %v668 = vmax.f32 %v618, 0.0
      %v669 = vmax.f32 %v621, 0.0
      %v670 = vmax.f32 %v626, 0.0
      %v671 = vmax.f32 %v629, 0.0
      %v672 = vmax.f32 %v634, 0.0
      %v673 = vmax.f32 %v637, 0.0
      %v674 = vmax.f32 %v642, 0.0
      %v675 = vmax.f32 %v645, 0.0
      %v676 = vmax.f32 %v650, 0.0
      %v677 = vmax.f32 %v653, 0.0
      %v678 = vmax.f32 %v658, 0.0
      %v679 = vmax.f32 %v661, 0.0
      %v680 = vld [vmem:[%s5] sm:$0xf]
      %v681 = vld [vmem:[%s5 + $0x4] sm:$0xf]
      %v682 = vld [vmem:[%s5 + $0x8] sm:$0xf]
      %v683 = vld [vmem:[%s5 + $0xc] sm:$0xf]
      %v684 = vld [vmem:[%s5 + $0x10] sm:$0xf]
      %v685 = vld [vmem:[%s5 + $0x14] sm:$0xf]
      %v686 = vld [vmem:[%s5 + $0x18] sm:$0xf]
      %v687 = vld [vmem:[%s5 + $0x1c] sm:$0xf]
      %v688 = vld [vmem:[%s5 + $0x20] sm:$0xf]
      %v689 = vld [vmem:[%s5 + $0x24] sm:$0xf]
      %v690 = vld [vmem:[%s5 + $0x28] sm:$0xf]
      %v691 = vld [vmem:[%s5 + $0x2c] sm:$0xf]
      %v692 = vld [vmem:[%s5 + $0x30] sm:$0xf]
      %v693 = vld [vmem:[%s5 + $0x34] sm:$0xf]
      %v694 = vld [vmem:[%s5 + $0x38] sm:$0xf]
      %v695 = vld [vmem:[%s5 + $0x3c] sm:$0xf]
      %v696 = vld [vmem:[%s6] sm:$0x1]
      %v697 = vpack.c.bf16 %v665, %v664
      %v698 = vpack.c.bf16 %v667, %v666
      %v699 = vpack.c.bf16 %v669, %v668
      %v700 = vpack.c.bf16 %v671, %v670
      %v701 = vpack.c.bf16 %v673, %v672
      %v702 = vpack.c.bf16 %v675, %v674
      %v703 = vpack.c.bf16 %v677, %v676
      %v704 = vpack.c.bf16 %v679, %v678
      %v706 = vlaneseq
      %v707 = vshrl.u32 %v706, 7
      %v708 = vsub.s32 0, %v707
      %v709 = vrot.slane %v696, %v708
      %v727 = vunpack.c.l.b16 %v680
      %v728 = vunpack.c.l.b16 %v681
      %v729 = vunpack.c.l.b16 %v682
      %v730 = vunpack.c.l.b16 %v683
      %v731 = vunpack.c.l.b16 %v684
      %v732 = vunpack.c.l.b16 %v685
      %v733 = vunpack.c.l.b16 %v686
      %v734 = vunpack.c.l.b16 %v687
      %v735 = vunpack.c.l.b16 %v688
      %v736 = vunpack.c.l.b16 %v689
      %v737 = vunpack.c.l.b16 %v690
      %v738 = vunpack.c.l.b16 %v691
      %v739 = vunpack.c.l.b16 %v692
      %v740 = vunpack.c.l.b16 %v693
      %v741 = vunpack.c.l.b16 %v694
      %v742 = vunpack.c.l.b16 %v695
      %v743 = vpack.c.b16 %v728, %v727
      %v744 = vpack.c.b16 %v730, %v729
      %v745 = vpack.c.b16 %v732, %v731
      %v746 = vpack.c.b16 %v734, %v733
      %v747 = vpack.c.b16 %v736, %v735
      %v748 = vpack.c.b16 %v738, %v737
      %v749 = vpack.c.b16 %v740, %v739
      %v750 = vpack.c.b16 %v742, %v741
      %759 = vmatprep.subr.bf16.mxu0 0
      %760 = vmatpush1.bf16.msra.mxu0 %v743
      %761 = vmatprep.subr.bf16.mxu0 0
      %762 = vmatpush1.bf16.msra.mxu0 %v744
      %763 = vmatprep.subr.bf16.mxu0 0
      %764 = vmatpush1.bf16.msra.mxu0 %v745
      %765 = vmatprep.subr.bf16.mxu0 0
      %766 = vmatpush1.bf16.msra.mxu0 %v746
      %767 = vmatprep.subr.bf16.mxu0 0
      %768 = vmatpush1.bf16.msra.mxu0 %v747
      %769 = vmatprep.subr.bf16.mxu0 0
      %770 = vmatpush1.bf16.msra.mxu0 %v748
      %771 = vmatprep.subr.bf16.mxu0 0
      %772 = vmatpush1.bf16.msra.mxu0 %v749
      %773 = vmatprep.subr.bf16.mxu0 0
      %774 = vmatpush1.bf16.msra.mxu0 %v750
      %775 = vmatprep.subr.bf16.mxu0 0
      %776 = vmatpush1.bf16.msra.mxu0 0
      %777 = vmatprep.subr.bf16.mxu0 0
      %778 = vmatpush1.bf16.msra.mxu0 0
      %779 = vmatprep.subr.bf16.mxu0 0
      %780 = vmatpush1.bf16.msra.mxu0 0
      %781 = vmatprep.subr.bf16.mxu0 0
      %782 = vmatpush1.bf16.msra.mxu0 0
      %783 = vmatprep.subr.bf16.mxu0 0
      %784 = vmatpush1.bf16.msra.mxu0 0
      %785 = vmatprep.subr.bf16.mxu0 0
      %786 = vmatpush1.bf16.msra.mxu0 0
      %787 = vmatprep.subr.bf16.mxu0 0
      %788 = vmatpush1.bf16.msra.mxu0 0
      %789 = vmatprep.subr.bf16.mxu0 0
      %790 = vmatpush1.bf16.msra.mxu0 0
      %791 = vmatprep.mubr.bf16.mxu0 0
      %792 = vmatmul.mubr.bf16.gmra.mrb[0].mxu0 %v697
      %v793 = vpop.f32.mrb[0].mxu0
      %v794 = vadd.f32 %v709, %v793
      %v795 = vpop.f32.mrb[0].mxu0
      %v796 = vpop.f32.mrb[0].mxu0
      %v797 = vadd.f32 %v709, %v796
      %v798 = vpop.f32.mrb[0].mxu0
      %799 = vmatprep.mubr.bf16.mxu0 0
      %800 = vmatmul.mubr.bf16.gmra.mrb[0].mxu0 %v698
      %v801 = vpop.f32.mrb[0].mxu0
      %v802 = vadd.f32 %v709, %v801
      %v803 = vpop.f32.mrb[0].mxu0
      %v804 = vpop.f32.mrb[0].mxu0
      %v805 = vadd.f32 %v709, %v804
      %v806 = vpop.f32.mrb[0].mxu0
      %807 = vmatprep.mubr.bf16.mxu0 0
      %808 = vmatmul.mubr.bf16.gmra.mrb[0].mxu0 %v699
      %v809 = vpop.f32.mrb[0].mxu0
      %v810 = vadd.f32 %v709, %v809
      %v811 = vpop.f32.mrb[0].mxu0
      %v812 = vpop.f32.mrb[0].mxu0
      %v813 = vadd.f32 %v709, %v812
      %v814 = vpop.f32.mrb[0].mxu0
      %815 = vmatprep.mubr.bf16.mxu0 0
      %816 = vmatmul.mubr.bf16.gmra.mrb[0].mxu0 %v700
      %v817 = vpop.f32.mrb[0].mxu0
      %v818 = vadd.f32 %v709, %v817
      %v819 = vpop.f32.mrb[0].mxu0
      %v820 = vpop.f32.mrb[0].mxu0
      %v821 = vadd.f32 %v709, %v820
      %v822 = vpop.f32.mrb[0].mxu0
      %823 = vmatprep.mubr.bf16.mxu0 0
      %824 = vmatmul.mubr.bf16.gmra.mrb[0].mxu0 %v701
      %v825 = vpop.f32.mrb[0].mxu0
      %v826 = vadd.f32 %v709, %v825
      %v827 = vpop.f32.mrb[0].mxu0
      %v828 = vpop.f32.mrb[0].mxu0
      %v829 = vadd.f32 %v709, %v828
      %v830 = vpop.f32.mrb[0].mxu0
      %831 = vmatprep.mubr.bf16.mxu0 0
      %832 = vmatmul.mubr.bf16.gmra.mrb[0].mxu0 %v702
      %v833 = vpop.f32.mrb[0].mxu0
      %v834 = vadd.f32 %v709, %v833
      %v835 = vpop.f32.mrb[0].mxu0
      %v836 = vpop.f32.mrb[0].mxu0
      %v837 = vadd.f32 %v709, %v836
      %v838 = vpop.f32.mrb[0].mxu0
      %839 = vmatprep.mubr.bf16.mxu0 0
      %840 = vmatmul.mubr.bf16.gmra.mrb[0].mxu0 %v703
      %v841 = vpop.f32.mrb[0].mxu0
      %v842 = vadd.f32 %v709, %v841
      %v843 = vpop.f32.mrb[0].mxu0
      %v844 = vpop.f32.mrb[0].mxu0
      %v845 = vadd.f32 %v709, %v844
      %v846 = vpop.f32.mrb[0].mxu0
      %847 = vmatprep.mubr.bf16.mxu0 0
      %848 = vmatmul.mubr.bf16.gmra.mrb[0].mxu0 %v704
      %v849 = vpop.f32.mrb[0].mxu0
      %v850 = vadd.f32 %v709, %v849
      %v851 = vpop.f32.mrb[0].mxu0
      %v852 = vpop.f32.mrb[0].mxu0
      %v853 = vadd.f32 %v709, %v852
      %v854 = vpop.f32.mrb[0].mxu0
      %855 = vdwg.mxu0
      %v856 = vmax.f32 %v794, 0.0
      %v857 = vmax.f32 %v797, 0.0
      %v858 = vmax.f32 %v802, 0.0
      %v859 = vmax.f32 %v805, 0.0
      %v860 = vmax.f32 %v810, 0.0
      %v861 = vmax.f32 %v813, 0.0
      %v862 = vmax.f32 %v818, 0.0
      %v863 = vmax.f32 %v821, 0.0
      %v864 = vmax.f32 %v826, 0.0
      %v865 = vmax.f32 %v829, 0.0
      %v866 = vmax.f32 %v834, 0.0
      %v867 = vmax.f32 %v837, 0.0
      %v868 = vmax.f32 %v842, 0.0
      %v869 = vmax.f32 %v845, 0.0
      %v870 = vmax.f32 %v850, 0.0
      %v871 = vmax.f32 %v853, 0.0
      %v872 = vrot.slane %v856, 4
      %v873 = vmax.f32 %v856, %v872
      %v874 = vrot.slane %v873, 2
      %v875 = vmax.f32 %v873, %v874
      %v876 = vrot.slane %v875, 1
      %v877 = vmax.f32 %v875, %v876
      %v878 = vrot.slane %v857, 4
      %v879 = vmax.f32 %v857, %v878
      %v880 = vrot.slane %v879, 2
      %v881 = vmax.f32 %v879, %v880
      %v882 = vrot.slane %v881, 1
      %v883 = vmax.f32 %v881, %v882
      %v884 = vrot.slane %v858, 4
      %v885 = vmax.f32 %v858, %v884
      %v886 = vrot.slane %v885, 2
      %v887 = vmax.f32 %v885, %v886
      %v888 = vrot.slane %v887, 1
      %v889 = vmax.f32 %v887, %v888
      %v890 = vrot.slane %v859, 4
      %v891 = vmax.f32 %v859, %v890
      %v892 = vrot.slane %v891, 2
      %v893 = vmax.f32 %v891, %v892
      %v894 = vrot.slane %v893, 1
      %v895 = vmax.f32 %v893, %v894
      %v896 = vrot.slane %v860, 4
      %v897 = vmax.f32 %v860, %v896
      %v898 = vrot.slane %v897, 2
      %v899 = vmax.f32 %v897, %v898
      %v900 = vrot.slane %v899, 1
      %v901 = vmax.f32 %v899, %v900
      %v902 = vrot.slane %v861, 4
      %v903 = vmax.f32 %v861, %v902
      %v904 = vrot.slane %v903, 2
      %v905 = vmax.f32 %v903, %v904
      %v906 = vrot.slane %v905, 1
      %v907 = vmax.f32 %v905, %v906
      %v908 = vrot.slane %v862, 4
      %v909 = vmax.f32 %v862, %v908
      %v910 = vrot.slane %v909, 2
      %v911 = vmax.f32 %v909, %v910
      %v912 = vrot.slane %v911, 1
      %v913 = vmax.f32 %v911, %v912
      %v914 = vrot.slane %v863, 4
      %v915 = vmax.f32 %v863, %v914
      %v916 = vrot.slane %v915, 2
      %v917 = vmax.f32 %v915, %v916
      %v918 = vrot.slane %v917, 1
      %v919 = vmax.f32 %v917, %v918
      %v920 = vrot.slane %v864, 4
      %v921 = vmax.f32 %v864, %v920
      %v922 = vrot.slane %v921, 2
      %v923 = vmax.f32 %v921, %v922
      %v924 = vrot.slane %v923, 1
      %v925 = vmax.f32 %v923, %v924
      %v926 = vrot.slane %v865, 4
      %v927 = vmax.f32 %v865, %v926
      %v928 = vrot.slane %v927, 2
      %v929 = vmax.f32 %v927, %v928
      %v930 = vrot.slane %v929, 1
      %v931 = vmax.f32 %v929, %v930
      %v932 = vrot.slane %v866, 4
      %v933 = vmax.f32 %v866, %v932
      %v934 = vrot.slane %v933, 2
      %v935 = vmax.f32 %v933, %v934
      %v936 = vrot.slane %v935, 1
      %v937 = vmax.f32 %v935, %v936
      %v938 = vrot.slane %v867, 4
      %v939 = vmax.f32 %v867, %v938
      %v940 = vrot.slane %v939, 2
      %v941 = vmax.f32 %v939, %v940
      %v942 = vrot.slane %v941, 1
      %v943 = vmax.f32 %v941, %v942
      %v944 = vrot.slane %v868, 4
      %v945 = vmax.f32 %v868, %v944
      %v946 = vrot.slane %v945, 2
      %v947 = vmax.f32 %v945, %v946
      %v948 = vrot.slane %v947, 1
      %v949 = vmax.f32 %v947, %v948
      %v950 = vrot.slane %v869, 4
      %v951 = vmax.f32 %v869, %v950
      %v952 = vrot.slane %v951, 2
      %v953 = vmax.f32 %v951, %v952
      %v954 = vrot.slane %v953, 1
      %v955 = vmax.f32 %v953, %v954
      %v956 = vrot.slane %v870, 4
      %v957 = vmax.f32 %v870, %v956
      %v958 = vrot.slane %v957, 2
      %v959 = vmax.f32 %v957, %v958
      %v960 = vrot.slane %v959, 1
      %v961 = vmax.f32 %v959, %v960
      %v962 = vrot.slane %v871, 4
      %v963 = vmax.f32 %v871, %v962
      %v964 = vrot.slane %v963, 2
      %v965 = vmax.f32 %v963, %v964
      %v966 = vrot.slane %v965, 1
      %v967 = vmax.f32 %v965, %v966
      %vm984 = vcmask 1041409
      %v985 = vsel %vm984, %v883, %v877
      %vm986 = vcmask 1042434
      %v987 = vsel %vm986, %v889, %v985
      %vm988 = vcmask 1043459
      %v989 = vsel %vm988, %v895, %v987
      %vm990 = vcmask 1044484
      %v991 = vsel %vm990, %v901, %v989
      %vm992 = vcmask 1045509
      %v993 = vsel %vm992, %v907, %v991
      %vm994 = vcmask 1046534
      %v995 = vsel %vm994, %v913, %v993
      %vm996 = vcmask 1047559
      %v997 = vsel %vm996, %v919, %v995
      %v998 = vsel %vm984, %v931, %v925
      %v999 = vsel %vm986, %v937, %v998
      %v1000 = vsel %vm988, %v943, %v999
      %v1001 = vsel %vm990, %v949, %v1000
      %v1002 = vsel %vm992, %v955, %v1001
      %v1003 = vsel %vm994, %v961, %v1002
      %v1004 = vsel %vm996, %v967, %v1003
      %1007 = vst [vmem:[%s278] sm:$0xff] %v997
      %1008 = vst [vmem:[%s278 + $0x8] sm:$0xff] %v1004
      %p1009 = scmp.lt.s32.totalorder %s18, 1
      %s1010 = scalar_select %p1009, %s18, 1
      %s1011 = smul.addr %s1010, 2
      %s1012 = smul.addr %s1011, 8
      %s1013 = scalar_lea.vmem %s7, %s1012
      // Predicated region
      $region49: #{pointnet2_seg_forward.9} parent=47 // pred_check
        %p1014 = pneg %p188
      $region50: #{pointnet2_seg_forward.9} parent=47 // pred_check_branch
        %1016 = sbr.rel (%p1014) target = $region52
      $region51: #{pointnet2_seg_forward.9} parent=47 // pred_region
        _
      $region52: #{pointnet2_seg_forward.9} parent=47 // pred_fallthru
        _
    $region48: #{pointnet2_seg_forward.9} parent=5 // pred_fallthru
      _
    %p1017 = scmp.le.s32.totalorder 2, %s13
    // Predicated region
    $region53: #{pointnet2_seg_forward.9} parent=5 // pred_check
      %p1018 = pneg %p1017
    $region54: #{pointnet2_seg_forward.9} parent=5 // pred_check_branch
      %1020 = sbr.rel (%p1018) target = $region56
    $region55: #{pointnet2_seg_forward.9} parent=5 // pred_region
      %s1021 = ssub.s32 %s13, 2
      // Predicated region
      $region57: #{pointnet2_seg_forward.9} parent=55 // pred_check
        %p1022 = pneg %p194
      $region58: #{pointnet2_seg_forward.9} parent=55 // pred_check_branch
        %1024 = sbr.rel (%p1022) target = $region60
      $region59: #{pointnet2_seg_forward.9} parent=55 // pred_region
        %p1025 = scmp.lt.s32.totalorder %s19, 1
        %s1026 = scalar_select %p1025, %s19, 1
        %s1027 = smul.addr %s1026, 2
        %s1028 = smul.addr %s1027, 8
        %s1029 = scalar_lea.vmem %s7, %s1028
      $region60: #{pointnet2_seg_forward.9} parent=55 // pred_fallthru
        _
    $region56: #{pointnet2_seg_forward.9} parent=5 // pred_fallthru
      _
  $region6: #{pointnet2_seg_forward.9} parent=0 // loop_footer
    %s17 = sadd.s32 1, %s13
  $region7: #{pointnet2_seg_forward.9} parent=0 // loop_footer_branch
    %12 = sbr.rel target = $region3
  $region8: #{pointnet2_seg_forward.9} parent=0 // loop_exit
    _

// kernel: custom-call.43
$region0: #{custom-call.43}
  %s0 = inlined_call_operand.vmem [shape: f32[2,8], index: 0, kind: output, shape index: {}]

// kernel: pointnet2_seg_forward.10
$region0: #{pointnet2_seg_forward.10}
  #allocation0 [shape = 'u32[]', space=smem, size = 0x4, offset = 0x4, fixed_abs, tag = 'smem constant byte address 0x4 - core index']
  #allocation1 [shape = 'u32[144,128]{1,0:T(1,128)}', space=vmem, size = 0x12000, scoped, tag = 'internal scratch']
  %s0 = inlined_call_operand.vmem [shape: f32[2,64,128], index: 0, kind: input, shape index: {}]
  %s1 = inlined_call_operand.vmem [shape: bf16[128,128], index: 1, kind: input, shape index: {}]
  %s2 = inlined_call_operand.vmem [shape: f32[1,128], index: 2, kind: input, shape index: {}]
  %s3 = inlined_call_operand.vmem [shape: bf16[128,128], index: 3, kind: input, shape index: {}]
  %s4 = inlined_call_operand.vmem [shape: f32[1,128], index: 4, kind: input, shape index: {}]
  %s5 = inlined_call_operand.vmem [shape: bf16[128,128], index: 5, kind: input, shape index: {}]
  %s6 = inlined_call_operand.vmem [shape: f32[1,128], index: 6, kind: input, shape index: {}]
  %s7 = inlined_call_operand.vmem [shape: f32[2,8,128], index: 7, kind: output, shape index: {}]
  %s8 = sld [smem:[#allocation0]]
  $region61: #{pointnet2_seg_forward.10} parent=0
    _
  %s10 = ssub.s32 1, %s8
  %s11 = scalar_select 0, %s10, %s8
  loop: start=0, step=1, limit=4
  $region2: #{pointnet2_seg_forward.10} parent=0 // loop_pre_header
    _
  $region3: #{pointnet2_seg_forward.10} parent=0 // loop_header
    %s13 = sphi 0, %s17
    %p14 = scmp.ge.s32.totalorder %s13, 4
    %s23 = sphi 0, %s25
    %s26 = sphi 0, %s23
    %s27 = sphi 0, %s26
    %s43 = sphi 0, %s27
    %s47 = sphi 0, %s47
    %s49 = sphi 0, %s47
    %s50 = sphi 0, %s49
    %s64 = sphi 0, %s50
    %s68 = sphi 0, %s68
    %s70 = sphi 0, %s68
    %s71 = sphi 0, %s70
    %s85 = sphi 0, %s71
    %s89 = sphi 0, %s89
    %s91 = sphi 0, %s89
    %s92 = sphi 0, %s91
    %s106 = sphi 0, %s92
    %s110 = sphi 0, %s110
    %s112 = sphi 0, %s110
    %s113 = sphi 0, %s112
    %s127 = sphi 0, %s113
    %s131 = sphi 0, %s131
    %s133 = sphi 0, %s131
    %s134 = sphi 0, %s133
    %s148 = sphi 0, %s134
    %s152 = sphi 0, %s152
    %s154 = sphi 0, %s152
    %s155 = sphi 0, %s154
    %s169 = sphi 0, %s155
    %s175 = sphi 0, %s177
    %s178 = sphi 0, %s175
    %s179 = sphi 0, %s178
    %s195 = sphi 0, %s179
  $region4: #{pointnet2_seg_forward.10} parent=0 // loop_header_branch
    %16 = sbr.rel (%p14) target = $region8
  $region5: #{pointnet2_seg_forward.10} parent=0 // loop_body
    %s18 = ssub.s32 %s13, 1
    %s19 = ssub.s32 %s13, 2
    %s20 = sadd.s32 %s13, 1
    %s21 = ssub.s32 %s13, %s20
    %p22 = scmp.eq.s32.totalorder %s21, 0
    %s24 = sadd.s32 %s23, 1
    %s25 = scalar_select %p22, %s23, %s24
    %p28 = pneg %p22
    %p29 = scmp.eq.s32.totalorder %s13, 1
    %p30 = por %p28, %p29
    %p31 = scmp.ne.s32.totalorder %s23, %s26
    %p32 = scmp.eq.s32.totalorder %s13, 0
    %p33 = por %p31, %p32
    %p34 = scmp.ne.s32.totalorder %s23, %s26
    %p35 = scmp.eq.s32.totalorder %s18, 1
    %p36 = por %p34, %p35
    %p37 = scmp.ne.s32.totalorder %s26, %s27
    %p38 = scmp.eq.s32.totalorder %s18, 0
    %p39 = por %p37, %p38
    %p40 = scmp.ne.s32.totalorder %s26, %s27
    %p41 = scmp.eq.s32.totalorder %s19, 1
    %p42 = por %p40, %p41
    %p44 = scmp.ne.s32.totalorder %s27, %s43
    %p45 = scmp.eq.s32.totalorder %s19, 0
    %p46 = por %p44, %p45
    %s48 = sadd.s32 %s47, 1
    %p51 = scmp.eq.s32.totalorder %s13, 1
    %p52 = scmp.ne.s32.totalorder %s47, %s49
    %p53 = scmp.eq.s32.totalorder %s13, 0
    %p54 = por %p52, %p53
    %p55 = scmp.ne.s32.totalorder %s47, %s49
    %p56 = scmp.eq.s32.totalorder %s18, 1
    %p57 = por %p55, %p56
    %p58 = scmp.ne.s32.totalorder %s49, %s50
    %p59 = scmp.eq.s32.totalorder %s18, 0
    %p60 = por %p58, %p59
    %p61 = scmp.ne.s32.totalorder %s49, %s50
    %p62 = scmp.eq.s32.totalorder %s19, 1
    %p63 = por %p61, %p62
    %p65 = scmp.ne.s32.totalorder %s50, %s64
    %p66 = scmp.eq.s32.totalorder %s19, 0
    %p67 = por %p65, %p66
    %s69 = sadd.s32 %s68, 1
    %p72 = scmp.eq.s32.totalorder %s13, 1
    %p73 = scmp.ne.s32.totalorder %s68, %s70
    %p74 = scmp.eq.s32.totalorder %s13, 0
    %p75 = por %p73, %p74
    %p76 = scmp.ne.s32.totalorder %s68, %s70
    %p77 = scmp.eq.s32.totalorder %s18, 1
    %p78 = por %p76, %p77
    %p79 = scmp.ne.s32.totalorder %s70, %s71
    %p80 = scmp.eq.s32.totalorder %s18, 0
    %p81 = por %p79, %p80
    %p82 = scmp.ne.s32.totalorder %s70, %s71
    %p83 = scmp.eq.s32.totalorder %s19, 1
    %p84 = por %p82, %p83
    %p86 = scmp.ne.s32.totalorder %s71, %s85
    %p87 = scmp.eq.s32.totalorder %s19, 0
    %p88 = por %p86, %p87
    %s90 = sadd.s32 %s89, 1
    %p93 = scmp.eq.s32.totalorder %s13, 1
    %p94 = scmp.ne.s32.totalorder %s89, %s91
    %p95 = scmp.eq.s32.totalorder %s13, 0
    %p96 = por %p94, %p95
    %p97 = scmp.ne.s32.totalorder %s89, %s91
    %p98 = scmp.eq.s32.totalorder %s18, 1
    %p99 = por %p97, %p98
    %p100 = scmp.ne.s32.totalorder %s91, %s92
    %p101 = scmp.eq.s32.totalorder %s18, 0
    %p102 = por %p100, %p101
    %p103 = scmp.ne.s32.totalorder %s91, %s92
    %p104 = scmp.eq.s32.totalorder %s19, 1
    %p105 = por %p103, %p104
    %p107 = scmp.ne.s32.totalorder %s92, %s106
    %p108 = scmp.eq.s32.totalorder %s19, 0
    %p109 = por %p107, %p108
    %s111 = sadd.s32 %s110, 1
    %p114 = scmp.eq.s32.totalorder %s13, 1
    %p115 = scmp.ne.s32.totalorder %s110, %s112
    %p116 = scmp.eq.s32.totalorder %s13, 0
    %p117 = por %p115, %p116
    %p118 = scmp.ne.s32.totalorder %s110, %s112
    %p119 = scmp.eq.s32.totalorder %s18, 1
    %p120 = por %p118, %p119
    %p121 = scmp.ne.s32.totalorder %s112, %s113
    %p122 = scmp.eq.s32.totalorder %s18, 0
    %p123 = por %p121, %p122
    %p124 = scmp.ne.s32.totalorder %s112, %s113
    %p125 = scmp.eq.s32.totalorder %s19, 1
    %p126 = por %p124, %p125
    %p128 = scmp.ne.s32.totalorder %s113, %s127
    %p129 = scmp.eq.s32.totalorder %s19, 0
    %p130 = por %p128, %p129
    %s132 = sadd.s32 %s131, 1
    %p135 = scmp.eq.s32.totalorder %s13, 1
    %p136 = scmp.ne.s32.totalorder %s131, %s133
    %p137 = scmp.eq.s32.totalorder %s13, 0
    %p138 = por %p136, %p137
    %p139 = scmp.ne.s32.totalorder %s131, %s133
    %p140 = scmp.eq.s32.totalorder %s18, 1
    %p141 = por %p139, %p140
    %p142 = scmp.ne.s32.totalorder %s133, %s134
    %p143 = scmp.eq.s32.totalorder %s18, 0
    %p144 = por %p142, %p143
    %p145 = scmp.ne.s32.totalorder %s133, %s134
    %p146 = scmp.eq.s32.totalorder %s19, 1
    %p147 = por %p145, %p146
    %p149 = scmp.ne.s32.totalorder %s134, %s148
    %p150 = scmp.eq.s32.totalorder %s19, 0
    %p151 = por %p149, %p150
    %s153 = sadd.s32 %s152, 1
    %p156 = scmp.eq.s32.totalorder %s13, 1
    %p157 = scmp.ne.s32.totalorder %s152, %s154
    %p158 = scmp.eq.s32.totalorder %s13, 0
    %p159 = por %p157, %p158
    %p160 = scmp.ne.s32.totalorder %s152, %s154
    %p161 = scmp.eq.s32.totalorder %s18, 1
    %p162 = por %p160, %p161
    %p163 = scmp.ne.s32.totalorder %s154, %s155
    %p164 = scmp.eq.s32.totalorder %s18, 0
    %p165 = por %p163, %p164
    %p166 = scmp.ne.s32.totalorder %s154, %s155
    %p167 = scmp.eq.s32.totalorder %s19, 1
    %p168 = por %p166, %p167
    %p170 = scmp.ne.s32.totalorder %s155, %s169
    %p171 = scmp.eq.s32.totalorder %s19, 0
    %p172 = por %p170, %p171
    %s173 = ssub.s32 %s13, %s20
    %p174 = scmp.eq.s32.totalorder %s173, 0
    %s176 = sadd.s32 %s175, 1
    %s177 = scalar_select %p174, %s175, %s176
    %p180 = pneg %p174
    %p181 = scmp.eq.s32.totalorder %s13, 1
    %p182 = por %p180, %p181
    %p183 = scmp.ne.s32.totalorder %s175, %s178
    %p184 = scmp.eq.s32.totalorder %s13, 0
    %p185 = por %p183, %p184
    %p186 = scmp.ne.s32.totalorder %s175, %s178
    %p187 = scmp.eq.s32.totalorder %s18, 1
    %p188 = por %p186, %p187
    %p189 = scmp.ne.s32.totalorder %s178, %s179
    %p190 = scmp.eq.s32.totalorder %s18, 0
    %p191 = por %p189, %p190
    %p192 = scmp.ne.s32.totalorder %s178, %s179
    %p193 = scmp.eq.s32.totalorder %s19, 1
    %p194 = por %p192, %p193
    %p196 = scmp.ne.s32.totalorder %s179, %s195
    %p197 = scmp.eq.s32.totalorder %s19, 0
    %p198 = por %p196, %p197
    %p199 = scmp.le.s32.totalorder 1, %s13
    %p200 = scmp.lt.s32.totalorder %s13, 3
    %p201 = pnand %p199, %p200
    %p202 = pneg %p201
    // Predicated region
    $region9: #{pointnet2_seg_forward.10} parent=5 // pred_check
      _
    $region10: #{pointnet2_seg_forward.10} parent=5 // pred_check_branch
      %204 = sbr.rel (%p201) target = $region12
    $region11: #{pointnet2_seg_forward.10} parent=5 // pred_region
      %s205 = ssub.s32 %s13, 1
      // Predicated region
      $region13: #{pointnet2_seg_forward.10} parent=11 // pred_check
        %p206 = pneg %p60
      $region14: #{pointnet2_seg_forward.10} parent=11 // pred_check_branch
        %208 = sbr.rel (%p206) target = $region16
      $region15: #{pointnet2_seg_forward.10} parent=11 // pred_region
        _
      $region16: #{pointnet2_seg_forward.10} parent=11 // pred_fallthru
        _
      // Predicated region
      $region17: #{pointnet2_seg_forward.10} parent=11 // pred_check
        %p209 = pneg %p81
      $region18: #{pointnet2_seg_forward.10} parent=11 // pred_check_branch
        %211 = sbr.rel (%p209) target = $region20
      $region19: #{pointnet2_seg_forward.10} parent=11 // pred_region
        _
      $region20: #{pointnet2_seg_forward.10} parent=11 // pred_fallthru
        _
      // Predicated region
      $region21: #{pointnet2_seg_forward.10} parent=11 // pred_check
        %p212 = pneg %p102
      $region22: #{pointnet2_seg_forward.10} parent=11 // pred_check_branch
        %214 = sbr.rel (%p212) target = $region24
      $region23: #{pointnet2_seg_forward.10} parent=11 // pred_region
        _
      $region24: #{pointnet2_seg_forward.10} parent=11 // pred_fallthru
        _
      // Predicated region
      $region25: #{pointnet2_seg_forward.10} parent=11 // pred_check
        %p215 = pneg %p123
      $region26: #{pointnet2_seg_forward.10} parent=11 // pred_check_branch
        %217 = sbr.rel (%p215) target = $region28
      $region27: #{pointnet2_seg_forward.10} parent=11 // pred_region
        _
      $region28: #{pointnet2_seg_forward.10} parent=11 // pred_fallthru
        _
      // Predicated region
      $region29: #{pointnet2_seg_forward.10} parent=11 // pred_check
        %p218 = pneg %p144
      $region30: #{pointnet2_seg_forward.10} parent=11 // pred_check_branch
        %220 = sbr.rel (%p218) target = $region32
      $region31: #{pointnet2_seg_forward.10} parent=11 // pred_region
        _
      $region32: #{pointnet2_seg_forward.10} parent=11 // pred_fallthru
        _
      // Predicated region
      $region33: #{pointnet2_seg_forward.10} parent=11 // pred_check
        %p221 = pneg %p165
      $region34: #{pointnet2_seg_forward.10} parent=11 // pred_check_branch
        %223 = sbr.rel (%p221) target = $region36
      $region35: #{pointnet2_seg_forward.10} parent=11 // pred_region
        _
      $region36: #{pointnet2_seg_forward.10} parent=11 // pred_fallthru
        _
    $region12: #{pointnet2_seg_forward.10} parent=5 // pred_fallthru
      _
    %p224 = scmp.lt.s32.totalorder %s13, 2
    // Predicated region
    $region37: #{pointnet2_seg_forward.10} parent=5 // pred_check
      %p225 = pneg %p224
    $region38: #{pointnet2_seg_forward.10} parent=5 // pred_check_branch
      %227 = sbr.rel (%p225) target = $region40
    $region39: #{pointnet2_seg_forward.10} parent=5 // pred_region
      // Predicated region
      $region41: #{pointnet2_seg_forward.10} parent=39 // pred_check
        %p228 = pneg %p33
      $region42: #{pointnet2_seg_forward.10} parent=39 // pred_check_branch
        %230 = sbr.rel (%p228) target = $region44
      $region43: #{pointnet2_seg_forward.10} parent=39 // pred_region
        %p231 = scmp.lt.s32.totalorder %s13, 1
        %s232 = scalar_select %p231, %s13, 1
        %s233 = smul.addr %s232, 8
        %s234 = smul.addr %s233, 8
        %s235 = scalar_lea.vmem %s0, %s234
      $region44: #{pointnet2_seg_forward.10} parent=39 // pred_fallthru
        _
    $region40: #{pointnet2_seg_forward.10} parent=5 // pred_fallthru
      _
    %p236 = scmp.le.s32.totalorder 1, %s13
    %p237 = scmp.lt.s32.totalorder %s13, 3
    %p238 = pnand %p236, %p237
    %p239 = pneg %p238
    // Predicated region
    $region45: #{pointnet2_seg_forward.10} parent=5 // pred_check
      _
    $region46: #{pointnet2_seg_forward.10} parent=5 // pred_check_branch
      %241 = sbr.rel (%p238) target = $region48
    $region47: #{pointnet2_seg_forward.10} parent=5 // pred_region
      %s242 = ssub.s32 %s13, 1
      %p243 = scmp.lt.s32.totalorder %s18, 1
      %s244 = scalar_select %p243, %s18, 1
      %s245 = smul.addr %s244, 8
      %s246 = smul.addr %s245, 8
      %s247 = scalar_lea.vmem %s0, %s246
      %p248 = pneg %p39
      %p249 = pneg %p36
      %p250 = pneg %p60
      %p251 = pneg %p57
      %p252 = pneg %p81
      %p253 = pneg %p78
      %p254 = pneg %p102
      %p255 = pneg %p99
      %p256 = pneg %p123
      %p257 = pneg %p120
      %p258 = pneg %p144
      %p259 = pneg %p141
      %p260 = pneg %p165
      %p261 = pneg %p162
      %p262 = pneg %p191
      %p263 = pneg %p188
      %p264 = scmp.lt.s32.totalorder %s18, 1
      %s265 = scalar_select %p264, %s18, 1
      %s266 = smul.addr %s265, 8
      %s267 = scalar_lea.vmem %s7, %s266
      %p268 = scmp.lt.s32.totalorder %s18, 1
      %s269 = scalar_select %p268, %s18, 1
      %s270 = smul.addr %s269, 8
      %s271 = smul.addr %s270, 8
      %s272 = scalar_lea.vmem %s0, %s271
      %p273 = scmp.lt.s32.totalorder %s18, 1
      %s274 = scalar_select %p273, %s18, 1
      %s275 = smul.addr %s274, 8
      %s276 = scalar_lea.vmem %s7, %s275
      %v278 = vld [vmem:[%s272] sm:$0xff]
      %v279 = vld [vmem:[%s272 + $0x8] sm:$0xff]
      %v280 = vld [vmem:[%s272 + $0x10] sm:$0xff]
      %v281 = vld [vmem:[%s272 + $0x18] sm:$0xff]
      %v282 = vld [vmem:[%s272 + $0x20] sm:$0xff]
      %v283 = vld [vmem:[%s272 + $0x28] sm:$0xff]
      %v284 = vld [vmem:[%s272 + $0x30] sm:$0xff]
      %v285 = vld [vmem:[%s272 + $0x38] sm:$0xff]
      %v286 = vld [vmem:[%s1] sm:$0xf]
      %v287 = vld [vmem:[%s1 + $0x4] sm:$0xf]
      %v288 = vld [vmem:[%s1 + $0x8] sm:$0xf]
      %v289 = vld [vmem:[%s1 + $0xc] sm:$0xf]
      %v290 = vld [vmem:[%s1 + $0x10] sm:$0xf]
      %v291 = vld [vmem:[%s1 + $0x14] sm:$0xf]
      %v292 = vld [vmem:[%s1 + $0x18] sm:$0xf]
      %v293 = vld [vmem:[%s1 + $0x1c] sm:$0xf]
      %v294 = vld [vmem:[%s1 + $0x20] sm:$0xf]
      %v295 = vld [vmem:[%s1 + $0x24] sm:$0xf]
      %v296 = vld [vmem:[%s1 + $0x28] sm:$0xf]
      %v297 = vld [vmem:[%s1 + $0x2c] sm:$0xf]
      %v298 = vld [vmem:[%s1 + $0x30] sm:$0xf]
      %v299 = vld [vmem:[%s1 + $0x34] sm:$0xf]
      %v300 = vld [vmem:[%s1 + $0x38] sm:$0xf]
      %v301 = vld [vmem:[%s1 + $0x3c] sm:$0xf]
      %v302 = vld [vmem:[%s2] sm:$0x1]
      %v303 = vpack.c.bf16 %v279, %v278
      %v304 = vpack.c.bf16 %v281, %v280
      %v305 = vpack.c.bf16 %v283, %v282
      %v306 = vpack.c.bf16 %v285, %v284
      %v308 = vlaneseq
      %v309 = vshrl.u32 %v308, 7
      %v310 = vsub.s32 0, %v309
      %v311 = vrot.slane %v302, %v310
      %v329 = vunpack.c.l.b16 %v286
      %v330 = vunpack.c.l.b16 %v287
      %v331 = vunpack.c.l.b16 %v288
      %v332 = vunpack.c.l.b16 %v289
      %v333 = vunpack.c.l.b16 %v290
      %v334 = vunpack.c.l.b16 %v291
      %v335 = vunpack.c.l.b16 %v292
      %v336 = vunpack.c.l.b16 %v293
      %v337 = vunpack.c.l.b16 %v294
      %v338 = vunpack.c.l.b16 %v295
      %v339 = vunpack.c.l.b16 %v296
      %v340 = vunpack.c.l.b16 %v297
      %v341 = vunpack.c.l.b16 %v298
      %v342 = vunpack.c.l.b16 %v299
      %v343 = vunpack.c.l.b16 %v300
      %v344 = vunpack.c.l.b16 %v301
      %v345 = vpack.c.b16 %v330, %v329
      %v346 = vpack.c.b16 %v332, %v331
      %v347 = vpack.c.b16 %v334, %v333
      %v348 = vpack.c.b16 %v336, %v335
      %v349 = vpack.c.b16 %v338, %v337
      %v350 = vpack.c.b16 %v340, %v339
      %v351 = vpack.c.b16 %v342, %v341
      %v352 = vpack.c.b16 %v344, %v343
      %361 = vmatprep.subr.bf16.mxu0 0
      %362 = vmatpush1.bf16.msra.mxu0 %v345
      %363 = vmatprep.subr.bf16.mxu0 0
      %364 = vmatpush1.bf16.msra.mxu0 %v346
      %365 = vmatprep.subr.bf16.mxu0 0
      %366 = vmatpush1.bf16.msra.mxu0 %v347
      %367 = vmatprep.subr.bf16.mxu0 0
      %368 = vmatpush1.bf16.msra.mxu0 %v348
      %369 = vmatprep.subr.bf16.mxu0 0
      %370 = vmatpush1.bf16.msra.mxu0 %v349
      %371 = vmatprep.subr.bf16.mxu0 0
      %372 = vmatpush1.bf16.msra.mxu0 %v350
      %373 = vmatprep.subr.bf16.mxu0 0
      %374 = vmatpush1.bf16.msra.mxu0 %v351
      %375 = vmatprep.subr.bf16.mxu0 0
      %376 = vmatpush1.bf16.msra.mxu0 %v352
      %377 = vmatprep.subr.bf16.mxu0 0
      %378 = vmatpush1.bf16.msra.mxu0 0
      %379 = vmatprep.subr.bf16.mxu0 0
      %380 = vmatpush1.bf16.msra.mxu0 0
      %381 = vmatprep.subr.bf16.mxu0 0
      %382 = vmatpush1.bf16.msra.mxu0 0
      %383 = vmatprep.subr.bf16.mxu0 0
      %384 = vmatpush1.bf16.msra.mxu0 0
      %385 = vmatprep.subr.bf16.mxu0 0
      %386 = vmatpush1.bf16.msra.mxu0 0
      %387 = vmatprep.subr.bf16.mxu0 0
      %388 = vmatpush1.bf16.msra.mxu0 0
      %389 = vmatprep.subr.bf16.mxu0 0
      %390 = vmatpush1.bf16.msra.mxu0 0
      %391 = vmatprep.subr.bf16.mxu0 0
      %392 = vmatpush1.bf16.msra.mxu0 0
      %393 = vmatprep.mubr.bf16.mxu0 0
      %394 = vmatmul.mubr.bf16.gmra.mrb[0].mxu0 %v303
      %v395 = vpop.f32.mrb[0].mxu0
      %v396 = vadd.f32 %v311, %v395
      %v397 = vpop.f32.mrb[0].mxu0
      %v398 = vpop.f32.mrb[0].mxu0
      %v399 = vadd.f32 %v311, %v398
      %v400 = vpop.f32.mrb[0].mxu0
      %401 = vmatprep.mubr.bf16.mxu0 0
      %402 = vmatmul.mubr.bf16.gmra.mrb[0].mxu0 %v304
      %v403 = vpop.f32.mrb[0].mxu0
      %v404 = vadd.f32 %v311, %v403
      %v405 = vpop.f32.mrb[0].mxu0
      %v406 = vpop.f32.mrb[0].mxu0
      %v407 = vadd.f32 %v311, %v406
      %v408 = vpop.f32.mrb[0].mxu0
      %409 = vmatprep.mubr.bf16.mxu0 0
      %410 = vmatmul.mubr.bf16.gmra.mrb[0].mxu0 %v305
      %v411 = vpop.f32.mrb[0].mxu0
      %v412 = vadd.f32 %v311, %v411
      %v413 = vpop.f32.mrb[0].mxu0
      %v414 = vpop.f32.mrb[0].mxu0
      %v415 = vadd.f32 %v311, %v414
      %v416 = vpop.f32.mrb[0].mxu0
      %417 = vmatprep.mubr.bf16.mxu0 0
      %418 = vmatmul.mubr.bf16.gmra.mrb[0].mxu0 %v306
      %v419 = vpop.f32.mrb[0].mxu0
      %v420 = vadd.f32 %v311, %v419
      %v421 = vpop.f32.mrb[0].mxu0
      %v422 = vpop.f32.mrb[0].mxu0
      %v423 = vadd.f32 %v311, %v422
      %v424 = vpop.f32.mrb[0].mxu0
      %425 = vdwg.mxu0
      %v426 = vmax.f32 %v396, 0.0
      %v427 = vmax.f32 %v399, 0.0
      %v428 = vmax.f32 %v404, 0.0
      %v429 = vmax.f32 %v407, 0.0
      %v430 = vmax.f32 %v412, 0.0
      %v431 = vmax.f32 %v415, 0.0
      %v432 = vmax.f32 %v420, 0.0
      %v433 = vmax.f32 %v423, 0.0
      %v434 = vld [vmem:[%s3] sm:$0xf]
      %v435 = vld [vmem:[%s3 + $0x4] sm:$0xf]
      %v436 = vld [vmem:[%s3 + $0x8] sm:$0xf]
      %v437 = vld [vmem:[%s3 + $0xc] sm:$0xf]
      %v438 = vld [vmem:[%s3 + $0x10] sm:$0xf]
      %v439 = vld [vmem:[%s3 + $0x14] sm:$0xf]
      %v440 = vld [vmem:[%s3 + $0x18] sm:$0xf]
      %v441 = vld [vmem:[%s3 + $0x1c] sm:$0xf]
      %v442 = vld [vmem:[%s3 + $0x20] sm:$0xf]
      %v443 = vld [vmem:[%s3 + $0x24] sm:$0xf]
      %v444 = vld [vmem:[%s3 + $0x28] sm:$0xf]
      %v445 = vld [vmem:[%s3 + $0x2c] sm:$0xf]
      %v446 = vld [vmem:[%s3 + $0x30] sm:$0xf]
      %v447 = vld [vmem:[%s3 + $0x34] sm:$0xf]
      %v448 = vld [vmem:[%s3 + $0x38] sm:$0xf]
      %v449 = vld [vmem:[%s3 + $0x3c] sm:$0xf]
      %v450 = vld [vmem:[%s4] sm:$0x1]
      %v451 = vpack.c.bf16 %v427, %v426
      %v452 = vpack.c.bf16 %v429, %v428
      %v453 = vpack.c.bf16 %v431, %v430
      %v454 = vpack.c.bf16 %v433, %v432
      %v456 = vlaneseq
      %v457 = vshrl.u32 %v456, 7
      %v458 = vsub.s32 0, %v457
      %v459 = vrot.slane %v450, %v458
      %v477 = vunpack.c.l.b16 %v434
      %v478 = vunpack.c.l.b16 %v435
      %v479 = vunpack.c.l.b16 %v436
      %v480 = vunpack.c.l.b16 %v437
      %v481 = vunpack.c.l.b16 %v438
      %v482 = vunpack.c.l.b16 %v439
      %v483 = vunpack.c.l.b16 %v440
      %v484 = vunpack.c.l.b16 %v441
      %v485 = vunpack.c.l.b16 %v442
      %v486 = vunpack.c.l.b16 %v443
      %v487 = vunpack.c.l.b16 %v444
      %v488 = vunpack.c.l.b16 %v445
      %v489 = vunpack.c.l.b16 %v446
      %v490 = vunpack.c.l.b16 %v447
      %v491 = vunpack.c.l.b16 %v448
      %v492 = vunpack.c.l.b16 %v449
      %v493 = vpack.c.b16 %v478, %v477
      %v494 = vpack.c.b16 %v480, %v479
      %v495 = vpack.c.b16 %v482, %v481
      %v496 = vpack.c.b16 %v484, %v483
      %v497 = vpack.c.b16 %v486, %v485
      %v498 = vpack.c.b16 %v488, %v487
      %v499 = vpack.c.b16 %v490, %v489
      %v500 = vpack.c.b16 %v492, %v491
      %509 = vmatprep.subr.bf16.mxu0 0
      %510 = vmatpush1.bf16.msra.mxu0 %v493
      %511 = vmatprep.subr.bf16.mxu0 0
      %512 = vmatpush1.bf16.msra.mxu0 %v494
      %513 = vmatprep.subr.bf16.mxu0 0
      %514 = vmatpush1.bf16.msra.mxu0 %v495
      %515 = vmatprep.subr.bf16.mxu0 0
      %516 = vmatpush1.bf16.msra.mxu0 %v496
      %517 = vmatprep.subr.bf16.mxu0 0
      %518 = vmatpush1.bf16.msra.mxu0 %v497
      %519 = vmatprep.subr.bf16.mxu0 0
      %520 = vmatpush1.bf16.msra.mxu0 %v498
      %521 = vmatprep.subr.bf16.mxu0 0
      %522 = vmatpush1.bf16.msra.mxu0 %v499
      %523 = vmatprep.subr.bf16.mxu0 0
      %524 = vmatpush1.bf16.msra.mxu0 %v500
      %525 = vmatprep.subr.bf16.mxu0 0
      %526 = vmatpush1.bf16.msra.mxu0 0
      %527 = vmatprep.subr.bf16.mxu0 0
      %528 = vmatpush1.bf16.msra.mxu0 0
      %529 = vmatprep.subr.bf16.mxu0 0
      %530 = vmatpush1.bf16.msra.mxu0 0
      %531 = vmatprep.subr.bf16.mxu0 0
      %532 = vmatpush1.bf16.msra.mxu0 0
      %533 = vmatprep.subr.bf16.mxu0 0
      %534 = vmatpush1.bf16.msra.mxu0 0
      %535 = vmatprep.subr.bf16.mxu0 0
      %536 = vmatpush1.bf16.msra.mxu0 0
      %537 = vmatprep.subr.bf16.mxu0 0
      %538 = vmatpush1.bf16.msra.mxu0 0
      %539 = vmatprep.subr.bf16.mxu0 0
      %540 = vmatpush1.bf16.msra.mxu0 0
      %541 = vmatprep.mubr.bf16.mxu0 0
      %542 = vmatmul.mubr.bf16.gmra.mrb[0].mxu0 %v451
      %v543 = vpop.f32.mrb[0].mxu0
      %v544 = vadd.f32 %v459, %v543
      %v545 = vpop.f32.mrb[0].mxu0
      %v546 = vpop.f32.mrb[0].mxu0
      %v547 = vadd.f32 %v459, %v546
      %v548 = vpop.f32.mrb[0].mxu0
      %549 = vmatprep.mubr.bf16.mxu0 0
      %550 = vmatmul.mubr.bf16.gmra.mrb[0].mxu0 %v452
      %v551 = vpop.f32.mrb[0].mxu0
      %v552 = vadd.f32 %v459, %v551
      %v553 = vpop.f32.mrb[0].mxu0
      %v554 = vpop.f32.mrb[0].mxu0
      %v555 = vadd.f32 %v459, %v554
      %v556 = vpop.f32.mrb[0].mxu0
      %557 = vmatprep.mubr.bf16.mxu0 0
      %558 = vmatmul.mubr.bf16.gmra.mrb[0].mxu0 %v453
      %v559 = vpop.f32.mrb[0].mxu0
      %v560 = vadd.f32 %v459, %v559
      %v561 = vpop.f32.mrb[0].mxu0
      %v562 = vpop.f32.mrb[0].mxu0
      %v563 = vadd.f32 %v459, %v562
      %v564 = vpop.f32.mrb[0].mxu0
      %565 = vmatprep.mubr.bf16.mxu0 0
      %566 = vmatmul.mubr.bf16.gmra.mrb[0].mxu0 %v454
      %v567 = vpop.f32.mrb[0].mxu0
      %v568 = vadd.f32 %v459, %v567
      %v569 = vpop.f32.mrb[0].mxu0
      %v570 = vpop.f32.mrb[0].mxu0
      %v571 = vadd.f32 %v459, %v570
      %v572 = vpop.f32.mrb[0].mxu0
      %573 = vdwg.mxu0
      %v574 = vmax.f32 %v544, 0.0
      %v575 = vmax.f32 %v547, 0.0
      %v576 = vmax.f32 %v552, 0.0
      %v577 = vmax.f32 %v555, 0.0
      %v578 = vmax.f32 %v560, 0.0
      %v579 = vmax.f32 %v563, 0.0
      %v580 = vmax.f32 %v568, 0.0
      %v581 = vmax.f32 %v571, 0.0
      %v582 = vld [vmem:[%s5] sm:$0xf]
      %v583 = vld [vmem:[%s5 + $0x4] sm:$0xf]
      %v584 = vld [vmem:[%s5 + $0x8] sm:$0xf]
      %v585 = vld [vmem:[%s5 + $0xc] sm:$0xf]
      %v586 = vld [vmem:[%s5 + $0x10] sm:$0xf]
      %v587 = vld [vmem:[%s5 + $0x14] sm:$0xf]
      %v588 = vld [vmem:[%s5 + $0x18] sm:$0xf]
      %v589 = vld [vmem:[%s5 + $0x1c] sm:$0xf]
      %v590 = vld [vmem:[%s5 + $0x20] sm:$0xf]
      %v591 = vld [vmem:[%s5 + $0x24] sm:$0xf]
      %v592 = vld [vmem:[%s5 + $0x28] sm:$0xf]
      %v593 = vld [vmem:[%s5 + $0x2c] sm:$0xf]
      %v594 = vld [vmem:[%s5 + $0x30] sm:$0xf]
      %v595 = vld [vmem:[%s5 + $0x34] sm:$0xf]
      %v596 = vld [vmem:[%s5 + $0x38] sm:$0xf]
      %v597 = vld [vmem:[%s5 + $0x3c] sm:$0xf]
      %v598 = vld [vmem:[%s6] sm:$0x1]
      %v599 = vpack.c.bf16 %v575, %v574
      %v600 = vpack.c.bf16 %v577, %v576
      %v601 = vpack.c.bf16 %v579, %v578
      %v602 = vpack.c.bf16 %v581, %v580
      %v604 = vlaneseq
      %v605 = vshrl.u32 %v604, 7
      %v606 = vsub.s32 0, %v605
      %v607 = vrot.slane %v598, %v606
      %v625 = vunpack.c.l.b16 %v582
      %v626 = vunpack.c.l.b16 %v583
      %v627 = vunpack.c.l.b16 %v584
      %v628 = vunpack.c.l.b16 %v585
      %v629 = vunpack.c.l.b16 %v586
      %v630 = vunpack.c.l.b16 %v587
      %v631 = vunpack.c.l.b16 %v588
      %v632 = vunpack.c.l.b16 %v589
      %v633 = vunpack.c.l.b16 %v590
      %v634 = vunpack.c.l.b16 %v591
      %v635 = vunpack.c.l.b16 %v592
      %v636 = vunpack.c.l.b16 %v593
      %v637 = vunpack.c.l.b16 %v594
      %v638 = vunpack.c.l.b16 %v595
      %v639 = vunpack.c.l.b16 %v596
      %v640 = vunpack.c.l.b16 %v597
      %v641 = vpack.c.b16 %v626, %v625
      %v642 = vpack.c.b16 %v628, %v627
      %v643 = vpack.c.b16 %v630, %v629
      %v644 = vpack.c.b16 %v632, %v631
      %v645 = vpack.c.b16 %v634, %v633
      %v646 = vpack.c.b16 %v636, %v635
      %v647 = vpack.c.b16 %v638, %v637
      %v648 = vpack.c.b16 %v640, %v639
      %657 = vmatprep.subr.bf16.mxu0 0
      %658 = vmatpush1.bf16.msra.mxu0 %v641
      %659 = vmatprep.subr.bf16.mxu0 0
      %660 = vmatpush1.bf16.msra.mxu0 %v642
      %661 = vmatprep.subr.bf16.mxu0 0
      %662 = vmatpush1.bf16.msra.mxu0 %v643
      %663 = vmatprep.subr.bf16.mxu0 0
      %664 = vmatpush1.bf16.msra.mxu0 %v644
      %665 = vmatprep.subr.bf16.mxu0 0
      %666 = vmatpush1.bf16.msra.mxu0 %v645
      %667 = vmatprep.subr.bf16.mxu0 0
      %668 = vmatpush1.bf16.msra.mxu0 %v646
      %669 = vmatprep.subr.bf16.mxu0 0
      %670 = vmatpush1.bf16.msra.mxu0 %v647
      %671 = vmatprep.subr.bf16.mxu0 0
      %672 = vmatpush1.bf16.msra.mxu0 %v648
      %673 = vmatprep.subr.bf16.mxu0 0
      %674 = vmatpush1.bf16.msra.mxu0 0
      %675 = vmatprep.subr.bf16.mxu0 0
      %676 = vmatpush1.bf16.msra.mxu0 0
      %677 = vmatprep.subr.bf16.mxu0 0
      %678 = vmatpush1.bf16.msra.mxu0 0
      %679 = vmatprep.subr.bf16.mxu0 0
      %680 = vmatpush1.bf16.msra.mxu0 0
      %681 = vmatprep.subr.bf16.mxu0 0
      %682 = vmatpush1.bf16.msra.mxu0 0
      %683 = vmatprep.subr.bf16.mxu0 0
      %684 = vmatpush1.bf16.msra.mxu0 0
      %685 = vmatprep.subr.bf16.mxu0 0
      %686 = vmatpush1.bf16.msra.mxu0 0
      %687 = vmatprep.subr.bf16.mxu0 0
      %688 = vmatpush1.bf16.msra.mxu0 0
      %689 = vmatprep.mubr.bf16.mxu0 0
      %690 = vmatmul.mubr.bf16.gmra.mrb[0].mxu0 %v599
      %v691 = vpop.f32.mrb[0].mxu0
      %v692 = vadd.f32 %v607, %v691
      %v693 = vpop.f32.mrb[0].mxu0
      %v694 = vpop.f32.mrb[0].mxu0
      %v695 = vadd.f32 %v607, %v694
      %v696 = vpop.f32.mrb[0].mxu0
      %697 = vmatprep.mubr.bf16.mxu0 0
      %698 = vmatmul.mubr.bf16.gmra.mrb[0].mxu0 %v600
      %v699 = vpop.f32.mrb[0].mxu0
      %v700 = vadd.f32 %v607, %v699
      %v701 = vpop.f32.mrb[0].mxu0
      %v702 = vpop.f32.mrb[0].mxu0
      %v703 = vadd.f32 %v607, %v702
      %v704 = vpop.f32.mrb[0].mxu0
      %705 = vmatprep.mubr.bf16.mxu0 0
      %706 = vmatmul.mubr.bf16.gmra.mrb[0].mxu0 %v601
      %v707 = vpop.f32.mrb[0].mxu0
      %v708 = vadd.f32 %v607, %v707
      %v709 = vpop.f32.mrb[0].mxu0
      %v710 = vpop.f32.mrb[0].mxu0
      %v711 = vadd.f32 %v607, %v710
      %v712 = vpop.f32.mrb[0].mxu0
      %713 = vmatprep.mubr.bf16.mxu0 0
      %714 = vmatmul.mubr.bf16.gmra.mrb[0].mxu0 %v602
      %v715 = vpop.f32.mrb[0].mxu0
      %v716 = vadd.f32 %v607, %v715
      %v717 = vpop.f32.mrb[0].mxu0
      %v718 = vpop.f32.mrb[0].mxu0
      %v719 = vadd.f32 %v607, %v718
      %v720 = vpop.f32.mrb[0].mxu0
      %721 = vdwg.mxu0
      %v722 = vmax.f32 %v692, 0.0
      %v723 = vmax.f32 %v695, 0.0
      %v724 = vmax.f32 %v700, 0.0
      %v725 = vmax.f32 %v703, 0.0
      %v726 = vmax.f32 %v708, 0.0
      %v727 = vmax.f32 %v711, 0.0
      %v728 = vmax.f32 %v716, 0.0
      %v729 = vmax.f32 %v719, 0.0
      %v730 = vrot.slane %v722, 4
      %v731 = vmax.f32 %v722, %v730
      %v732 = vrot.slane %v731, 2
      %v733 = vmax.f32 %v731, %v732
      %v734 = vrot.slane %v733, 1
      %v735 = vmax.f32 %v733, %v734
      %v736 = vrot.slane %v723, 4
      %v737 = vmax.f32 %v723, %v736
      %v738 = vrot.slane %v737, 2
      %v739 = vmax.f32 %v737, %v738
      %v740 = vrot.slane %v739, 1
      %v741 = vmax.f32 %v739, %v740
      %v742 = vrot.slane %v724, 4
      %v743 = vmax.f32 %v724, %v742
      %v744 = vrot.slane %v743, 2
      %v745 = vmax.f32 %v743, %v744
      %v746 = vrot.slane %v745, 1
      %v747 = vmax.f32 %v745, %v746
      %v748 = vrot.slane %v725, 4
      %v749 = vmax.f32 %v725, %v748
      %v750 = vrot.slane %v749, 2
      %v751 = vmax.f32 %v749, %v750
      %v752 = vrot.slane %v751, 1
      %v753 = vmax.f32 %v751, %v752
      %v754 = vrot.slane %v726, 4
      %v755 = vmax.f32 %v726, %v754
      %v756 = vrot.slane %v755, 2
      %v757 = vmax.f32 %v755, %v756
      %v758 = vrot.slane %v757, 1
      %v759 = vmax.f32 %v757, %v758
      %v760 = vrot.slane %v727, 4
      %v761 = vmax.f32 %v727, %v760
      %v762 = vrot.slane %v761, 2
      %v763 = vmax.f32 %v761, %v762
      %v764 = vrot.slane %v763, 1
      %v765 = vmax.f32 %v763, %v764
      %v766 = vrot.slane %v728, 4
      %v767 = vmax.f32 %v728, %v766
      %v768 = vrot.slane %v767, 2
      %v769 = vmax.f32 %v767, %v768
      %v770 = vrot.slane %v769, 1
      %v771 = vmax.f32 %v769, %v770
      %v772 = vrot.slane %v729, 4
      %v773 = vmax.f32 %v729, %v772
      %v774 = vrot.slane %v773, 2
      %v775 = vmax.f32 %v773, %v774
      %v776 = vrot.slane %v775, 1
      %v777 = vmax.f32 %v775, %v776
      %vm786 = vcmask 1041409
      %v787 = vsel %vm786, %v741, %v735
      %vm788 = vcmask 1042434
      %v789 = vsel %vm788, %v747, %v787
      %vm790 = vcmask 1043459
      %v791 = vsel %vm790, %v753, %v789
      %vm792 = vcmask 1044484
      %v793 = vsel %vm792, %v759, %v791
      %vm794 = vcmask 1045509
      %v795 = vsel %vm794, %v765, %v793
      %vm796 = vcmask 1046534
      %v797 = vsel %vm796, %v771, %v795
      %vm798 = vcmask 1047559
      %v799 = vsel %vm798, %v777, %v797
      %801 = vst [vmem:[%s276] sm:$0xff] %v799
      %p802 = scmp.lt.s32.totalorder %s18, 1
      %s803 = scalar_select %p802, %s18, 1
      %s804 = smul.addr %s803, 8
      %s805 = scalar_lea.vmem %s7, %s804
      // Predicated region
      $region49: #{pointnet2_seg_forward.10} parent=47 // pred_check
        %p806 = pneg %p188
      $region50: #{pointnet2_seg_forward.10} parent=47 // pred_check_branch
        %808 = sbr.rel (%p806) target = $region52
      $region51: #{pointnet2_seg_forward.10} parent=47 // pred_region
        _
      $region52: #{pointnet2_seg_forward.10} parent=47 // pred_fallthru
        _
    $region48: #{pointnet2_seg_forward.10} parent=5 // pred_fallthru
      _
    %p809 = scmp.le.s32.totalorder 2, %s13
    // Predicated region
    $region53: #{pointnet2_seg_forward.10} parent=5 // pred_check
      %p810 = pneg %p809
    $region54: #{pointnet2_seg_forward.10} parent=5 // pred_check_branch
      %812 = sbr.rel (%p810) target = $region56
    $region55: #{pointnet2_seg_forward.10} parent=5 // pred_region
      %s813 = ssub.s32 %s13, 2
      // Predicated region
      $region57: #{pointnet2_seg_forward.10} parent=55 // pred_check
        %p814 = pneg %p194
      $region58: #{pointnet2_seg_forward.10} parent=55 // pred_check_branch
        %816 = sbr.rel (%p814) target = $region60
      $region59: #{pointnet2_seg_forward.10} parent=55 // pred_region
        %p817 = scmp.lt.s32.totalorder %s19, 1
        %s818 = scalar_select %p817, %s19, 1
        %s819 = smul.addr %s818, 8
        %s820 = scalar_lea.vmem %s7, %s819
      $region60: #{pointnet2_seg_forward.10} parent=55 // pred_fallthru
        _
    $region56: #{pointnet2_seg_forward.10} parent=5 // pred_fallthru
      _
  $region6: #{pointnet2_seg_forward.10} parent=0 // loop_footer
    %s17 = sadd.s32 1, %s13
  $region7: #{pointnet2_seg_forward.10} parent=0 // loop_footer_branch
    %12 = sbr.rel target = $region3
  $region8: #{pointnet2_seg_forward.10} parent=0 // loop_exit
    _

// kernel: neg.8
$region0: #{neg.8}
  #allocation0 [shape = 's32[1]{0}', space=sflag, size = 0x4, scoped, tag = 'scoped memory for neg.8']
  %s0 = inlined_call_operand.vmem [shape: f32[2,8,4], index: 0, kind: input, shape index: {}]
  %s1 = inlined_call_operand.vmem [shape: f32[2,8,4], index: 1, kind: output, shape index: {}]
  %v2 = vld [vmem:[%s0] sm:$0xf]
  %3 = xla_tuple %v2
  %4 = xla_tuple %3
  %v5 = vxor.u32 %v2, 2147483648
  %6 = xla_tuple %v5
  %7 = vst [vmem:[%s1] sm:$0xf] %v5
  %s8 = scalar_lea.vmem %s0, 4
  %v9 = vld [vmem:[%s8] sm:$0xf]
  %10 = xla_tuple %v9
  %11 = xla_tuple %10
  %v12 = vxor.u32 %v9, 2147483648
  %13 = xla_tuple %v12
  %s14 = scalar_lea.vmem %s1, 4
  %15 = vst [vmem:[%s14] sm:$0xf] %v12

// kernel: neg.10
$region0: #{neg.10}
  #allocation0 [shape = 's32[1]{0}', space=sflag, size = 0x4, scoped, tag = 'scoped memory for neg.10']
  %s0 = inlined_call_operand.vmem [shape: f32[2,16,8], index: 0, kind: input, shape index: {}]
  %s1 = inlined_call_operand.vmem [shape: f32[2,16,8], index: 1, kind: output, shape index: {}]
  %v2 = vld [vmem:[%s0] sm:$0xff]
  %3 = xla_tuple %v2
  %4 = xla_tuple %3
  %v5 = vxor.u32 %v2, 2147483648
  %6 = xla_tuple %v5
  %7 = vst [vmem:[%s1] sm:$0xff] %v5
  %s8 = scalar_lea.vmem %s0, 8
  %v9 = vld [vmem:[%s8] sm:$0xff]
  %10 = xla_tuple %v9
  %11 = xla_tuple %10
  %v12 = vxor.u32 %v9, 2147483648
  %13 = xla_tuple %v12
  %s14 = scalar_lea.vmem %s1, 8
  %15 = vst [vmem:[%s14] sm:$0xff] %v12

// kernel: pointnet2_seg_forward.11
$region0: #{pointnet2_seg_forward.11}
  #allocation0 [shape = 'u32[]', space=smem, size = 0x4, offset = 0x4, fixed_abs, tag = 'smem constant byte address 0x4 - core index']
  #allocation1 [shape = 'u32[144,128]{1,0:T(1,128)}', space=vmem, size = 0x12000, scoped, tag = 'internal scratch']
  %s0 = inlined_call_operand.vmem [shape: f32[2,32,256], index: 0, kind: input, shape index: {}]
  %s1 = inlined_call_operand.vmem [shape: bf16[256,128], index: 1, kind: input, shape index: {}]
  %s2 = inlined_call_operand.vmem [shape: f32[1,128], index: 2, kind: input, shape index: {}]
  %s3 = inlined_call_operand.vmem [shape: bf16[128,128], index: 3, kind: input, shape index: {}]
  %s4 = inlined_call_operand.vmem [shape: f32[1,128], index: 4, kind: input, shape index: {}]
  %s5 = inlined_call_operand.vmem [shape: bf16[128,256], index: 5, kind: input, shape index: {}]
  %s6 = inlined_call_operand.vmem [shape: f32[1,256], index: 6, kind: input, shape index: {}]
  %s7 = inlined_call_operand.vmem [shape: f32[2,4,256], index: 7, kind: output, shape index: {}]
  %s8 = sld [smem:[#allocation0]]
  $region61: #{pointnet2_seg_forward.11} parent=0
    _
  %s10 = ssub.s32 1, %s8
  %s11 = scalar_select 0, %s10, %s8
  loop: start=0, step=1, limit=4
  $region2: #{pointnet2_seg_forward.11} parent=0 // loop_pre_header
    _
  $region3: #{pointnet2_seg_forward.11} parent=0 // loop_header
    %s13 = sphi 0, %s17
    %p14 = scmp.ge.s32.totalorder %s13, 4
    %s23 = sphi 0, %s25
    %s26 = sphi 0, %s23
    %s27 = sphi 0, %s26
    %s43 = sphi 0, %s27
    %s47 = sphi 0, %s47
    %s49 = sphi 0, %s47
    %s50 = sphi 0, %s49
    %s64 = sphi 0, %s50
    %s68 = sphi 0, %s68
    %s70 = sphi 0, %s68
    %s71 = sphi 0, %s70
    %s85 = sphi 0, %s71
    %s89 = sphi 0, %s89
    %s91 = sphi 0, %s89
    %s92 = sphi 0, %s91
    %s106 = sphi 0, %s92
    %s110 = sphi 0, %s110
    %s112 = sphi 0, %s110
    %s113 = sphi 0, %s112
    %s127 = sphi 0, %s113
    %s131 = sphi 0, %s131
    %s133 = sphi 0, %s131
    %s134 = sphi 0, %s133
    %s148 = sphi 0, %s134
    %s152 = sphi 0, %s152
    %s154 = sphi 0, %s152
    %s155 = sphi 0, %s154
    %s169 = sphi 0, %s155
    %s175 = sphi 0, %s177
    %s178 = sphi 0, %s175
    %s179 = sphi 0, %s178
    %s195 = sphi 0, %s179
  $region4: #{pointnet2_seg_forward.11} parent=0 // loop_header_branch
    %16 = sbr.rel (%p14) target = $region8
  $region5: #{pointnet2_seg_forward.11} parent=0 // loop_body
    %s18 = ssub.s32 %s13, 1
    %s19 = ssub.s32 %s13, 2
    %s20 = sadd.s32 %s13, 1
    %s21 = ssub.s32 %s13, %s20
    %p22 = scmp.eq.s32.totalorder %s21, 0
    %s24 = sadd.s32 %s23, 1
    %s25 = scalar_select %p22, %s23, %s24
    %p28 = pneg %p22
    %p29 = scmp.eq.s32.totalorder %s13, 1
    %p30 = por %p28, %p29
    %p31 = scmp.ne.s32.totalorder %s23, %s26
    %p32 = scmp.eq.s32.totalorder %s13, 0
    %p33 = por %p31, %p32
    %p34 = scmp.ne.s32.totalorder %s23, %s26
    %p35 = scmp.eq.s32.totalorder %s18, 1
    %p36 = por %p34, %p35
    %p37 = scmp.ne.s32.totalorder %s26, %s27
    %p38 = scmp.eq.s32.totalorder %s18, 0
    %p39 = por %p37, %p38
    %p40 = scmp.ne.s32.totalorder %s26, %s27
    %p41 = scmp.eq.s32.totalorder %s19, 1
    %p42 = por %p40, %p41
    %p44 = scmp.ne.s32.totalorder %s27, %s43
    %p45 = scmp.eq.s32.totalorder %s19, 0
    %p46 = por %p44, %p45
    %s48 = sadd.s32 %s47, 1
    %p51 = scmp.eq.s32.totalorder %s13, 1
    %p52 = scmp.ne.s32.totalorder %s47, %s49
    %p53 = scmp.eq.s32.totalorder %s13, 0
    %p54 = por %p52, %p53
    %p55 = scmp.ne.s32.totalorder %s47, %s49
    %p56 = scmp.eq.s32.totalorder %s18, 1
    %p57 = por %p55, %p56
    %p58 = scmp.ne.s32.totalorder %s49, %s50
    %p59 = scmp.eq.s32.totalorder %s18, 0
    %p60 = por %p58, %p59
    %p61 = scmp.ne.s32.totalorder %s49, %s50
    %p62 = scmp.eq.s32.totalorder %s19, 1
    %p63 = por %p61, %p62
    %p65 = scmp.ne.s32.totalorder %s50, %s64
    %p66 = scmp.eq.s32.totalorder %s19, 0
    %p67 = por %p65, %p66
    %s69 = sadd.s32 %s68, 1
    %p72 = scmp.eq.s32.totalorder %s13, 1
    %p73 = scmp.ne.s32.totalorder %s68, %s70
    %p74 = scmp.eq.s32.totalorder %s13, 0
    %p75 = por %p73, %p74
    %p76 = scmp.ne.s32.totalorder %s68, %s70
    %p77 = scmp.eq.s32.totalorder %s18, 1
    %p78 = por %p76, %p77
    %p79 = scmp.ne.s32.totalorder %s70, %s71
    %p80 = scmp.eq.s32.totalorder %s18, 0
    %p81 = por %p79, %p80
    %p82 = scmp.ne.s32.totalorder %s70, %s71
    %p83 = scmp.eq.s32.totalorder %s19, 1
    %p84 = por %p82, %p83
    %p86 = scmp.ne.s32.totalorder %s71, %s85
    %p87 = scmp.eq.s32.totalorder %s19, 0
    %p88 = por %p86, %p87
    %s90 = sadd.s32 %s89, 1
    %p93 = scmp.eq.s32.totalorder %s13, 1
    %p94 = scmp.ne.s32.totalorder %s89, %s91
    %p95 = scmp.eq.s32.totalorder %s13, 0
    %p96 = por %p94, %p95
    %p97 = scmp.ne.s32.totalorder %s89, %s91
    %p98 = scmp.eq.s32.totalorder %s18, 1
    %p99 = por %p97, %p98
    %p100 = scmp.ne.s32.totalorder %s91, %s92
    %p101 = scmp.eq.s32.totalorder %s18, 0
    %p102 = por %p100, %p101
    %p103 = scmp.ne.s32.totalorder %s91, %s92
    %p104 = scmp.eq.s32.totalorder %s19, 1
    %p105 = por %p103, %p104
    %p107 = scmp.ne.s32.totalorder %s92, %s106
    %p108 = scmp.eq.s32.totalorder %s19, 0
    %p109 = por %p107, %p108
    %s111 = sadd.s32 %s110, 1
    %p114 = scmp.eq.s32.totalorder %s13, 1
    %p115 = scmp.ne.s32.totalorder %s110, %s112
    %p116 = scmp.eq.s32.totalorder %s13, 0
    %p117 = por %p115, %p116
    %p118 = scmp.ne.s32.totalorder %s110, %s112
    %p119 = scmp.eq.s32.totalorder %s18, 1
    %p120 = por %p118, %p119
    %p121 = scmp.ne.s32.totalorder %s112, %s113
    %p122 = scmp.eq.s32.totalorder %s18, 0
    %p123 = por %p121, %p122
    %p124 = scmp.ne.s32.totalorder %s112, %s113
    %p125 = scmp.eq.s32.totalorder %s19, 1
    %p126 = por %p124, %p125
    %p128 = scmp.ne.s32.totalorder %s113, %s127
    %p129 = scmp.eq.s32.totalorder %s19, 0
    %p130 = por %p128, %p129
    %s132 = sadd.s32 %s131, 1
    %p135 = scmp.eq.s32.totalorder %s13, 1
    %p136 = scmp.ne.s32.totalorder %s131, %s133
    %p137 = scmp.eq.s32.totalorder %s13, 0
    %p138 = por %p136, %p137
    %p139 = scmp.ne.s32.totalorder %s131, %s133
    %p140 = scmp.eq.s32.totalorder %s18, 1
    %p141 = por %p139, %p140
    %p142 = scmp.ne.s32.totalorder %s133, %s134
    %p143 = scmp.eq.s32.totalorder %s18, 0
    %p144 = por %p142, %p143
    %p145 = scmp.ne.s32.totalorder %s133, %s134
    %p146 = scmp.eq.s32.totalorder %s19, 1
    %p147 = por %p145, %p146
    %p149 = scmp.ne.s32.totalorder %s134, %s148
    %p150 = scmp.eq.s32.totalorder %s19, 0
    %p151 = por %p149, %p150
    %s153 = sadd.s32 %s152, 1
    %p156 = scmp.eq.s32.totalorder %s13, 1
    %p157 = scmp.ne.s32.totalorder %s152, %s154
    %p158 = scmp.eq.s32.totalorder %s13, 0
    %p159 = por %p157, %p158
    %p160 = scmp.ne.s32.totalorder %s152, %s154
    %p161 = scmp.eq.s32.totalorder %s18, 1
    %p162 = por %p160, %p161
    %p163 = scmp.ne.s32.totalorder %s154, %s155
    %p164 = scmp.eq.s32.totalorder %s18, 0
    %p165 = por %p163, %p164
    %p166 = scmp.ne.s32.totalorder %s154, %s155
    %p167 = scmp.eq.s32.totalorder %s19, 1
    %p168 = por %p166, %p167
    %p170 = scmp.ne.s32.totalorder %s155, %s169
    %p171 = scmp.eq.s32.totalorder %s19, 0
    %p172 = por %p170, %p171
    %s173 = ssub.s32 %s13, %s20
    %p174 = scmp.eq.s32.totalorder %s173, 0
    %s176 = sadd.s32 %s175, 1
    %s177 = scalar_select %p174, %s175, %s176
    %p180 = pneg %p174
    %p181 = scmp.eq.s32.totalorder %s13, 1
    %p182 = por %p180, %p181
    %p183 = scmp.ne.s32.totalorder %s175, %s178
    %p184 = scmp.eq.s32.totalorder %s13, 0
    %p185 = por %p183, %p184
    %p186 = scmp.ne.s32.totalorder %s175, %s178
    %p187 = scmp.eq.s32.totalorder %s18, 1
    %p188 = por %p186, %p187
    %p189 = scmp.ne.s32.totalorder %s178, %s179
    %p190 = scmp.eq.s32.totalorder %s18, 0
    %p191 = por %p189, %p190
    %p192 = scmp.ne.s32.totalorder %s178, %s179
    %p193 = scmp.eq.s32.totalorder %s19, 1
    %p194 = por %p192, %p193
    %p196 = scmp.ne.s32.totalorder %s179, %s195
    %p197 = scmp.eq.s32.totalorder %s19, 0
    %p198 = por %p196, %p197
    %p199 = scmp.le.s32.totalorder 1, %s13
    %p200 = scmp.lt.s32.totalorder %s13, 3
    %p201 = pnand %p199, %p200
    %p202 = pneg %p201
    // Predicated region
    $region9: #{pointnet2_seg_forward.11} parent=5 // pred_check
      _
    $region10: #{pointnet2_seg_forward.11} parent=5 // pred_check_branch
      %204 = sbr.rel (%p201) target = $region12
    $region11: #{pointnet2_seg_forward.11} parent=5 // pred_region
      %s205 = ssub.s32 %s13, 1
      // Predicated region
      $region13: #{pointnet2_seg_forward.11} parent=11 // pred_check
        %p206 = pneg %p60
      $region14: #{pointnet2_seg_forward.11} parent=11 // pred_check_branch
        %208 = sbr.rel (%p206) target = $region16
      $region15: #{pointnet2_seg_forward.11} parent=11 // pred_region
        _
      $region16: #{pointnet2_seg_forward.11} parent=11 // pred_fallthru
        _
      // Predicated region
      $region17: #{pointnet2_seg_forward.11} parent=11 // pred_check
        %p209 = pneg %p81
      $region18: #{pointnet2_seg_forward.11} parent=11 // pred_check_branch
        %211 = sbr.rel (%p209) target = $region20
      $region19: #{pointnet2_seg_forward.11} parent=11 // pred_region
        _
      $region20: #{pointnet2_seg_forward.11} parent=11 // pred_fallthru
        _
      // Predicated region
      $region21: #{pointnet2_seg_forward.11} parent=11 // pred_check
        %p212 = pneg %p102
      $region22: #{pointnet2_seg_forward.11} parent=11 // pred_check_branch
        %214 = sbr.rel (%p212) target = $region24
      $region23: #{pointnet2_seg_forward.11} parent=11 // pred_region
        _
      $region24: #{pointnet2_seg_forward.11} parent=11 // pred_fallthru
        _
      // Predicated region
      $region25: #{pointnet2_seg_forward.11} parent=11 // pred_check
        %p215 = pneg %p123
      $region26: #{pointnet2_seg_forward.11} parent=11 // pred_check_branch
        %217 = sbr.rel (%p215) target = $region28
      $region27: #{pointnet2_seg_forward.11} parent=11 // pred_region
        _
      $region28: #{pointnet2_seg_forward.11} parent=11 // pred_fallthru
        _
      // Predicated region
      $region29: #{pointnet2_seg_forward.11} parent=11 // pred_check
        %p218 = pneg %p144
      $region30: #{pointnet2_seg_forward.11} parent=11 // pred_check_branch
        %220 = sbr.rel (%p218) target = $region32
      $region31: #{pointnet2_seg_forward.11} parent=11 // pred_region
        _
      $region32: #{pointnet2_seg_forward.11} parent=11 // pred_fallthru
        _
      // Predicated region
      $region33: #{pointnet2_seg_forward.11} parent=11 // pred_check
        %p221 = pneg %p165
      $region34: #{pointnet2_seg_forward.11} parent=11 // pred_check_branch
        %223 = sbr.rel (%p221) target = $region36
      $region35: #{pointnet2_seg_forward.11} parent=11 // pred_region
        _
      $region36: #{pointnet2_seg_forward.11} parent=11 // pred_fallthru
        _
    $region12: #{pointnet2_seg_forward.11} parent=5 // pred_fallthru
      _
    %p224 = scmp.lt.s32.totalorder %s13, 2
    // Predicated region
    $region37: #{pointnet2_seg_forward.11} parent=5 // pred_check
      %p225 = pneg %p224
    $region38: #{pointnet2_seg_forward.11} parent=5 // pred_check_branch
      %227 = sbr.rel (%p225) target = $region40
    $region39: #{pointnet2_seg_forward.11} parent=5 // pred_region
      // Predicated region
      $region41: #{pointnet2_seg_forward.11} parent=39 // pred_check
        %p228 = pneg %p33
      $region42: #{pointnet2_seg_forward.11} parent=39 // pred_check_branch
        %230 = sbr.rel (%p228) target = $region44
      $region43: #{pointnet2_seg_forward.11} parent=39 // pred_region
        %p231 = scmp.lt.s32.totalorder %s13, 1
        %s232 = scalar_select %p231, %s13, 1
        %s233 = smul.addr %s232, 8
        %s234 = smul.addr %s233, 8
        %s235 = scalar_lea.vmem %s0, %s234
      $region44: #{pointnet2_seg_forward.11} parent=39 // pred_fallthru
        _
    $region40: #{pointnet2_seg_forward.11} parent=5 // pred_fallthru
      _
    %p236 = scmp.le.s32.totalorder 1, %s13
    %p237 = scmp.lt.s32.totalorder %s13, 3
    %p238 = pnand %p236, %p237
    %p239 = pneg %p238
    // Predicated region
    $region45: #{pointnet2_seg_forward.11} parent=5 // pred_check
      _
    $region46: #{pointnet2_seg_forward.11} parent=5 // pred_check_branch
      %241 = sbr.rel (%p238) target = $region48
    $region47: #{pointnet2_seg_forward.11} parent=5 // pred_region
      %s242 = ssub.s32 %s13, 1
      %p243 = scmp.lt.s32.totalorder %s18, 1
      %s244 = scalar_select %p243, %s18, 1
      %s245 = smul.addr %s244, 8
      %s246 = smul.addr %s245, 8
      %s247 = scalar_lea.vmem %s0, %s246
      %p248 = pneg %p39
      %p249 = pneg %p36
      %p250 = pneg %p60
      %p251 = pneg %p57
      %p252 = pneg %p81
      %p253 = pneg %p78
      %p254 = pneg %p102
      %p255 = pneg %p99
      %p256 = pneg %p123
      %p257 = pneg %p120
      %p258 = pneg %p144
      %p259 = pneg %p141
      %p260 = pneg %p165
      %p261 = pneg %p162
      %p262 = pneg %p191
      %p263 = pneg %p188
      %p264 = scmp.lt.s32.totalorder %s18, 1
      %s265 = scalar_select %p264, %s18, 1
      %s266 = smul.addr %s265, 2
      %s267 = smul.addr %s266, 4
      %s268 = scalar_lea.vmem %s7, %s267
      %p269 = scmp.lt.s32.totalorder %s18, 1
      %s270 = scalar_select %p269, %s18, 1
      %s271 = smul.addr %s270, 8
      %s272 = smul.addr %s271, 8
      %s273 = scalar_lea.vmem %s0, %s272
      %p274 = scmp.lt.s32.totalorder %s18, 1
      %s275 = scalar_select %p274, %s18, 1
      %s276 = smul.addr %s275, 2
      %s277 = smul.addr %s276, 4
      %s278 = scalar_lea.vmem %s7, %s277
      %v280 = vld [vmem:[%s273] sm:$0xff]
      %v281 = vld [vmem:[%s273 + $0x8] sm:$0xff]
      %v282 = vld [vmem:[%s273 + $0x10] sm:$0xff]
      %v283 = vld [vmem:[%s273 + $0x18] sm:$0xff]
      %v284 = vld [vmem:[%s273 + $0x20] sm:$0xff]
      %v285 = vld [vmem:[%s273 + $0x28] sm:$0xff]
      %v286 = vld [vmem:[%s273 + $0x30] sm:$0xff]
      %v287 = vld [vmem:[%s273 + $0x38] sm:$0xff]
      %v288 = vld [vmem:[%s1] sm:$0xf]
      %v289 = vld [vmem:[%s1 + $0x4] sm:$0xf]
      %v290 = vld [vmem:[%s1 + $0x8] sm:$0xf]
      %v291 = vld [vmem:[%s1 + $0xc] sm:$0xf]
      %v292 = vld [vmem:[%s1 + $0x10] sm:$0xf]
      %v293 = vld [vmem:[%s1 + $0x14] sm:$0xf]
      %v294 = vld [vmem:[%s1 + $0x18] sm:$0xf]
      %v295 = vld [vmem:[%s1 + $0x1c] sm:$0xf]
      %v296 = vld [vmem:[%s1 + $0x20] sm:$0xf]
      %v297 = vld [vmem:[%s1 + $0x24] sm:$0xf]
      %v298 = vld [vmem:[%s1 + $0x28] sm:$0xf]
      %v299 = vld [vmem:[%s1 + $0x2c] sm:$0xf]
      %v300 = vld [vmem:[%s1 + $0x30] sm:$0xf]
      %v301 = vld [vmem:[%s1 + $0x34] sm:$0xf]
      %v302 = vld [vmem:[%s1 + $0x38] sm:$0xf]
      %v303 = vld [vmem:[%s1 + $0x3c] sm:$0xf]
      %v304 = vld [vmem:[%s1 + $0x40] sm:$0xf]
      %v305 = vld [vmem:[%s1 + $0x44] sm:$0xf]
      %v306 = vld [vmem:[%s1 + $0x48] sm:$0xf]
      %v307 = vld [vmem:[%s1 + $0x4c] sm:$0xf]
      %v308 = vld [vmem:[%s1 + $0x50] sm:$0xf]
      %v309 = vld [vmem:[%s1 + $0x54] sm:$0xf]
      %v310 = vld [vmem:[%s1 + $0x58] sm:$0xf]
      %v311 = vld [vmem:[%s1 + $0x5c] sm:$0xf]
      %v312 = vld [vmem:[%s1 + $0x60] sm:$0xf]
      %v313 = vld [vmem:[%s1 + $0x64] sm:$0xf]
      %v314 = vld [vmem:[%s1 + $0x68] sm:$0xf]
      %v315 = vld [vmem:[%s1 + $0x6c] sm:$0xf]
      %v316 = vld [vmem:[%s1 + $0x70] sm:$0xf]
      %v317 = vld [vmem:[%s1 + $0x74] sm:$0xf]
      %v318 = vld [vmem:[%s1 + $0x78] sm:$0xf]
      %v319 = vld [vmem:[%s1 + $0x7c] sm:$0xf]
      %v320 = vld [vmem:[%s2] sm:$0x1]
      %v321 = vpack.c.bf16 %v282, %v280
      %v322 = vpack.c.bf16 %v283, %v281
      %v323 = vpack.c.bf16 %v286, %v284
      %v324 = vpack.c.bf16 %v287, %v285
      %v326 = vlaneseq
      %v327 = vshrl.u32 %v326, 7
      %v328 = vsub.s32 0, %v327
      %v329 = vrot.slane %v320, %v328
      %v363 = vunpack.c.l.b16 %v288
      %v364 = vunpack.c.l.b16 %v289
      %v365 = vunpack.c.l.b16 %v290
      %v366 = vunpack.c.l.b16 %v291
      %v367 = vunpack.c.l.b16 %v292
      %v368 = vunpack.c.l.b16 %v293
      %v369 = vunpack.c.l.b16 %v294
      %v370 = vunpack.c.l.b16 %v295
      %v371 = vunpack.c.l.b16 %v296
      %v372 = vunpack.c.l.b16 %v297
      %v373 = vunpack.c.l.b16 %v298
      %v374 = vunpack.c.l.b16 %v299
      %v375 = vunpack.c.l.b16 %v300
      %v376 = vunpack.c.l.b16 %v301
      %v377 = vunpack.c.l.b16 %v302
      %v378 = vunpack.c.l.b16 %v303
      %v379 = vunpack.c.l.b16 %v304
      %v380 = vunpack.c.l.b16 %v305
      %v381 = vunpack.c.l.b16 %v306
      %v382 = vunpack.c.l.b16 %v307
      %v383 = vunpack.c.l.b16 %v308
      %v384 = vunpack.c.l.b16 %v309
      %v385 = vunpack.c.l.b16 %v310
      %v386 = vunpack.c.l.b16 %v311
      %v387 = vunpack.c.l.b16 %v312
      %v388 = vunpack.c.l.b16 %v313
      %v389 = vunpack.c.l.b16 %v314
      %v390 = vunpack.c.l.b16 %v315
      %v391 = vunpack.c.l.b16 %v316
      %v392 = vunpack.c.l.b16 %v317
      %v393 = vunpack.c.l.b16 %v318
      %v394 = vunpack.c.l.b16 %v319
      %v395 = vpack.c.b16 %v364, %v363
      %v396 = vpack.c.b16 %v366, %v365
      %v397 = vpack.c.b16 %v368, %v367
      %v398 = vpack.c.b16 %v370, %v369
      %v399 = vpack.c.b16 %v372, %v371
      %v400 = vpack.c.b16 %v374, %v373
      %v401 = vpack.c.b16 %v376, %v375
      %v402 = vpack.c.b16 %v378, %v377
      %v403 = vpack.c.b16 %v380, %v379
      %v404 = vpack.c.b16 %v382, %v381
      %v405 = vpack.c.b16 %v384, %v383
      %v406 = vpack.c.b16 %v386, %v385
      %v407 = vpack.c.b16 %v388, %v387
      %v408 = vpack.c.b16 %v390, %v389
      %v409 = vpack.c.b16 %v392, %v391
      %v410 = vpack.c.b16 %v394, %v393
      %427 = vmatprep.subr.bf16.mxu0 0
      %428 = vmatpush1.bf16.msra.mxu0 %v395
      %429 = vmatprep.subr.bf16.mxu0 0
      %430 = vmatpush1.bf16.msra.mxu0 %v396
      %431 = vmatprep.subr.bf16.mxu0 0
      %432 = vmatpush1.bf16.msra.mxu0 %v397
      %433 = vmatprep.subr.bf16.mxu0 0
      %434 = vmatpush1.bf16.msra.mxu0 %v398
      %435 = vmatprep.subr.bf16.mxu0 0
      %436 = vmatpush1.bf16.msra.mxu0 %v399
      %437 = vmatprep.subr.bf16.mxu0 0
      %438 = vmatpush1.bf16.msra.mxu0 %v400
      %439 = vmatprep.subr.bf16.mxu0 0
      %440 = vmatpush1.bf16.msra.mxu0 %v401
      %441 = vmatprep.subr.bf16.mxu0 0
      %442 = vmatpush1.bf16.msra.mxu0 %v402
      %443 = vmatprep.subr.bf16.mxu0 0
      %444 = vmatpush1.bf16.msra.mxu0 %v403
      %445 = vmatprep.subr.bf16.mxu0 0
      %446 = vmatpush1.bf16.msra.mxu0 %v404
      %447 = vmatprep.subr.bf16.mxu0 0
      %448 = vmatpush1.bf16.msra.mxu0 %v405
      %449 = vmatprep.subr.bf16.mxu0 0
      %450 = vmatpush1.bf16.msra.mxu0 %v406
      %451 = vmatprep.subr.bf16.mxu0 0
      %452 = vmatpush1.bf16.msra.mxu0 %v407
      %453 = vmatprep.subr.bf16.mxu0 0
      %454 = vmatpush1.bf16.msra.mxu0 %v408
      %455 = vmatprep.subr.bf16.mxu0 0
      %456 = vmatpush1.bf16.msra.mxu0 %v409
      %457 = vmatprep.subr.bf16.mxu0 0
      %458 = vmatpush1.bf16.msra.mxu0 %v410
      %459 = vmatprep.mubr.bf16.mxu0 %v322
      %460 = vmatmul.mubr.bf16.gmra.mrb[0].mxu0 %v321
      %v461 = vpop.f32.mrb[0].mxu0
      %v462 = vadd.f32 %v329, %v461
      %v463 = vpop.f32.mrb[0].mxu0
      %v464 = vpop.f32.mrb[0].mxu0
      %v465 = vadd.f32 %v329, %v464
      %v466 = vpop.f32.mrb[0].mxu0
      %467 = vmatprep.mubr.bf16.mxu0 %v324
      %468 = vmatmul.mubr.bf16.gmra.mrb[0].mxu0 %v323
      %v469 = vpop.f32.mrb[0].mxu0
      %v470 = vadd.f32 %v329, %v469
      %v471 = vpop.f32.mrb[0].mxu0
      %v472 = vpop.f32.mrb[0].mxu0
      %v473 = vadd.f32 %v329, %v472
      %v474 = vpop.f32.mrb[0].mxu0
      %475 = vdwg.mxu0
      %v476 = vmax.f32 %v462, 0.0
      %v477 = vmax.f32 %v465, 0.0
      %v478 = vmax.f32 %v470, 0.0
      %v479 = vmax.f32 %v473, 0.0
      %v480 = vld [vmem:[%s3] sm:$0xf]
      %v481 = vld [vmem:[%s3 + $0x4] sm:$0xf]
      %v482 = vld [vmem:[%s3 + $0x8] sm:$0xf]
      %v483 = vld [vmem:[%s3 + $0xc] sm:$0xf]
      %v484 = vld [vmem:[%s3 + $0x10] sm:$0xf]
      %v485 = vld [vmem:[%s3 + $0x14] sm:$0xf]
      %v486 = vld [vmem:[%s3 + $0x18] sm:$0xf]
      %v487 = vld [vmem:[%s3 + $0x1c] sm:$0xf]
      %v488 = vld [vmem:[%s3 + $0x20] sm:$0xf]
      %v489 = vld [vmem:[%s3 + $0x24] sm:$0xf]
      %v490 = vld [vmem:[%s3 + $0x28] sm:$0xf]
      %v491 = vld [vmem:[%s3 + $0x2c] sm:$0xf]
      %v492 = vld [vmem:[%s3 + $0x30] sm:$0xf]
      %v493 = vld [vmem:[%s3 + $0x34] sm:$0xf]
      %v494 = vld [vmem:[%s3 + $0x38] sm:$0xf]
      %v495 = vld [vmem:[%s3 + $0x3c] sm:$0xf]
      %v496 = vld [vmem:[%s4] sm:$0x1]
      %v497 = vpack.c.bf16 %v477, %v476
      %v498 = vpack.c.bf16 %v479, %v478
      %v500 = vlaneseq
      %v501 = vshrl.u32 %v500, 7
      %v502 = vsub.s32 0, %v501
      %v503 = vrot.slane %v496, %v502
      %v521 = vunpack.c.l.b16 %v480
      %v522 = vunpack.c.l.b16 %v481
      %v523 = vunpack.c.l.b16 %v482
      %v524 = vunpack.c.l.b16 %v483
      %v525 = vunpack.c.l.b16 %v484
      %v526 = vunpack.c.l.b16 %v485
      %v527 = vunpack.c.l.b16 %v486
      %v528 = vunpack.c.l.b16 %v487
      %v529 = vunpack.c.l.b16 %v488
      %v530 = vunpack.c.l.b16 %v489
      %v531 = vunpack.c.l.b16 %v490
      %v532 = vunpack.c.l.b16 %v491
      %v533 = vunpack.c.l.b16 %v492
      %v534 = vunpack.c.l.b16 %v493
      %v535 = vunpack.c.l.b16 %v494
      %v536 = vunpack.c.l.b16 %v495
      %v537 = vpack.c.b16 %v522, %v521
      %v538 = vpack.c.b16 %v524, %v523
      %v539 = vpack.c.b16 %v526, %v525
      %v540 = vpack.c.b16 %v528, %v527
      %v541 = vpack.c.b16 %v530, %v529
      %v542 = vpack.c.b16 %v532, %v531
      %v543 = vpack.c.b16 %v534, %v533
      %v544 = vpack.c.b16 %v536, %v535
      %553 = vmatprep.subr.bf16.mxu0 0
      %554 = vmatpush1.bf16.msra.mxu0 %v537
      %555 = vmatprep.subr.bf16.mxu0 0
      %556 = vmatpush1.bf16.msra.mxu0 %v538
      %557 = vmatprep.subr.bf16.mxu0 0
      %558 = vmatpush1.bf16.msra.mxu0 %v539
      %559 = vmatprep.subr.bf16.mxu0 0
      %560 = vmatpush1.bf16.msra.mxu0 %v540
      %561 = vmatprep.subr.bf16.mxu0 0
      %562 = vmatpush1.bf16.msra.mxu0 %v541
      %563 = vmatprep.subr.bf16.mxu0 0
      %564 = vmatpush1.bf16.msra.mxu0 %v542
      %565 = vmatprep.subr.bf16.mxu0 0
      %566 = vmatpush1.bf16.msra.mxu0 %v543
      %567 = vmatprep.subr.bf16.mxu0 0
      %568 = vmatpush1.bf16.msra.mxu0 %v544
      %569 = vmatprep.subr.bf16.mxu0 0
      %570 = vmatpush1.bf16.msra.mxu0 0
      %571 = vmatprep.subr.bf16.mxu0 0
      %572 = vmatpush1.bf16.msra.mxu0 0
      %573 = vmatprep.subr.bf16.mxu0 0
      %574 = vmatpush1.bf16.msra.mxu0 0
      %575 = vmatprep.subr.bf16.mxu0 0
      %576 = vmatpush1.bf16.msra.mxu0 0
      %577 = vmatprep.subr.bf16.mxu0 0
      %578 = vmatpush1.bf16.msra.mxu0 0
      %579 = vmatprep.subr.bf16.mxu0 0
      %580 = vmatpush1.bf16.msra.mxu0 0
      %581 = vmatprep.subr.bf16.mxu0 0
      %582 = vmatpush1.bf16.msra.mxu0 0
      %583 = vmatprep.subr.bf16.mxu0 0
      %584 = vmatpush1.bf16.msra.mxu0 0
      %585 = vmatprep.mubr.bf16.mxu0 0
      %586 = vmatmul.mubr.bf16.gmra.mrb[0].mxu0 %v497
      %v587 = vpop.f32.mrb[0].mxu0
      %v588 = vadd.f32 %v503, %v587
      %v589 = vpop.f32.mrb[0].mxu0
      %v590 = vpop.f32.mrb[0].mxu0
      %v591 = vadd.f32 %v503, %v590
      %v592 = vpop.f32.mrb[0].mxu0
      %593 = vmatprep.mubr.bf16.mxu0 0
      %594 = vmatmul.mubr.bf16.gmra.mrb[0].mxu0 %v498
      %v595 = vpop.f32.mrb[0].mxu0
      %v596 = vadd.f32 %v503, %v595
      %v597 = vpop.f32.mrb[0].mxu0
      %v598 = vpop.f32.mrb[0].mxu0
      %v599 = vadd.f32 %v503, %v598
      %v600 = vpop.f32.mrb[0].mxu0
      %601 = vdwg.mxu0
      %v602 = vmax.f32 %v588, 0.0
      %v603 = vmax.f32 %v591, 0.0
      %v604 = vmax.f32 %v596, 0.0
      %v605 = vmax.f32 %v599, 0.0
      %v606 = vld [vmem:[%s5] sm:$0xff]
      %v607 = vld [vmem:[%s5 + $0x8] sm:$0xff]
      %v608 = vld [vmem:[%s5 + $0x10] sm:$0xff]
      %v609 = vld [vmem:[%s5 + $0x18] sm:$0xff]
      %v610 = vld [vmem:[%s5 + $0x20] sm:$0xff]
      %v611 = vld [vmem:[%s5 + $0x28] sm:$0xff]
      %v612 = vld [vmem:[%s5 + $0x30] sm:$0xff]
      %v613 = vld [vmem:[%s5 + $0x38] sm:$0xff]
      %v614 = vld [vmem:[%s5 + $0x40] sm:$0xff]
      %v615 = vld [vmem:[%s5 + $0x48] sm:$0xff]
      %v616 = vld [vmem:[%s5 + $0x50] sm:$0xff]
      %v617 = vld [vmem:[%s5 + $0x58] sm:$0xff]
      %v618 = vld [vmem:[%s5 + $0x60] sm:$0xff]
      %v619 = vld [vmem:[%s5 + $0x68] sm:$0xff]
      %v620 = vld [vmem:[%s5 + $0x70] sm:$0xff]
      %v621 = vld [vmem:[%s5 + $0x78] sm:$0xff]
      %v622 = vld [vmem:[%s6] sm:$0x3]
      %v623 = vpack.c.bf16 %v603, %v602
      %v624 = vpack.c.bf16 %v605, %v604
      %v626 = vlaneseq
      %v627 = vshrl.u32 %v626, 7
      %v628 = vsub.s32 0, %v627
      %v629 = vrot.slane %v622, %v628
      %v630 = vlaneseq
      %v631 = vshrl.u32 %v630, 7
      %v632 = vsub.s32 1, %v631
      %v633 = vrot.slane %v622, %v632
      %v652 = vunpack.c.l.b16 %v606
      %v653 = vunpack.c.h.b16 %v606
      %v654 = vunpack.c.l.b16 %v607
      %v655 = vunpack.c.h.b16 %v607
      %v656 = vunpack.c.l.b16 %v608
      %v657 = vunpack.c.h.b16 %v608
      %v658 = vunpack.c.l.b16 %v609
      %v659 = vunpack.c.h.b16 %v609
      %v660 = vunpack.c.l.b16 %v610
      %v661 = vunpack.c.h.b16 %v610
      %v662 = vunpack.c.l.b16 %v611
      %v663 = vunpack.c.h.b16 %v611
      %v664 = vunpack.c.l.b16 %v612
      %v665 = vunpack.c.h.b16 %v612
      %v666 = vunpack.c.l.b16 %v613
      %v667 = vunpack.c.h.b16 %v613
      %v668 = vunpack.c.l.b16 %v614
      %v669 = vunpack.c.h.b16 %v614
      %v670 = vunpack.c.l.b16 %v615
      %v671 = vunpack.c.h.b16 %v615
      %v672 = vunpack.c.l.b16 %v616
      %v673 = vunpack.c.h.b16 %v616
      %v674 = vunpack.c.l.b16 %v617
      %v675 = vunpack.c.h.b16 %v617
      %v676 = vunpack.c.l.b16 %v618
      %v677 = vunpack.c.h.b16 %v618
      %v678 = vunpack.c.l.b16 %v619
      %v679 = vunpack.c.h.b16 %v619
      %v680 = vunpack.c.l.b16 %v620
      %v681 = vunpack.c.h.b16 %v620
      %v682 = vunpack.c.l.b16 %v621
      %v683 = vunpack.c.h.b16 %v621
      %v684 = vpack.c.b16 %v654, %v652
      %v685 = vpack.c.b16 %v655, %v653
      %v686 = vpack.c.b16 %v658, %v656
      %v687 = vpack.c.b16 %v659, %v657
      %v688 = vpack.c.b16 %v662, %v660
      %v689 = vpack.c.b16 %v663, %v661
      %v690 = vpack.c.b16 %v666, %v664
      %v691 = vpack.c.b16 %v667, %v665
      %v692 = vpack.c.b16 %v670, %v668
      %v693 = vpack.c.b16 %v671, %v669
      %v694 = vpack.c.b16 %v674, %v672
      %v695 = vpack.c.b16 %v675, %v673
      %v696 = vpack.c.b16 %v678, %v676
      %v697 = vpack.c.b16 %v679, %v677
      %v698 = vpack.c.b16 %v682, %v680
      %v699 = vpack.c.b16 %v683, %v681
      %716 = vmatprep.subr.bf16.mxu0 %v685
      %717 = vmatpush1.bf16.msra.mxu0 %v684
      %718 = vmatprep.subr.bf16.mxu0 %v687
      %719 = vmatpush1.bf16.msra.mxu0 %v686
      %720 = vmatprep.subr.bf16.mxu0 %v689
      %721 = vmatpush1.bf16.msra.mxu0 %v688
      %722 = vmatprep.subr.bf16.mxu0 %v691
      %723 = vmatpush1.bf16.msra.mxu0 %v690
      %724 = vmatprep.subr.bf16.mxu0 %v693
      %725 = vmatpush1.bf16.msra.mxu0 %v692
      %726 = vmatprep.subr.bf16.mxu0 %v695
      %727 = vmatpush1.bf16.msra.mxu0 %v694
      %728 = vmatprep.subr.bf16.mxu0 %v697
      %729 = vmatpush1.bf16.msra.mxu0 %v696
      %730 = vmatprep.subr.bf16.mxu0 %v699
      %731 = vmatpush1.bf16.msra.mxu0 %v698
      %732 = vmatprep.subr.bf16.mxu0 0
      %733 = vmatpush1.bf16.msra.mxu0 0
      %734 = vmatprep.subr.bf16.mxu0 0
      %735 = vmatpush1.bf16.msra.mxu0 0
      %736 = vmatprep.subr.bf16.mxu0 0
      %737 = vmatpush1.bf16.msra.mxu0 0
      %738 = vmatprep.subr.bf16.mxu0 0
      %739 = vmatpush1.bf16.msra.mxu0 0
      %740 = vmatprep.subr.bf16.mxu0 0
      %741 = vmatpush1.bf16.msra.mxu0 0
      %742 = vmatprep.subr.bf16.mxu0 0
      %743 = vmatpush1.bf16.msra.mxu0 0
      %744 = vmatprep.subr.bf16.mxu0 0
      %745 = vmatpush1.bf16.msra.mxu0 0
      %746 = vmatprep.subr.bf16.mxu0 0
      %747 = vmatpush1.bf16.msra.mxu0 0
      %748 = vmatprep.mubr.bf16.mxu0 0
      %749 = vmatmul.mubr.bf16.gmra.mrb[0].mxu0 %v623
      %v750 = vpop.f32.mrb[0].mxu0
      %v751 = vadd.f32 %v629, %v750
      %v752 = vpop.f32.mrb[0].mxu0
      %v753 = vadd.f32 %v633, %v752
      %v754 = vpop.f32.mrb[0].mxu0
      %v755 = vadd.f32 %v629, %v754
      %v756 = vpop.f32.mrb[0].mxu0
      %v757 = vadd.f32 %v633, %v756
      %758 = vmatprep.mubr.bf16.mxu0 0
      %759 = vmatmul.mubr.bf16.gmra.mrb[0].mxu0 %v624
      %v760 = vpop.f32.mrb[0].mxu0
      %v761 = vadd.f32 %v629, %v760
      %v762 = vpop.f32.mrb[0].mxu0
      %v763 = vadd.f32 %v633, %v762
      %v764 = vpop.f32.mrb[0].mxu0
      %v765 = vadd.f32 %v629, %v764
      %v766 = vpop.f32.mrb[0].mxu0
      %v767 = vadd.f32 %v633, %v766
      %768 = vdwg.mxu0
      %v769 = vmax.f32 %v751, 0.0
      %v770 = vmax.f32 %v753, 0.0
      %v771 = vmax.f32 %v755, 0.0
      %v772 = vmax.f32 %v757, 0.0
      %v773 = vmax.f32 %v761, 0.0
      %v774 = vmax.f32 %v763, 0.0
      %v775 = vmax.f32 %v765, 0.0
      %v776 = vmax.f32 %v767, 0.0
      %v777 = vrot.slane %v769, 4
      %v778 = vmax.f32 %v769, %v777
      %v779 = vrot.slane %v778, 2
      %v780 = vmax.f32 %v778, %v779
      %v781 = vrot.slane %v780, 1
      %v782 = vmax.f32 %v780, %v781
      %v783 = vrot.slane %v770, 4
      %v784 = vmax.f32 %v770, %v783
      %v785 = vrot.slane %v784, 2
      %v786 = vmax.f32 %v784, %v785
      %v787 = vrot.slane %v786, 1
      %v788 = vmax.f32 %v786, %v787
      %v789 = vrot.slane %v771, 4
      %v790 = vmax.f32 %v771, %v789
      %v791 = vrot.slane %v790, 2
      %v792 = vmax.f32 %v790, %v791
      %v793 = vrot.slane %v792, 1
      %v794 = vmax.f32 %v792, %v793
      %v795 = vrot.slane %v772, 4
      %v796 = vmax.f32 %v772, %v795
      %v797 = vrot.slane %v796, 2
      %v798 = vmax.f32 %v796, %v797
      %v799 = vrot.slane %v798, 1
      %v800 = vmax.f32 %v798, %v799
      %v801 = vrot.slane %v773, 4
      %v802 = vmax.f32 %v773, %v801
      %v803 = vrot.slane %v802, 2
      %v804 = vmax.f32 %v802, %v803
      %v805 = vrot.slane %v804, 1
      %v806 = vmax.f32 %v804, %v805
      %v807 = vrot.slane %v774, 4
      %v808 = vmax.f32 %v774, %v807
      %v809 = vrot.slane %v808, 2
      %v810 = vmax.f32 %v808, %v809
      %v811 = vrot.slane %v810, 1
      %v812 = vmax.f32 %v810, %v811
      %v813 = vrot.slane %v775, 4
      %v814 = vmax.f32 %v775, %v813
      %v815 = vrot.slane %v814, 2
      %v816 = vmax.f32 %v814, %v815
      %v817 = vrot.slane %v816, 1
      %v818 = vmax.f32 %v816, %v817
      %v819 = vrot.slane %v776, 4
      %v820 = vmax.f32 %v776, %v819
      %v821 = vrot.slane %v820, 2
      %v822 = vmax.f32 %v820, %v821
      %v823 = vrot.slane %v822, 1
      %v824 = vmax.f32 %v822, %v823
      %v833 = vcombine.low %v782, %v788
      %v834 = vcombine.low %v794, %v800
      %v835 = vcombine.low %v806, %v812
      %v836 = vcombine.low %v818, %v824
      %v837 = vrot.slane %v834, 7
      %vm838 = vcmask 1041409
      %v839 = vsel %vm838, %v837, %v833
      %vm840 = vcmask 1045509
      %v841 = vsel %vm840, %v837, %v839
      %v842 = vrot.slane %v835, 6
      %vm843 = vcmask 1042434
      %v844 = vsel %vm843, %v842, %v841
      %vm845 = vcmask 1046534
      %v846 = vsel %vm845, %v842, %v844
      %v847 = vrot.slane %v836, 5
      %vm848 = vcmask 1043459
      %v849 = vsel %vm848, %v847, %v846
      %vm850 = vcmask 1047559
      %v851 = vsel %vm850, %v847, %v849
      %853 = vst [vmem:[%s278] sm:$0xff] %v851
      %p854 = scmp.lt.s32.totalorder %s18, 1
      %s855 = scalar_select %p854, %s18, 1
      %s856 = smul.addr %s855, 2
      %s857 = smul.addr %s856, 4
      %s858 = scalar_lea.vmem %s7, %s857
      // Predicated region
      $region49: #{pointnet2_seg_forward.11} parent=47 // pred_check
        %p859 = pneg %p188
      $region50: #{pointnet2_seg_forward.11} parent=47 // pred_check_branch
        %861 = sbr.rel (%p859) target = $region52
      $region51: #{pointnet2_seg_forward.11} parent=47 // pred_region
        _
      $region52: #{pointnet2_seg_forward.11} parent=47 // pred_fallthru
        _
    $region48: #{pointnet2_seg_forward.11} parent=5 // pred_fallthru
      _
    %p862 = scmp.le.s32.totalorder 2, %s13
    // Predicated region
    $region53: #{pointnet2_seg_forward.11} parent=5 // pred_check
      %p863 = pneg %p862
    $region54: #{pointnet2_seg_forward.11} parent=5 // pred_check_branch
      %865 = sbr.rel (%p863) target = $region56
    $region55: #{pointnet2_seg_forward.11} parent=5 // pred_region
      %s866 = ssub.s32 %s13, 2
      // Predicated region
      $region57: #{pointnet2_seg_forward.11} parent=55 // pred_check
        %p867 = pneg %p194
      $region58: #{pointnet2_seg_forward.11} parent=55 // pred_check_branch
        %869 = sbr.rel (%p867) target = $region60
      $region59: #{pointnet2_seg_forward.11} parent=55 // pred_region
        %p870 = scmp.lt.s32.totalorder %s19, 1
        %s871 = scalar_select %p870, %s19, 1
        %s872 = smul.addr %s871, 2
        %s873 = smul.addr %s872, 4
        %s874 = scalar_lea.vmem %s7, %s873
      $region60: #{pointnet2_seg_forward.11} parent=55 // pred_fallthru
        _
    $region56: #{pointnet2_seg_forward.11} parent=5 // pred_fallthru
      _
  $region6: #{pointnet2_seg_forward.11} parent=0 // loop_footer
    %s17 = sadd.s32 1, %s13
  $region7: #{pointnet2_seg_forward.11} parent=0 // loop_footer_branch
    %12 = sbr.rel target = $region3
  $region8: #{pointnet2_seg_forward.11} parent=0 // loop_exit
    _

// kernel: neg.12
$region0: #{neg.12}
  #allocation0 [shape = 's32[1]{0}', space=sflag, size = 0x4, scoped, tag = 'scoped memory for neg.12']
  %s0 = inlined_call_operand.vmem [shape: f32[2,32,16], index: 0, kind: input, shape index: {}]
  %s1 = inlined_call_operand.vmem [shape: f32[2,32,16], index: 1, kind: output, shape index: {}]
  %v2 = vld [vmem:[%s0] sm:$0xff]
  %3 = xla_tuple %v2
  %4 = xla_tuple %3
  %v5 = vxor.u32 %v2, 2147483648
  %6 = xla_tuple %v5
  %7 = vst [vmem:[%s1] sm:$0xff] %v5
  %s8 = scalar_lea.vmem %s0, 16
  %v9 = vld [vmem:[%s8] sm:$0xff]
  %10 = xla_tuple %v9
  %11 = xla_tuple %10
  %v12 = vxor.u32 %v9, 2147483648
  %13 = xla_tuple %v12
  %s14 = scalar_lea.vmem %s1, 16
  %15 = vst [vmem:[%s14] sm:$0xff] %v12
  %s16 = scalar_lea.vmem %s0, 8
  %v17 = vld [vmem:[%s16] sm:$0xff]
  %18 = xla_tuple %v17
  %19 = xla_tuple %18
  %v20 = vxor.u32 %v17, 2147483648
  %21 = xla_tuple %v20
  %s22 = scalar_lea.vmem %s1, 8
  %23 = vst [vmem:[%s22] sm:$0xff] %v20
  %s24 = scalar_lea.vmem %s0, 24
  %v25 = vld [vmem:[%s24] sm:$0xff]
  %26 = xla_tuple %v25
  %27 = xla_tuple %26
  %v28 = vxor.u32 %v25, 2147483648
  %29 = xla_tuple %v28
  %s30 = scalar_lea.vmem %s1, 24
  %31 = vst [vmem:[%s30] sm:$0xff] %v28

// kernel: pointnet2_seg_forward.12
$region0: #{pointnet2_seg_forward.12}
  #allocation0 [shape = 'u32[]', space=smem, size = 0x4, offset = 0x4, fixed_abs, tag = 'smem constant byte address 0x4 - core index']
  #allocation1 [shape = 'u32[144,128]{1,0:T(1,128)}', space=vmem, size = 0x12000, scoped, tag = 'internal scratch']
  %s0 = inlined_call_operand.vmem [shape: f32[2,8,256], index: 0, kind: input, shape index: {}]
  %s1 = inlined_call_operand.vmem [shape: f32[2,8,256], index: 1, kind: input, shape index: {}]
  %s2 = inlined_call_operand.vmem [shape: f32[2,8,256], index: 2, kind: input, shape index: {}]
  %s3 = inlined_call_operand.vmem [shape: f32[2,8,3], index: 3, kind: input, shape index: {}]
  %s4 = inlined_call_operand.vmem [shape: f32[2,8,128], index: 4, kind: input, shape index: {}]
  %s5 = inlined_call_operand.vmem [shape: bf16[256,128], index: 5, kind: input, shape index: {}]
  %s6 = inlined_call_operand.vmem [shape: bf16[128,128], index: 6, kind: input, shape index: {}]
  %s7 = inlined_call_operand.vmem [shape: f32[1,128], index: 7, kind: input, shape index: {}]
  %s8 = inlined_call_operand.vmem [shape: bf16[128,128], index: 8, kind: input, shape index: {}]
  %s9 = inlined_call_operand.vmem [shape: f32[1,128], index: 9, kind: input, shape index: {}]
  %s10 = inlined_call_operand.vmem [shape: f32[2,8,128], index: 10, kind: output, shape index: {}]
  %s11 = sld [smem:[#allocation0]]
  $region73: #{pointnet2_seg_forward.12} parent=0
    _
  %s13 = ssub.s32 1, %s11
  %s14 = scalar_select 0, %s13, %s11
  loop: start=0, step=1, limit=4
  $region2: #{pointnet2_seg_forward.12} parent=0 // loop_pre_header
    _
  $region3: #{pointnet2_seg_forward.12} parent=0 // loop_header
    %s16 = sphi 0, %s20
    %p17 = scmp.ge.s32.totalorder %s16, 4
    %s26 = sphi 0, %s28
    %s29 = sphi 0, %s26
    %s30 = sphi 0, %s29
    %s46 = sphi 0, %s30
    %s52 = sphi 0, %s54
    %s55 = sphi 0, %s52
    %s56 = sphi 0, %s55
    %s72 = sphi 0, %s56
    %s78 = sphi 0, %s80
    %s81 = sphi 0, %s78
    %s82 = sphi 0, %s81
    %s98 = sphi 0, %s82
    %s104 = sphi 0, %s106
    %s107 = sphi 0, %s104
    %s108 = sphi 0, %s107
    %s124 = sphi 0, %s108
    %s130 = sphi 0, %s132
    %s133 = sphi 0, %s130
    %s134 = sphi 0, %s133
    %s150 = sphi 0, %s134
    %s154 = sphi 0, %s154
    %s156 = sphi 0, %s154
    %s157 = sphi 0, %s156
    %s171 = sphi 0, %s157
    %s175 = sphi 0, %s175
    %s177 = sphi 0, %s175
    %s178 = sphi 0, %s177
    %s192 = sphi 0, %s178
    %s196 = sphi 0, %s196
    %s198 = sphi 0, %s196
    %s199 = sphi 0, %s198
    %s213 = sphi 0, %s199
    %s217 = sphi 0, %s217
    %s219 = sphi 0, %s217
    %s220 = sphi 0, %s219
    %s234 = sphi 0, %s220
    %s238 = sphi 0, %s238
    %s240 = sphi 0, %s238
    %s241 = sphi 0, %s240
    %s255 = sphi 0, %s241
    %s261 = sphi 0, %s263
    %s264 = sphi 0, %s261
    %s265 = sphi 0, %s264
    %s281 = sphi 0, %s265
  $region4: #{pointnet2_seg_forward.12} parent=0 // loop_header_branch
    %19 = sbr.rel (%p17) target = $region8
  $region5: #{pointnet2_seg_forward.12} parent=0 // loop_body
    %s21 = ssub.s32 %s16, 1
    %s22 = ssub.s32 %s16, 2
    %s23 = sadd.s32 %s16, 1
    %s24 = ssub.s32 %s16, %s23
    %p25 = scmp.eq.s32.totalorder %s24, 0
    %s27 = sadd.s32 %s26, 1
    %s28 = scalar_select %p25, %s26, %s27
    %p31 = pneg %p25
    %p32 = scmp.eq.s32.totalorder %s16, 1
    %p33 = por %p31, %p32
    %p34 = scmp.ne.s32.totalorder %s26, %s29
    %p35 = scmp.eq.s32.totalorder %s16, 0
    %p36 = por %p34, %p35
    %p37 = scmp.ne.s32.totalorder %s26, %s29
    %p38 = scmp.eq.s32.totalorder %s21, 1
    %p39 = por %p37, %p38
    %p40 = scmp.ne.s32.totalorder %s29, %s30
    %p41 = scmp.eq.s32.totalorder %s21, 0
    %p42 = por %p40, %p41
    %p43 = scmp.ne.s32.totalorder %s29, %s30
    %p44 = scmp.eq.s32.totalorder %s22, 1
    %p45 = por %p43, %p44
    %p47 = scmp.ne.s32.totalorder %s30, %s46
    %p48 = scmp.eq.s32.totalorder %s22, 0
    %p49 = por %p47, %p48
    %s50 = ssub.s32 %s16, %s23
    %p51 = scmp.eq.s32.totalorder %s50, 0
    %s53 = sadd.s32 %s52, 1
    %s54 = scalar_select %p51, %s52, %s53
    %p57 = pneg %p51
    %p58 = scmp.eq.s32.totalorder %s16, 1
    %p59 = por %p57, %p58
    %p60 = scmp.ne.s32.totalorder %s52, %s55
    %p61 = scmp.eq.s32.totalorder %s16, 0
    %p62 = por %p60, %p61
    %p63 = scmp.ne.s32.totalorder %s52, %s55
    %p64 = scmp.eq.s32.totalorder %s21, 1
    %p65 = por %p63, %p64
    %p66 = scmp.ne.s32.totalorder %s55, %s56
    %p67 = scmp.eq.s32.totalorder %s21, 0
    %p68 = por %p66, %p67
    %p69 = scmp.ne.s32.totalorder %s55, %s56
    %p70 = scmp.eq.s32.totalorder %s22, 1
    %p71 = por %p69, %p70
    %p73 = scmp.ne.s32.totalorder %s56, %s72
    %p74 = scmp.eq.s32.totalorder %s22, 0
    %p75 = por %p73, %p74
    %s76 = ssub.s32 %s16, %s23
    %p77 = scmp.eq.s32.totalorder %s76, 0
    %s79 = sadd.s32 %s78, 1
    %s80 = scalar_select %p77, %s78, %s79
    %p83 = pneg %p77
    %p84 = scmp.eq.s32.totalorder %s16, 1
    %p85 = por %p83, %p84
    %p86 = scmp.ne.s32.totalorder %s78, %s81
    %p87 = scmp.eq.s32.totalorder %s16, 0
    %p88 = por %p86, %p87
    %p89 = scmp.ne.s32.totalorder %s78, %s81
    %p90 = scmp.eq.s32.totalorder %s21, 1
    %p91 = por %p89, %p90
    %p92 = scmp.ne.s32.totalorder %s81, %s82
    %p93 = scmp.eq.s32.totalorder %s21, 0
    %p94 = por %p92, %p93
    %p95 = scmp.ne.s32.totalorder %s81, %s82
    %p96 = scmp.eq.s32.totalorder %s22, 1
    %p97 = por %p95, %p96
    %p99 = scmp.ne.s32.totalorder %s82, %s98
    %p100 = scmp.eq.s32.totalorder %s22, 0
    %p101 = por %p99, %p100
    %s102 = ssub.s32 %s16, %s23
    %p103 = scmp.eq.s32.totalorder %s102, 0
    %s105 = sadd.s32 %s104, 1
    %s106 = scalar_select %p103, %s104, %s105
    %p109 = pneg %p103
    %p110 = scmp.eq.s32.totalorder %s16, 1
    %p111 = por %p109, %p110
    %p112 = scmp.ne.s32.totalorder %s104, %s107
    %p113 = scmp.eq.s32.totalorder %s16, 0
    %p114 = por %p112, %p113
    %p115 = scmp.ne.s32.totalorder %s104, %s107
    %p116 = scmp.eq.s32.totalorder %s21, 1
    %p117 = por %p115, %p116
    %p118 = scmp.ne.s32.totalorder %s107, %s108
    %p119 = scmp.eq.s32.totalorder %s21, 0
    %p120 = por %p118, %p119
    %p121 = scmp.ne.s32.totalorder %s107, %s108
    %p122 = scmp.eq.s32.totalorder %s22, 1
    %p123 = por %p121, %p122
    %p125 = scmp.ne.s32.totalorder %s108, %s124
    %p126 = scmp.eq.s32.totalorder %s22, 0
    %p127 = por %p125, %p126
    %s128 = ssub.s32 %s16, %s23
    %p129 = scmp.eq.s32.totalorder %s128, 0
    %s131 = sadd.s32 %s130, 1
    %s132 = scalar_select %p129, %s130, %s131
    %p135 = pneg %p129
    %p136 = scmp.eq.s32.totalorder %s16, 1
    %p137 = por %p135, %p136
    %p138 = scmp.ne.s32.totalorder %s130, %s133
    %p139 = scmp.eq.s32.totalorder %s16, 0
    %p140 = por %p138, %p139
    %p141 = scmp.ne.s32.totalorder %s130, %s133
    %p142 = scmp.eq.s32.totalorder %s21, 1
    %p143 = por %p141, %p142
    %p144 = scmp.ne.s32.totalorder %s133, %s134
    %p145 = scmp.eq.s32.totalorder %s21, 0
    %p146 = por %p144, %p145
    %p147 = scmp.ne.s32.totalorder %s133, %s134
    %p148 = scmp.eq.s32.totalorder %s22, 1
    %p149 = por %p147, %p148
    %p151 = scmp.ne.s32.totalorder %s134, %s150
    %p152 = scmp.eq.s32.totalorder %s22, 0
    %p153 = por %p151, %p152
    %s155 = sadd.s32 %s154, 1
    %p158 = scmp.eq.s32.totalorder %s16, 1
    %p159 = scmp.ne.s32.totalorder %s154, %s156
    %p160 = scmp.eq.s32.totalorder %s16, 0
    %p161 = por %p159, %p160
    %p162 = scmp.ne.s32.totalorder %s154, %s156
    %p163 = scmp.eq.s32.totalorder %s21, 1
    %p164 = por %p162, %p163
    %p165 = scmp.ne.s32.totalorder %s156, %s157
    %p166 = scmp.eq.s32.totalorder %s21, 0
    %p167 = por %p165, %p166
    %p168 = scmp.ne.s32.totalorder %s156, %s157
    %p169 = scmp.eq.s32.totalorder %s22, 1
    %p170 = por %p168, %p169
    %p172 = scmp.ne.s32.totalorder %s157, %s171
    %p173 = scmp.eq.s32.totalorder %s22, 0
    %p174 = por %p172, %p173
    %s176 = sadd.s32 %s175, 1
    %p179 = scmp.eq.s32.totalorder %s16, 1
    %p180 = scmp.ne.s32.totalorder %s175, %s177
    %p181 = scmp.eq.s32.totalorder %s16, 0
    %p182 = por %p180, %p181
    %p183 = scmp.ne.s32.totalorder %s175, %s177
    %p184 = scmp.eq.s32.totalorder %s21, 1
    %p185 = por %p183, %p184
    %p186 = scmp.ne.s32.totalorder %s177, %s178
    %p187 = scmp.eq.s32.totalorder %s21, 0
    %p188 = por %p186, %p187
    %p189 = scmp.ne.s32.totalorder %s177, %s178
    %p190 = scmp.eq.s32.totalorder %s22, 1
    %p191 = por %p189, %p190
    %p193 = scmp.ne.s32.totalorder %s178, %s192
    %p194 = scmp.eq.s32.totalorder %s22, 0
    %p195 = por %p193, %p194
    %s197 = sadd.s32 %s196, 1
    %p200 = scmp.eq.s32.totalorder %s16, 1
    %p201 = scmp.ne.s32.totalorder %s196, %s198
    %p202 = scmp.eq.s32.totalorder %s16, 0
    %p203 = por %p201, %p202
    %p204 = scmp.ne.s32.totalorder %s196, %s198
    %p205 = scmp.eq.s32.totalorder %s21, 1
    %p206 = por %p204, %p205
    %p207 = scmp.ne.s32.totalorder %s198, %s199
    %p208 = scmp.eq.s32.totalorder %s21, 0
    %p209 = por %p207, %p208
    %p210 = scmp.ne.s32.totalorder %s198, %s199
    %p211 = scmp.eq.s32.totalorder %s22, 1
    %p212 = por %p210, %p211
    %p214 = scmp.ne.s32.totalorder %s199, %s213
    %p215 = scmp.eq.s32.totalorder %s22, 0
    %p216 = por %p214, %p215
    %s218 = sadd.s32 %s217, 1
    %p221 = scmp.eq.s32.totalorder %s16, 1
    %p222 = scmp.ne.s32.totalorder %s217, %s219
    %p223 = scmp.eq.s32.totalorder %s16, 0
    %p224 = por %p222, %p223
    %p225 = scmp.ne.s32.totalorder %s217, %s219
    %p226 = scmp.eq.s32.totalorder %s21, 1
    %p227 = por %p225, %p226
    %p228 = scmp.ne.s32.totalorder %s219, %s220
    %p229 = scmp.eq.s32.totalorder %s21, 0
    %p230 = por %p228, %p229
    %p231 = scmp.ne.s32.totalorder %s219, %s220
    %p232 = scmp.eq.s32.totalorder %s22, 1
    %p233 = por %p231, %p232
    %p235 = scmp.ne.s32.totalorder %s220, %s234
    %p236 = scmp.eq.s32.totalorder %s22, 0
    %p237 = por %p235, %p236
    %s239 = sadd.s32 %s238, 1
    %p242 = scmp.eq.s32.totalorder %s16, 1
    %p243 = scmp.ne.s32.totalorder %s238, %s240
    %p244 = scmp.eq.s32.totalorder %s16, 0
    %p245 = por %p243, %p244
    %p246 = scmp.ne.s32.totalorder %s238, %s240
    %p247 = scmp.eq.s32.totalorder %s21, 1
    %p248 = por %p246, %p247
    %p249 = scmp.ne.s32.totalorder %s240, %s241
    %p250 = scmp.eq.s32.totalorder %s21, 0
    %p251 = por %p249, %p250
    %p252 = scmp.ne.s32.totalorder %s240, %s241
    %p253 = scmp.eq.s32.totalorder %s22, 1
    %p254 = por %p252, %p253
    %p256 = scmp.ne.s32.totalorder %s241, %s255
    %p257 = scmp.eq.s32.totalorder %s22, 0
    %p258 = por %p256, %p257
    %s259 = ssub.s32 %s16, %s23
    %p260 = scmp.eq.s32.totalorder %s259, 0
    %s262 = sadd.s32 %s261, 1
    %s263 = scalar_select %p260, %s261, %s262
    %p266 = pneg %p260
    %p267 = scmp.eq.s32.totalorder %s16, 1
    %p268 = por %p266, %p267
    %p269 = scmp.ne.s32.totalorder %s261, %s264
    %p270 = scmp.eq.s32.totalorder %s16, 0
    %p271 = por %p269, %p270
    %p272 = scmp.ne.s32.totalorder %s261, %s264
    %p273 = scmp.eq.s32.totalorder %s21, 1
    %p274 = por %p272, %p273
    %p275 = scmp.ne.s32.totalorder %s264, %s265
    %p276 = scmp.eq.s32.totalorder %s21, 0
    %p277 = por %p275, %p276
    %p278 = scmp.ne.s32.totalorder %s264, %s265
    %p279 = scmp.eq.s32.totalorder %s22, 1
    %p280 = por %p278, %p279
    %p282 = scmp.ne.s32.totalorder %s265, %s281
    %p283 = scmp.eq.s32.totalorder %s22, 0
    %p284 = por %p282, %p283
    %p285 = scmp.le.s32.totalorder 1, %s16
    %p286 = scmp.lt.s32.totalorder %s16, 3
    %p287 = pnand %p285, %p286
    %p288 = pneg %p287
    // Predicated region
    $region9: #{pointnet2_seg_forward.12} parent=5 // pred_check
      _
    $region10: #{pointnet2_seg_forward.12} parent=5 // pred_check_branch
      %290 = sbr.rel (%p287) target = $region12
    $region11: #{pointnet2_seg_forward.12} parent=5 // pred_region
      %s291 = ssub.s32 %s16, 1
      // Predicated region
      $region13: #{pointnet2_seg_forward.12} parent=11 // pred_check
        %p292 = pneg %p167
      $region14: #{pointnet2_seg_forward.12} parent=11 // pred_check_branch
        %294 = sbr.rel (%p292) target = $region16
      $region15: #{pointnet2_seg_forward.12} parent=11 // pred_region
        _
      $region16: #{pointnet2_seg_forward.12} parent=11 // pred_fallthru
        _
      // Predicated region
      $region17: #{pointnet2_seg_forward.12} parent=11 // pred_check
        %p295 = pneg %p188
      $region18: #{pointnet2_seg_forward.12} parent=11 // pred_check_branch
        %297 = sbr.rel (%p295) target = $region20
      $region19: #{pointnet2_seg_forward.12} parent=11 // pred_region
        _
      $region20: #{pointnet2_seg_forward.12} parent=11 // pred_fallthru
        _
      // Predicated region
      $region21: #{pointnet2_seg_forward.12} parent=11 // pred_check
        %p298 = pneg %p209
      $region22: #{pointnet2_seg_forward.12} parent=11 // pred_check_branch
        %300 = sbr.rel (%p298) target = $region24
      $region23: #{pointnet2_seg_forward.12} parent=11 // pred_region
        _
      $region24: #{pointnet2_seg_forward.12} parent=11 // pred_fallthru
        _
      // Predicated region
      $region25: #{pointnet2_seg_forward.12} parent=11 // pred_check
        %p301 = pneg %p230
      $region26: #{pointnet2_seg_forward.12} parent=11 // pred_check_branch
        %303 = sbr.rel (%p301) target = $region28
      $region27: #{pointnet2_seg_forward.12} parent=11 // pred_region
        _
      $region28: #{pointnet2_seg_forward.12} parent=11 // pred_fallthru
        _
      // Predicated region
      $region29: #{pointnet2_seg_forward.12} parent=11 // pred_check
        %p304 = pneg %p251
      $region30: #{pointnet2_seg_forward.12} parent=11 // pred_check_branch
        %306 = sbr.rel (%p304) target = $region32
      $region31: #{pointnet2_seg_forward.12} parent=11 // pred_region
        _
      $region32: #{pointnet2_seg_forward.12} parent=11 // pred_fallthru
        _
    $region12: #{pointnet2_seg_forward.12} parent=5 // pred_fallthru
      _
    %p307 = scmp.lt.s32.totalorder %s16, 2
    // Predicated region
    $region33: #{pointnet2_seg_forward.12} parent=5 // pred_check
      %p308 = pneg %p307
    $region34: #{pointnet2_seg_forward.12} parent=5 // pred_check_branch
      %310 = sbr.rel (%p308) target = $region36
    $region35: #{pointnet2_seg_forward.12} parent=5 // pred_region
      // Predicated region
      $region37: #{pointnet2_seg_forward.12} parent=35 // pred_check
        %p311 = pneg %p36
      $region38: #{pointnet2_seg_forward.12} parent=35 // pred_check_branch
        %313 = sbr.rel (%p311) target = $region40
      $region39: #{pointnet2_seg_forward.12} parent=35 // pred_region
        %p314 = scmp.lt.s32.totalorder %s16, 1
        %s315 = scalar_select %p314, %s16, 1
        %s316 = smul.addr %s315, 2
        %s317 = smul.addr %s316, 8
        %s318 = scalar_lea.vmem %s0, %s317
      $region40: #{pointnet2_seg_forward.12} parent=35 // pred_fallthru
        _
      // Predicated region
      $region41: #{pointnet2_seg_forward.12} parent=35 // pred_check
        %p319 = pneg %p62
      $region42: #{pointnet2_seg_forward.12} parent=35 // pred_check_branch
        %321 = sbr.rel (%p319) target = $region44
      $region43: #{pointnet2_seg_forward.12} parent=35 // pred_region
        %p322 = scmp.lt.s32.totalorder %s16, 1
        %s323 = scalar_select %p322, %s16, 1
        %s324 = smul.addr %s323, 2
        %s325 = smul.addr %s324, 8
        %s326 = scalar_lea.vmem %s1, %s325
      $region44: #{pointnet2_seg_forward.12} parent=35 // pred_fallthru
        _
      // Predicated region
      $region45: #{pointnet2_seg_forward.12} parent=35 // pred_check
        %p327 = pneg %p88
      $region46: #{pointnet2_seg_forward.12} parent=35 // pred_check_branch
        %329 = sbr.rel (%p327) target = $region48
      $region47: #{pointnet2_seg_forward.12} parent=35 // pred_region
        %p330 = scmp.lt.s32.totalorder %s16, 1
        %s331 = scalar_select %p330, %s16, 1
        %s332 = smul.addr %s331, 2
        %s333 = smul.addr %s332, 8
        %s334 = scalar_lea.vmem %s2, %s333
      $region48: #{pointnet2_seg_forward.12} parent=35 // pred_fallthru
        _
      // Predicated region
      $region49: #{pointnet2_seg_forward.12} parent=35 // pred_check
        %p335 = pneg %p114
      $region50: #{pointnet2_seg_forward.12} parent=35 // pred_check_branch
        %337 = sbr.rel (%p335) target = $region52
      $region51: #{pointnet2_seg_forward.12} parent=35 // pred_region
        %p338 = scmp.lt.s32.totalorder %s16, 1
        %s339 = scalar_select %p338, %s16, 1
        %s340 = smul.addr %s339, 8
        %s341 = scalar_lea.vmem %s3, %s340
      $region52: #{pointnet2_seg_forward.12} parent=35 // pred_fallthru
        _
      // Predicated region
      $region53: #{pointnet2_seg_forward.12} parent=35 // pred_check
        %p342 = pneg %p140
      $region54: #{pointnet2_seg_forward.12} parent=35 // pred_check_branch
        %344 = sbr.rel (%p342) target = $region56
      $region55: #{pointnet2_seg_forward.12} parent=35 // pred_region
        %p345 = scmp.lt.s32.totalorder %s16, 1
        %s346 = scalar_select %p345, %s16, 1
        %s347 = smul.addr %s346, 8
        %s348 = scalar_lea.vmem %s4, %s347
      $region56: #{pointnet2_seg_forward.12} parent=35 // pred_fallthru
        _
    $region36: #{pointnet2_seg_forward.12} parent=5 // pred_fallthru
      _
    %p349 = scmp.le.s32.totalorder 1, %s16
    %p350 = scmp.lt.s32.totalorder %s16, 3
    %p351 = pnand %p349, %p350
    %p352 = pneg %p351
    // Predicated region
    $region57: #{pointnet2_seg_forward.12} parent=5 // pred_check
      _
    $region58: #{pointnet2_seg_forward.12} parent=5 // pred_check_branch
      %354 = sbr.rel (%p351) target = $region60
    $region59: #{pointnet2_seg_forward.12} parent=5 // pred_region
      %s355 = ssub.s32 %s16, 1
      %p356 = scmp.lt.s32.totalorder %s21, 1
      %s357 = scalar_select %p356, %s21, 1
      %s358 = smul.addr %s357, 2
      %s359 = smul.addr %s358, 8
      %s360 = scalar_lea.vmem %s0, %s359
      %p361 = pneg %p42
      %p362 = pneg %p39
      %p363 = scmp.lt.s32.totalorder %s21, 1
      %s364 = scalar_select %p363, %s21, 1
      %s365 = smul.addr %s364, 2
      %s366 = smul.addr %s365, 8
      %s367 = scalar_lea.vmem %s1, %s366
      %p368 = pneg %p68
      %p369 = pneg %p65
      %p370 = scmp.lt.s32.totalorder %s21, 1
      %s371 = scalar_select %p370, %s21, 1
      %s372 = smul.addr %s371, 2
      %s373 = smul.addr %s372, 8
      %s374 = scalar_lea.vmem %s2, %s373
      %p375 = pneg %p94
      %p376 = pneg %p91
      %p377 = scmp.lt.s32.totalorder %s21, 1
      %s378 = scalar_select %p377, %s21, 1
      %s379 = smul.addr %s378, 8
      %s380 = scalar_lea.vmem %s3, %s379
      %p381 = pneg %p120
      %p382 = pneg %p117
      %p383 = scmp.lt.s32.totalorder %s21, 1
      %s384 = scalar_select %p383, %s21, 1
      %s385 = smul.addr %s384, 8
      %s386 = scalar_lea.vmem %s4, %s385
      %p387 = pneg %p146
      %p388 = pneg %p143
      %p389 = pneg %p167
      %p390 = pneg %p164
      %p391 = pneg %p188
      %p392 = pneg %p185
      %p393 = pneg %p209
      %p394 = pneg %p206
      %p395 = pneg %p230
      %p396 = pneg %p227
      %p397 = pneg %p251
      %p398 = pneg %p248
      %p399 = pneg %p277
      %p400 = pneg %p274
      %p401 = scmp.lt.s32.totalorder %s21, 1
      %s402 = scalar_select %p401, %s21, 1
      %s403 = smul.addr %s402, 8
      %s404 = scalar_lea.vmem %s10, %s403
      %p405 = scmp.lt.s32.totalorder %s21, 1
      %s406 = scalar_select %p405, %s21, 1
      %s407 = smul.addr %s406, 2
      %s408 = smul.addr %s407, 8
      %s409 = scalar_lea.vmem %s0, %s408
      %p410 = scmp.lt.s32.totalorder %s21, 1
      %s411 = scalar_select %p410, %s21, 1
      %s412 = smul.addr %s411, 2
      %s413 = smul.addr %s412, 8
      %s414 = scalar_lea.vmem %s1, %s413
      %p415 = scmp.lt.s32.totalorder %s21, 1
      %s416 = scalar_select %p415, %s21, 1
      %s417 = smul.addr %s416, 2
      %s418 = smul.addr %s417, 8
      %s419 = scalar_lea.vmem %s2, %s418
      %p420 = scmp.lt.s32.totalorder %s21, 1
      %s421 = scalar_select %p420, %s21, 1
      %s422 = smul.addr %s421, 8
      %s423 = scalar_lea.vmem %s3, %s422
      %p424 = scmp.lt.s32.totalorder %s21, 1
      %s425 = scalar_select %p424, %s21, 1
      %s426 = smul.addr %s425, 8
      %s427 = scalar_lea.vmem %s4, %s426
      %p428 = scmp.lt.s32.totalorder %s21, 1
      %s429 = scalar_select %p428, %s21, 1
      %s430 = smul.addr %s429, 8
      %s431 = scalar_lea.vmem %s10, %s430
      %v433 = vld [vmem:[%s5] sm:$0xf]
      %v434 = vld [vmem:[%s5 + $0x4] sm:$0xf]
      %v435 = vld [vmem:[%s5 + $0x8] sm:$0xf]
      %v436 = vld [vmem:[%s5 + $0xc] sm:$0xf]
      %v437 = vld [vmem:[%s5 + $0x10] sm:$0xf]
      %v438 = vld [vmem:[%s5 + $0x14] sm:$0xf]
      %v439 = vld [vmem:[%s5 + $0x18] sm:$0xf]
      %v440 = vld [vmem:[%s5 + $0x1c] sm:$0xf]
      %v441 = vld [vmem:[%s5 + $0x20] sm:$0xf]
      %v442 = vld [vmem:[%s5 + $0x24] sm:$0xf]
      %v443 = vld [vmem:[%s5 + $0x28] sm:$0xf]
      %v444 = vld [vmem:[%s5 + $0x2c] sm:$0xf]
      %v445 = vld [vmem:[%s5 + $0x30] sm:$0xf]
      %v446 = vld [vmem:[%s5 + $0x34] sm:$0xf]
      %v447 = vld [vmem:[%s5 + $0x38] sm:$0xf]
      %v448 = vld [vmem:[%s5 + $0x3c] sm:$0xf]
      %v449 = vld [vmem:[%s5 + $0x40] sm:$0xf]
      %v450 = vld [vmem:[%s5 + $0x44] sm:$0xf]
      %v451 = vld [vmem:[%s5 + $0x48] sm:$0xf]
      %v452 = vld [vmem:[%s5 + $0x4c] sm:$0xf]
      %v453 = vld [vmem:[%s5 + $0x50] sm:$0xf]
      %v454 = vld [vmem:[%s5 + $0x54] sm:$0xf]
      %v455 = vld [vmem:[%s5 + $0x58] sm:$0xf]
      %v456 = vld [vmem:[%s5 + $0x5c] sm:$0xf]
      %v457 = vld [vmem:[%s5 + $0x60] sm:$0xf]
      %v458 = vld [vmem:[%s5 + $0x64] sm:$0xf]
      %v459 = vld [vmem:[%s5 + $0x68] sm:$0xf]
      %v460 = vld [vmem:[%s5 + $0x6c] sm:$0xf]
      %v461 = vld [vmem:[%s5 + $0x70] sm:$0xf]
      %v462 = vld [vmem:[%s5 + $0x74] sm:$0xf]
      %v463 = vld [vmem:[%s5 + $0x78] sm:$0xf]
      %v464 = vld [vmem:[%s5 + $0x7c] sm:$0xf]
      %v465 = vld [vmem:[%s6] sm:$0xf]
      %v466 = vld [vmem:[%s6 + $0x4] sm:$0xf]
      %v467 = vld [vmem:[%s6 + $0x8] sm:$0xf]
      %v468 = vld [vmem:[%s6 + $0xc] sm:$0xf]
      %v469 = vld [vmem:[%s6 + $0x10] sm:$0xf]
      %v470 = vld [vmem:[%s6 + $0x14] sm:$0xf]
      %v471 = vld [vmem:[%s6 + $0x18] sm:$0xf]
      %v472 = vld [vmem:[%s6 + $0x1c] sm:$0xf]
      %v473 = vld [vmem:[%s6 + $0x20] sm:$0xf]
      %v474 = vld [vmem:[%s6 + $0x24] sm:$0xf]
      %v475 = vld [vmem:[%s6 + $0x28] sm:$0xf]
      %v476 = vld [vmem:[%s6 + $0x2c] sm:$0xf]
      %v477 = vld [vmem:[%s6 + $0x30] sm:$0xf]
      %v478 = vld [vmem:[%s6 + $0x34] sm:$0xf]
      %v479 = vld [vmem:[%s6 + $0x38] sm:$0xf]
      %v480 = vld [vmem:[%s6 + $0x3c] sm:$0xf]
      %v481 = vld [vmem:[%s7] sm:$0x1]
      %v482 = vld [vmem:[%s423] sm:$0xff]
      %v483 = vld [vmem:[%s409] sm:$0xff]
      %v484 = vld [vmem:[%s409 + $0x8] sm:$0xff]
      %486 = vset.pattern.permute.xlu0 0
      %487 = vperm.xlu0 %486, %v482
      %v488 = vpop.permute.xlu0 %487
      %v490 = vmul.f32 %v483, %v488
      %v491 = vmul.f32 %v484, %v488
      %v492 = vld [vmem:[%s414] sm:$0xff]
      %v493 = vld [vmem:[%s414 + $0x8] sm:$0xff]
      %494 = vset.pattern.permute.xlu0 1
      %495 = vperm.xlu0 %494, %v482
      %v496 = vpop.permute.xlu0 %495
      %v498 = vmul.f32 %v492, %v496
      %v499 = vmul.f32 %v493, %v496
      %v500 = vadd.f32 %v490, %v498
      %v501 = vadd.f32 %v491, %v499
      %v502 = vld [vmem:[%s419] sm:$0xff]
      %v503 = vld [vmem:[%s419 + $0x8] sm:$0xff]
      %504 = vset.pattern.permute.xlu0 2
      %505 = vperm.xlu0 %504, %v482
      %v506 = vpop.permute.xlu0 %505
      %v508 = vmul.f32 %v502, %v506
      %v509 = vmul.f32 %v503, %v506
      %v510 = vadd.f32 %v500, %v508
      %v511 = vadd.f32 %v501, %v509
      %v512 = vpack.c.bf16 %v510, %v510
      %v513 = vpack.c.bf16 %v511, %v511
      %v514 = vld [vmem:[%s427] sm:$0xff]
      %v515 = vpack.c.bf16 %v514, %v514
      %v532 = vunpack.c.l.b16 %v465
      %v533 = vunpack.c.l.b16 %v466
      %v534 = vunpack.c.l.b16 %v467
      %v535 = vunpack.c.l.b16 %v468
      %v536 = vunpack.c.l.b16 %v469
      %v537 = vunpack.c.l.b16 %v470
      %v538 = vunpack.c.l.b16 %v471
      %v539 = vunpack.c.l.b16 %v472
      %v540 = vunpack.c.l.b16 %v473
      %v541 = vunpack.c.l.b16 %v474
      %v542 = vunpack.c.l.b16 %v475
      %v543 = vunpack.c.l.b16 %v476
      %v544 = vunpack.c.l.b16 %v477
      %v545 = vunpack.c.l.b16 %v478
      %v546 = vunpack.c.l.b16 %v479
      %v547 = vunpack.c.l.b16 %v480
      %v548 = vpack.c.b16 %v533, %v532
      %v549 = vpack.c.b16 %v535, %v534
      %v550 = vpack.c.b16 %v537, %v536
      %v551 = vpack.c.b16 %v539, %v538
      %v552 = vpack.c.b16 %v541, %v540
      %v553 = vpack.c.b16 %v543, %v542
      %v554 = vpack.c.b16 %v545, %v544
      %v555 = vpack.c.b16 %v547, %v546
      %564 = vmatprep.subr.bf16.mxu0 0
      %565 = vmatpush1.bf16.msra.mxu0 %v548
      %566 = vmatprep.subr.bf16.mxu0 0
      %567 = vmatpush1.bf16.msra.mxu0 %v549
      %568 = vmatprep.subr.bf16.mxu0 0
      %569 = vmatpush1.bf16.msra.mxu0 %v550
      %570 = vmatprep.subr.bf16.mxu0 0
      %571 = vmatpush1.bf16.msra.mxu0 %v551
      %572 = vmatprep.subr.bf16.mxu0 0
      %573 = vmatpush1.bf16.msra.mxu0 %v552
      %574 = vmatprep.subr.bf16.mxu0 0
      %575 = vmatpush1.bf16.msra.mxu0 %v553
      %576 = vmatprep.subr.bf16.mxu0 0
      %577 = vmatpush1.bf16.msra.mxu0 %v554
      %578 = vmatprep.subr.bf16.mxu0 0
      %579 = vmatpush1.bf16.msra.mxu0 %v555
      %580 = vmatprep.subr.bf16.mxu0 0
      %581 = vmatpush1.bf16.msra.mxu0 0
      %582 = vmatprep.subr.bf16.mxu0 0
      %583 = vmatpush1.bf16.msra.mxu0 0
      %584 = vmatprep.subr.bf16.mxu0 0
      %585 = vmatpush1.bf16.msra.mxu0 0
      %586 = vmatprep.subr.bf16.mxu0 0
      %587 = vmatpush1.bf16.msra.mxu0 0
      %588 = vmatprep.subr.bf16.mxu0 0
      %589 = vmatpush1.bf16.msra.mxu0 0
      %590 = vmatprep.subr.bf16.mxu0 0
      %591 = vmatpush1.bf16.msra.mxu0 0
      %592 = vmatprep.subr.bf16.mxu0 0
      %593 = vmatpush1.bf16.msra.mxu0 0
      %594 = vmatprep.subr.bf16.mxu0 0
      %595 = vmatpush1.bf16.msra.mxu0 0
      %596 = vmatprep.mubr.bf16.mxu0 0
      %597 = vmatmul.mubr.bf16.gmra.mrb[0].mxu0 %v515
      %v598 = vpop.f32.mrb[0].mxu0
      %v599 = vadd.f32 0.0, %v598
      %v600 = vpop.f32.mrb[0].mxu0
      %v601 = vpop.f32.mrb[0].mxu0
      %v602 = vpop.f32.mrb[0].mxu0
      %603 = vdwg.mxu0
      %v636 = vunpack.c.l.b16 %v433
      %v637 = vunpack.c.l.b16 %v434
      %v638 = vunpack.c.l.b16 %v435
      %v639 = vunpack.c.l.b16 %v436
      %v640 = vunpack.c.l.b16 %v437
      %v641 = vunpack.c.l.b16 %v438
      %v642 = vunpack.c.l.b16 %v439
      %v643 = vunpack.c.l.b16 %v440
      %v644 = vunpack.c.l.b16 %v441
      %v645 = vunpack.c.l.b16 %v442
      %v646 = vunpack.c.l.b16 %v443
      %v647 = vunpack.c.l.b16 %v444
      %v648 = vunpack.c.l.b16 %v445
      %v649 = vunpack.c.l.b16 %v446
      %v650 = vunpack.c.l.b16 %v447
      %v651 = vunpack.c.l.b16 %v448
      %v652 = vunpack.c.l.b16 %v449
      %v653 = vunpack.c.l.b16 %v450
      %v654 = vunpack.c.l.b16 %v451
      %v655 = vunpack.c.l.b16 %v452
      %v656 = vunpack.c.l.b16 %v453
      %v657 = vunpack.c.l.b16 %v454
      %v658 = vunpack.c.l.b16 %v455
      %v659 = vunpack.c.l.b16 %v456
      %v660 = vunpack.c.l.b16 %v457
      %v661 = vunpack.c.l.b16 %v458
      %v662 = vunpack.c.l.b16 %v459
      %v663 = vunpack.c.l.b16 %v460
      %v664 = vunpack.c.l.b16 %v461
      %v665 = vunpack.c.l.b16 %v462
      %v666 = vunpack.c.l.b16 %v463
      %v667 = vunpack.c.l.b16 %v464
      %v668 = vpack.c.b16 %v637, %v636
      %v669 = vpack.c.b16 %v639, %v638
      %v670 = vpack.c.b16 %v641, %v640
      %v671 = vpack.c.b16 %v643, %v642
      %v672 = vpack.c.b16 %v645, %v644
      %v673 = vpack.c.b16 %v647, %v646
      %v674 = vpack.c.b16 %v649, %v648
      %v675 = vpack.c.b16 %v651, %v650
      %v676 = vpack.c.b16 %v653, %v652
      %v677 = vpack.c.b16 %v655, %v654
      %v678 = vpack.c.b16 %v657, %v656
      %v679 = vpack.c.b16 %v659, %v658
      %v680 = vpack.c.b16 %v661, %v660
      %v681 = vpack.c.b16 %v663, %v662
      %v682 = vpack.c.b16 %v665, %v664
      %v683 = vpack.c.b16 %v667, %v666
      %700 = vmatprep.subr.bf16.mxu0 0
      %701 = vmatpush1.bf16.msra.mxu0 %v668
      %702 = vmatprep.subr.bf16.mxu0 0
      %703 = vmatpush1.bf16.msra.mxu0 %v669
      %704 = vmatprep.subr.bf16.mxu0 0
      %705 = vmatpush1.bf16.msra.mxu0 %v670
      %706 = vmatprep.subr.bf16.mxu0 0
      %707 = vmatpush1.bf16.msra.mxu0 %v671
      %708 = vmatprep.subr.bf16.mxu0 0
      %709 = vmatpush1.bf16.msra.mxu0 %v672
      %710 = vmatprep.subr.bf16.mxu0 0
      %711 = vmatpush1.bf16.msra.mxu0 %v673
      %712 = vmatprep.subr.bf16.mxu0 0
      %713 = vmatpush1.bf16.msra.mxu0 %v674
      %714 = vmatprep.subr.bf16.mxu0 0
      %715 = vmatpush1.bf16.msra.mxu0 %v675
      %716 = vmatprep.subr.bf16.mxu0 0
      %717 = vmatpush1.bf16.msra.mxu0 %v676
      %718 = vmatprep.subr.bf16.mxu0 0
      %719 = vmatpush1.bf16.msra.mxu0 %v677
      %720 = vmatprep.subr.bf16.mxu0 0
      %721 = vmatpush1.bf16.msra.mxu0 %v678
      %722 = vmatprep.subr.bf16.mxu0 0
      %723 = vmatpush1.bf16.msra.mxu0 %v679
      %724 = vmatprep.subr.bf16.mxu0 0
      %725 = vmatpush1.bf16.msra.mxu0 %v680
      %726 = vmatprep.subr.bf16.mxu0 0
      %727 = vmatpush1.bf16.msra.mxu0 %v681
      %728 = vmatprep.subr.bf16.mxu0 0
      %729 = vmatpush1.bf16.msra.mxu0 %v682
      %730 = vmatprep.subr.bf16.mxu0 0
      %731 = vmatpush1.bf16.msra.mxu0 %v683
      %732 = vmatprep.mubr.bf16.mxu0 %v513
      %733 = vmatmul.mubr.bf16.gmra.mrb[0].mxu0 %v512
      %v734 = vpop.f32.mrb[0].mxu0
      %v735 = vadd.f32 %v599, %v734
      %v736 = vpop.f32.mrb[0].mxu0
      %v737 = vpop.f32.mrb[0].mxu0
      %v738 = vpop.f32.mrb[0].mxu0
      %739 = vdwg.mxu0
      %v741 = vlaneseq
      %v742 = vshrl.u32 %v741, 7
      %v743 = vsub.s32 0, %v742
      %v744 = vrot.slane %v481, %v743
      %v746 = vadd.f32 %v735, %v744
      %v747 = vmax.f32 %v746, 0.0
      %v748 = vld [vmem:[%s8] sm:$0xf]
      %v749 = vld [vmem:[%s8 + $0x4] sm:$0xf]
      %v750 = vld [vmem:[%s8 + $0x8] sm:$0xf]
      %v751 = vld [vmem:[%s8 + $0xc] sm:$0xf]
      %v752 = vld [vmem:[%s8 + $0x10] sm:$0xf]
      %v753 = vld [vmem:[%s8 + $0x14] sm:$0xf]
      %v754 = vld [vmem:[%s8 + $0x18] sm:$0xf]
      %v755 = vld [vmem:[%s8 + $0x1c] sm:$0xf]
      %v756 = vld [vmem:[%s8 + $0x20] sm:$0xf]
      %v757 = vld [vmem:[%s8 + $0x24] sm:$0xf]
      %v758 = vld [vmem:[%s8 + $0x28] sm:$0xf]
      %v759 = vld [vmem:[%s8 + $0x2c] sm:$0xf]
      %v760 = vld [vmem:[%s8 + $0x30] sm:$0xf]
      %v761 = vld [vmem:[%s8 + $0x34] sm:$0xf]
      %v762 = vld [vmem:[%s8 + $0x38] sm:$0xf]
      %v763 = vld [vmem:[%s8 + $0x3c] sm:$0xf]
      %v764 = vld [vmem:[%s9] sm:$0x1]
      %v765 = vpack.c.bf16 %v747, %v747
      %v767 = vlaneseq
      %v768 = vshrl.u32 %v767, 7
      %v769 = vsub.s32 0, %v768
      %v770 = vrot.slane %v764, %v769
      %v788 = vunpack.c.l.b16 %v748
      %v789 = vunpack.c.l.b16 %v749
      %v790 = vunpack.c.l.b16 %v750
      %v791 = vunpack.c.l.b16 %v751
      %v792 = vunpack.c.l.b16 %v752
      %v793 = vunpack.c.l.b16 %v753
      %v794 = vunpack.c.l.b16 %v754
      %v795 = vunpack.c.l.b16 %v755
      %v796 = vunpack.c.l.b16 %v756
      %v797 = vunpack.c.l.b16 %v757
      %v798 = vunpack.c.l.b16 %v758
      %v799 = vunpack.c.l.b16 %v759
      %v800 = vunpack.c.l.b16 %v760
      %v801 = vunpack.c.l.b16 %v761
      %v802 = vunpack.c.l.b16 %v762
      %v803 = vunpack.c.l.b16 %v763
      %v804 = vpack.c.b16 %v789, %v788
      %v805 = vpack.c.b16 %v791, %v790
      %v806 = vpack.c.b16 %v793, %v792
      %v807 = vpack.c.b16 %v795, %v794
      %v808 = vpack.c.b16 %v797, %v796
      %v809 = vpack.c.b16 %v799, %v798
      %v810 = vpack.c.b16 %v801, %v800
      %v811 = vpack.c.b16 %v803, %v802
      %820 = vmatprep.subr.bf16.mxu0 0
      %821 = vmatpush1.bf16.msra.mxu0 %v804
      %822 = vmatprep.subr.bf16.mxu0 0
      %823 = vmatpush1.bf16.msra.mxu0 %v805
      %824 = vmatprep.subr.bf16.mxu0 0
      %825 = vmatpush1.bf16.msra.mxu0 %v806
      %826 = vmatprep.subr.bf16.mxu0 0
      %827 = vmatpush1.bf16.msra.mxu0 %v807
      %828 = vmatprep.subr.bf16.mxu0 0
      %829 = vmatpush1.bf16.msra.mxu0 %v808
      %830 = vmatprep.subr.bf16.mxu0 0
      %831 = vmatpush1.bf16.msra.mxu0 %v809
      %832 = vmatprep.subr.bf16.mxu0 0
      %833 = vmatpush1.bf16.msra.mxu0 %v810
      %834 = vmatprep.subr.bf16.mxu0 0
      %835 = vmatpush1.bf16.msra.mxu0 %v811
      %836 = vmatprep.subr.bf16.mxu0 0
      %837 = vmatpush1.bf16.msra.mxu0 0
      %838 = vmatprep.subr.bf16.mxu0 0
      %839 = vmatpush1.bf16.msra.mxu0 0
      %840 = vmatprep.subr.bf16.mxu0 0
      %841 = vmatpush1.bf16.msra.mxu0 0
      %842 = vmatprep.subr.bf16.mxu0 0
      %843 = vmatpush1.bf16.msra.mxu0 0
      %844 = vmatprep.subr.bf16.mxu0 0
      %845 = vmatpush1.bf16.msra.mxu0 0
      %846 = vmatprep.subr.bf16.mxu0 0
      %847 = vmatpush1.bf16.msra.mxu0 0
      %848 = vmatprep.subr.bf16.mxu0 0
      %849 = vmatpush1.bf16.msra.mxu0 0
      %850 = vmatprep.subr.bf16.mxu0 0
      %851 = vmatpush1.bf16.msra.mxu0 0
      %852 = vmatprep.mubr.bf16.mxu0 0
      %853 = vmatmul.mubr.bf16.gmra.mrb[0].mxu0 %v765
      %v854 = vpop.f32.mrb[0].mxu0
      %v855 = vadd.f32 %v770, %v854
      %v856 = vpop.f32.mrb[0].mxu0
      %v857 = vpop.f32.mrb[0].mxu0
      %v858 = vpop.f32.mrb[0].mxu0
      %859 = vdwg.mxu0
      %v860 = vmax.f32 %v855, 0.0
      %861 = vst [vmem:[%s431] sm:$0xff] %v860
      %p862 = scmp.lt.s32.totalorder %s21, 1
      %s863 = scalar_select %p862, %s21, 1
      %s864 = smul.addr %s863, 8
      %s865 = scalar_lea.vmem %s10, %s864
      // Predicated region
      $region61: #{pointnet2_seg_forward.12} parent=59 // pred_check
        %p866 = pneg %p274
      $region62: #{pointnet2_seg_forward.12} parent=59 // pred_check_branch
        %868 = sbr.rel (%p866) target = $region64
      $region63: #{pointnet2_seg_forward.12} parent=59 // pred_region
        _
      $region64: #{pointnet2_seg_forward.12} parent=59 // pred_fallthru
        _
    $region60: #{pointnet2_seg_forward.12} parent=5 // pred_fallthru
      _
    %p869 = scmp.le.s32.totalorder 2, %s16
    // Predicated region
    $region65: #{pointnet2_seg_forward.12} parent=5 // pred_check
      %p870 = pneg %p869
    $region66: #{pointnet2_seg_forward.12} parent=5 // pred_check_branch
      %872 = sbr.rel (%p870) target = $region68
    $region67: #{pointnet2_seg_forward.12} parent=5 // pred_region
      %s873 = ssub.s32 %s16, 2
      // Predicated region
      $region69: #{pointnet2_seg_forward.12} parent=67 // pred_check
        %p874 = pneg %p280
      $region70: #{pointnet2_seg_forward.12} parent=67 // pred_check_branch
        %876 = sbr.rel (%p874) target = $region72
      $region71: #{pointnet2_seg_forward.12} parent=67 // pred_region
        %p877 = scmp.lt.s32.totalorder %s22, 1
        %s878 = scalar_select %p877, %s22, 1
        %s879 = smul.addr %s878, 8
        %s880 = scalar_lea.vmem %s10, %s879
      $region72: #{pointnet2_seg_forward.12} parent=67 // pred_fallthru
        _
    $region68: #{pointnet2_seg_forward.12} parent=5 // pred_fallthru
      _
  $region6: #{pointnet2_seg_forward.12} parent=0 // loop_footer
    %s20 = sadd.s32 1, %s16
  $region7: #{pointnet2_seg_forward.12} parent=0 // loop_footer_branch
    %15 = sbr.rel target = $region3
  $region8: #{pointnet2_seg_forward.12} parent=0 // loop_exit
    _

// kernel: pointnet2_seg_forward.13
$region0: #{pointnet2_seg_forward.13}
  #allocation0 [shape = 'u32[]', space=smem, size = 0x4, offset = 0x4, fixed_abs, tag = 'smem constant byte address 0x4 - core index']
  #allocation1 [shape = 'u32[144,128]{1,0:T(1,128)}', space=vmem, size = 0x12000, scoped, tag = 'internal scratch']
  %s0 = inlined_call_operand.vmem [shape: f32[2,16,128], index: 0, kind: input, shape index: {}]
  %s1 = inlined_call_operand.vmem [shape: f32[2,16,128], index: 1, kind: input, shape index: {}]
  %s2 = inlined_call_operand.vmem [shape: f32[2,16,128], index: 2, kind: input, shape index: {}]
  %s3 = inlined_call_operand.vmem [shape: f32[2,16,3], index: 3, kind: input, shape index: {}]
  %s4 = inlined_call_operand.vmem [shape: f32[2,16,64], index: 4, kind: input, shape index: {}]
  %s5 = inlined_call_operand.vmem [shape: bf16[128,128], index: 5, kind: input, shape index: {}]
  %s6 = inlined_call_operand.vmem [shape: bf16[64,128], index: 6, kind: input, shape index: {}]
  %s7 = inlined_call_operand.vmem [shape: f32[1,128], index: 7, kind: input, shape index: {}]
  %s8 = inlined_call_operand.vmem [shape: bf16[128,128], index: 8, kind: input, shape index: {}]
  %s9 = inlined_call_operand.vmem [shape: f32[1,128], index: 9, kind: input, shape index: {}]
  %s10 = inlined_call_operand.vmem [shape: f32[2,16,128], index: 10, kind: output, shape index: {}]
  %s11 = sld [smem:[#allocation0]]
  $region73: #{pointnet2_seg_forward.13} parent=0
    _
  %s13 = ssub.s32 1, %s11
  %s14 = scalar_select 0, %s13, %s11
  loop: start=0, step=1, limit=4
  $region2: #{pointnet2_seg_forward.13} parent=0 // loop_pre_header
    _
  $region3: #{pointnet2_seg_forward.13} parent=0 // loop_header
    %s16 = sphi 0, %s20
    %p17 = scmp.ge.s32.totalorder %s16, 4
    %s26 = sphi 0, %s28
    %s29 = sphi 0, %s26
    %s30 = sphi 0, %s29
    %s46 = sphi 0, %s30
    %s52 = sphi 0, %s54
    %s55 = sphi 0, %s52
    %s56 = sphi 0, %s55
    %s72 = sphi 0, %s56
    %s78 = sphi 0, %s80
    %s81 = sphi 0, %s78
    %s82 = sphi 0, %s81
    %s98 = sphi 0, %s82
    %s104 = sphi 0, %s106
    %s107 = sphi 0, %s104
    %s108 = sphi 0, %s107
    %s124 = sphi 0, %s108
    %s130 = sphi 0, %s132
    %s133 = sphi 0, %s130
    %s134 = sphi 0, %s133
    %s150 = sphi 0, %s134
    %s154 = sphi 0, %s154
    %s156 = sphi 0, %s154
    %s157 = sphi 0, %s156
    %s171 = sphi 0, %s157
    %s175 = sphi 0, %s175
    %s177 = sphi 0, %s175
    %s178 = sphi 0, %s177
    %s192 = sphi 0, %s178
    %s196 = sphi 0, %s196
    %s198 = sphi 0, %s196
    %s199 = sphi 0, %s198
    %s213 = sphi 0, %s199
    %s217 = sphi 0, %s217
    %s219 = sphi 0, %s217
    %s220 = sphi 0, %s219
    %s234 = sphi 0, %s220
    %s238 = sphi 0, %s238
    %s240 = sphi 0, %s238
    %s241 = sphi 0, %s240
    %s255 = sphi 0, %s241
    %s261 = sphi 0, %s263
    %s264 = sphi 0, %s261
    %s265 = sphi 0, %s264
    %s281 = sphi 0, %s265
  $region4: #{pointnet2_seg_forward.13} parent=0 // loop_header_branch
    %19 = sbr.rel (%p17) target = $region8
  $region5: #{pointnet2_seg_forward.13} parent=0 // loop_body
    %s21 = ssub.s32 %s16, 1
    %s22 = ssub.s32 %s16, 2
    %s23 = sadd.s32 %s16, 1
    %s24 = ssub.s32 %s16, %s23
    %p25 = scmp.eq.s32.totalorder %s24, 0
    %s27 = sadd.s32 %s26, 1
    %s28 = scalar_select %p25, %s26, %s27
    %p31 = pneg %p25
    %p32 = scmp.eq.s32.totalorder %s16, 1
    %p33 = por %p31, %p32
    %p34 = scmp.ne.s32.totalorder %s26, %s29
    %p35 = scmp.eq.s32.totalorder %s16, 0
    %p36 = por %p34, %p35
    %p37 = scmp.ne.s32.totalorder %s26, %s29
    %p38 = scmp.eq.s32.totalorder %s21, 1
    %p39 = por %p37, %p38
    %p40 = scmp.ne.s32.totalorder %s29, %s30
    %p41 = scmp.eq.s32.totalorder %s21, 0
    %p42 = por %p40, %p41
    %p43 = scmp.ne.s32.totalorder %s29, %s30
    %p44 = scmp.eq.s32.totalorder %s22, 1
    %p45 = por %p43, %p44
    %p47 = scmp.ne.s32.totalorder %s30, %s46
    %p48 = scmp.eq.s32.totalorder %s22, 0
    %p49 = por %p47, %p48
    %s50 = ssub.s32 %s16, %s23
    %p51 = scmp.eq.s32.totalorder %s50, 0
    %s53 = sadd.s32 %s52, 1
    %s54 = scalar_select %p51, %s52, %s53
    %p57 = pneg %p51
    %p58 = scmp.eq.s32.totalorder %s16, 1
    %p59 = por %p57, %p58
    %p60 = scmp.ne.s32.totalorder %s52, %s55
    %p61 = scmp.eq.s32.totalorder %s16, 0
    %p62 = por %p60, %p61
    %p63 = scmp.ne.s32.totalorder %s52, %s55
    %p64 = scmp.eq.s32.totalorder %s21, 1
    %p65 = por %p63, %p64
    %p66 = scmp.ne.s32.totalorder %s55, %s56
    %p67 = scmp.eq.s32.totalorder %s21, 0
    %p68 = por %p66, %p67
    %p69 = scmp.ne.s32.totalorder %s55, %s56
    %p70 = scmp.eq.s32.totalorder %s22, 1
    %p71 = por %p69, %p70
    %p73 = scmp.ne.s32.totalorder %s56, %s72
    %p74 = scmp.eq.s32.totalorder %s22, 0
    %p75 = por %p73, %p74
    %s76 = ssub.s32 %s16, %s23
    %p77 = scmp.eq.s32.totalorder %s76, 0
    %s79 = sadd.s32 %s78, 1
    %s80 = scalar_select %p77, %s78, %s79
    %p83 = pneg %p77
    %p84 = scmp.eq.s32.totalorder %s16, 1
    %p85 = por %p83, %p84
    %p86 = scmp.ne.s32.totalorder %s78, %s81
    %p87 = scmp.eq.s32.totalorder %s16, 0
    %p88 = por %p86, %p87
    %p89 = scmp.ne.s32.totalorder %s78, %s81
    %p90 = scmp.eq.s32.totalorder %s21, 1
    %p91 = por %p89, %p90
    %p92 = scmp.ne.s32.totalorder %s81, %s82
    %p93 = scmp.eq.s32.totalorder %s21, 0
    %p94 = por %p92, %p93
    %p95 = scmp.ne.s32.totalorder %s81, %s82
    %p96 = scmp.eq.s32.totalorder %s22, 1
    %p97 = por %p95, %p96
    %p99 = scmp.ne.s32.totalorder %s82, %s98
    %p100 = scmp.eq.s32.totalorder %s22, 0
    %p101 = por %p99, %p100
    %s102 = ssub.s32 %s16, %s23
    %p103 = scmp.eq.s32.totalorder %s102, 0
    %s105 = sadd.s32 %s104, 1
    %s106 = scalar_select %p103, %s104, %s105
    %p109 = pneg %p103
    %p110 = scmp.eq.s32.totalorder %s16, 1
    %p111 = por %p109, %p110
    %p112 = scmp.ne.s32.totalorder %s104, %s107
    %p113 = scmp.eq.s32.totalorder %s16, 0
    %p114 = por %p112, %p113
    %p115 = scmp.ne.s32.totalorder %s104, %s107
    %p116 = scmp.eq.s32.totalorder %s21, 1
    %p117 = por %p115, %p116
    %p118 = scmp.ne.s32.totalorder %s107, %s108
    %p119 = scmp.eq.s32.totalorder %s21, 0
    %p120 = por %p118, %p119
    %p121 = scmp.ne.s32.totalorder %s107, %s108
    %p122 = scmp.eq.s32.totalorder %s22, 1
    %p123 = por %p121, %p122
    %p125 = scmp.ne.s32.totalorder %s108, %s124
    %p126 = scmp.eq.s32.totalorder %s22, 0
    %p127 = por %p125, %p126
    %s128 = ssub.s32 %s16, %s23
    %p129 = scmp.eq.s32.totalorder %s128, 0
    %s131 = sadd.s32 %s130, 1
    %s132 = scalar_select %p129, %s130, %s131
    %p135 = pneg %p129
    %p136 = scmp.eq.s32.totalorder %s16, 1
    %p137 = por %p135, %p136
    %p138 = scmp.ne.s32.totalorder %s130, %s133
    %p139 = scmp.eq.s32.totalorder %s16, 0
    %p140 = por %p138, %p139
    %p141 = scmp.ne.s32.totalorder %s130, %s133
    %p142 = scmp.eq.s32.totalorder %s21, 1
    %p143 = por %p141, %p142
    %p144 = scmp.ne.s32.totalorder %s133, %s134
    %p145 = scmp.eq.s32.totalorder %s21, 0
    %p146 = por %p144, %p145
    %p147 = scmp.ne.s32.totalorder %s133, %s134
    %p148 = scmp.eq.s32.totalorder %s22, 1
    %p149 = por %p147, %p148
    %p151 = scmp.ne.s32.totalorder %s134, %s150
    %p152 = scmp.eq.s32.totalorder %s22, 0
    %p153 = por %p151, %p152
    %s155 = sadd.s32 %s154, 1
    %p158 = scmp.eq.s32.totalorder %s16, 1
    %p159 = scmp.ne.s32.totalorder %s154, %s156
    %p160 = scmp.eq.s32.totalorder %s16, 0
    %p161 = por %p159, %p160
    %p162 = scmp.ne.s32.totalorder %s154, %s156
    %p163 = scmp.eq.s32.totalorder %s21, 1
    %p164 = por %p162, %p163
    %p165 = scmp.ne.s32.totalorder %s156, %s157
    %p166 = scmp.eq.s32.totalorder %s21, 0
    %p167 = por %p165, %p166
    %p168 = scmp.ne.s32.totalorder %s156, %s157
    %p169 = scmp.eq.s32.totalorder %s22, 1
    %p170 = por %p168, %p169
    %p172 = scmp.ne.s32.totalorder %s157, %s171
    %p173 = scmp.eq.s32.totalorder %s22, 0
    %p174 = por %p172, %p173
    %s176 = sadd.s32 %s175, 1
    %p179 = scmp.eq.s32.totalorder %s16, 1
    %p180 = scmp.ne.s32.totalorder %s175, %s177
    %p181 = scmp.eq.s32.totalorder %s16, 0
    %p182 = por %p180, %p181
    %p183 = scmp.ne.s32.totalorder %s175, %s177
    %p184 = scmp.eq.s32.totalorder %s21, 1
    %p185 = por %p183, %p184
    %p186 = scmp.ne.s32.totalorder %s177, %s178
    %p187 = scmp.eq.s32.totalorder %s21, 0
    %p188 = por %p186, %p187
    %p189 = scmp.ne.s32.totalorder %s177, %s178
    %p190 = scmp.eq.s32.totalorder %s22, 1
    %p191 = por %p189, %p190
    %p193 = scmp.ne.s32.totalorder %s178, %s192
    %p194 = scmp.eq.s32.totalorder %s22, 0
    %p195 = por %p193, %p194
    %s197 = sadd.s32 %s196, 1
    %p200 = scmp.eq.s32.totalorder %s16, 1
    %p201 = scmp.ne.s32.totalorder %s196, %s198
    %p202 = scmp.eq.s32.totalorder %s16, 0
    %p203 = por %p201, %p202
    %p204 = scmp.ne.s32.totalorder %s196, %s198
    %p205 = scmp.eq.s32.totalorder %s21, 1
    %p206 = por %p204, %p205
    %p207 = scmp.ne.s32.totalorder %s198, %s199
    %p208 = scmp.eq.s32.totalorder %s21, 0
    %p209 = por %p207, %p208
    %p210 = scmp.ne.s32.totalorder %s198, %s199
    %p211 = scmp.eq.s32.totalorder %s22, 1
    %p212 = por %p210, %p211
    %p214 = scmp.ne.s32.totalorder %s199, %s213
    %p215 = scmp.eq.s32.totalorder %s22, 0
    %p216 = por %p214, %p215
    %s218 = sadd.s32 %s217, 1
    %p221 = scmp.eq.s32.totalorder %s16, 1
    %p222 = scmp.ne.s32.totalorder %s217, %s219
    %p223 = scmp.eq.s32.totalorder %s16, 0
    %p224 = por %p222, %p223
    %p225 = scmp.ne.s32.totalorder %s217, %s219
    %p226 = scmp.eq.s32.totalorder %s21, 1
    %p227 = por %p225, %p226
    %p228 = scmp.ne.s32.totalorder %s219, %s220
    %p229 = scmp.eq.s32.totalorder %s21, 0
    %p230 = por %p228, %p229
    %p231 = scmp.ne.s32.totalorder %s219, %s220
    %p232 = scmp.eq.s32.totalorder %s22, 1
    %p233 = por %p231, %p232
    %p235 = scmp.ne.s32.totalorder %s220, %s234
    %p236 = scmp.eq.s32.totalorder %s22, 0
    %p237 = por %p235, %p236
    %s239 = sadd.s32 %s238, 1
    %p242 = scmp.eq.s32.totalorder %s16, 1
    %p243 = scmp.ne.s32.totalorder %s238, %s240
    %p244 = scmp.eq.s32.totalorder %s16, 0
    %p245 = por %p243, %p244
    %p246 = scmp.ne.s32.totalorder %s238, %s240
    %p247 = scmp.eq.s32.totalorder %s21, 1
    %p248 = por %p246, %p247
    %p249 = scmp.ne.s32.totalorder %s240, %s241
    %p250 = scmp.eq.s32.totalorder %s21, 0
    %p251 = por %p249, %p250
    %p252 = scmp.ne.s32.totalorder %s240, %s241
    %p253 = scmp.eq.s32.totalorder %s22, 1
    %p254 = por %p252, %p253
    %p256 = scmp.ne.s32.totalorder %s241, %s255
    %p257 = scmp.eq.s32.totalorder %s22, 0
    %p258 = por %p256, %p257
    %s259 = ssub.s32 %s16, %s23
    %p260 = scmp.eq.s32.totalorder %s259, 0
    %s262 = sadd.s32 %s261, 1
    %s263 = scalar_select %p260, %s261, %s262
    %p266 = pneg %p260
    %p267 = scmp.eq.s32.totalorder %s16, 1
    %p268 = por %p266, %p267
    %p269 = scmp.ne.s32.totalorder %s261, %s264
    %p270 = scmp.eq.s32.totalorder %s16, 0
    %p271 = por %p269, %p270
    %p272 = scmp.ne.s32.totalorder %s261, %s264
    %p273 = scmp.eq.s32.totalorder %s21, 1
    %p274 = por %p272, %p273
    %p275 = scmp.ne.s32.totalorder %s264, %s265
    %p276 = scmp.eq.s32.totalorder %s21, 0
    %p277 = por %p275, %p276
    %p278 = scmp.ne.s32.totalorder %s264, %s265
    %p279 = scmp.eq.s32.totalorder %s22, 1
    %p280 = por %p278, %p279
    %p282 = scmp.ne.s32.totalorder %s265, %s281
    %p283 = scmp.eq.s32.totalorder %s22, 0
    %p284 = por %p282, %p283
    %p285 = scmp.le.s32.totalorder 1, %s16
    %p286 = scmp.lt.s32.totalorder %s16, 3
    %p287 = pnand %p285, %p286
    %p288 = pneg %p287
    // Predicated region
    $region9: #{pointnet2_seg_forward.13} parent=5 // pred_check
      _
    $region10: #{pointnet2_seg_forward.13} parent=5 // pred_check_branch
      %290 = sbr.rel (%p287) target = $region12
    $region11: #{pointnet2_seg_forward.13} parent=5 // pred_region
      %s291 = ssub.s32 %s16, 1
      // Predicated region
      $region13: #{pointnet2_seg_forward.13} parent=11 // pred_check
        %p292 = pneg %p167
      $region14: #{pointnet2_seg_forward.13} parent=11 // pred_check_branch
        %294 = sbr.rel (%p292) target = $region16
      $region15: #{pointnet2_seg_forward.13} parent=11 // pred_region
        _
      $region16: #{pointnet2_seg_forward.13} parent=11 // pred_fallthru
        _
      // Predicated region
      $region17: #{pointnet2_seg_forward.13} parent=11 // pred_check
        %p295 = pneg %p188
      $region18: #{pointnet2_seg_forward.13} parent=11 // pred_check_branch
        %297 = sbr.rel (%p295) target = $region20
      $region19: #{pointnet2_seg_forward.13} parent=11 // pred_region
        _
      $region20: #{pointnet2_seg_forward.13} parent=11 // pred_fallthru
        _
      // Predicated region
      $region21: #{pointnet2_seg_forward.13} parent=11 // pred_check
        %p298 = pneg %p209
      $region22: #{pointnet2_seg_forward.13} parent=11 // pred_check_branch
        %300 = sbr.rel (%p298) target = $region24
      $region23: #{pointnet2_seg_forward.13} parent=11 // pred_region
        _
      $region24: #{pointnet2_seg_forward.13} parent=11 // pred_fallthru
        _
      // Predicated region
      $region25: #{pointnet2_seg_forward.13} parent=11 // pred_check
        %p301 = pneg %p230
      $region26: #{pointnet2_seg_forward.13} parent=11 // pred_check_branch
        %303 = sbr.rel (%p301) target = $region28
      $region27: #{pointnet2_seg_forward.13} parent=11 // pred_region
        _
      $region28: #{pointnet2_seg_forward.13} parent=11 // pred_fallthru
        _
      // Predicated region
      $region29: #{pointnet2_seg_forward.13} parent=11 // pred_check
        %p304 = pneg %p251
      $region30: #{pointnet2_seg_forward.13} parent=11 // pred_check_branch
        %306 = sbr.rel (%p304) target = $region32
      $region31: #{pointnet2_seg_forward.13} parent=11 // pred_region
        _
      $region32: #{pointnet2_seg_forward.13} parent=11 // pred_fallthru
        _
    $region12: #{pointnet2_seg_forward.13} parent=5 // pred_fallthru
      _
    %p307 = scmp.lt.s32.totalorder %s16, 2
    // Predicated region
    $region33: #{pointnet2_seg_forward.13} parent=5 // pred_check
      %p308 = pneg %p307
    $region34: #{pointnet2_seg_forward.13} parent=5 // pred_check_branch
      %310 = sbr.rel (%p308) target = $region36
    $region35: #{pointnet2_seg_forward.13} parent=5 // pred_region
      // Predicated region
      $region37: #{pointnet2_seg_forward.13} parent=35 // pred_check
        %p311 = pneg %p36
      $region38: #{pointnet2_seg_forward.13} parent=35 // pred_check_branch
        %313 = sbr.rel (%p311) target = $region40
      $region39: #{pointnet2_seg_forward.13} parent=35 // pred_region
        %p314 = scmp.lt.s32.totalorder %s16, 1
        %s315 = scalar_select %p314, %s16, 1
        %s316 = smul.addr %s315, 2
        %s317 = smul.addr %s316, 8
        %s318 = scalar_lea.vmem %s0, %s317
      $region40: #{pointnet2_seg_forward.13} parent=35 // pred_fallthru
        _
      // Predicated region
      $region41: #{pointnet2_seg_forward.13} parent=35 // pred_check
        %p319 = pneg %p62
      $region42: #{pointnet2_seg_forward.13} parent=35 // pred_check_branch
        %321 = sbr.rel (%p319) target = $region44
      $region43: #{pointnet2_seg_forward.13} parent=35 // pred_region
        %p322 = scmp.lt.s32.totalorder %s16, 1
        %s323 = scalar_select %p322, %s16, 1
        %s324 = smul.addr %s323, 2
        %s325 = smul.addr %s324, 8
        %s326 = scalar_lea.vmem %s1, %s325
      $region44: #{pointnet2_seg_forward.13} parent=35 // pred_fallthru
        _
      // Predicated region
      $region45: #{pointnet2_seg_forward.13} parent=35 // pred_check
        %p327 = pneg %p88
      $region46: #{pointnet2_seg_forward.13} parent=35 // pred_check_branch
        %329 = sbr.rel (%p327) target = $region48
      $region47: #{pointnet2_seg_forward.13} parent=35 // pred_region
        %p330 = scmp.lt.s32.totalorder %s16, 1
        %s331 = scalar_select %p330, %s16, 1
        %s332 = smul.addr %s331, 2
        %s333 = smul.addr %s332, 8
        %s334 = scalar_lea.vmem %s2, %s333
      $region48: #{pointnet2_seg_forward.13} parent=35 // pred_fallthru
        _
      // Predicated region
      $region49: #{pointnet2_seg_forward.13} parent=35 // pred_check
        %p335 = pneg %p114
      $region50: #{pointnet2_seg_forward.13} parent=35 // pred_check_branch
        %337 = sbr.rel (%p335) target = $region52
      $region51: #{pointnet2_seg_forward.13} parent=35 // pred_region
        %p338 = scmp.lt.s32.totalorder %s16, 1
        %s339 = scalar_select %p338, %s16, 1
        %s340 = smul.addr %s339, 2
        %s341 = smul.addr %s340, 8
        %s342 = scalar_lea.vmem %s3, %s341
      $region52: #{pointnet2_seg_forward.13} parent=35 // pred_fallthru
        _
      // Predicated region
      $region53: #{pointnet2_seg_forward.13} parent=35 // pred_check
        %p343 = pneg %p140
      $region54: #{pointnet2_seg_forward.13} parent=35 // pred_check_branch
        %345 = sbr.rel (%p343) target = $region56
      $region55: #{pointnet2_seg_forward.13} parent=35 // pred_region
        %p346 = scmp.lt.s32.totalorder %s16, 1
        %s347 = scalar_select %p346, %s16, 1
        %s348 = smul.addr %s347, 2
        %s349 = smul.addr %s348, 8
        %s350 = scalar_lea.vmem %s4, %s349
      $region56: #{pointnet2_seg_forward.13} parent=35 // pred_fallthru
        _
    $region36: #{pointnet2_seg_forward.13} parent=5 // pred_fallthru
      _
    %p351 = scmp.le.s32.totalorder 1, %s16
    %p352 = scmp.lt.s32.totalorder %s16, 3
    %p353 = pnand %p351, %p352
    %p354 = pneg %p353
    // Predicated region
    $region57: #{pointnet2_seg_forward.13} parent=5 // pred_check
      _
    $region58: #{pointnet2_seg_forward.13} parent=5 // pred_check_branch
      %356 = sbr.rel (%p353) target = $region60
    $region59: #{pointnet2_seg_forward.13} parent=5 // pred_region
      %s357 = ssub.s32 %s16, 1
      %p358 = scmp.lt.s32.totalorder %s21, 1
      %s359 = scalar_select %p358, %s21, 1
      %s360 = smul.addr %s359, 2
      %s361 = smul.addr %s360, 8
      %s362 = scalar_lea.vmem %s0, %s361
      %p363 = pneg %p42
      %p364 = pneg %p39
      %p365 = scmp.lt.s32.totalorder %s21, 1
      %s366 = scalar_select %p365, %s21, 1
      %s367 = smul.addr %s366, 2
      %s368 = smul.addr %s367, 8
      %s369 = scalar_lea.vmem %s1, %s368
      %p370 = pneg %p68
      %p371 = pneg %p65
      %p372 = scmp.lt.s32.totalorder %s21, 1
      %s373 = scalar_select %p372, %s21, 1
      %s374 = smul.addr %s373, 2
      %s375 = smul.addr %s374, 8
      %s376 = scalar_lea.vmem %s2, %s375
      %p377 = pneg %p94
      %p378 = pneg %p91
      %p379 = scmp.lt.s32.totalorder %s21, 1
      %s380 = scalar_select %p379, %s21, 1
      %s381 = smul.addr %s380, 2
      %s382 = smul.addr %s381, 8
      %s383 = scalar_lea.vmem %s3, %s382
      %p384 = pneg %p120
      %p385 = pneg %p117
      %p386 = scmp.lt.s32.totalorder %s21, 1
      %s387 = scalar_select %p386, %s21, 1
      %s388 = smul.addr %s387, 2
      %s389 = smul.addr %s388, 8
      %s390 = scalar_lea.vmem %s4, %s389
      %p391 = pneg %p146
      %p392 = pneg %p143
      %p393 = pneg %p167
      %p394 = pneg %p164
      %p395 = pneg %p188
      %p396 = pneg %p185
      %p397 = pneg %p209
      %p398 = pneg %p206
      %p399 = pneg %p230
      %p400 = pneg %p227
      %p401 = pneg %p251
      %p402 = pneg %p248
      %p403 = pneg %p277
      %p404 = pneg %p274
      %p405 = scmp.lt.s32.totalorder %s21, 1
      %s406 = scalar_select %p405, %s21, 1
      %s407 = smul.addr %s406, 2
      %s408 = smul.addr %s407, 8
      %s409 = scalar_lea.vmem %s10, %s408
      %p410 = scmp.lt.s32.totalorder %s21, 1
      %s411 = scalar_select %p410, %s21, 1
      %s412 = smul.addr %s411, 2
      %s413 = smul.addr %s412, 8
      %s414 = scalar_lea.vmem %s0, %s413
      %p415 = scmp.lt.s32.totalorder %s21, 1
      %s416 = scalar_select %p415, %s21, 1
      %s417 = smul.addr %s416, 2
      %s418 = smul.addr %s417, 8
      %s419 = scalar_lea.vmem %s1, %s418
      %p420 = scmp.lt.s32.totalorder %s21, 1
      %s421 = scalar_select %p420, %s21, 1
      %s422 = smul.addr %s421, 2
      %s423 = smul.addr %s422, 8
      %s424 = scalar_lea.vmem %s2, %s423
      %p425 = scmp.lt.s32.totalorder %s21, 1
      %s426 = scalar_select %p425, %s21, 1
      %s427 = smul.addr %s426, 2
      %s428 = smul.addr %s427, 8
      %s429 = scalar_lea.vmem %s3, %s428
      %p430 = scmp.lt.s32.totalorder %s21, 1
      %s431 = scalar_select %p430, %s21, 1
      %s432 = smul.addr %s431, 2
      %s433 = smul.addr %s432, 8
      %s434 = scalar_lea.vmem %s4, %s433
      %p435 = scmp.lt.s32.totalorder %s21, 1
      %s436 = scalar_select %p435, %s21, 1
      %s437 = smul.addr %s436, 2
      %s438 = smul.addr %s437, 8
      %s439 = scalar_lea.vmem %s10, %s438
      %v441 = vld [vmem:[%s5] sm:$0xf]
      %v442 = vld [vmem:[%s5 + $0x4] sm:$0xf]
      %v443 = vld [vmem:[%s5 + $0x8] sm:$0xf]
      %v444 = vld [vmem:[%s5 + $0xc] sm:$0xf]
      %v445 = vld [vmem:[%s5 + $0x10] sm:$0xf]
      %v446 = vld [vmem:[%s5 + $0x14] sm:$0xf]
      %v447 = vld [vmem:[%s5 + $0x18] sm:$0xf]
      %v448 = vld [vmem:[%s5 + $0x1c] sm:$0xf]
      %v449 = vld [vmem:[%s5 + $0x20] sm:$0xf]
      %v450 = vld [vmem:[%s5 + $0x24] sm:$0xf]
      %v451 = vld [vmem:[%s5 + $0x28] sm:$0xf]
      %v452 = vld [vmem:[%s5 + $0x2c] sm:$0xf]
      %v453 = vld [vmem:[%s5 + $0x30] sm:$0xf]
      %v454 = vld [vmem:[%s5 + $0x34] sm:$0xf]
      %v455 = vld [vmem:[%s5 + $0x38] sm:$0xf]
      %v456 = vld [vmem:[%s5 + $0x3c] sm:$0xf]
      %v457 = vld [vmem:[%s6] sm:$0xf]
      %v458 = vld [vmem:[%s6 + $0x4] sm:$0xf]
      %v459 = vld [vmem:[%s6 + $0x8] sm:$0xf]
      %v460 = vld [vmem:[%s6 + $0xc] sm:$0xf]
      %v461 = vld [vmem:[%s6 + $0x10] sm:$0xf]
      %v462 = vld [vmem:[%s6 + $0x14] sm:$0xf]
      %v463 = vld [vmem:[%s6 + $0x18] sm:$0xf]
      %v464 = vld [vmem:[%s6 + $0x1c] sm:$0xf]
      %v465 = vld [vmem:[%s7] sm:$0x1]
      %v466 = vld [vmem:[%s429] sm:$0xff]
      %v467 = vld [vmem:[%s429 + $0x8] sm:$0xff]
      %v468 = vld [vmem:[%s414] sm:$0xff]
      %v469 = vld [vmem:[%s414 + $0x8] sm:$0xff]
      %471 = vset.pattern.permute.xlu0 0
      %472 = vperm.xlu0 %471, %v466
      %v473 = vpop.permute.xlu0 %472
      %476 = vset.pattern.permute.xlu0 0
      %477 = vperm.xlu0 %476, %v467
      %v478 = vpop.permute.xlu0 %477
      %v480 = vmul.f32 %v468, %v473
      %v481 = vmul.f32 %v469, %v478
      %v482 = vld [vmem:[%s419] sm:$0xff]
      %v483 = vld [vmem:[%s419 + $0x8] sm:$0xff]
      %484 = vset.pattern.permute.xlu0 1
      %485 = vperm.xlu0 %484, %v466
      %v486 = vpop.permute.xlu0 %485
      %488 = vset.pattern.permute.xlu0 1
      %489 = vperm.xlu0 %488, %v467
      %v490 = vpop.permute.xlu0 %489
      %v492 = vmul.f32 %v482, %v486
      %v493 = vmul.f32 %v483, %v490
      %v494 = vadd.f32 %v480, %v492
      %v495 = vadd.f32 %v481, %v493
      %v496 = vld [vmem:[%s424] sm:$0xff]
      %v497 = vld [vmem:[%s424 + $0x8] sm:$0xff]
      %498 = vset.pattern.permute.xlu0 2
      %499 = vperm.xlu0 %498, %v466
      %v500 = vpop.permute.xlu0 %499
      %502 = vset.pattern.permute.xlu0 2
      %503 = vperm.xlu0 %502, %v467
      %v504 = vpop.permute.xlu0 %503
      %v506 = vmul.f32 %v496, %v500
      %v507 = vmul.f32 %v497, %v504
      %v508 = vadd.f32 %v494, %v506
      %v509 = vadd.f32 %v495, %v507
      %v510 = vpack.c.bf16 %v509, %v508
      %v511 = vld [vmem:[%s434] sm:$0xff]
      %v512 = vld [vmem:[%s434 + $0x8] sm:$0xff]
      %v513 = vpack.c.bf16 %v512, %v511
      %v522 = vunpack.c.l.b16 %v457
      %v523 = vunpack.c.l.b16 %v458
      %v524 = vunpack.c.l.b16 %v459
      %v525 = vunpack.c.l.b16 %v460
      %v526 = vunpack.c.l.b16 %v461
      %v527 = vunpack.c.l.b16 %v462
      %v528 = vunpack.c.l.b16 %v463
      %v529 = vunpack.c.l.b16 %v464
      %v530 = vpack.c.b16 %v523, %v522
      %v531 = vpack.c.b16 %v525, %v524
      %v532 = vpack.c.b16 %v527, %v526
      %v533 = vpack.c.b16 %v529, %v528
      %vm538 = vcmask 523264
      %v540 = vsel %vm538, %v513, 0
      %542 = vmatprep.subr.bf16.mxu0 0
      %543 = vmatpush1.bf16.msra.mxu0 %v530
      %544 = vmatprep.subr.bf16.mxu0 0
      %545 = vmatpush1.bf16.msra.mxu0 %v531
      %546 = vmatprep.subr.bf16.mxu0 0
      %547 = vmatpush1.bf16.msra.mxu0 %v532
      %548 = vmatprep.subr.bf16.mxu0 0
      %549 = vmatpush1.bf16.msra.mxu0 %v533
      %550 = vmatprep.subr.bf16.mxu0 0
      %551 = vmatpush1.bf16.msra.mxu0 0
      %552 = vmatprep.subr.bf16.mxu0 0
      %553 = vmatpush1.bf16.msra.mxu0 0
      %554 = vmatprep.subr.bf16.mxu0 0
      %555 = vmatpush1.bf16.msra.mxu0 0
      %556 = vmatprep.subr.bf16.mxu0 0
      %557 = vmatpush1.bf16.msra.mxu0 0
      %558 = vmatprep.subr.bf16.mxu0 0
      %559 = vmatpush1.bf16.msra.mxu0 0
      %560 = vmatprep.subr.bf16.mxu0 0
      %561 = vmatpush1.bf16.msra.mxu0 0
      %562 = vmatprep.subr.bf16.mxu0 0
      %563 = vmatpush1.bf16.msra.mxu0 0
      %564 = vmatprep.subr.bf16.mxu0 0
      %565 = vmatpush1.bf16.msra.mxu0 0
      %566 = vmatprep.subr.bf16.mxu0 0
      %567 = vmatpush1.bf16.msra.mxu0 0
      %568 = vmatprep.subr.bf16.mxu0 0
      %569 = vmatpush1.bf16.msra.mxu0 0
      %570 = vmatprep.subr.bf16.mxu0 0
      %571 = vmatpush1.bf16.msra.mxu0 0
      %572 = vmatprep.subr.bf16.mxu0 0
      %573 = vmatpush1.bf16.msra.mxu0 0
      %574 = vmatprep.mubr.bf16.mxu0 0
      %575 = vmatmul.mubr.bf16.gmra.mrb[0].mxu0 %v540
      %v576 = vpop.f32.mrb[0].mxu0
      %v577 = vadd.f32 0.0, %v576
      %v578 = vpop.f32.mrb[0].mxu0
      %v579 = vpop.f32.mrb[0].mxu0
      %v580 = vadd.f32 0.0, %v579
      %v581 = vpop.f32.mrb[0].mxu0
      %582 = vdwg.mxu0
      %v599 = vunpack.c.l.b16 %v441
      %v600 = vunpack.c.l.b16 %v442
      %v601 = vunpack.c.l.b16 %v443
      %v602 = vunpack.c.l.b16 %v444
      %v603 = vunpack.c.l.b16 %v445
      %v604 = vunpack.c.l.b16 %v446
      %v605 = vunpack.c.l.b16 %v447
      %v606 = vunpack.c.l.b16 %v448
      %v607 = vunpack.c.l.b16 %v449
      %v608 = vunpack.c.l.b16 %v450
      %v609 = vunpack.c.l.b16 %v451
      %v610 = vunpack.c.l.b16 %v452
      %v611 = vunpack.c.l.b16 %v453
      %v612 = vunpack.c.l.b16 %v454
      %v613 = vunpack.c.l.b16 %v455
      %v614 = vunpack.c.l.b16 %v456
      %v615 = vpack.c.b16 %v600, %v599
      %v616 = vpack.c.b16 %v602, %v601
      %v617 = vpack.c.b16 %v604, %v603
      %v618 = vpack.c.b16 %v606, %v605
      %v619 = vpack.c.b16 %v608, %v607
      %v620 = vpack.c.b16 %v610, %v609
      %v621 = vpack.c.b16 %v612, %v611
      %v622 = vpack.c.b16 %v614, %v613
      %631 = vmatprep.subr.bf16.mxu0 0
      %632 = vmatpush1.bf16.msra.mxu0 %v615
      %633 = vmatprep.subr.bf16.mxu0 0
      %634 = vmatpush1.bf16.msra.mxu0 %v616
      %635 = vmatprep.subr.bf16.mxu0 0
      %636 = vmatpush1.bf16.msra.mxu0 %v617
      %637 = vmatprep.subr.bf16.mxu0 0
      %638 = vmatpush1.bf16.msra.mxu0 %v618
      %639 = vmatprep.subr.bf16.mxu0 0
      %640 = vmatpush1.bf16.msra.mxu0 %v619
      %641 = vmatprep.subr.bf16.mxu0 0
      %642 = vmatpush1.bf16.msra.mxu0 %v620
      %643 = vmatprep.subr.bf16.mxu0 0
      %644 = vmatpush1.bf16.msra.mxu0 %v621
      %645 = vmatprep.subr.bf16.mxu0 0
      %646 = vmatpush1.bf16.msra.mxu0 %v622
      %647 = vmatprep.subr.bf16.mxu0 0
      %648 = vmatpush1.bf16.msra.mxu0 0
      %649 = vmatprep.subr.bf16.mxu0 0
      %650 = vmatpush1.bf16.msra.mxu0 0
      %651 = vmatprep.subr.bf16.mxu0 0
      %652 = vmatpush1.bf16.msra.mxu0 0
      %653 = vmatprep.subr.bf16.mxu0 0
      %654 = vmatpush1.bf16.msra.mxu0 0
      %655 = vmatprep.subr.bf16.mxu0 0
      %656 = vmatpush1.bf16.msra.mxu0 0
      %657 = vmatprep.subr.bf16.mxu0 0
      %658 = vmatpush1.bf16.msra.mxu0 0
      %659 = vmatprep.subr.bf16.mxu0 0
      %660 = vmatpush1.bf16.msra.mxu0 0
      %661 = vmatprep.subr.bf16.mxu0 0
      %662 = vmatpush1.bf16.msra.mxu0 0
      %663 = vmatprep.mubr.bf16.mxu0 0
      %664 = vmatmul.mubr.bf16.gmra.mrb[0].mxu0 %v510
      %v665 = vpop.f32.mrb[0].mxu0
      %v666 = vadd.f32 %v577, %v665
      %v667 = vpop.f32.mrb[0].mxu0
      %v668 = vpop.f32.mrb[0].mxu0
      %v669 = vadd.f32 %v580, %v668
      %v670 = vpop.f32.mrb[0].mxu0
      %671 = vdwg.mxu0
      %v673 = vlaneseq
      %v674 = vshrl.u32 %v673, 7
      %v675 = vsub.s32 0, %v674
      %v676 = vrot.slane %v465, %v675
      %v678 = vadd.f32 %v666, %v676
      %v679 = vadd.f32 %v669, %v676
      %v680 = vmax.f32 %v678, 0.0
      %v681 = vmax.f32 %v679, 0.0
      %v682 = vld [vmem:[%s8] sm:$0xf]
      %v683 = vld [vmem:[%s8 + $0x4] sm:$0xf]
      %v684 = vld [vmem:[%s8 + $0x8] sm:$0xf]
      %v685 = vld [vmem:[%s8 + $0xc] sm:$0xf]
      %v686 = vld [vmem:[%s8 + $0x10] sm:$0xf]
      %v687 = vld [vmem:[%s8 + $0x14] sm:$0xf]
      %v688 = vld [vmem:[%s8 + $0x18] sm:$0xf]
      %v689 = vld [vmem:[%s8 + $0x1c] sm:$0xf]
      %v690 = vld [vmem:[%s8 + $0x20] sm:$0xf]
      %v691 = vld [vmem:[%s8 + $0x24] sm:$0xf]
      %v692 = vld [vmem:[%s8 + $0x28] sm:$0xf]
      %v693 = vld [vmem:[%s8 + $0x2c] sm:$0xf]
      %v694 = vld [vmem:[%s8 + $0x30] sm:$0xf]
      %v695 = vld [vmem:[%s8 + $0x34] sm:$0xf]
      %v696 = vld [vmem:[%s8 + $0x38] sm:$0xf]
      %v697 = vld [vmem:[%s8 + $0x3c] sm:$0xf]
      %v698 = vld [vmem:[%s9] sm:$0x1]
      %v699 = vpack.c.bf16 %v681, %v680
      %v701 = vlaneseq
      %v702 = vshrl.u32 %v701, 7
      %v703 = vsub.s32 0, %v702
      %v704 = vrot.slane %v698, %v703
      %v722 = vunpack.c.l.b16 %v682
      %v723 = vunpack.c.l.b16 %v683
      %v724 = vunpack.c.l.b16 %v684
      %v725 = vunpack.c.l.b16 %v685
      %v726 = vunpack.c.l.b16 %v686
      %v727 = vunpack.c.l.b16 %v687
      %v728 = vunpack.c.l.b16 %v688
      %v729 = vunpack.c.l.b16 %v689
      %v730 = vunpack.c.l.b16 %v690
      %v731 = vunpack.c.l.b16 %v691
      %v732 = vunpack.c.l.b16 %v692
      %v733 = vunpack.c.l.b16 %v693
      %v734 = vunpack.c.l.b16 %v694
      %v735 = vunpack.c.l.b16 %v695
      %v736 = vunpack.c.l.b16 %v696
      %v737 = vunpack.c.l.b16 %v697
      %v738 = vpack.c.b16 %v723, %v722
      %v739 = vpack.c.b16 %v725, %v724
      %v740 = vpack.c.b16 %v727, %v726
      %v741 = vpack.c.b16 %v729, %v728
      %v742 = vpack.c.b16 %v731, %v730
      %v743 = vpack.c.b16 %v733, %v732
      %v744 = vpack.c.b16 %v735, %v734
      %v745 = vpack.c.b16 %v737, %v736
      %754 = vmatprep.subr.bf16.mxu0 0
      %755 = vmatpush1.bf16.msra.mxu0 %v738
      %756 = vmatprep.subr.bf16.mxu0 0
      %757 = vmatpush1.bf16.msra.mxu0 %v739
      %758 = vmatprep.subr.bf16.mxu0 0
      %759 = vmatpush1.bf16.msra.mxu0 %v740
      %760 = vmatprep.subr.bf16.mxu0 0
      %761 = vmatpush1.bf16.msra.mxu0 %v741
      %762 = vmatprep.subr.bf16.mxu0 0
      %763 = vmatpush1.bf16.msra.mxu0 %v742
      %764 = vmatprep.subr.bf16.mxu0 0
      %765 = vmatpush1.bf16.msra.mxu0 %v743
      %766 = vmatprep.subr.bf16.mxu0 0
      %767 = vmatpush1.bf16.msra.mxu0 %v744
      %768 = vmatprep.subr.bf16.mxu0 0
      %769 = vmatpush1.bf16.msra.mxu0 %v745
      %770 = vmatprep.subr.bf16.mxu0 0
      %771 = vmatpush1.bf16.msra.mxu0 0
      %772 = vmatprep.subr.bf16.mxu0 0
      %773 = vmatpush1.bf16.msra.mxu0 0
      %774 = vmatprep.subr.bf16.mxu0 0
      %775 = vmatpush1.bf16.msra.mxu0 0
      %776 = vmatprep.subr.bf16.mxu0 0
      %777 = vmatpush1.bf16.msra.mxu0 0
      %778 = vmatprep.subr.bf16.mxu0 0
      %779 = vmatpush1.bf16.msra.mxu0 0
      %780 = vmatprep.subr.bf16.mxu0 0
      %781 = vmatpush1.bf16.msra.mxu0 0
      %782 = vmatprep.subr.bf16.mxu0 0
      %783 = vmatpush1.bf16.msra.mxu0 0
      %784 = vmatprep.subr.bf16.mxu0 0
      %785 = vmatpush1.bf16.msra.mxu0 0
      %786 = vmatprep.mubr.bf16.mxu0 0
      %787 = vmatmul.mubr.bf16.gmra.mrb[0].mxu0 %v699
      %v788 = vpop.f32.mrb[0].mxu0
      %v789 = vadd.f32 %v704, %v788
      %v790 = vpop.f32.mrb[0].mxu0
      %v791 = vpop.f32.mrb[0].mxu0
      %v792 = vadd.f32 %v704, %v791
      %v793 = vpop.f32.mrb[0].mxu0
      %794 = vdwg.mxu0
      %v795 = vmax.f32 %v789, 0.0
      %v796 = vmax.f32 %v792, 0.0
      %797 = vst [vmem:[%s439] sm:$0xff] %v795
      %798 = vst [vmem:[%s439 + $0x8] sm:$0xff] %v796
      %p799 = scmp.lt.s32.totalorder %s21, 1
      %s800 = scalar_select %p799, %s21, 1
      %s801 = smul.addr %s800, 2
      %s802 = smul.addr %s801, 8
      %s803 = scalar_lea.vmem %s10, %s802
      // Predicated region
      $region61: #{pointnet2_seg_forward.13} parent=59 // pred_check
        %p804 = pneg %p274
      $region62: #{pointnet2_seg_forward.13} parent=59 // pred_check_branch
        %806 = sbr.rel (%p804) target = $region64
      $region63: #{pointnet2_seg_forward.13} parent=59 // pred_region
        _
      $region64: #{pointnet2_seg_forward.13} parent=59 // pred_fallthru
        _
    $region60: #{pointnet2_seg_forward.13} parent=5 // pred_fallthru
      _
    %p807 = scmp.le.s32.totalorder 2, %s16
    // Predicated region
    $region65: #{pointnet2_seg_forward.13} parent=5 // pred_check
      %p808 = pneg %p807
    $region66: #{pointnet2_seg_forward.13} parent=5 // pred_check_branch
      %810 = sbr.rel (%p808) target = $region68
    $region67: #{pointnet2_seg_forward.13} parent=5 // pred_region
      %s811 = ssub.s32 %s16, 2
      // Predicated region
      $region69: #{pointnet2_seg_forward.13} parent=67 // pred_check
        %p812 = pneg %p280
      $region70: #{pointnet2_seg_forward.13} parent=67 // pred_check_branch
        %814 = sbr.rel (%p812) target = $region72
      $region71: #{pointnet2_seg_forward.13} parent=67 // pred_region
        %p815 = scmp.lt.s32.totalorder %s22, 1
        %s816 = scalar_select %p815, %s22, 1
        %s817 = smul.addr %s816, 2
        %s818 = smul.addr %s817, 8
        %s819 = scalar_lea.vmem %s10, %s818
      $region72: #{pointnet2_seg_forward.13} parent=67 // pred_fallthru
        _
    $region68: #{pointnet2_seg_forward.13} parent=5 // pred_fallthru
      _
  $region6: #{pointnet2_seg_forward.13} parent=0 // loop_footer
    %s20 = sadd.s32 1, %s16
  $region7: #{pointnet2_seg_forward.13} parent=0 // loop_footer_branch
    %15 = sbr.rel target = $region3
  $region8: #{pointnet2_seg_forward.13} parent=0 // loop_exit
    _

// kernel: neg.14
$region0: #{neg.14}
  #allocation0 [shape = 's32[1]{0}', space=sflag, size = 0x4, scoped, tag = 'scoped memory for neg.14']
  %s0 = inlined_call_operand.vmem [shape: f32[2,64,32], index: 0, kind: input, shape index: {}]
  %s1 = inlined_call_operand.vmem [shape: f32[2,64,32], index: 1, kind: output, shape index: {}]
  %v2 = vld [vmem:[%s0] sm:$0xff]
  %3 = xla_tuple %v2
  %4 = xla_tuple %3
  %v5 = vxor.u32 %v2, 2147483648
  %6 = xla_tuple %v5
  %7 = vst [vmem:[%s1] sm:$0xff] %v5
  %s8 = scalar_lea.vmem %s0, 32
  %v9 = vld [vmem:[%s8] sm:$0xff]
  %10 = xla_tuple %v9
  %11 = xla_tuple %10
  %v12 = vxor.u32 %v9, 2147483648
  %13 = xla_tuple %v12
  %s14 = scalar_lea.vmem %s1, 32
  %15 = vst [vmem:[%s14] sm:$0xff] %v12
  %s16 = scalar_lea.vmem %s0, 8
  %v17 = vld [vmem:[%s16] sm:$0xff]
  %18 = xla_tuple %v17
  %19 = xla_tuple %18
  %v20 = vxor.u32 %v17, 2147483648
  %21 = xla_tuple %v20
  %s22 = scalar_lea.vmem %s1, 8
  %23 = vst [vmem:[%s22] sm:$0xff] %v20
  %s24 = scalar_lea.vmem %s0, 40
  %v25 = vld [vmem:[%s24] sm:$0xff]
  %26 = xla_tuple %v25
  %27 = xla_tuple %26
  %v28 = vxor.u32 %v25, 2147483648
  %29 = xla_tuple %v28
  %s30 = scalar_lea.vmem %s1, 40
  %31 = vst [vmem:[%s30] sm:$0xff] %v28
  %s32 = scalar_lea.vmem %s0, 16
  %v33 = vld [vmem:[%s32] sm:$0xff]
  %34 = xla_tuple %v33
  %35 = xla_tuple %34
  %v36 = vxor.u32 %v33, 2147483648
  %37 = xla_tuple %v36
  %s38 = scalar_lea.vmem %s1, 16
  %39 = vst [vmem:[%s38] sm:$0xff] %v36
  %s40 = scalar_lea.vmem %s0, 48
  %v41 = vld [vmem:[%s40] sm:$0xff]
  %42 = xla_tuple %v41
  %43 = xla_tuple %42
  %v44 = vxor.u32 %v41, 2147483648
  %45 = xla_tuple %v44
  %s46 = scalar_lea.vmem %s1, 48
  %47 = vst [vmem:[%s46] sm:$0xff] %v44
  %s48 = scalar_lea.vmem %s0, 24
  %v49 = vld [vmem:[%s48] sm:$0xff]
  %50 = xla_tuple %v49
  %51 = xla_tuple %50
  %v52 = vxor.u32 %v49, 2147483648
  %53 = xla_tuple %v52
  %s54 = scalar_lea.vmem %s1, 24
  %55 = vst [vmem:[%s54] sm:$0xff] %v52
  %s56 = scalar_lea.vmem %s0, 56
  %v57 = vld [vmem:[%s56] sm:$0xff]
  %58 = xla_tuple %v57
  %59 = xla_tuple %58
  %v60 = vxor.u32 %v57, 2147483648
  %61 = xla_tuple %v60
  %s62 = scalar_lea.vmem %s1, 56
  %63 = vst [vmem:[%s62] sm:$0xff] %v60

// kernel: pointnet2_seg_forward.14
$region0: #{pointnet2_seg_forward.14}
  #allocation0 [shape = 'u32[]', space=smem, size = 0x4, offset = 0x4, fixed_abs, tag = 'smem constant byte address 0x4 - core index']
  #allocation1 [shape = 'u32[144,128]{1,0:T(1,128)}', space=vmem, size = 0x12000, scoped, tag = 'internal scratch']
  %s0 = inlined_call_operand.vmem [shape: f32[2,32,64], index: 0, kind: input, shape index: {}]
  %s1 = inlined_call_operand.vmem [shape: f32[2,32,64], index: 1, kind: input, shape index: {}]
  %s2 = inlined_call_operand.vmem [shape: f32[2,32,64], index: 2, kind: input, shape index: {}]
  %s3 = inlined_call_operand.vmem [shape: f32[2,32,3], index: 3, kind: input, shape index: {}]
  %s4 = inlined_call_operand.vmem [shape: f32[2,32,32], index: 4, kind: input, shape index: {}]
  %s5 = inlined_call_operand.vmem [shape: bf16[64,128], index: 5, kind: input, shape index: {}]
  %s6 = inlined_call_operand.vmem [shape: bf16[32,128], index: 6, kind: input, shape index: {}]
  %s7 = inlined_call_operand.vmem [shape: f32[1,128], index: 7, kind: input, shape index: {}]
  %s8 = inlined_call_operand.vmem [shape: bf16[128,128], index: 8, kind: input, shape index: {}]
  %s9 = inlined_call_operand.vmem [shape: f32[1,128], index: 9, kind: input, shape index: {}]
  %s10 = inlined_call_operand.vmem [shape: f32[2,32,128], index: 10, kind: output, shape index: {}]
  %s11 = sld [smem:[#allocation0]]
  $region73: #{pointnet2_seg_forward.14} parent=0
    _
  %s13 = ssub.s32 1, %s11
  %s14 = scalar_select 0, %s13, %s11
  loop: start=0, step=1, limit=4
  $region2: #{pointnet2_seg_forward.14} parent=0 // loop_pre_header
    _
  $region3: #{pointnet2_seg_forward.14} parent=0 // loop_header
    %s16 = sphi 0, %s20
    %p17 = scmp.ge.s32.totalorder %s16, 4
    %s26 = sphi 0, %s28
    %s29 = sphi 0, %s26
    %s30 = sphi 0, %s29
    %s46 = sphi 0, %s30
    %s52 = sphi 0, %s54
    %s55 = sphi 0, %s52
    %s56 = sphi 0, %s55
    %s72 = sphi 0, %s56
    %s78 = sphi 0, %s80
    %s81 = sphi 0, %s78
    %s82 = sphi 0, %s81
    %s98 = sphi 0, %s82
    %s104 = sphi 0, %s106
    %s107 = sphi 0, %s104
    %s108 = sphi 0, %s107
    %s124 = sphi 0, %s108
    %s130 = sphi 0, %s132
    %s133 = sphi 0, %s130
    %s134 = sphi 0, %s133
    %s150 = sphi 0, %s134
    %s154 = sphi 0, %s154
    %s156 = sphi 0, %s154
    %s157 = sphi 0, %s156
    %s171 = sphi 0, %s157
    %s175 = sphi 0, %s175
    %s177 = sphi 0, %s175
    %s178 = sphi 0, %s177
    %s192 = sphi 0, %s178
    %s196 = sphi 0, %s196
    %s198 = sphi 0, %s196
    %s199 = sphi 0, %s198
    %s213 = sphi 0, %s199
    %s217 = sphi 0, %s217
    %s219 = sphi 0, %s217
    %s220 = sphi 0, %s219
    %s234 = sphi 0, %s220
    %s238 = sphi 0, %s238
    %s240 = sphi 0, %s238
    %s241 = sphi 0, %s240
    %s255 = sphi 0, %s241
    %s261 = sphi 0, %s263
    %s264 = sphi 0, %s261
    %s265 = sphi 0, %s264
    %s281 = sphi 0, %s265
  $region4: #{pointnet2_seg_forward.14} parent=0 // loop_header_branch
    %19 = sbr.rel (%p17) target = $region8
  $region5: #{pointnet2_seg_forward.14} parent=0 // loop_body
    %s21 = ssub.s32 %s16, 1
    %s22 = ssub.s32 %s16, 2
    %s23 = sadd.s32 %s16, 1
    %s24 = ssub.s32 %s16, %s23
    %p25 = scmp.eq.s32.totalorder %s24, 0
    %s27 = sadd.s32 %s26, 1
    %s28 = scalar_select %p25, %s26, %s27
    %p31 = pneg %p25
    %p32 = scmp.eq.s32.totalorder %s16, 1
    %p33 = por %p31, %p32
    %p34 = scmp.ne.s32.totalorder %s26, %s29
    %p35 = scmp.eq.s32.totalorder %s16, 0
    %p36 = por %p34, %p35
    %p37 = scmp.ne.s32.totalorder %s26, %s29
    %p38 = scmp.eq.s32.totalorder %s21, 1
    %p39 = por %p37, %p38
    %p40 = scmp.ne.s32.totalorder %s29, %s30
    %p41 = scmp.eq.s32.totalorder %s21, 0
    %p42 = por %p40, %p41
    %p43 = scmp.ne.s32.totalorder %s29, %s30
    %p44 = scmp.eq.s32.totalorder %s22, 1
    %p45 = por %p43, %p44
    %p47 = scmp.ne.s32.totalorder %s30, %s46
    %p48 = scmp.eq.s32.totalorder %s22, 0
    %p49 = por %p47, %p48
    %s50 = ssub.s32 %s16, %s23
    %p51 = scmp.eq.s32.totalorder %s50, 0
    %s53 = sadd.s32 %s52, 1
    %s54 = scalar_select %p51, %s52, %s53
    %p57 = pneg %p51
    %p58 = scmp.eq.s32.totalorder %s16, 1
    %p59 = por %p57, %p58
    %p60 = scmp.ne.s32.totalorder %s52, %s55
    %p61 = scmp.eq.s32.totalorder %s16, 0
    %p62 = por %p60, %p61
    %p63 = scmp.ne.s32.totalorder %s52, %s55
    %p64 = scmp.eq.s32.totalorder %s21, 1
    %p65 = por %p63, %p64
    %p66 = scmp.ne.s32.totalorder %s55, %s56
    %p67 = scmp.eq.s32.totalorder %s21, 0
    %p68 = por %p66, %p67
    %p69 = scmp.ne.s32.totalorder %s55, %s56
    %p70 = scmp.eq.s32.totalorder %s22, 1
    %p71 = por %p69, %p70
    %p73 = scmp.ne.s32.totalorder %s56, %s72
    %p74 = scmp.eq.s32.totalorder %s22, 0
    %p75 = por %p73, %p74
    %s76 = ssub.s32 %s16, %s23
    %p77 = scmp.eq.s32.totalorder %s76, 0
    %s79 = sadd.s32 %s78, 1
    %s80 = scalar_select %p77, %s78, %s79
    %p83 = pneg %p77
    %p84 = scmp.eq.s32.totalorder %s16, 1
    %p85 = por %p83, %p84
    %p86 = scmp.ne.s32.totalorder %s78, %s81
    %p87 = scmp.eq.s32.totalorder %s16, 0
    %p88 = por %p86, %p87
    %p89 = scmp.ne.s32.totalorder %s78, %s81
    %p90 = scmp.eq.s32.totalorder %s21, 1
    %p91 = por %p89, %p90
    %p92 = scmp.ne.s32.totalorder %s81, %s82
    %p93 = scmp.eq.s32.totalorder %s21, 0
    %p94 = por %p92, %p93
    %p95 = scmp.ne.s32.totalorder %s81, %s82
    %p96 = scmp.eq.s32.totalorder %s22, 1
    %p97 = por %p95, %p96
    %p99 = scmp.ne.s32.totalorder %s82, %s98
    %p100 = scmp.eq.s32.totalorder %s22, 0
    %p101 = por %p99, %p100
    %s102 = ssub.s32 %s16, %s23
    %p103 = scmp.eq.s32.totalorder %s102, 0
    %s105 = sadd.s32 %s104, 1
    %s106 = scalar_select %p103, %s104, %s105
    %p109 = pneg %p103
    %p110 = scmp.eq.s32.totalorder %s16, 1
    %p111 = por %p109, %p110
    %p112 = scmp.ne.s32.totalorder %s104, %s107
    %p113 = scmp.eq.s32.totalorder %s16, 0
    %p114 = por %p112, %p113
    %p115 = scmp.ne.s32.totalorder %s104, %s107
    %p116 = scmp.eq.s32.totalorder %s21, 1
    %p117 = por %p115, %p116
    %p118 = scmp.ne.s32.totalorder %s107, %s108
    %p119 = scmp.eq.s32.totalorder %s21, 0
    %p120 = por %p118, %p119
    %p121 = scmp.ne.s32.totalorder %s107, %s108
    %p122 = scmp.eq.s32.totalorder %s22, 1
    %p123 = por %p121, %p122
    %p125 = scmp.ne.s32.totalorder %s108, %s124
    %p126 = scmp.eq.s32.totalorder %s22, 0
    %p127 = por %p125, %p126
    %s128 = ssub.s32 %s16, %s23
    %p129 = scmp.eq.s32.totalorder %s128, 0
    %s131 = sadd.s32 %s130, 1
    %s132 = scalar_select %p129, %s130, %s131
    %p135 = pneg %p129
    %p136 = scmp.eq.s32.totalorder %s16, 1
    %p137 = por %p135, %p136
    %p138 = scmp.ne.s32.totalorder %s130, %s133
    %p139 = scmp.eq.s32.totalorder %s16, 0
    %p140 = por %p138, %p139
    %p141 = scmp.ne.s32.totalorder %s130, %s133
    %p142 = scmp.eq.s32.totalorder %s21, 1
    %p143 = por %p141, %p142
    %p144 = scmp.ne.s32.totalorder %s133, %s134
    %p145 = scmp.eq.s32.totalorder %s21, 0
    %p146 = por %p144, %p145
    %p147 = scmp.ne.s32.totalorder %s133, %s134
    %p148 = scmp.eq.s32.totalorder %s22, 1
    %p149 = por %p147, %p148
    %p151 = scmp.ne.s32.totalorder %s134, %s150
    %p152 = scmp.eq.s32.totalorder %s22, 0
    %p153 = por %p151, %p152
    %s155 = sadd.s32 %s154, 1
    %p158 = scmp.eq.s32.totalorder %s16, 1
    %p159 = scmp.ne.s32.totalorder %s154, %s156
    %p160 = scmp.eq.s32.totalorder %s16, 0
    %p161 = por %p159, %p160
    %p162 = scmp.ne.s32.totalorder %s154, %s156
    %p163 = scmp.eq.s32.totalorder %s21, 1
    %p164 = por %p162, %p163
    %p165 = scmp.ne.s32.totalorder %s156, %s157
    %p166 = scmp.eq.s32.totalorder %s21, 0
    %p167 = por %p165, %p166
    %p168 = scmp.ne.s32.totalorder %s156, %s157
    %p169 = scmp.eq.s32.totalorder %s22, 1
    %p170 = por %p168, %p169
    %p172 = scmp.ne.s32.totalorder %s157, %s171
    %p173 = scmp.eq.s32.totalorder %s22, 0
    %p174 = por %p172, %p173
    %s176 = sadd.s32 %s175, 1
    %p179 = scmp.eq.s32.totalorder %s16, 1
    %p180 = scmp.ne.s32.totalorder %s175, %s177
    %p181 = scmp.eq.s32.totalorder %s16, 0
    %p182 = por %p180, %p181
    %p183 = scmp.ne.s32.totalorder %s175, %s177
    %p184 = scmp.eq.s32.totalorder %s21, 1
    %p185 = por %p183, %p184
    %p186 = scmp.ne.s32.totalorder %s177, %s178
    %p187 = scmp.eq.s32.totalorder %s21, 0
    %p188 = por %p186, %p187
    %p189 = scmp.ne.s32.totalorder %s177, %s178
    %p190 = scmp.eq.s32.totalorder %s22, 1
    %p191 = por %p189, %p190
    %p193 = scmp.ne.s32.totalorder %s178, %s192
    %p194 = scmp.eq.s32.totalorder %s22, 0
    %p195 = por %p193, %p194
    %s197 = sadd.s32 %s196, 1
    %p200 = scmp.eq.s32.totalorder %s16, 1
    %p201 = scmp.ne.s32.totalorder %s196, %s198
    %p202 = scmp.eq.s32.totalorder %s16, 0
    %p203 = por %p201, %p202
    %p204 = scmp.ne.s32.totalorder %s196, %s198
    %p205 = scmp.eq.s32.totalorder %s21, 1
    %p206 = por %p204, %p205
    %p207 = scmp.ne.s32.totalorder %s198, %s199
    %p208 = scmp.eq.s32.totalorder %s21, 0
    %p209 = por %p207, %p208
    %p210 = scmp.ne.s32.totalorder %s198, %s199
    %p211 = scmp.eq.s32.totalorder %s22, 1
    %p212 = por %p210, %p211
    %p214 = scmp.ne.s32.totalorder %s199, %s213
    %p215 = scmp.eq.s32.totalorder %s22, 0
    %p216 = por %p214, %p215
    %s218 = sadd.s32 %s217, 1
    %p221 = scmp.eq.s32.totalorder %s16, 1
    %p222 = scmp.ne.s32.totalorder %s217, %s219
    %p223 = scmp.eq.s32.totalorder %s16, 0
    %p224 = por %p222, %p223
    %p225 = scmp.ne.s32.totalorder %s217, %s219
    %p226 = scmp.eq.s32.totalorder %s21, 1
    %p227 = por %p225, %p226
    %p228 = scmp.ne.s32.totalorder %s219, %s220
    %p229 = scmp.eq.s32.totalorder %s21, 0
    %p230 = por %p228, %p229
    %p231 = scmp.ne.s32.totalorder %s219, %s220
    %p232 = scmp.eq.s32.totalorder %s22, 1
    %p233 = por %p231, %p232
    %p235 = scmp.ne.s32.totalorder %s220, %s234
    %p236 = scmp.eq.s32.totalorder %s22, 0
    %p237 = por %p235, %p236
    %s239 = sadd.s32 %s238, 1
    %p242 = scmp.eq.s32.totalorder %s16, 1
    %p243 = scmp.ne.s32.totalorder %s238, %s240
    %p244 = scmp.eq.s32.totalorder %s16, 0
    %p245 = por %p243, %p244
    %p246 = scmp.ne.s32.totalorder %s238, %s240
    %p247 = scmp.eq.s32.totalorder %s21, 1
    %p248 = por %p246, %p247
    %p249 = scmp.ne.s32.totalorder %s240, %s241
    %p250 = scmp.eq.s32.totalorder %s21, 0
    %p251 = por %p249, %p250
    %p252 = scmp.ne.s32.totalorder %s240, %s241
    %p253 = scmp.eq.s32.totalorder %s22, 1
    %p254 = por %p252, %p253
    %p256 = scmp.ne.s32.totalorder %s241, %s255
    %p257 = scmp.eq.s32.totalorder %s22, 0
    %p258 = por %p256, %p257
    %s259 = ssub.s32 %s16, %s23
    %p260 = scmp.eq.s32.totalorder %s259, 0
    %s262 = sadd.s32 %s261, 1
    %s263 = scalar_select %p260, %s261, %s262
    %p266 = pneg %p260
    %p267 = scmp.eq.s32.totalorder %s16, 1
    %p268 = por %p266, %p267
    %p269 = scmp.ne.s32.totalorder %s261, %s264
    %p270 = scmp.eq.s32.totalorder %s16, 0
    %p271 = por %p269, %p270
    %p272 = scmp.ne.s32.totalorder %s261, %s264
    %p273 = scmp.eq.s32.totalorder %s21, 1
    %p274 = por %p272, %p273
    %p275 = scmp.ne.s32.totalorder %s264, %s265
    %p276 = scmp.eq.s32.totalorder %s21, 0
    %p277 = por %p275, %p276
    %p278 = scmp.ne.s32.totalorder %s264, %s265
    %p279 = scmp.eq.s32.totalorder %s22, 1
    %p280 = por %p278, %p279
    %p282 = scmp.ne.s32.totalorder %s265, %s281
    %p283 = scmp.eq.s32.totalorder %s22, 0
    %p284 = por %p282, %p283
    %p285 = scmp.le.s32.totalorder 1, %s16
    %p286 = scmp.lt.s32.totalorder %s16, 3
    %p287 = pnand %p285, %p286
    %p288 = pneg %p287
    // Predicated region
    $region9: #{pointnet2_seg_forward.14} parent=5 // pred_check
      _
    $region10: #{pointnet2_seg_forward.14} parent=5 // pred_check_branch
      %290 = sbr.rel (%p287) target = $region12
    $region11: #{pointnet2_seg_forward.14} parent=5 // pred_region
      %s291 = ssub.s32 %s16, 1
      // Predicated region
      $region13: #{pointnet2_seg_forward.14} parent=11 // pred_check
        %p292 = pneg %p167
      $region14: #{pointnet2_seg_forward.14} parent=11 // pred_check_branch
        %294 = sbr.rel (%p292) target = $region16
      $region15: #{pointnet2_seg_forward.14} parent=11 // pred_region
        _
      $region16: #{pointnet2_seg_forward.14} parent=11 // pred_fallthru
        _
      // Predicated region
      $region17: #{pointnet2_seg_forward.14} parent=11 // pred_check
        %p295 = pneg %p188
      $region18: #{pointnet2_seg_forward.14} parent=11 // pred_check_branch
        %297 = sbr.rel (%p295) target = $region20
      $region19: #{pointnet2_seg_forward.14} parent=11 // pred_region
        _
      $region20: #{pointnet2_seg_forward.14} parent=11 // pred_fallthru
        _
      // Predicated region
      $region21: #{pointnet2_seg_forward.14} parent=11 // pred_check
        %p298 = pneg %p209
      $region22: #{pointnet2_seg_forward.14} parent=11 // pred_check_branch
        %300 = sbr.rel (%p298) target = $region24
      $region23: #{pointnet2_seg_forward.14} parent=11 // pred_region
        _
      $region24: #{pointnet2_seg_forward.14} parent=11 // pred_fallthru
        _
      // Predicated region
      $region25: #{pointnet2_seg_forward.14} parent=11 // pred_check
        %p301 = pneg %p230
      $region26: #{pointnet2_seg_forward.14} parent=11 // pred_check_branch
        %303 = sbr.rel (%p301) target = $region28
      $region27: #{pointnet2_seg_forward.14} parent=11 // pred_region
        _
      $region28: #{pointnet2_seg_forward.14} parent=11 // pred_fallthru
        _
      // Predicated region
      $region29: #{pointnet2_seg_forward.14} parent=11 // pred_check
        %p304 = pneg %p251
      $region30: #{pointnet2_seg_forward.14} parent=11 // pred_check_branch
        %306 = sbr.rel (%p304) target = $region32
      $region31: #{pointnet2_seg_forward.14} parent=11 // pred_region
        _
      $region32: #{pointnet2_seg_forward.14} parent=11 // pred_fallthru
        _
    $region12: #{pointnet2_seg_forward.14} parent=5 // pred_fallthru
      _
    %p307 = scmp.lt.s32.totalorder %s16, 2
    // Predicated region
    $region33: #{pointnet2_seg_forward.14} parent=5 // pred_check
      %p308 = pneg %p307
    $region34: #{pointnet2_seg_forward.14} parent=5 // pred_check_branch
      %310 = sbr.rel (%p308) target = $region36
    $region35: #{pointnet2_seg_forward.14} parent=5 // pred_region
      // Predicated region
      $region37: #{pointnet2_seg_forward.14} parent=35 // pred_check
        %p311 = pneg %p36
      $region38: #{pointnet2_seg_forward.14} parent=35 // pred_check_branch
        %313 = sbr.rel (%p311) target = $region40
      $region39: #{pointnet2_seg_forward.14} parent=35 // pred_region
        %p314 = scmp.lt.s32.totalorder %s16, 1
        %s315 = scalar_select %p314, %s16, 1
        %s316 = smul.addr %s315, 4
        %s317 = smul.addr %s316, 8
        %s318 = scalar_lea.vmem %s0, %s317
      $region40: #{pointnet2_seg_forward.14} parent=35 // pred_fallthru
        _
      // Predicated region
      $region41: #{pointnet2_seg_forward.14} parent=35 // pred_check
        %p319 = pneg %p62
      $region42: #{pointnet2_seg_forward.14} parent=35 // pred_check_branch
        %321 = sbr.rel (%p319) target = $region44
      $region43: #{pointnet2_seg_forward.14} parent=35 // pred_region
        %p322 = scmp.lt.s32.totalorder %s16, 1
        %s323 = scalar_select %p322, %s16, 1
        %s324 = smul.addr %s323, 4
        %s325 = smul.addr %s324, 8
        %s326 = scalar_lea.vmem %s1, %s325
      $region44: #{pointnet2_seg_forward.14} parent=35 // pred_fallthru
        _
      // Predicated region
      $region45: #{pointnet2_seg_forward.14} parent=35 // pred_check
        %p327 = pneg %p88
      $region46: #{pointnet2_seg_forward.14} parent=35 // pred_check_branch
        %329 = sbr.rel (%p327) target = $region48
      $region47: #{pointnet2_seg_forward.14} parent=35 // pred_region
        %p330 = scmp.lt.s32.totalorder %s16, 1
        %s331 = scalar_select %p330, %s16, 1
        %s332 = smul.addr %s331, 4
        %s333 = smul.addr %s332, 8
        %s334 = scalar_lea.vmem %s2, %s333
      $region48: #{pointnet2_seg_forward.14} parent=35 // pred_fallthru
        _
      // Predicated region
      $region49: #{pointnet2_seg_forward.14} parent=35 // pred_check
        %p335 = pneg %p114
      $region50: #{pointnet2_seg_forward.14} parent=35 // pred_check_branch
        %337 = sbr.rel (%p335) target = $region52
      $region51: #{pointnet2_seg_forward.14} parent=35 // pred_region
        %p338 = scmp.lt.s32.totalorder %s16, 1
        %s339 = scalar_select %p338, %s16, 1
        %s340 = smul.addr %s339, 4
        %s341 = smul.addr %s340, 8
        %s342 = scalar_lea.vmem %s3, %s341
      $region52: #{pointnet2_seg_forward.14} parent=35 // pred_fallthru
        _
      // Predicated region
      $region53: #{pointnet2_seg_forward.14} parent=35 // pred_check
        %p343 = pneg %p140
      $region54: #{pointnet2_seg_forward.14} parent=35 // pred_check_branch
        %345 = sbr.rel (%p343) target = $region56
      $region55: #{pointnet2_seg_forward.14} parent=35 // pred_region
        %p346 = scmp.lt.s32.totalorder %s16, 1
        %s347 = scalar_select %p346, %s16, 1
        %s348 = smul.addr %s347, 4
        %s349 = smul.addr %s348, 8
        %s350 = scalar_lea.vmem %s4, %s349
      $region56: #{pointnet2_seg_forward.14} parent=35 // pred_fallthru
        _
    $region36: #{pointnet2_seg_forward.14} parent=5 // pred_fallthru
      _
    %p351 = scmp.le.s32.totalorder 1, %s16
    %p352 = scmp.lt.s32.totalorder %s16, 3
    %p353 = pnand %p351, %p352
    %p354 = pneg %p353
    // Predicated region
    $region57: #{pointnet2_seg_forward.14} parent=5 // pred_check
      _
    $region58: #{pointnet2_seg_forward.14} parent=5 // pred_check_branch
      %356 = sbr.rel (%p353) target = $region60
    $region59: #{pointnet2_seg_forward.14} parent=5 // pred_region
      %s357 = ssub.s32 %s16, 1
      %p358 = scmp.lt.s32.totalorder %s21, 1
      %s359 = scalar_select %p358, %s21, 1
      %s360 = smul.addr %s359, 4
      %s361 = smul.addr %s360, 8
      %s362 = scalar_lea.vmem %s0, %s361
      %p363 = pneg %p42
      %p364 = pneg %p39
      %p365 = scmp.lt.s32.totalorder %s21, 1
      %s366 = scalar_select %p365, %s21, 1
      %s367 = smul.addr %s366, 4
      %s368 = smul.addr %s367, 8
      %s369 = scalar_lea.vmem %s1, %s368
      %p370 = pneg %p68
      %p371 = pneg %p65
      %p372 = scmp.lt.s32.totalorder %s21, 1
      %s373 = scalar_select %p372, %s21, 1
      %s374 = smul.addr %s373, 4
      %s375 = smul.addr %s374, 8
      %s376 = scalar_lea.vmem %s2, %s375
      %p377 = pneg %p94
      %p378 = pneg %p91
      %p379 = scmp.lt.s32.totalorder %s21, 1
      %s380 = scalar_select %p379, %s21, 1
      %s381 = smul.addr %s380, 4
      %s382 = smul.addr %s381, 8
      %s383 = scalar_lea.vmem %s3, %s382
      %p384 = pneg %p120
      %p385 = pneg %p117
      %p386 = scmp.lt.s32.totalorder %s21, 1
      %s387 = scalar_select %p386, %s21, 1
      %s388 = smul.addr %s387, 4
      %s389 = smul.addr %s388, 8
      %s390 = scalar_lea.vmem %s4, %s389
      %p391 = pneg %p146
      %p392 = pneg %p143
      %p393 = pneg %p167
      %p394 = pneg %p164
      %p395 = pneg %p188
      %p396 = pneg %p185
      %p397 = pneg %p209
      %p398 = pneg %p206
      %p399 = pneg %p230
      %p400 = pneg %p227
      %p401 = pneg %p251
      %p402 = pneg %p248
      %p403 = pneg %p277
      %p404 = pneg %p274
      %p405 = scmp.lt.s32.totalorder %s21, 1
      %s406 = scalar_select %p405, %s21, 1
      %s407 = smul.addr %s406, 4
      %s408 = smul.addr %s407, 8
      %s409 = scalar_lea.vmem %s10, %s408
      %p410 = scmp.lt.s32.totalorder %s21, 1
      %s411 = scalar_select %p410, %s21, 1
      %s412 = smul.addr %s411, 4
      %s413 = smul.addr %s412, 8
      %s414 = scalar_lea.vmem %s0, %s413
      %p415 = scmp.lt.s32.totalorder %s21, 1
      %s416 = scalar_select %p415, %s21, 1
      %s417 = smul.addr %s416, 4
      %s418 = smul.addr %s417, 8
      %s419 = scalar_lea.vmem %s1, %s418
      %p420 = scmp.lt.s32.totalorder %s21, 1
      %s421 = scalar_select %p420, %s21, 1
      %s422 = smul.addr %s421, 4
      %s423 = smul.addr %s422, 8
      %s424 = scalar_lea.vmem %s2, %s423
      %p425 = scmp.lt.s32.totalorder %s21, 1
      %s426 = scalar_select %p425, %s21, 1
      %s427 = smul.addr %s426, 4
      %s428 = smul.addr %s427, 8
      %s429 = scalar_lea.vmem %s3, %s428
      %p430 = scmp.lt.s32.totalorder %s21, 1
      %s431 = scalar_select %p430, %s21, 1
      %s432 = smul.addr %s431, 4
      %s433 = smul.addr %s432, 8
      %s434 = scalar_lea.vmem %s4, %s433
      %p435 = scmp.lt.s32.totalorder %s21, 1
      %s436 = scalar_select %p435, %s21, 1
      %s437 = smul.addr %s436, 4
      %s438 = smul.addr %s437, 8
      %s439 = scalar_lea.vmem %s10, %s438
      %v441 = vld [vmem:[%s5] sm:$0xf]
      %v442 = vld [vmem:[%s5 + $0x4] sm:$0xf]
      %v443 = vld [vmem:[%s5 + $0x8] sm:$0xf]
      %v444 = vld [vmem:[%s5 + $0xc] sm:$0xf]
      %v445 = vld [vmem:[%s5 + $0x10] sm:$0xf]
      %v446 = vld [vmem:[%s5 + $0x14] sm:$0xf]
      %v447 = vld [vmem:[%s5 + $0x18] sm:$0xf]
      %v448 = vld [vmem:[%s5 + $0x1c] sm:$0xf]
      %v449 = vld [vmem:[%s6] sm:$0xf]
      %v450 = vld [vmem:[%s6 + $0x4] sm:$0xf]
      %v451 = vld [vmem:[%s6 + $0x8] sm:$0xf]
      %v452 = vld [vmem:[%s6 + $0xc] sm:$0xf]
      %v453 = vld [vmem:[%s7] sm:$0x1]
      %v454 = vld [vmem:[%s429] sm:$0xff]
      %v455 = vld [vmem:[%s429 + $0x8] sm:$0xff]
      %v456 = vld [vmem:[%s429 + $0x10] sm:$0xff]
      %v457 = vld [vmem:[%s429 + $0x18] sm:$0xff]
      %v458 = vld [vmem:[%s414] sm:$0xff]
      %v459 = vld [vmem:[%s414 + $0x8] sm:$0xff]
      %v460 = vld [vmem:[%s414 + $0x10] sm:$0xff]
      %v461 = vld [vmem:[%s414 + $0x18] sm:$0xff]
      %463 = vset.pattern.permute.xlu0 0
      %464 = vperm.xlu0 %463, %v454
      %v465 = vpop.permute.xlu0 %464
      %468 = vset.pattern.permute.xlu0 0
      %469 = vperm.xlu0 %468, %v455
      %v470 = vpop.permute.xlu0 %469
      %473 = vset.pattern.permute.xlu0 0
      %474 = vperm.xlu0 %473, %v456
      %v475 = vpop.permute.xlu0 %474
      %478 = vset.pattern.permute.xlu0 0
      %479 = vperm.xlu0 %478, %v457
      %v480 = vpop.permute.xlu0 %479
      %v482 = vmul.f32 %v458, %v465
      %v483 = vmul.f32 %v459, %v470
      %v484 = vmul.f32 %v460, %v475
      %v485 = vmul.f32 %v461, %v480
      %v486 = vld [vmem:[%s419] sm:$0xff]
      %v487 = vld [vmem:[%s419 + $0x8] sm:$0xff]
      %v488 = vld [vmem:[%s419 + $0x10] sm:$0xff]
      %v489 = vld [vmem:[%s419 + $0x18] sm:$0xff]
      %490 = vset.pattern.permute.xlu0 1
      %491 = vperm.xlu0 %490, %v454
      %v492 = vpop.permute.xlu0 %491
      %494 = vset.pattern.permute.xlu0 1
      %495 = vperm.xlu0 %494, %v455
      %v496 = vpop.permute.xlu0 %495
      %498 = vset.pattern.permute.xlu0 1
      %499 = vperm.xlu0 %498, %v456
      %v500 = vpop.permute.xlu0 %499
      %502 = vset.pattern.permute.xlu0 1
      %503 = vperm.xlu0 %502, %v457
      %v504 = vpop.permute.xlu0 %503
      %v506 = vmul.f32 %v486, %v492
      %v507 = vmul.f32 %v487, %v496
      %v508 = vmul.f32 %v488, %v500
      %v509 = vmul.f32 %v489, %v504
      %v510 = vadd.f32 %v482, %v506
      %v511 = vadd.f32 %v483, %v507
      %v512 = vadd.f32 %v484, %v508
      %v513 = vadd.f32 %v485, %v509
      %v514 = vld [vmem:[%s424] sm:$0xff]
      %v515 = vld [vmem:[%s424 + $0x8] sm:$0xff]
      %v516 = vld [vmem:[%s424 + $0x10] sm:$0xff]
      %v517 = vld [vmem:[%s424 + $0x18] sm:$0xff]
      %518 = vset.pattern.permute.xlu0 2
      %519 = vperm.xlu0 %518, %v454
      %v520 = vpop.permute.xlu0 %519
      %522 = vset.pattern.permute.xlu0 2
      %523 = vperm.xlu0 %522, %v455
      %v524 = vpop.permute.xlu0 %523
      %526 = vset.pattern.permute.xlu0 2
      %527 = vperm.xlu0 %526, %v456
      %v528 = vpop.permute.xlu0 %527
      %530 = vset.pattern.permute.xlu0 2
      %531 = vperm.xlu0 %530, %v457
      %v532 = vpop.permute.xlu0 %531
      %v534 = vmul.f32 %v514, %v520
      %v535 = vmul.f32 %v515, %v524
      %v536 = vmul.f32 %v516, %v528
      %v537 = vmul.f32 %v517, %v532
      %v538 = vadd.f32 %v510, %v534
      %v539 = vadd.f32 %v511, %v535
      %v540 = vadd.f32 %v512, %v536
      %v541 = vadd.f32 %v513, %v537
      %v542 = vpack.c.bf16 %v539, %v538
      %v543 = vpack.c.bf16 %v541, %v540
      %v544 = vld [vmem:[%s434] sm:$0xff]
      %v545 = vld [vmem:[%s434 + $0x8] sm:$0xff]
      %v546 = vld [vmem:[%s434 + $0x10] sm:$0xff]
      %v547 = vld [vmem:[%s434 + $0x18] sm:$0xff]
      %v548 = vpack.c.bf16 %v545, %v544
      %v549 = vpack.c.bf16 %v547, %v546
      %v554 = vunpack.c.l.b16 %v449
      %v555 = vunpack.c.l.b16 %v450
      %v556 = vunpack.c.l.b16 %v451
      %v557 = vunpack.c.l.b16 %v452
      %v558 = vpack.c.b16 %v555, %v554
      %v559 = vpack.c.b16 %v557, %v556
      %vm562 = vcmask 261120
      %v564 = vsel %vm562, %v548, 0
      %v567 = vsel %vm562, %v549, 0
      %569 = vmatprep.subr.bf16.mxu0 0
      %570 = vmatpush1.bf16.msra.mxu0 %v558
      %571 = vmatprep.subr.bf16.mxu0 0
      %572 = vmatpush1.bf16.msra.mxu0 %v559
      %573 = vmatprep.subr.bf16.mxu0 0
      %574 = vmatpush1.bf16.msra.mxu0 0
      %575 = vmatprep.subr.bf16.mxu0 0
      %576 = vmatpush1.bf16.msra.mxu0 0
      %577 = vmatprep.subr.bf16.mxu0 0
      %578 = vmatpush1.bf16.msra.mxu0 0
      %579 = vmatprep.subr.bf16.mxu0 0
      %580 = vmatpush1.bf16.msra.mxu0 0
      %581 = vmatprep.subr.bf16.mxu0 0
      %582 = vmatpush1.bf16.msra.mxu0 0
      %583 = vmatprep.subr.bf16.mxu0 0
      %584 = vmatpush1.bf16.msra.mxu0 0
      %585 = vmatprep.subr.bf16.mxu0 0
      %586 = vmatpush1.bf16.msra.mxu0 0
      %587 = vmatprep.subr.bf16.mxu0 0
      %588 = vmatpush1.bf16.msra.mxu0 0
      %589 = vmatprep.subr.bf16.mxu0 0
      %590 = vmatpush1.bf16.msra.mxu0 0
      %591 = vmatprep.subr.bf16.mxu0 0
      %592 = vmatpush1.bf16.msra.mxu0 0
      %593 = vmatprep.subr.bf16.mxu0 0
      %594 = vmatpush1.bf16.msra.mxu0 0
      %595 = vmatprep.subr.bf16.mxu0 0
      %596 = vmatpush1.bf16.msra.mxu0 0
      %597 = vmatprep.subr.bf16.mxu0 0
      %598 = vmatpush1.bf16.msra.mxu0 0
      %599 = vmatprep.subr.bf16.mxu0 0
      %600 = vmatpush1.bf16.msra.mxu0 0
      %601 = vmatprep.mubr.bf16.mxu0 0
      %602 = vmatmul.mubr.bf16.gmra.mrb[0].mxu0 %v564
      %v603 = vpop.f32.mrb[0].mxu0
      %v604 = vadd.f32 0.0, %v603
      %v605 = vpop.f32.mrb[0].mxu0
      %v606 = vpop.f32.mrb[0].mxu0
      %v607 = vadd.f32 0.0, %v606
      %v608 = vpop.f32.mrb[0].mxu0
      %609 = vmatprep.mubr.bf16.mxu0 0
      %610 = vmatmul.mubr.bf16.gmra.mrb[0].mxu0 %v567
      %v611 = vpop.f32.mrb[0].mxu0
      %v612 = vadd.f32 0.0, %v611
      %v613 = vpop.f32.mrb[0].mxu0
      %v614 = vpop.f32.mrb[0].mxu0
      %v615 = vadd.f32 0.0, %v614
      %v616 = vpop.f32.mrb[0].mxu0
      %617 = vdwg.mxu0
      %v626 = vunpack.c.l.b16 %v441
      %v627 = vunpack.c.l.b16 %v442
      %v628 = vunpack.c.l.b16 %v443
      %v629 = vunpack.c.l.b16 %v444
      %v630 = vunpack.c.l.b16 %v445
      %v631 = vunpack.c.l.b16 %v446
      %v632 = vunpack.c.l.b16 %v447
      %v633 = vunpack.c.l.b16 %v448
      %v634 = vpack.c.b16 %v627, %v626
      %v635 = vpack.c.b16 %v629, %v628
      %v636 = vpack.c.b16 %v631, %v630
      %v637 = vpack.c.b16 %v633, %v632
      %vm642 = vcmask 523264
      %v644 = vsel %vm642, %v542, 0
      %v647 = vsel %vm642, %v543, 0
      %649 = vmatprep.subr.bf16.mxu0 0
      %650 = vmatpush1.bf16.msra.mxu0 %v634
      %651 = vmatprep.subr.bf16.mxu0 0
      %652 = vmatpush1.bf16.msra.mxu0 %v635
      %653 = vmatprep.subr.bf16.mxu0 0
      %654 = vmatpush1.bf16.msra.mxu0 %v636
      %655 = vmatprep.subr.bf16.mxu0 0
      %656 = vmatpush1.bf16.msra.mxu0 %v637
      %657 = vmatprep.subr.bf16.mxu0 0
      %658 = vmatpush1.bf16.msra.mxu0 0
      %659 = vmatprep.subr.bf16.mxu0 0
      %660 = vmatpush1.bf16.msra.mxu0 0
      %661 = vmatprep.subr.bf16.mxu0 0
      %662 = vmatpush1.bf16.msra.mxu0 0
      %663 = vmatprep.subr.bf16.mxu0 0
      %664 = vmatpush1.bf16.msra.mxu0 0
      %665 = vmatprep.subr.bf16.mxu0 0
      %666 = vmatpush1.bf16.msra.mxu0 0
      %667 = vmatprep.subr.bf16.mxu0 0
      %668 = vmatpush1.bf16.msra.mxu0 0
      %669 = vmatprep.subr.bf16.mxu0 0
      %670 = vmatpush1.bf16.msra.mxu0 0
      %671 = vmatprep.subr.bf16.mxu0 0
      %672 = vmatpush1.bf16.msra.mxu0 0
      %673 = vmatprep.subr.bf16.mxu0 0
      %674 = vmatpush1.bf16.msra.mxu0 0
      %675 = vmatprep.subr.bf16.mxu0 0
      %676 = vmatpush1.bf16.msra.mxu0 0
      %677 = vmatprep.subr.bf16.mxu0 0
      %678 = vmatpush1.bf16.msra.mxu0 0
      %679 = vmatprep.subr.bf16.mxu0 0
      %680 = vmatpush1.bf16.msra.mxu0 0
      %681 = vmatprep.mubr.bf16.mxu0 0
      %682 = vmatmul.mubr.bf16.gmra.mrb[0].mxu0 %v644
      %v683 = vpop.f32.mrb[0].mxu0
      %v684 = vadd.f32 %v604, %v683
      %v685 = vpop.f32.mrb[0].mxu0
      %v686 = vpop.f32.mrb[0].mxu0
      %v687 = vadd.f32 %v607, %v686
      %v688 = vpop.f32.mrb[0].mxu0
      %689 = vmatprep.mubr.bf16.mxu0 0
      %690 = vmatmul.mubr.bf16.gmra.mrb[0].mxu0 %v647
      %v691 = vpop.f32.mrb[0].mxu0
      %v692 = vadd.f32 %v612, %v691
      %v693 = vpop.f32.mrb[0].mxu0
      %v694 = vpop.f32.mrb[0].mxu0
      %v695 = vadd.f32 %v615, %v694
      %v696 = vpop.f32.mrb[0].mxu0
      %697 = vdwg.mxu0
      %v699 = vlaneseq
      %v700 = vshrl.u32 %v699, 7
      %v701 = vsub.s32 0, %v700
      %v702 = vrot.slane %v453, %v701
      %v704 = vadd.f32 %v684, %v702
      %v705 = vadd.f32 %v687, %v702
      %v706 = vadd.f32 %v692, %v702
      %v707 = vadd.f32 %v695, %v702
      %v708 = vmax.f32 %v704, 0.0
      %v709 = vmax.f32 %v705, 0.0
      %v710 = vmax.f32 %v706, 0.0
      %v711 = vmax.f32 %v707, 0.0
      %v712 = vld [vmem:[%s8] sm:$0xf]
      %v713 = vld [vmem:[%s8 + $0x4] sm:$0xf]
      %v714 = vld [vmem:[%s8 + $0x8] sm:$0xf]
      %v715 = vld [vmem:[%s8 + $0xc] sm:$0xf]
      %v716 = vld [vmem:[%s8 + $0x10] sm:$0xf]
      %v717 = vld [vmem:[%s8 + $0x14] sm:$0xf]
      %v718 = vld [vmem:[%s8 + $0x18] sm:$0xf]
      %v719 = vld [vmem:[%s8 + $0x1c] sm:$0xf]
      %v720 = vld [vmem:[%s8 + $0x20] sm:$0xf]
      %v721 = vld [vmem:[%s8 + $0x24] sm:$0xf]
      %v722 = vld [vmem:[%s8 + $0x28] sm:$0xf]
      %v723 = vld [vmem:[%s8 + $0x2c] sm:$0xf]
      %v724 = vld [vmem:[%s8 + $0x30] sm:$0xf]
      %v725 = vld [vmem:[%s8 + $0x34] sm:$0xf]
      %v726 = vld [vmem:[%s8 + $0x38] sm:$0xf]
      %v727 = vld [vmem:[%s8 + $0x3c] sm:$0xf]
      %v728 = vld [vmem:[%s9] sm:$0x1]
      %v729 = vpack.c.bf16 %v709, %v708
      %v730 = vpack.c.bf16 %v711, %v710
      %v732 = vlaneseq
      %v733 = vshrl.u32 %v732, 7
      %v734 = vsub.s32 0, %v733
      %v735 = vrot.slane %v728, %v734
      %v753 = vunpack.c.l.b16 %v712
      %v754 = vunpack.c.l.b16 %v713
      %v755 = vunpack.c.l.b16 %v714
      %v756 = vunpack.c.l.b16 %v715
      %v757 = vunpack.c.l.b16 %v716
      %v758 = vunpack.c.l.b16 %v717
      %v759 = vunpack.c.l.b16 %v718
      %v760 = vunpack.c.l.b16 %v719
      %v761 = vunpack.c.l.b16 %v720
      %v762 = vunpack.c.l.b16 %v721
      %v763 = vunpack.c.l.b16 %v722
      %v764 = vunpack.c.l.b16 %v723
      %v765 = vunpack.c.l.b16 %v724
      %v766 = vunpack.c.l.b16 %v725
      %v767 = vunpack.c.l.b16 %v726
      %v768 = vunpack.c.l.b16 %v727
      %v769 = vpack.c.b16 %v754, %v753
      %v770 = vpack.c.b16 %v756, %v755
      %v771 = vpack.c.b16 %v758, %v757
      %v772 = vpack.c.b16 %v760, %v759
      %v773 = vpack.c.b16 %v762, %v761
      %v774 = vpack.c.b16 %v764, %v763
      %v775 = vpack.c.b16 %v766, %v765
      %v776 = vpack.c.b16 %v768, %v767
      %785 = vmatprep.subr.bf16.mxu0 0
      %786 = vmatpush1.bf16.msra.mxu0 %v769
      %787 = vmatprep.subr.bf16.mxu0 0
      %788 = vmatpush1.bf16.msra.mxu0 %v770
      %789 = vmatprep.subr.bf16.mxu0 0
      %790 = vmatpush1.bf16.msra.mxu0 %v771
      %791 = vmatprep.subr.bf16.mxu0 0
      %792 = vmatpush1.bf16.msra.mxu0 %v772
      %793 = vmatprep.subr.bf16.mxu0 0
      %794 = vmatpush1.bf16.msra.mxu0 %v773
      %795 = vmatprep.subr.bf16.mxu0 0
      %796 = vmatpush1.bf16.msra.mxu0 %v774
      %797 = vmatprep.subr.bf16.mxu0 0
      %798 = vmatpush1.bf16.msra.mxu0 %v775
      %799 = vmatprep.subr.bf16.mxu0 0
      %800 = vmatpush1.bf16.msra.mxu0 %v776
      %801 = vmatprep.subr.bf16.mxu0 0
      %802 = vmatpush1.bf16.msra.mxu0 0
      %803 = vmatprep.subr.bf16.mxu0 0
      %804 = vmatpush1.bf16.msra.mxu0 0
      %805 = vmatprep.subr.bf16.mxu0 0
      %806 = vmatpush1.bf16.msra.mxu0 0
      %807 = vmatprep.subr.bf16.mxu0 0
      %808 = vmatpush1.bf16.msra.mxu0 0
      %809 = vmatprep.subr.bf16.mxu0 0
      %810 = vmatpush1.bf16.msra.mxu0 0
      %811 = vmatprep.subr.bf16.mxu0 0
      %812 = vmatpush1.bf16.msra.mxu0 0
      %813 = vmatprep.subr.bf16.mxu0 0
      %814 = vmatpush1.bf16.msra.mxu0 0
      %815 = vmatprep.subr.bf16.mxu0 0
      %816 = vmatpush1.bf16.msra.mxu0 0
      %817 = vmatprep.mubr.bf16.mxu0 0
      %818 = vmatmul.mubr.bf16.gmra.mrb[0].mxu0 %v729
      %v819 = vpop.f32.mrb[0].mxu0
      %v820 = vadd.f32 %v735, %v819
      %v821 = vpop.f32.mrb[0].mxu0
      %v822 = vpop.f32.mrb[0].mxu0
      %v823 = vadd.f32 %v735, %v822
      %v824 = vpop.f32.mrb[0].mxu0
      %825 = vmatprep.mubr.bf16.mxu0 0
      %826 = vmatmul.mubr.bf16.gmra.mrb[0].mxu0 %v730
      %v827 = vpop.f32.mrb[0].mxu0
      %v828 = vadd.f32 %v735, %v827
      %v829 = vpop.f32.mrb[0].mxu0
      %v830 = vpop.f32.mrb[0].mxu0
      %v831 = vadd.f32 %v735, %v830
      %v832 = vpop.f32.mrb[0].mxu0
      %833 = vdwg.mxu0
      %v834 = vmax.f32 %v820, 0.0
      %v835 = vmax.f32 %v823, 0.0
      %v836 = vmax.f32 %v828, 0.0
      %v837 = vmax.f32 %v831, 0.0
      %838 = vst [vmem:[%s439] sm:$0xff] %v834
      %839 = vst [vmem:[%s439 + $0x8] sm:$0xff] %v835
      %840 = vst [vmem:[%s439 + $0x10] sm:$0xff] %v836
      %841 = vst [vmem:[%s439 + $0x18] sm:$0xff] %v837
      %p842 = scmp.lt.s32.totalorder %s21, 1
      %s843 = scalar_select %p842, %s21, 1
      %s844 = smul.addr %s843, 4
      %s845 = smul.addr %s844, 8
      %s846 = scalar_lea.vmem %s10, %s845
      // Predicated region
      $region61: #{pointnet2_seg_forward.14} parent=59 // pred_check
        %p847 = pneg %p274
      $region62: #{pointnet2_seg_forward.14} parent=59 // pred_check_branch
        %849 = sbr.rel (%p847) target = $region64
      $region63: #{pointnet2_seg_forward.14} parent=59 // pred_region
        _
      $region64: #{pointnet2_seg_forward.14} parent=59 // pred_fallthru
        _
    $region60: #{pointnet2_seg_forward.14} parent=5 // pred_fallthru
      _
    %p850 = scmp.le.s32.totalorder 2, %s16
    // Predicated region
    $region65: #{pointnet2_seg_forward.14} parent=5 // pred_check
      %p851 = pneg %p850
    $region66: #{pointnet2_seg_forward.14} parent=5 // pred_check_branch
      %853 = sbr.rel (%p851) target = $region68
    $region67: #{pointnet2_seg_forward.14} parent=5 // pred_region
      %s854 = ssub.s32 %s16, 2
      // Predicated region
      $region69: #{pointnet2_seg_forward.14} parent=67 // pred_check
        %p855 = pneg %p280
      $region70: #{pointnet2_seg_forward.14} parent=67 // pred_check_branch
        %857 = sbr.rel (%p855) target = $region72
      $region71: #{pointnet2_seg_forward.14} parent=67 // pred_region
        %p858 = scmp.lt.s32.totalorder %s22, 1
        %s859 = scalar_select %p858, %s22, 1
        %s860 = smul.addr %s859, 4
        %s861 = smul.addr %s860, 8
        %s862 = scalar_lea.vmem %s10, %s861
      $region72: #{pointnet2_seg_forward.14} parent=67 // pred_fallthru
        _
    $region68: #{pointnet2_seg_forward.14} parent=5 // pred_fallthru
      _
  $region6: #{pointnet2_seg_forward.14} parent=0 // loop_footer
    %s20 = sadd.s32 1, %s16
  $region7: #{pointnet2_seg_forward.14} parent=0 // loop_footer_branch
    %15 = sbr.rel target = $region3
  $region8: #{pointnet2_seg_forward.14} parent=0 // loop_exit
    _

// kernel: pointnet2_seg_forward.15
$region0: #{pointnet2_seg_forward.15}
  #allocation0 [shape = 'u32[]', space=smem, size = 0x4, offset = 0x4, fixed_abs, tag = 'smem constant byte address 0x4 - core index']
  #allocation1 [shape = 'u32[144,128]{1,0:T(1,128)}', space=vmem, size = 0x12000, scoped, tag = 'internal scratch']
  %s0 = inlined_call_operand.vmem [shape: f32[2,64,32], index: 0, kind: input, shape index: {}]
  %s1 = inlined_call_operand.vmem [shape: f32[2,64,32], index: 1, kind: input, shape index: {}]
  %s2 = inlined_call_operand.vmem [shape: f32[2,64,32], index: 2, kind: input, shape index: {}]
  %s3 = inlined_call_operand.vmem [shape: f32[2,64,3], index: 3, kind: input, shape index: {}]
  %s4 = inlined_call_operand.vmem [shape: f32[2,64,8], index: 4, kind: input, shape index: {}]
  %s5 = inlined_call_operand.vmem [shape: bf16[32,128], index: 5, kind: input, shape index: {}]
  %s6 = inlined_call_operand.vmem [shape: bf16[8,128], index: 6, kind: input, shape index: {}]
  %s7 = inlined_call_operand.vmem [shape: f32[1,128], index: 7, kind: input, shape index: {}]
  %s8 = inlined_call_operand.vmem [shape: bf16[128,128], index: 8, kind: input, shape index: {}]
  %s9 = inlined_call_operand.vmem [shape: f32[1,128], index: 9, kind: input, shape index: {}]
  %s10 = inlined_call_operand.vmem [shape: bf16[128,128], index: 10, kind: input, shape index: {}]
  %s11 = inlined_call_operand.vmem [shape: f32[1,128], index: 11, kind: input, shape index: {}]
  %s12 = inlined_call_operand.vmem [shape: f32[2,64,128], index: 12, kind: output, shape index: {}]
  %s13 = sld [smem:[#allocation0]]
  $region81: #{pointnet2_seg_forward.15} parent=0
    _
  %s15 = ssub.s32 1, %s13
  %s16 = scalar_select 0, %s15, %s13
  loop: start=0, step=1, limit=4
  $region2: #{pointnet2_seg_forward.15} parent=0 // loop_pre_header
    _
  $region3: #{pointnet2_seg_forward.15} parent=0 // loop_header
    %s18 = sphi 0, %s22
    %p19 = scmp.ge.s32.totalorder %s18, 4
    %s28 = sphi 0, %s30
    %s31 = sphi 0, %s28
    %s32 = sphi 0, %s31
    %s48 = sphi 0, %s32
    %s54 = sphi 0, %s56
    %s57 = sphi 0, %s54
    %s58 = sphi 0, %s57
    %s74 = sphi 0, %s58
    %s80 = sphi 0, %s82
    %s83 = sphi 0, %s80
    %s84 = sphi 0, %s83
    %s100 = sphi 0, %s84
    %s106 = sphi 0, %s108
    %s109 = sphi 0, %s106
    %s110 = sphi 0, %s109
    %s126 = sphi 0, %s110
    %s132 = sphi 0, %s134
    %s135 = sphi 0, %s132
    %s136 = sphi 0, %s135
    %s152 = sphi 0, %s136
    %s156 = sphi 0, %s156
    %s158 = sphi 0, %s156
    %s159 = sphi 0, %s158
    %s173 = sphi 0, %s159
    %s177 = sphi 0, %s177
    %s179 = sphi 0, %s177
    %s180 = sphi 0, %s179
    %s194 = sphi 0, %s180
    %s198 = sphi 0, %s198
    %s200 = sphi 0, %s198
    %s201 = sphi 0, %s200
    %s215 = sphi 0, %s201
    %s219 = sphi 0, %s219
    %s221 = sphi 0, %s219
    %s222 = sphi 0, %s221
    %s236 = sphi 0, %s222
    %s240 = sphi 0, %s240
    %s242 = sphi 0, %s240
    %s243 = sphi 0, %s242
    %s257 = sphi 0, %s243
    %s261 = sphi 0, %s261
    %s263 = sphi 0, %s261
    %s264 = sphi 0, %s263
    %s278 = sphi 0, %s264
    %s282 = sphi 0, %s282
    %s284 = sphi 0, %s282
    %s285 = sphi 0, %s284
    %s299 = sphi 0, %s285
    %s305 = sphi 0, %s307
    %s308 = sphi 0, %s305
    %s309 = sphi 0, %s308
    %s325 = sphi 0, %s309
  $region4: #{pointnet2_seg_forward.15} parent=0 // loop_header_branch
    %21 = sbr.rel (%p19) target = $region8
  $region5: #{pointnet2_seg_forward.15} parent=0 // loop_body
    %s23 = ssub.s32 %s18, 1
    %s24 = ssub.s32 %s18, 2
    %s25 = sadd.s32 %s18, 1
    %s26 = ssub.s32 %s18, %s25
    %p27 = scmp.eq.s32.totalorder %s26, 0
    %s29 = sadd.s32 %s28, 1
    %s30 = scalar_select %p27, %s28, %s29
    %p33 = pneg %p27
    %p34 = scmp.eq.s32.totalorder %s18, 1
    %p35 = por %p33, %p34
    %p36 = scmp.ne.s32.totalorder %s28, %s31
    %p37 = scmp.eq.s32.totalorder %s18, 0
    %p38 = por %p36, %p37
    %p39 = scmp.ne.s32.totalorder %s28, %s31
    %p40 = scmp.eq.s32.totalorder %s23, 1
    %p41 = por %p39, %p40
    %p42 = scmp.ne.s32.totalorder %s31, %s32
    %p43 = scmp.eq.s32.totalorder %s23, 0
    %p44 = por %p42, %p43
    %p45 = scmp.ne.s32.totalorder %s31, %s32
    %p46 = scmp.eq.s32.totalorder %s24, 1
    %p47 = por %p45, %p46
    %p49 = scmp.ne.s32.totalorder %s32, %s48
    %p50 = scmp.eq.s32.totalorder %s24, 0
    %p51 = por %p49, %p50
    %s52 = ssub.s32 %s18, %s25
    %p53 = scmp.eq.s32.totalorder %s52, 0
    %s55 = sadd.s32 %s54, 1
    %s56 = scalar_select %p53, %s54, %s55
    %p59 = pneg %p53
    %p60 = scmp.eq.s32.totalorder %s18, 1
    %p61 = por %p59, %p60
    %p62 = scmp.ne.s32.totalorder %s54, %s57
    %p63 = scmp.eq.s32.totalorder %s18, 0
    %p64 = por %p62, %p63
    %p65 = scmp.ne.s32.totalorder %s54, %s57
    %p66 = scmp.eq.s32.totalorder %s23, 1
    %p67 = por %p65, %p66
    %p68 = scmp.ne.s32.totalorder %s57, %s58
    %p69 = scmp.eq.s32.totalorder %s23, 0
    %p70 = por %p68, %p69
    %p71 = scmp.ne.s32.totalorder %s57, %s58
    %p72 = scmp.eq.s32.totalorder %s24, 1
    %p73 = por %p71, %p72
    %p75 = scmp.ne.s32.totalorder %s58, %s74
    %p76 = scmp.eq.s32.totalorder %s24, 0
    %p77 = por %p75, %p76
    %s78 = ssub.s32 %s18, %s25
    %p79 = scmp.eq.s32.totalorder %s78, 0
    %s81 = sadd.s32 %s80, 1
    %s82 = scalar_select %p79, %s80, %s81
    %p85 = pneg %p79
    %p86 = scmp.eq.s32.totalorder %s18, 1
    %p87 = por %p85, %p86
    %p88 = scmp.ne.s32.totalorder %s80, %s83
    %p89 = scmp.eq.s32.totalorder %s18, 0
    %p90 = por %p88, %p89
    %p91 = scmp.ne.s32.totalorder %s80, %s83
    %p92 = scmp.eq.s32.totalorder %s23, 1
    %p93 = por %p91, %p92
    %p94 = scmp.ne.s32.totalorder %s83, %s84
    %p95 = scmp.eq.s32.totalorder %s23, 0
    %p96 = por %p94, %p95
    %p97 = scmp.ne.s32.totalorder %s83, %s84
    %p98 = scmp.eq.s32.totalorder %s24, 1
    %p99 = por %p97, %p98
    %p101 = scmp.ne.s32.totalorder %s84, %s100
    %p102 = scmp.eq.s32.totalorder %s24, 0
    %p103 = por %p101, %p102
    %s104 = ssub.s32 %s18, %s25
    %p105 = scmp.eq.s32.totalorder %s104, 0
    %s107 = sadd.s32 %s106, 1
    %s108 = scalar_select %p105, %s106, %s107
    %p111 = pneg %p105
    %p112 = scmp.eq.s32.totalorder %s18, 1
    %p113 = por %p111, %p112
    %p114 = scmp.ne.s32.totalorder %s106, %s109
    %p115 = scmp.eq.s32.totalorder %s18, 0
    %p116 = por %p114, %p115
    %p117 = scmp.ne.s32.totalorder %s106, %s109
    %p118 = scmp.eq.s32.totalorder %s23, 1
    %p119 = por %p117, %p118
    %p120 = scmp.ne.s32.totalorder %s109, %s110
    %p121 = scmp.eq.s32.totalorder %s23, 0
    %p122 = por %p120, %p121
    %p123 = scmp.ne.s32.totalorder %s109, %s110
    %p124 = scmp.eq.s32.totalorder %s24, 1
    %p125 = por %p123, %p124
    %p127 = scmp.ne.s32.totalorder %s110, %s126
    %p128 = scmp.eq.s32.totalorder %s24, 0
    %p129 = por %p127, %p128
    %s130 = ssub.s32 %s18, %s25
    %p131 = scmp.eq.s32.totalorder %s130, 0
    %s133 = sadd.s32 %s132, 1
    %s134 = scalar_select %p131, %s132, %s133
    %p137 = pneg %p131
    %p138 = scmp.eq.s32.totalorder %s18, 1
    %p139 = por %p137, %p138
    %p140 = scmp.ne.s32.totalorder %s132, %s135
    %p141 = scmp.eq.s32.totalorder %s18, 0
    %p142 = por %p140, %p141
    %p143 = scmp.ne.s32.totalorder %s132, %s135
    %p144 = scmp.eq.s32.totalorder %s23, 1
    %p145 = por %p143, %p144
    %p146 = scmp.ne.s32.totalorder %s135, %s136
    %p147 = scmp.eq.s32.totalorder %s23, 0
    %p148 = por %p146, %p147
    %p149 = scmp.ne.s32.totalorder %s135, %s136
    %p150 = scmp.eq.s32.totalorder %s24, 1
    %p151 = por %p149, %p150
    %p153 = scmp.ne.s32.totalorder %s136, %s152
    %p154 = scmp.eq.s32.totalorder %s24, 0
    %p155 = por %p153, %p154
    %s157 = sadd.s32 %s156, 1
    %p160 = scmp.eq.s32.totalorder %s18, 1
    %p161 = scmp.ne.s32.totalorder %s156, %s158
    %p162 = scmp.eq.s32.totalorder %s18, 0
    %p163 = por %p161, %p162
    %p164 = scmp.ne.s32.totalorder %s156, %s158
    %p165 = scmp.eq.s32.totalorder %s23, 1
    %p166 = por %p164, %p165
    %p167 = scmp.ne.s32.totalorder %s158, %s159
    %p168 = scmp.eq.s32.totalorder %s23, 0
    %p169 = por %p167, %p168
    %p170 = scmp.ne.s32.totalorder %s158, %s159
    %p171 = scmp.eq.s32.totalorder %s24, 1
    %p172 = por %p170, %p171
    %p174 = scmp.ne.s32.totalorder %s159, %s173
    %p175 = scmp.eq.s32.totalorder %s24, 0
    %p176 = por %p174, %p175
    %s178 = sadd.s32 %s177, 1
    %p181 = scmp.eq.s32.totalorder %s18, 1
    %p182 = scmp.ne.s32.totalorder %s177, %s179
    %p183 = scmp.eq.s32.totalorder %s18, 0
    %p184 = por %p182, %p183
    %p185 = scmp.ne.s32.totalorder %s177, %s179
    %p186 = scmp.eq.s32.totalorder %s23, 1
    %p187 = por %p185, %p186
    %p188 = scmp.ne.s32.totalorder %s179, %s180
    %p189 = scmp.eq.s32.totalorder %s23, 0
    %p190 = por %p188, %p189
    %p191 = scmp.ne.s32.totalorder %s179, %s180
    %p192 = scmp.eq.s32.totalorder %s24, 1
    %p193 = por %p191, %p192
    %p195 = scmp.ne.s32.totalorder %s180, %s194
    %p196 = scmp.eq.s32.totalorder %s24, 0
    %p197 = por %p195, %p196
    %s199 = sadd.s32 %s198, 1
    %p202 = scmp.eq.s32.totalorder %s18, 1
    %p203 = scmp.ne.s32.totalorder %s198, %s200
    %p204 = scmp.eq.s32.totalorder %s18, 0
    %p205 = por %p203, %p204
    %p206 = scmp.ne.s32.totalorder %s198, %s200
    %p207 = scmp.eq.s32.totalorder %s23, 1
    %p208 = por %p206, %p207
    %p209 = scmp.ne.s32.totalorder %s200, %s201
    %p210 = scmp.eq.s32.totalorder %s23, 0
    %p211 = por %p209, %p210
    %p212 = scmp.ne.s32.totalorder %s200, %s201
    %p213 = scmp.eq.s32.totalorder %s24, 1
    %p214 = por %p212, %p213
    %p216 = scmp.ne.s32.totalorder %s201, %s215
    %p217 = scmp.eq.s32.totalorder %s24, 0
    %p218 = por %p216, %p217
    %s220 = sadd.s32 %s219, 1
    %p223 = scmp.eq.s32.totalorder %s18, 1
    %p224 = scmp.ne.s32.totalorder %s219, %s221
    %p225 = scmp.eq.s32.totalorder %s18, 0
    %p226 = por %p224, %p225
    %p227 = scmp.ne.s32.totalorder %s219, %s221
    %p228 = scmp.eq.s32.totalorder %s23, 1
    %p229 = por %p227, %p228
    %p230 = scmp.ne.s32.totalorder %s221, %s222
    %p231 = scmp.eq.s32.totalorder %s23, 0
    %p232 = por %p230, %p231
    %p233 = scmp.ne.s32.totalorder %s221, %s222
    %p234 = scmp.eq.s32.totalorder %s24, 1
    %p235 = por %p233, %p234
    %p237 = scmp.ne.s32.totalorder %s222, %s236
    %p238 = scmp.eq.s32.totalorder %s24, 0
    %p239 = por %p237, %p238
    %s241 = sadd.s32 %s240, 1
    %p244 = scmp.eq.s32.totalorder %s18, 1
    %p245 = scmp.ne.s32.totalorder %s240, %s242
    %p246 = scmp.eq.s32.totalorder %s18, 0
    %p247 = por %p245, %p246
    %p248 = scmp.ne.s32.totalorder %s240, %s242
    %p249 = scmp.eq.s32.totalorder %s23, 1
    %p250 = por %p248, %p249
    %p251 = scmp.ne.s32.totalorder %s242, %s243
    %p252 = scmp.eq.s32.totalorder %s23, 0
    %p253 = por %p251, %p252
    %p254 = scmp.ne.s32.totalorder %s242, %s243
    %p255 = scmp.eq.s32.totalorder %s24, 1
    %p256 = por %p254, %p255
    %p258 = scmp.ne.s32.totalorder %s243, %s257
    %p259 = scmp.eq.s32.totalorder %s24, 0
    %p260 = por %p258, %p259
    %s262 = sadd.s32 %s261, 1
    %p265 = scmp.eq.s32.totalorder %s18, 1
    %p266 = scmp.ne.s32.totalorder %s261, %s263
    %p267 = scmp.eq.s32.totalorder %s18, 0
    %p268 = por %p266, %p267
    %p269 = scmp.ne.s32.totalorder %s261, %s263
    %p270 = scmp.eq.s32.totalorder %s23, 1
    %p271 = por %p269, %p270
    %p272 = scmp.ne.s32.totalorder %s263, %s264
    %p273 = scmp.eq.s32.totalorder %s23, 0
    %p274 = por %p272, %p273
    %p275 = scmp.ne.s32.totalorder %s263, %s264
    %p276 = scmp.eq.s32.totalorder %s24, 1
    %p277 = por %p275, %p276
    %p279 = scmp.ne.s32.totalorder %s264, %s278
    %p280 = scmp.eq.s32.totalorder %s24, 0
    %p281 = por %p279, %p280
    %s283 = sadd.s32 %s282, 1
    %p286 = scmp.eq.s32.totalorder %s18, 1
    %p287 = scmp.ne.s32.totalorder %s282, %s284
    %p288 = scmp.eq.s32.totalorder %s18, 0
    %p289 = por %p287, %p288
    %p290 = scmp.ne.s32.totalorder %s282, %s284
    %p291 = scmp.eq.s32.totalorder %s23, 1
    %p292 = por %p290, %p291
    %p293 = scmp.ne.s32.totalorder %s284, %s285
    %p294 = scmp.eq.s32.totalorder %s23, 0
    %p295 = por %p293, %p294
    %p296 = scmp.ne.s32.totalorder %s284, %s285
    %p297 = scmp.eq.s32.totalorder %s24, 1
    %p298 = por %p296, %p297
    %p300 = scmp.ne.s32.totalorder %s285, %s299
    %p301 = scmp.eq.s32.totalorder %s24, 0
    %p302 = por %p300, %p301
    %s303 = ssub.s32 %s18, %s25
    %p304 = scmp.eq.s32.totalorder %s303, 0
    %s306 = sadd.s32 %s305, 1
    %s307 = scalar_select %p304, %s305, %s306
    %p310 = pneg %p304
    %p311 = scmp.eq.s32.totalorder %s18, 1
    %p312 = por %p310, %p311
    %p313 = scmp.ne.s32.totalorder %s305, %s308
    %p314 = scmp.eq.s32.totalorder %s18, 0
    %p315 = por %p313, %p314
    %p316 = scmp.ne.s32.totalorder %s305, %s308
    %p317 = scmp.eq.s32.totalorder %s23, 1
    %p318 = por %p316, %p317
    %p319 = scmp.ne.s32.totalorder %s308, %s309
    %p320 = scmp.eq.s32.totalorder %s23, 0
    %p321 = por %p319, %p320
    %p322 = scmp.ne.s32.totalorder %s308, %s309
    %p323 = scmp.eq.s32.totalorder %s24, 1
    %p324 = por %p322, %p323
    %p326 = scmp.ne.s32.totalorder %s309, %s325
    %p327 = scmp.eq.s32.totalorder %s24, 0
    %p328 = por %p326, %p327
    %p329 = scmp.le.s32.totalorder 1, %s18
    %p330 = scmp.lt.s32.totalorder %s18, 3
    %p331 = pnand %p329, %p330
    %p332 = pneg %p331
    // Predicated region
    $region9: #{pointnet2_seg_forward.15} parent=5 // pred_check
      _
    $region10: #{pointnet2_seg_forward.15} parent=5 // pred_check_branch
      %334 = sbr.rel (%p331) target = $region12
    $region11: #{pointnet2_seg_forward.15} parent=5 // pred_region
      %s335 = ssub.s32 %s18, 1
      // Predicated region
      $region13: #{pointnet2_seg_forward.15} parent=11 // pred_check
        %p336 = pneg %p169
      $region14: #{pointnet2_seg_forward.15} parent=11 // pred_check_branch
        %338 = sbr.rel (%p336) target = $region16
      $region15: #{pointnet2_seg_forward.15} parent=11 // pred_region
        _
      $region16: #{pointnet2_seg_forward.15} parent=11 // pred_fallthru
        _
      // Predicated region
      $region17: #{pointnet2_seg_forward.15} parent=11 // pred_check
        %p339 = pneg %p190
      $region18: #{pointnet2_seg_forward.15} parent=11 // pred_check_branch
        %341 = sbr.rel (%p339) target = $region20
      $region19: #{pointnet2_seg_forward.15} parent=11 // pred_region
        _
      $region20: #{pointnet2_seg_forward.15} parent=11 // pred_fallthru
        _
      // Predicated region
      $region21: #{pointnet2_seg_forward.15} parent=11 // pred_check
        %p342 = pneg %p211
      $region22: #{pointnet2_seg_forward.15} parent=11 // pred_check_branch
        %344 = sbr.rel (%p342) target = $region24
      $region23: #{pointnet2_seg_forward.15} parent=11 // pred_region
        _
      $region24: #{pointnet2_seg_forward.15} parent=11 // pred_fallthru
        _
      // Predicated region
      $region25: #{pointnet2_seg_forward.15} parent=11 // pred_check
        %p345 = pneg %p232
      $region26: #{pointnet2_seg_forward.15} parent=11 // pred_check_branch
        %347 = sbr.rel (%p345) target = $region28
      $region27: #{pointnet2_seg_forward.15} parent=11 // pred_region
        _
      $region28: #{pointnet2_seg_forward.15} parent=11 // pred_fallthru
        _
      // Predicated region
      $region29: #{pointnet2_seg_forward.15} parent=11 // pred_check
        %p348 = pneg %p253
      $region30: #{pointnet2_seg_forward.15} parent=11 // pred_check_branch
        %350 = sbr.rel (%p348) target = $region32
      $region31: #{pointnet2_seg_forward.15} parent=11 // pred_region
        _
      $region32: #{pointnet2_seg_forward.15} parent=11 // pred_fallthru
        _
      // Predicated region
      $region33: #{pointnet2_seg_forward.15} parent=11 // pred_check
        %p351 = pneg %p274
      $region34: #{pointnet2_seg_forward.15} parent=11 // pred_check_branch
        %353 = sbr.rel (%p351) target = $region36
      $region35: #{pointnet2_seg_forward.15} parent=11 // pred_region
        _
      $region36: #{pointnet2_seg_forward.15} parent=11 // pred_fallthru
        _
      // Predicated region
      $region37: #{pointnet2_seg_forward.15} parent=11 // pred_check
        %p354 = pneg %p295
      $region38: #{pointnet2_seg_forward.15} parent=11 // pred_check_branch
        %356 = sbr.rel (%p354) target = $region40
      $region39: #{pointnet2_seg_forward.15} parent=11 // pred_region
        _
      $region40: #{pointnet2_seg_forward.15} parent=11 // pred_fallthru
        _
    $region12: #{pointnet2_seg_forward.15} parent=5 // pred_fallthru
      _
    %p357 = scmp.lt.s32.totalorder %s18, 2
    // Predicated region
    $region41: #{pointnet2_seg_forward.15} parent=5 // pred_check
      %p358 = pneg %p357
    $region42: #{pointnet2_seg_forward.15} parent=5 // pred_check_branch
      %360 = sbr.rel (%p358) target = $region44
    $region43: #{pointnet2_seg_forward.15} parent=5 // pred_region
      // Predicated region
      $region45: #{pointnet2_seg_forward.15} parent=43 // pred_check
        %p361 = pneg %p38
      $region46: #{pointnet2_seg_forward.15} parent=43 // pred_check_branch
        %363 = sbr.rel (%p361) target = $region48
      $region47: #{pointnet2_seg_forward.15} parent=43 // pred_region
        %p364 = scmp.lt.s32.totalorder %s18, 1
        %s365 = scalar_select %p364, %s18, 1
        %s366 = smul.addr %s365, 8
        %s367 = smul.addr %s366, 8
        %s368 = scalar_lea.vmem %s0, %s367
      $region48: #{pointnet2_seg_forward.15} parent=43 // pred_fallthru
        _
      // Predicated region
      $region49: #{pointnet2_seg_forward.15} parent=43 // pred_check
        %p369 = pneg %p64
      $region50: #{pointnet2_seg_forward.15} parent=43 // pred_check_branch
        %371 = sbr.rel (%p369) target = $region52
      $region51: #{pointnet2_seg_forward.15} parent=43 // pred_region
        %p372 = scmp.lt.s32.totalorder %s18, 1
        %s373 = scalar_select %p372, %s18, 1
        %s374 = smul.addr %s373, 8
        %s375 = smul.addr %s374, 8
        %s376 = scalar_lea.vmem %s1, %s375
      $region52: #{pointnet2_seg_forward.15} parent=43 // pred_fallthru
        _
      // Predicated region
      $region53: #{pointnet2_seg_forward.15} parent=43 // pred_check
        %p377 = pneg %p90
      $region54: #{pointnet2_seg_forward.15} parent=43 // pred_check_branch
        %379 = sbr.rel (%p377) target = $region56
      $region55: #{pointnet2_seg_forward.15} parent=43 // pred_region
        %p380 = scmp.lt.s32.totalorder %s18, 1
        %s381 = scalar_select %p380, %s18, 1
        %s382 = smul.addr %s381, 8
        %s383 = smul.addr %s382, 8
        %s384 = scalar_lea.vmem %s2, %s383
      $region56: #{pointnet2_seg_forward.15} parent=43 // pred_fallthru
        _
      // Predicated region
      $region57: #{pointnet2_seg_forward.15} parent=43 // pred_check
        %p385 = pneg %p116
      $region58: #{pointnet2_seg_forward.15} parent=43 // pred_check_branch
        %387 = sbr.rel (%p385) target = $region60
      $region59: #{pointnet2_seg_forward.15} parent=43 // pred_region
        %p388 = scmp.lt.s32.totalorder %s18, 1
        %s389 = scalar_select %p388, %s18, 1
        %s390 = smul.addr %s389, 8
        %s391 = smul.addr %s390, 8
        %s392 = scalar_lea.vmem %s3, %s391
      $region60: #{pointnet2_seg_forward.15} parent=43 // pred_fallthru
        _
      // Predicated region
      $region61: #{pointnet2_seg_forward.15} parent=43 // pred_check
        %p393 = pneg %p142
      $region62: #{pointnet2_seg_forward.15} parent=43 // pred_check_branch
        %395 = sbr.rel (%p393) target = $region64
      $region63: #{pointnet2_seg_forward.15} parent=43 // pred_region
        %p396 = scmp.lt.s32.totalorder %s18, 1
        %s397 = scalar_select %p396, %s18, 1
        %s398 = smul.addr %s397, 8
        %s399 = smul.addr %s398, 8
        %s400 = scalar_lea.vmem %s4, %s399
      $region64: #{pointnet2_seg_forward.15} parent=43 // pred_fallthru
        _
    $region44: #{pointnet2_seg_forward.15} parent=5 // pred_fallthru
      _
    %p401 = scmp.le.s32.totalorder 1, %s18
    %p402 = scmp.lt.s32.totalorder %s18, 3
    %p403 = pnand %p401, %p402
    %p404 = pneg %p403
    // Predicated region
    $region65: #{pointnet2_seg_forward.15} parent=5 // pred_check
      _
    $region66: #{pointnet2_seg_forward.15} parent=5 // pred_check_branch
      %406 = sbr.rel (%p403) target = $region68
    $region67: #{pointnet2_seg_forward.15} parent=5 // pred_region
      %s407 = ssub.s32 %s18, 1
      %p408 = scmp.lt.s32.totalorder %s23, 1
      %s409 = scalar_select %p408, %s23, 1
      %s410 = smul.addr %s409, 8
      %s411 = smul.addr %s410, 8
      %s412 = scalar_lea.vmem %s0, %s411
      %p413 = pneg %p44
      %p414 = pneg %p41
      %p415 = scmp.lt.s32.totalorder %s23, 1
      %s416 = scalar_select %p415, %s23, 1
      %s417 = smul.addr %s416, 8
      %s418 = smul.addr %s417, 8
      %s419 = scalar_lea.vmem %s1, %s418
      %p420 = pneg %p70
      %p421 = pneg %p67
      %p422 = scmp.lt.s32.totalorder %s23, 1
      %s423 = scalar_select %p422, %s23, 1
      %s424 = smul.addr %s423, 8
      %s425 = smul.addr %s424, 8
      %s426 = scalar_lea.vmem %s2, %s425
      %p427 = pneg %p96
      %p428 = pneg %p93
      %p429 = scmp.lt.s32.totalorder %s23, 1
      %s430 = scalar_select %p429, %s23, 1
      %s431 = smul.addr %s430, 8
      %s432 = smul.addr %s431, 8
      %s433 = scalar_lea.vmem %s3, %s432
      %p434 = pneg %p122
      %p435 = pneg %p119
      %p436 = scmp.lt.s32.totalorder %s23, 1
      %s437 = scalar_select %p436, %s23, 1
      %s438 = smul.addr %s437, 8
      %s439 = smul.addr %s438, 8
      %s440 = scalar_lea.vmem %s4, %s439
      %p441 = pneg %p148
      %p442 = pneg %p145
      %p443 = pneg %p169
      %p444 = pneg %p166
      %p445 = pneg %p190
      %p446 = pneg %p187
      %p447 = pneg %p211
      %p448 = pneg %p208
      %p449 = pneg %p232
      %p450 = pneg %p229
      %p451 = pneg %p253
      %p452 = pneg %p250
      %p453 = pneg %p274
      %p454 = pneg %p271
      %p455 = pneg %p295
      %p456 = pneg %p292
      %p457 = pneg %p321
      %p458 = pneg %p318
      %p459 = scmp.lt.s32.totalorder %s23, 1
      %s460 = scalar_select %p459, %s23, 1
      %s461 = smul.addr %s460, 8
      %s462 = smul.addr %s461, 8
      %s463 = scalar_lea.vmem %s12, %s462
      %p464 = scmp.lt.s32.totalorder %s23, 1
      %s465 = scalar_select %p464, %s23, 1
      %s466 = smul.addr %s465, 8
      %s467 = smul.addr %s466, 8
      %s468 = scalar_lea.vmem %s0, %s467
      %p469 = scmp.lt.s32.totalorder %s23, 1
      %s470 = scalar_select %p469, %s23, 1
      %s471 = smul.addr %s470, 8
      %s472 = smul.addr %s471, 8
      %s473 = scalar_lea.vmem %s1, %s472
      %p474 = scmp.lt.s32.totalorder %s23, 1
      %s475 = scalar_select %p474, %s23, 1
      %s476 = smul.addr %s475, 8
      %s477 = smul.addr %s476, 8
      %s478 = scalar_lea.vmem %s2, %s477
      %p479 = scmp.lt.s32.totalorder %s23, 1
      %s480 = scalar_select %p479, %s23, 1
      %s481 = smul.addr %s480, 8
      %s482 = smul.addr %s481, 8
      %s483 = scalar_lea.vmem %s3, %s482
      %p484 = scmp.lt.s32.totalorder %s23, 1
      %s485 = scalar_select %p484, %s23, 1
      %s486 = smul.addr %s485, 8
      %s487 = smul.addr %s486, 8
      %s488 = scalar_lea.vmem %s4, %s487
      %p489 = scmp.lt.s32.totalorder %s23, 1
      %s490 = scalar_select %p489, %s23, 1
      %s491 = smul.addr %s490, 8
      %s492 = smul.addr %s491, 8
      %s493 = scalar_lea.vmem %s12, %s492
      %v495 = vld [vmem:[%s5] sm:$0xf]
      %v496 = vld [vmem:[%s5 + $0x4] sm:$0xf]
      %v497 = vld [vmem:[%s5 + $0x8] sm:$0xf]
      %v498 = vld [vmem:[%s5 + $0xc] sm:$0xf]
      %v499 = vld [vmem:[%s6] sm:$0xf]
      %v500 = vld [vmem:[%s7] sm:$0x1]
      %v501 = vld [vmem:[%s483] sm:$0xff]
      %v502 = vld [vmem:[%s483 + $0x8] sm:$0xff]
      %v503 = vld [vmem:[%s483 + $0x10] sm:$0xff]
      %v504 = vld [vmem:[%s483 + $0x18] sm:$0xff]
      %v505 = vld [vmem:[%s483 + $0x20] sm:$0xff]
      %v506 = vld [vmem:[%s483 + $0x28] sm:$0xff]
      %v507 = vld [vmem:[%s483 + $0x30] sm:$0xff]
      %v508 = vld [vmem:[%s483 + $0x38] sm:$0xff]
      %v509 = vld [vmem:[%s468] sm:$0xff]
      %v510 = vld [vmem:[%s468 + $0x8] sm:$0xff]
      %v511 = vld [vmem:[%s468 + $0x10] sm:$0xff]
      %v512 = vld [vmem:[%s468 + $0x18] sm:$0xff]
      %v513 = vld [vmem:[%s468 + $0x20] sm:$0xff]
      %v514 = vld [vmem:[%s468 + $0x28] sm:$0xff]
      %v515 = vld [vmem:[%s468 + $0x30] sm:$0xff]
      %v516 = vld [vmem:[%s468 + $0x38] sm:$0xff]
      %518 = vset.pattern.permute.xlu0 0
      %519 = vperm.xlu0 %518, %v501
      %v520 = vpop.permute.xlu0 %519
      %523 = vset.pattern.permute.xlu0 0
      %524 = vperm.xlu0 %523, %v502
      %v525 = vpop.permute.xlu0 %524
      %528 = vset.pattern.permute.xlu0 0
      %529 = vperm.xlu0 %528, %v503
      %v530 = vpop.permute.xlu0 %529
      %533 = vset.pattern.permute.xlu0 0
      %534 = vperm.xlu0 %533, %v504
      %v535 = vpop.permute.xlu0 %534
      %538 = vset.pattern.permute.xlu0 0
      %539 = vperm.xlu0 %538, %v505
      %v540 = vpop.permute.xlu0 %539
      %543 = vset.pattern.permute.xlu0 0
      %544 = vperm.xlu0 %543, %v506
      %v545 = vpop.permute.xlu0 %544
      %548 = vset.pattern.permute.xlu0 0
      %549 = vperm.xlu0 %548, %v507
      %v550 = vpop.permute.xlu0 %549
      %553 = vset.pattern.permute.xlu0 0
      %554 = vperm.xlu0 %553, %v508
      %v555 = vpop.permute.xlu0 %554
      %v557 = vmul.f32 %v509, %v520
      %v558 = vmul.f32 %v510, %v525
      %v559 = vmul.f32 %v511, %v530
      %v560 = vmul.f32 %v512, %v535
      %v561 = vmul.f32 %v513, %v540
      %v562 = vmul.f32 %v514, %v545
      %v563 = vmul.f32 %v515, %v550
      %v564 = vmul.f32 %v516, %v555
      %v565 = vld [vmem:[%s473] sm:$0xff]
      %v566 = vld [vmem:[%s473 + $0x8] sm:$0xff]
      %v567 = vld [vmem:[%s473 + $0x10] sm:$0xff]
      %v568 = vld [vmem:[%s473 + $0x18] sm:$0xff]
      %v569 = vld [vmem:[%s473 + $0x20] sm:$0xff]
      %v570 = vld [vmem:[%s473 + $0x28] sm:$0xff]
      %v571 = vld [vmem:[%s473 + $0x30] sm:$0xff]
      %v572 = vld [vmem:[%s473 + $0x38] sm:$0xff]
      %573 = vset.pattern.permute.xlu0 1
      %574 = vperm.xlu0 %573, %v501
      %v575 = vpop.permute.xlu0 %574
      %577 = vset.pattern.permute.xlu0 1
      %578 = vperm.xlu0 %577, %v502
      %v579 = vpop.permute.xlu0 %578
      %581 = vset.pattern.permute.xlu0 1
      %582 = vperm.xlu0 %581, %v503
      %v583 = vpop.permute.xlu0 %582
      %585 = vset.pattern.permute.xlu0 1
      %586 = vperm.xlu0 %585, %v504
      %v587 = vpop.permute.xlu0 %586
      %589 = vset.pattern.permute.xlu0 1
      %590 = vperm.xlu0 %589, %v505
      %v591 = vpop.permute.xlu0 %590
      %593 = vset.pattern.permute.xlu0 1
      %594 = vperm.xlu0 %593, %v506
      %v595 = vpop.permute.xlu0 %594
      %597 = vset.pattern.permute.xlu0 1
      %598 = vperm.xlu0 %597, %v507
      %v599 = vpop.permute.xlu0 %598
      %601 = vset.pattern.permute.xlu0 1
      %602 = vperm.xlu0 %601, %v508
      %v603 = vpop.permute.xlu0 %602
      %v605 = vmul.f32 %v565, %v575
      %v606 = vmul.f32 %v566, %v579
      %v607 = vmul.f32 %v567, %v583
      %v608 = vmul.f32 %v568, %v587
      %v609 = vmul.f32 %v569, %v591
      %v610 = vmul.f32 %v570, %v595
      %v611 = vmul.f32 %v571, %v599
      %v612 = vmul.f32 %v572, %v603
      %v613 = vadd.f32 %v557, %v605
      %v614 = vadd.f32 %v558, %v606
      %v615 = vadd.f32 %v559, %v607
      %v616 = vadd.f32 %v560, %v608
      %v617 = vadd.f32 %v561, %v609
      %v618 = vadd.f32 %v562, %v610
      %v619 = vadd.f32 %v563, %v611
      %v620 = vadd.f32 %v564, %v612
      %v621 = vld [vmem:[%s478] sm:$0xff]
      %v622 = vld [vmem:[%s478 + $0x8] sm:$0xff]
      %v623 = vld [vmem:[%s478 + $0x10] sm:$0xff]
      %v624 = vld [vmem:[%s478 + $0x18] sm:$0xff]
      %v625 = vld [vmem:[%s478 + $0x20] sm:$0xff]
      %v626 = vld [vmem:[%s478 + $0x28] sm:$0xff]
      %v627 = vld [vmem:[%s478 + $0x30] sm:$0xff]
      %v628 = vld [vmem:[%s478 + $0x38] sm:$0xff]
      %629 = vset.pattern.permute.xlu0 2
      %630 = vperm.xlu0 %629, %v501
      %v631 = vpop.permute.xlu0 %630
      %633 = vset.pattern.permute.xlu0 2
      %634 = vperm.xlu0 %633, %v502
      %v635 = vpop.permute.xlu0 %634
      %637 = vset.pattern.permute.xlu0 2
      %638 = vperm.xlu0 %637, %v503
      %v639 = vpop.permute.xlu0 %638
      %641 = vset.pattern.permute.xlu0 2
      %642 = vperm.xlu0 %641, %v504
      %v643 = vpop.permute.xlu0 %642
      %645 = vset.pattern.permute.xlu0 2
      %646 = vperm.xlu0 %645, %v505
      %v647 = vpop.permute.xlu0 %646
      %649 = vset.pattern.permute.xlu0 2
      %650 = vperm.xlu0 %649, %v506
      %v651 = vpop.permute.xlu0 %650
      %653 = vset.pattern.permute.xlu0 2
      %654 = vperm.xlu0 %653, %v507
      %v655 = vpop.permute.xlu0 %654
      %657 = vset.pattern.permute.xlu0 2
      %658 = vperm.xlu0 %657, %v508
      %v659 = vpop.permute.xlu0 %658
      %v661 = vmul.f32 %v621, %v631
      %v662 = vmul.f32 %v622, %v635
      %v663 = vmul.f32 %v623, %v639
      %v664 = vmul.f32 %v624, %v643
      %v665 = vmul.f32 %v625, %v647
      %v666 = vmul.f32 %v626, %v651
      %v667 = vmul.f32 %v627, %v655
      %v668 = vmul.f32 %v628, %v659
      %v669 = vadd.f32 %v613, %v661
      %v670 = vadd.f32 %v614, %v662
      %v671 = vadd.f32 %v615, %v663
      %v672 = vadd.f32 %v616, %v664
      %v673 = vadd.f32 %v617, %v665
      %v674 = vadd.f32 %v618, %v666
      %v675 = vadd.f32 %v619, %v667
      %v676 = vadd.f32 %v620, %v668
      %v677 = vpack.c.bf16 %v670, %v669
      %v678 = vpack.c.bf16 %v672, %v671
      %v679 = vpack.c.bf16 %v674, %v673
      %v680 = vpack.c.bf16 %v676, %v675
      %v681 = vld [vmem:[%s488] sm:$0xff]
      %v682 = vld [vmem:[%s488 + $0x8] sm:$0xff]
      %v683 = vld [vmem:[%s488 + $0x10] sm:$0xff]
      %v684 = vld [vmem:[%s488 + $0x18] sm:$0xff]
      %v685 = vld [vmem:[%s488 + $0x20] sm:$0xff]
      %v686 = vld [vmem:[%s488 + $0x28] sm:$0xff]
      %v687 = vld [vmem:[%s488 + $0x30] sm:$0xff]
      %v688 = vld [vmem:[%s488 + $0x38] sm:$0xff]
      %v689 = vpack.c.bf16 %v682, %v681
      %v690 = vpack.c.bf16 %v684, %v683
      %v691 = vpack.c.bf16 %v686, %v685
      %v692 = vpack.c.bf16 %v688, %v687
      %vm693 = vcmask 64512
      %v695 = vsel %vm693, %v689, 0
      %v698 = vsel %vm693, %v690, 0
      %v701 = vsel %vm693, %v691, 0
      %v704 = vsel %vm693, %v692, 0
      %vm706 = vcmask 1043456
      %v708 = vsel %vm706, %v499, 0
      %710 = vmatprep.subr.bf16.mxu0 0
      %711 = vmatpush1.bf16.msra.mxu0 %v708
      %712 = vmatprep.subr.bf16.mxu0 0
      %713 = vmatpush1.bf16.msra.mxu0 0
      %714 = vmatprep.subr.bf16.mxu0 0
      %715 = vmatpush1.bf16.msra.mxu0 0
      %716 = vmatprep.subr.bf16.mxu0 0
      %717 = vmatpush1.bf16.msra.mxu0 0
      %718 = vmatprep.subr.bf16.mxu0 0
      %719 = vmatpush1.bf16.msra.mxu0 0
      %720 = vmatprep.subr.bf16.mxu0 0
      %721 = vmatpush1.bf16.msra.mxu0 0
      %722 = vmatprep.subr.bf16.mxu0 0
      %723 = vmatpush1.bf16.msra.mxu0 0
      %724 = vmatprep.subr.bf16.mxu0 0
      %725 = vmatpush1.bf16.msra.mxu0 0
      %726 = vmatprep.subr.bf16.mxu0 0
      %727 = vmatpush1.bf16.msra.mxu0 0
      %728 = vmatprep.subr.bf16.mxu0 0
      %729 = vmatpush1.bf16.msra.mxu0 0
      %730 = vmatprep.subr.bf16.mxu0 0
      %731 = vmatpush1.bf16.msra.mxu0 0
      %732 = vmatprep.subr.bf16.mxu0 0
      %733 = vmatpush1.bf16.msra.mxu0 0
      %734 = vmatprep.subr.bf16.mxu0 0
      %735 = vmatpush1.bf16.msra.mxu0 0
      %736 = vmatprep.subr.bf16.mxu0 0
      %737 = vmatpush1.bf16.msra.mxu0 0
      %738 = vmatprep.subr.bf16.mxu0 0
      %739 = vmatpush1.bf16.msra.mxu0 0
      %740 = vmatprep.subr.bf16.mxu0 0
      %741 = vmatpush1.bf16.msra.mxu0 0
      %742 = vmatprep.mubr.bf16.mxu0 0
      %743 = vmatmul.mubr.bf16.gmra.mrb[0].mxu0 %v695
      %v744 = vpop.f32.mrb[0].mxu0
      %v745 = vadd.f32 0.0, %v744
      %v746 = vpop.f32.mrb[0].mxu0
      %v747 = vpop.f32.mrb[0].mxu0
      %v748 = vadd.f32 0.0, %v747
      %v749 = vpop.f32.mrb[0].mxu0
      %750 = vmatprep.mubr.bf16.mxu0 0
      %751 = vmatmul.mubr.bf16.gmra.mrb[0].mxu0 %v698
      %v752 = vpop.f32.mrb[0].mxu0
      %v753 = vadd.f32 0.0, %v752
      %v754 = vpop.f32.mrb[0].mxu0
      %v755 = vpop.f32.mrb[0].mxu0
      %v756 = vadd.f32 0.0, %v755
      %v757 = vpop.f32.mrb[0].mxu0
      %758 = vmatprep.mubr.bf16.mxu0 0
      %759 = vmatmul.mubr.bf16.gmra.mrb[0].mxu0 %v701
      %v760 = vpop.f32.mrb[0].mxu0
      %v761 = vadd.f32 0.0, %v760
      %v762 = vpop.f32.mrb[0].mxu0
      %v763 = vpop.f32.mrb[0].mxu0
      %v764 = vadd.f32 0.0, %v763
      %v765 = vpop.f32.mrb[0].mxu0
      %766 = vmatprep.mubr.bf16.mxu0 0
      %767 = vmatmul.mubr.bf16.gmra.mrb[0].mxu0 %v704
      %v768 = vpop.f32.mrb[0].mxu0
      %v769 = vadd.f32 0.0, %v768
      %v770 = vpop.f32.mrb[0].mxu0
      %v771 = vpop.f32.mrb[0].mxu0
      %v772 = vadd.f32 0.0, %v771
      %v773 = vpop.f32.mrb[0].mxu0
      %774 = vdwg.mxu0
      %v779 = vunpack.c.l.b16 %v495
      %v780 = vunpack.c.l.b16 %v496
      %v781 = vunpack.c.l.b16 %v497
      %v782 = vunpack.c.l.b16 %v498
      %v783 = vpack.c.b16 %v780, %v779
      %v784 = vpack.c.b16 %v782, %v781
      %vm787 = vcmask 261120
      %v789 = vsel %vm787, %v677, 0
      %v792 = vsel %vm787, %v678, 0
      %v795 = vsel %vm787, %v679, 0
      %v798 = vsel %vm787, %v680, 0
      %800 = vmatprep.subr.bf16.mxu0 0
      %801 = vmatpush1.bf16.msra.mxu0 %v783
      %802 = vmatprep.subr.bf16.mxu0 0
      %803 = vmatpush1.bf16.msra.mxu0 %v784
      %804 = vmatprep.subr.bf16.mxu0 0
      %805 = vmatpush1.bf16.msra.mxu0 0
      %806 = vmatprep.subr.bf16.mxu0 0
      %807 = vmatpush1.bf16.msra.mxu0 0
      %808 = vmatprep.subr.bf16.mxu0 0
      %809 = vmatpush1.bf16.msra.mxu0 0
      %810 = vmatprep.subr.bf16.mxu0 0
      %811 = vmatpush1.bf16.msra.mxu0 0
      %812 = vmatprep.subr.bf16.mxu0 0
      %813 = vmatpush1.bf16.msra.mxu0 0
      %814 = vmatprep.subr.bf16.mxu0 0
      %815 = vmatpush1.bf16.msra.mxu0 0
      %816 = vmatprep.subr.bf16.mxu0 0
      %817 = vmatpush1.bf16.msra.mxu0 0
      %818 = vmatprep.subr.bf16.mxu0 0
      %819 = vmatpush1.bf16.msra.mxu0 0
      %820 = vmatprep.subr.bf16.mxu0 0
      %821 = vmatpush1.bf16.msra.mxu0 0
      %822 = vmatprep.subr.bf16.mxu0 0
      %823 = vmatpush1.bf16.msra.mxu0 0
      %824 = vmatprep.subr.bf16.mxu0 0
      %825 = vmatpush1.bf16.msra.mxu0 0
      %826 = vmatprep.subr.bf16.mxu0 0
      %827 = vmatpush1.bf16.msra.mxu0 0
      %828 = vmatprep.subr.bf16.mxu0 0
      %829 = vmatpush1.bf16.msra.mxu0 0
      %830 = vmatprep.subr.bf16.mxu0 0
      %831 = vmatpush1.bf16.msra.mxu0 0
      %832 = vmatprep.mubr.bf16.mxu0 0
      %833 = vmatmul.mubr.bf16.gmra.mrb[0].mxu0 %v789
      %v834 = vpop.f32.mrb[0].mxu0
      %v835 = vadd.f32 %v745, %v834
      %v836 = vpop.f32.mrb[0].mxu0
      %v837 = vpop.f32.mrb[0].mxu0
      %v838 = vadd.f32 %v748, %v837
      %v839 = vpop.f32.mrb[0].mxu0
      %840 = vmatprep.mubr.bf16.mxu0 0
      %841 = vmatmul.mubr.bf16.gmra.mrb[0].mxu0 %v792
      %v842 = vpop.f32.mrb[0].mxu0
      %v843 = vadd.f32 %v753, %v842
      %v844 = vpop.f32.mrb[0].mxu0
      %v845 = vpop.f32.mrb[0].mxu0
      %v846 = vadd.f32 %v756, %v845
      %v847 = vpop.f32.mrb[0].mxu0
      %848 = vmatprep.mubr.bf16.mxu0 0
      %849 = vmatmul.mubr.bf16.gmra.mrb[0].mxu0 %v795
      %v850 = vpop.f32.mrb[0].mxu0
      %v851 = vadd.f32 %v761, %v850
      %v852 = vpop.f32.mrb[0].mxu0
      %v853 = vpop.f32.mrb[0].mxu0
      %v854 = vadd.f32 %v764, %v853
      %v855 = vpop.f32.mrb[0].mxu0
      %856 = vmatprep.mubr.bf16.mxu0 0
      %857 = vmatmul.mubr.bf16.gmra.mrb[0].mxu0 %v798
      %v858 = vpop.f32.mrb[0].mxu0
      %v859 = vadd.f32 %v769, %v858
      %v860 = vpop.f32.mrb[0].mxu0
      %v861 = vpop.f32.mrb[0].mxu0
      %v862 = vadd.f32 %v772, %v861
      %v863 = vpop.f32.mrb[0].mxu0
      %864 = vdwg.mxu0
      %v866 = vlaneseq
      %v867 = vshrl.u32 %v866, 7
      %v868 = vsub.s32 0, %v867
      %v869 = vrot.slane %v500, %v868
      %v871 = vadd.f32 %v835, %v869
      %v872 = vadd.f32 %v838, %v869
      %v873 = vadd.f32 %v843, %v869
      %v874 = vadd.f32 %v846, %v869
      %v875 = vadd.f32 %v851, %v869
      %v876 = vadd.f32 %v854, %v869
      %v877 = vadd.f32 %v859, %v869
      %v878 = vadd.f32 %v862, %v869
      %v879 = vmax.f32 %v871, 0.0
      %v880 = vmax.f32 %v872, 0.0
      %v881 = vmax.f32 %v873, 0.0
      %v882 = vmax.f32 %v874, 0.0
      %v883 = vmax.f32 %v875, 0.0
      %v884 = vmax.f32 %v876, 0.0
      %v885 = vmax.f32 %v877, 0.0
      %v886 = vmax.f32 %v878, 0.0
      %v887 = vld [vmem:[%s8] sm:$0xf]
      %v888 = vld [vmem:[%s8 + $0x4] sm:$0xf]
      %v889 = vld [vmem:[%s8 + $0x8] sm:$0xf]
      %v890 = vld [vmem:[%s8 + $0xc] sm:$0xf]
      %v891 = vld [vmem:[%s8 + $0x10] sm:$0xf]
      %v892 = vld [vmem:[%s8 + $0x14] sm:$0xf]
      %v893 = vld [vmem:[%s8 + $0x18] sm:$0xf]
      %v894 = vld [vmem:[%s8 + $0x1c] sm:$0xf]
      %v895 = vld [vmem:[%s8 + $0x20] sm:$0xf]
      %v896 = vld [vmem:[%s8 + $0x24] sm:$0xf]
      %v897 = vld [vmem:[%s8 + $0x28] sm:$0xf]
      %v898 = vld [vmem:[%s8 + $0x2c] sm:$0xf]
      %v899 = vld [vmem:[%s8 + $0x30] sm:$0xf]
      %v900 = vld [vmem:[%s8 + $0x34] sm:$0xf]
      %v901 = vld [vmem:[%s8 + $0x38] sm:$0xf]
      %v902 = vld [vmem:[%s8 + $0x3c] sm:$0xf]
      %v903 = vld [vmem:[%s9] sm:$0x1]
      %v904 = vpack.c.bf16 %v880, %v879
      %v905 = vpack.c.bf16 %v882, %v881
      %v906 = vpack.c.bf16 %v884, %v883
      %v907 = vpack.c.bf16 %v886, %v885
      %v909 = vlaneseq
      %v910 = vshrl.u32 %v909, 7
      %v911 = vsub.s32 0, %v910
      %v912 = vrot.slane %v903, %v911
      %v930 = vunpack.c.l.b16 %v887
      %v931 = vunpack.c.l.b16 %v888
      %v932 = vunpack.c.l.b16 %v889
      %v933 = vunpack.c.l.b16 %v890
      %v934 = vunpack.c.l.b16 %v891
      %v935 = vunpack.c.l.b16 %v892
      %v936 = vunpack.c.l.b16 %v893
      %v937 = vunpack.c.l.b16 %v894
      %v938 = vunpack.c.l.b16 %v895
      %v939 = vunpack.c.l.b16 %v896
      %v940 = vunpack.c.l.b16 %v897
      %v941 = vunpack.c.l.b16 %v898
      %v942 = vunpack.c.l.b16 %v899
      %v943 = vunpack.c.l.b16 %v900
      %v944 = vunpack.c.l.b16 %v901
      %v945 = vunpack.c.l.b16 %v902
      %v946 = vpack.c.b16 %v931, %v930
      %v947 = vpack.c.b16 %v933, %v932
      %v948 = vpack.c.b16 %v935, %v934
      %v949 = vpack.c.b16 %v937, %v936
      %v950 = vpack.c.b16 %v939, %v938
      %v951 = vpack.c.b16 %v941, %v940
      %v952 = vpack.c.b16 %v943, %v942
      %v953 = vpack.c.b16 %v945, %v944
      %962 = vmatprep.subr.bf16.mxu0 0
      %963 = vmatpush1.bf16.msra.mxu0 %v946
      %964 = vmatprep.subr.bf16.mxu0 0
      %965 = vmatpush1.bf16.msra.mxu0 %v947
      %966 = vmatprep.subr.bf16.mxu0 0
      %967 = vmatpush1.bf16.msra.mxu0 %v948
      %968 = vmatprep.subr.bf16.mxu0 0
      %969 = vmatpush1.bf16.msra.mxu0 %v949
      %970 = vmatprep.subr.bf16.mxu0 0
      %971 = vmatpush1.bf16.msra.mxu0 %v950
      %972 = vmatprep.subr.bf16.mxu0 0
      %973 = vmatpush1.bf16.msra.mxu0 %v951
      %974 = vmatprep.subr.bf16.mxu0 0
      %975 = vmatpush1.bf16.msra.mxu0 %v952
      %976 = vmatprep.subr.bf16.mxu0 0
      %977 = vmatpush1.bf16.msra.mxu0 %v953
      %978 = vmatprep.subr.bf16.mxu0 0
      %979 = vmatpush1.bf16.msra.mxu0 0
      %980 = vmatprep.subr.bf16.mxu0 0
      %981 = vmatpush1.bf16.msra.mxu0 0
      %982 = vmatprep.subr.bf16.mxu0 0
      %983 = vmatpush1.bf16.msra.mxu0 0
      %984 = vmatprep.subr.bf16.mxu0 0
      %985 = vmatpush1.bf16.msra.mxu0 0
      %986 = vmatprep.subr.bf16.mxu0 0
      %987 = vmatpush1.bf16.msra.mxu0 0
      %988 = vmatprep.subr.bf16.mxu0 0
      %989 = vmatpush1.bf16.msra.mxu0 0
      %990 = vmatprep.subr.bf16.mxu0 0
      %991 = vmatpush1.bf16.msra.mxu0 0
      %992 = vmatprep.subr.bf16.mxu0 0
      %993 = vmatpush1.bf16.msra.mxu0 0
      %994 = vmatprep.mubr.bf16.mxu0 0
      %995 = vmatmul.mubr.bf16.gmra.mrb[0].mxu0 %v904
      %v996 = vpop.f32.mrb[0].mxu0
      %v997 = vadd.f32 %v912, %v996
      %v998 = vpop.f32.mrb[0].mxu0
      %v999 = vpop.f32.mrb[0].mxu0
      %v1000 = vadd.f32 %v912, %v999
      %v1001 = vpop.f32.mrb[0].mxu0
      %1002 = vmatprep.mubr.bf16.mxu0 0
      %1003 = vmatmul.mubr.bf16.gmra.mrb[0].mxu0 %v905
      %v1004 = vpop.f32.mrb[0].mxu0
      %v1005 = vadd.f32 %v912, %v1004
      %v1006 = vpop.f32.mrb[0].mxu0
      %v1007 = vpop.f32.mrb[0].mxu0
      %v1008 = vadd.f32 %v912, %v1007
      %v1009 = vpop.f32.mrb[0].mxu0
      %1010 = vmatprep.mubr.bf16.mxu0 0
      %1011 = vmatmul.mubr.bf16.gmra.mrb[0].mxu0 %v906
      %v1012 = vpop.f32.mrb[0].mxu0
      %v1013 = vadd.f32 %v912, %v1012
      %v1014 = vpop.f32.mrb[0].mxu0
      %v1015 = vpop.f32.mrb[0].mxu0
      %v1016 = vadd.f32 %v912, %v1015
      %v1017 = vpop.f32.mrb[0].mxu0
      %1018 = vmatprep.mubr.bf16.mxu0 0
      %1019 = vmatmul.mubr.bf16.gmra.mrb[0].mxu0 %v907
      %v1020 = vpop.f32.mrb[0].mxu0
      %v1021 = vadd.f32 %v912, %v1020
      %v1022 = vpop.f32.mrb[0].mxu0
      %v1023 = vpop.f32.mrb[0].mxu0
      %v1024 = vadd.f32 %v912, %v1023
      %v1025 = vpop.f32.mrb[0].mxu0
      %1026 = vdwg.mxu0
      %v1027 = vmax.f32 %v997, 0.0
      %v1028 = vmax.f32 %v1000, 0.0
      %v1029 = vmax.f32 %v1005, 0.0
      %v1030 = vmax.f32 %v1008, 0.0
      %v1031 = vmax.f32 %v1013, 0.0
      %v1032 = vmax.f32 %v1016, 0.0
      %v1033 = vmax.f32 %v1021, 0.0
      %v1034 = vmax.f32 %v1024, 0.0
      %v1035 = vld [vmem:[%s10] sm:$0xf]
      %v1036 = vld [vmem:[%s10 + $0x4] sm:$0xf]
      %v1037 = vld [vmem:[%s10 + $0x8] sm:$0xf]
      %v1038 = vld [vmem:[%s10 + $0xc] sm:$0xf]
      %v1039 = vld [vmem:[%s10 + $0x10] sm:$0xf]
      %v1040 = vld [vmem:[%s10 + $0x14] sm:$0xf]
      %v1041 = vld [vmem:[%s10 + $0x18] sm:$0xf]
      %v1042 = vld [vmem:[%s10 + $0x1c] sm:$0xf]
      %v1043 = vld [vmem:[%s10 + $0x20] sm:$0xf]
      %v1044 = vld [vmem:[%s10 + $0x24] sm:$0xf]
      %v1045 = vld [vmem:[%s10 + $0x28] sm:$0xf]
      %v1046 = vld [vmem:[%s10 + $0x2c] sm:$0xf]
      %v1047 = vld [vmem:[%s10 + $0x30] sm:$0xf]
      %v1048 = vld [vmem:[%s10 + $0x34] sm:$0xf]
      %v1049 = vld [vmem:[%s10 + $0x38] sm:$0xf]
      %v1050 = vld [vmem:[%s10 + $0x3c] sm:$0xf]
      %v1051 = vld [vmem:[%s11] sm:$0x1]
      %v1052 = vpack.c.bf16 %v1028, %v1027
      %v1053 = vpack.c.bf16 %v1030, %v1029
      %v1054 = vpack.c.bf16 %v1032, %v1031
      %v1055 = vpack.c.bf16 %v1034, %v1033
      %v1057 = vlaneseq
      %v1058 = vshrl.u32 %v1057, 7
      %v1059 = vsub.s32 0, %v1058
      %v1060 = vrot.slane %v1051, %v1059
      %v1078 = vunpack.c.l.b16 %v1035
      %v1079 = vunpack.c.l.b16 %v1036
      %v1080 = vunpack.c.l.b16 %v1037
      %v1081 = vunpack.c.l.b16 %v1038
      %v1082 = vunpack.c.l.b16 %v1039
      %v1083 = vunpack.c.l.b16 %v1040
      %v1084 = vunpack.c.l.b16 %v1041
      %v1085 = vunpack.c.l.b16 %v1042
      %v1086 = vunpack.c.l.b16 %v1043
      %v1087 = vunpack.c.l.b16 %v1044
      %v1088 = vunpack.c.l.b16 %v1045
      %v1089 = vunpack.c.l.b16 %v1046
      %v1090 = vunpack.c.l.b16 %v1047
      %v1091 = vunpack.c.l.b16 %v1048
      %v1092 = vunpack.c.l.b16 %v1049
      %v1093 = vunpack.c.l.b16 %v1050
      %v1094 = vpack.c.b16 %v1079, %v1078
      %v1095 = vpack.c.b16 %v1081, %v1080
      %v1096 = vpack.c.b16 %v1083, %v1082
      %v1097 = vpack.c.b16 %v1085, %v1084
      %v1098 = vpack.c.b16 %v1087, %v1086
      %v1099 = vpack.c.b16 %v1089, %v1088
      %v1100 = vpack.c.b16 %v1091, %v1090
      %v1101 = vpack.c.b16 %v1093, %v1092
      %1110 = vmatprep.subr.bf16.mxu0 0
      %1111 = vmatpush1.bf16.msra.mxu0 %v1094
      %1112 = vmatprep.subr.bf16.mxu0 0
      %1113 = vmatpush1.bf16.msra.mxu0 %v1095
      %1114 = vmatprep.subr.bf16.mxu0 0
      %1115 = vmatpush1.bf16.msra.mxu0 %v1096
      %1116 = vmatprep.subr.bf16.mxu0 0
      %1117 = vmatpush1.bf16.msra.mxu0 %v1097
      %1118 = vmatprep.subr.bf16.mxu0 0
      %1119 = vmatpush1.bf16.msra.mxu0 %v1098
      %1120 = vmatprep.subr.bf16.mxu0 0
      %1121 = vmatpush1.bf16.msra.mxu0 %v1099
      %1122 = vmatprep.subr.bf16.mxu0 0
      %1123 = vmatpush1.bf16.msra.mxu0 %v1100
      %1124 = vmatprep.subr.bf16.mxu0 0
      %1125 = vmatpush1.bf16.msra.mxu0 %v1101
      %1126 = vmatprep.subr.bf16.mxu0 0
      %1127 = vmatpush1.bf16.msra.mxu0 0
      %1128 = vmatprep.subr.bf16.mxu0 0
      %1129 = vmatpush1.bf16.msra.mxu0 0
      %1130 = vmatprep.subr.bf16.mxu0 0
      %1131 = vmatpush1.bf16.msra.mxu0 0
      %1132 = vmatprep.subr.bf16.mxu0 0
      %1133 = vmatpush1.bf16.msra.mxu0 0
      %1134 = vmatprep.subr.bf16.mxu0 0
      %1135 = vmatpush1.bf16.msra.mxu0 0
      %1136 = vmatprep.subr.bf16.mxu0 0
      %1137 = vmatpush1.bf16.msra.mxu0 0
      %1138 = vmatprep.subr.bf16.mxu0 0
      %1139 = vmatpush1.bf16.msra.mxu0 0
      %1140 = vmatprep.subr.bf16.mxu0 0
      %1141 = vmatpush1.bf16.msra.mxu0 0
      %1142 = vmatprep.mubr.bf16.mxu0 0
      %1143 = vmatmul.mubr.bf16.gmra.mrb[0].mxu0 %v1052
      %v1144 = vpop.f32.mrb[0].mxu0
      %v1145 = vadd.f32 %v1060, %v1144
      %v1146 = vpop.f32.mrb[0].mxu0
      %v1147 = vpop.f32.mrb[0].mxu0
      %v1148 = vadd.f32 %v1060, %v1147
      %v1149 = vpop.f32.mrb[0].mxu0
      %1150 = vmatprep.mubr.bf16.mxu0 0
      %1151 = vmatmul.mubr.bf16.gmra.mrb[0].mxu0 %v1053
      %v1152 = vpop.f32.mrb[0].mxu0
      %v1153 = vadd.f32 %v1060, %v1152
      %v1154 = vpop.f32.mrb[0].mxu0
      %v1155 = vpop.f32.mrb[0].mxu0
      %v1156 = vadd.f32 %v1060, %v1155
      %v1157 = vpop.f32.mrb[0].mxu0
      %1158 = vmatprep.mubr.bf16.mxu0 0
      %1159 = vmatmul.mubr.bf16.gmra.mrb[0].mxu0 %v1054
      %v1160 = vpop.f32.mrb[0].mxu0
      %v1161 = vadd.f32 %v1060, %v1160
      %v1162 = vpop.f32.mrb[0].mxu0
      %v1163 = vpop.f32.mrb[0].mxu0
      %v1164 = vadd.f32 %v1060, %v1163
      %v1165 = vpop.f32.mrb[0].mxu0
      %1166 = vmatprep.mubr.bf16.mxu0 0
      %1167 = vmatmul.mubr.bf16.gmra.mrb[0].mxu0 %v1055
      %v1168 = vpop.f32.mrb[0].mxu0
      %v1169 = vadd.f32 %v1060, %v1168
      %v1170 = vpop.f32.mrb[0].mxu0
      %v1171 = vpop.f32.mrb[0].mxu0
      %v1172 = vadd.f32 %v1060, %v1171
      %v1173 = vpop.f32.mrb[0].mxu0
      %1174 = vdwg.mxu0
      %1175 = vst [vmem:[%s493] sm:$0xff] %v1145
      %1176 = vst [vmem:[%s493 + $0x8] sm:$0xff] %v1148
      %1177 = vst [vmem:[%s493 + $0x10] sm:$0xff] %v1153
      %1178 = vst [vmem:[%s493 + $0x18] sm:$0xff] %v1156
      %1179 = vst [vmem:[%s493 + $0x20] sm:$0xff] %v1161
      %1180 = vst [vmem:[%s493 + $0x28] sm:$0xff] %v1164
      %1181 = vst [vmem:[%s493 + $0x30] sm:$0xff] %v1169
      %1182 = vst [vmem:[%s493 + $0x38] sm:$0xff] %v1172
      %p1183 = scmp.lt.s32.totalorder %s23, 1
      %s1184 = scalar_select %p1183, %s23, 1
      %s1185 = smul.addr %s1184, 8
      %s1186 = smul.addr %s1185, 8
      %s1187 = scalar_lea.vmem %s12, %s1186
      // Predicated region
      $region69: #{pointnet2_seg_forward.15} parent=67 // pred_check
        %p1188 = pneg %p318
      $region70: #{pointnet2_seg_forward.15} parent=67 // pred_check_branch
        %1190 = sbr.rel (%p1188) target = $region72
      $region71: #{pointnet2_seg_forward.15} parent=67 // pred_region
        _
      $region72: #{pointnet2_seg_forward.15} parent=67 // pred_fallthru
        _
    $region68: #{pointnet2_seg_forward.15} parent=5 // pred_fallthru
      _
    %p1191 = scmp.le.s32.totalorder 2, %s18
    // Predicated region
    $region73: #{pointnet2_seg_forward.15} parent=5 // pred_check
      %p1192 = pneg %p1191
    $region74: #{pointnet2_seg_forward.15} parent=5 // pred_check_branch
      %1194 = sbr.rel (%p1192) target = $region76
    $region75: #{pointnet2_seg_forward.15} parent=5 // pred_region
      %s1195 = ssub.s32 %s18, 2
      // Predicated region
      $region77: #{pointnet2_seg_forward.15} parent=75 // pred_check
        %p1196 = pneg %p324
      $region78: #{pointnet2_seg_forward.15} parent=75 // pred_check_branch
        %1198 = sbr.rel (%p1196) target = $region80
      $region79: #{pointnet2_seg_forward.15} parent=75 // pred_region
        %p1199 = scmp.lt.s32.totalorder %s24, 1
        %s1200 = scalar_select %p1199, %s24, 1
        %s1201 = smul.addr %s1200, 8
        %s1202 = smul.addr %s1201, 8
        %s1203 = scalar_lea.vmem %s12, %s1202
      $region80: #{pointnet2_seg_forward.15} parent=75 // pred_fallthru
        _
    $region76: #{pointnet2_seg_forward.15} parent=5 // pred_fallthru
      _
  $region6: #{pointnet2_seg_forward.15} parent=0 // loop_footer
    %s22 = sadd.s32 1, %s18
  $region7: #{pointnet2_seg_forward.15} parent=0 // loop_footer_branch
    %17 = sbr.rel target = $region3
  $region8: #{pointnet2_seg_forward.15} parent=0 // loop_exit
    _

</llo_original>
